<compile_context>
chip_gen: v5e
topology: v5e:2x2
jax: 0.10.0
libtpu: 0.0.40
codegen_flags: <defaults>
</compile_context>

<pallas_src>
import jax
import jax.numpy as jnp
from jax.experimental import pallas as pl
from jax.experimental.pallas import tpu as pltpu

SELU_ALPHA = 1.6732632423543772
SELU_SCALE = 1.0507009873554805


def _selu(x):
    return SELU_SCALE * jnp.where(x > 0, x, SELU_ALPHA * (jnp.exp(x) - 1.0))


# --------------------------------------------------------------------------------------
# Fused forward kernel: DownBlock -> MeshDownMP -> Bottleneck -> MeshUpMP -> UpBlock
# --------------------------------------------------------------------------------------
def _fused_kernel(
        v_ref, e_ref,                 # fine node / edge features, f32
        g2f_ref, sctf_ref,            # fine graph: fused gather [gsrc|gdst] (E,2N), scatter (N,E), bf16
        g2c_ref, sctc_ref,            # coarse graph: same
        poolsct_ref, unpool_ref,      # cluster scatter (Nc,Nf) / parent gather (Nf,Nc), bf16
        aux_ref,                      # f32 slab: invdeg_f | invdeg_c | invcnt | relpos | ceattr (pre-broadcast to W)
        fw_ref, fb_ref,               # fine-layer weights (Lf, W, 7W) bf16 / biases (Lf, 4, W) f32
        cw_ref, cb_ref,               # bottleneck (coarse) weights / biases
        rw_ref, rb_ref,               # pool/unpool/edge-encoder matrices (5, W, W) bf16 / row vectors (9, W) f32
        v_out_ref, e_out_ref,         # outputs
        vskip_ref, eskip_ref):        # VMEM scratch: skip connections across the bottleneck
    bf16 = jnp.bfloat16
    f32 = jnp.float32
    W = v_ref.shape[1]
    Nf = v_ref.shape[0]
    Nc = poolsct_ref.shape[0]
    Ec = sctc_ref.shape[1]

    def dotf(a, b):
        return jnp.dot(a, b, preferred_element_type=f32)

    def interaction(v, e, g2, sct, invdeg, w_ref, b_ref, l):
        """One InteractionNetwork layer (edge FNN -> residual -> mean scatter -> node FNN -> residual)."""
        v_b = v.astype(bf16)
        e_b = e.astype(bf16)
        b = b_ref[l]                                              # (4, W) f32: be1, be2, bn1, bn2
        # Edge FNN layer 1, REASSOCIATED: node-side weights applied at the N nodes first
        # (one 2W-wide MXU matmul), then ONE fused one-hot gather [gsrc|gdst] @ [t_s; t_d]
        # moves the result onto the E edges (E >> N, contraction depth 2N).
        t = dotf(v_b, w_ref[l, :, 0:2 * W]).astype(bf16)          # (N, 2W)
        t2 = jnp.concatenate([t[:, 0:W], t[:, W:2 * W]], axis=0)  # (2N, W)
        h = _selu(dotf(g2, t2)
                  + dotf(e_b, w_ref[l, :, 2 * W:3 * W])
                  + b[0:1, :])
        e_new = e + dotf(h.astype(bf16), w_ref[l, :, 3 * W:4 * W]) + b[1:2, :]
        # mean aggregation at receivers: unnormalized bf16 one-hot scatter matmul,
        # exact f32 1/deg scale (invdeg is pre-broadcast to (N, W) host-side -> no
        # per-layer broadcast_in_dim re-emission).
        agg = dotf(sct, e_new.astype(bf16)) * invdeg
        # node FNN: concat([v, agg]) @ Wn1 as a split-weight sum (no lane concat).
        h2 = _selu(dotf(v_b, w_ref[l, :, 4 * W:5 * W])
                   + dotf(agg.astype(bf16), w_ref[l, :, 5 * W:6 * W])
                   + b[2:3, :])
        v_new = v + dotf(h2.astype(bf16), w_ref[l, :, 6 * W:7 * W]) + b[3:4, :]
        return v_new, e_new

    # Graph structure + normalizers loaded once; resident in VMEM for every layer.
    g2f = g2f_ref[...]; sctf = sctf_ref[...]
    g2c = g2c_ref[...]; sctc = sctc_ref[...]
    invdeg_f = aux_ref[0:Nf, :]
    invdeg_c = aux_ref[Nf:Nf + Nc, :]
    invcnt = aux_ref[Nf + Nc:Nf + 2 * Nc, :]
    relpos = aux_ref[Nf + 2 * Nc:2 * Nf + 2 * Nc, :]
    ceattr = aux_ref[2 * Nf + 2 * Nc:2 * Nf + 2 * Nc + Ec, :]

    n_fine = fw_ref.shape[0]           # down layers then up layers
    down_depth = n_fine // 2
    n_bneck = cw_ref.shape[0]

    v = v_ref[...]
    e = e_ref[...]

    # ---- DownBlock: message passing on the fine graph (depth 2, fully unrolled) ----
    for l in range(down_depth):
        v, e = interaction(v, e, g2f, sctf, invdeg_f, fw_ref, fb_ref, l)

    # Skip connections parked in explicit VMEM scratch (bounds their live range across
    # the bottleneck instead of pinning them in values/vregs).
    vskip_ref[...] = v
    eskip_ref[...] = e

    # ---- MeshDownMP: FNN([v, rel_pos]) -> cluster-mean pool; coarse-edge encoder ----
    hp = _selu(dotf(v.astype(bf16), rw_ref[0]) + relpos * rb_ref[0:1, :] + rb_ref[1:2, :])
    m = dotf(hp.astype(bf16), rw_ref[1]) + rb_ref[2:3, :]
    v_c = dotf(poolsct_ref[...], m.astype(bf16)) * invcnt
    he = _selu(ceattr * rb_ref[3:4, :] + rb_ref[4:5, :])
    e_c = dotf(he.astype(bf16), rw_ref[2]) + rb_ref[5:6, :]

    # ---- Bottleneck: message passing on the coarse graph ----
    for l in range(n_bneck):
        v_c, e_c = interaction(v_c, e_c, g2c, sctc, invdeg_c, cw_ref, cb_ref, l)

    # ---- MeshUpMP (reassociated): weight applied on coarse nodes, one-hot gather up, + skip ----
    tu = dotf(v_c.astype(bf16), rw_ref[3]).astype(bf16)           # (Nc, W)
    g_up = dotf(unpool_ref[...], tu)                              # (Nf, W) parent gather
    hu = _selu(g_up + relpos * rb_ref[6:7, :] + rb_ref[7:8, :])
    v = vskip_ref[...] + dotf(hu.astype(bf16), rw_ref[4]) + rb_ref[8:9, :]
    e = eskip_ref[...]

    # ---- UpBlock: message passing on the fine graph (second half of the fine stack) ----
    for l in range(down_depth, n_fine):
        v, e = interaction(v, e, g2f, sctf, invdeg_f, fw_ref, fb_ref, l)

    v_out_ref[...] = v
    e_out_ref[...] = e


def multi_scale_gnn_forward(operands):
    v, e = operands[0], operands[1]
    n, w = v.shape
    ne = e.shape[0]
    vmem = lambda: pl.BlockSpec(memory_space=pltpu.MemorySpace.VMEM)
    return pl.pallas_call(
        _fused_kernel,
        out_shape=(jax.ShapeDtypeStruct((n, w), jnp.float32),
                   jax.ShapeDtypeStruct((ne, w), jnp.float32)),
        # No grid: the kernel runs once over whole VMEM-resident arrays; single-buffered,
        # no pipeline prologue/epilogue or double-buffering for a 1-point grid.
        in_specs=[vmem() for _ in operands],
        out_specs=(vmem(), vmem()),
        scratch_shapes=[pltpu.VMEM((n, w), jnp.float32),    # v_skip
                        pltpu.VMEM((ne, w), jnp.float32)],  # e_skip
        compiler_params=pltpu.CompilerParams(vmem_limit_bytes=32 * 1024 * 1024),
    )(*operands)


# --------------------------------------------------------------------------------------
# Host-side parameter / graph-operand construction and packing (plain JAX, done once)
# --------------------------------------------------------------------------------------
def _dense(key, fan_in, fan_out):
    bound = float(1.0 / (fan_in ** 0.5))
    kw, kb = jax.random.split(key)
    w = jax.random.uniform(kw, (fan_in, fan_out), jnp.float32, -bound, bound)
    b = jax.random.uniform(kb, (fan_out,), jnp.float32, -bound, bound)
    return w, b


def init_interaction_params(key, width):
    k = jax.random.split(key, 4)
    we1, be1 = _dense(k[0], 3 * width, width)   # edge FNN layer 1 ([v_src, v_dst, e])
    we2, be2 = _dense(k[1], width, width)       # edge FNN layer 2
    wn1, bn1 = _dense(k[2], 2 * width, width)   # node FNN layer 1 ([v, agg])
    wn2, bn2 = _dense(k[3], width, width)       # node FNN layer 2
    return dict(we1=we1, be1=be1, we2=we2, be2=be2, wn1=wn1, bn1=bn1, wn2=wn2, bn2=bn2)


def pack_interaction_stack(layers, width):
    """Pack per-layer InteractionNetwork params into one bf16 weight slab and one f32 bias slab."""
    w_slabs, b_slabs = [], []
    for p in layers:
        we1s, we1d, we1e = p["we1"][:width], p["we1"][width:2 * width], p["we1"][2 * width:]
        wn1v, wn1a = p["wn1"][:width], p["wn1"][width:]
        # column blocks: [we1s | we1d | we1e | we2 | wn1v | wn1a | wn2]  -> (W, 7W)
        w_slabs.append(jnp.concatenate([we1s, we1d, we1e, p["we2"], wn1v, wn1a, p["wn2"]],
                                       axis=1))
        b_slabs.append(jnp.stack([p["be1"], p["be2"], p["bn1"], p["bn2"]]))   # (4, W)
    return (jnp.stack(w_slabs).astype(jnp.bfloat16),     # (L, W, 7W)
            jnp.stack(b_slabs).astype(jnp.float32))      # (L, 4, W)


def init_resampling_params(key, width):
    k = jax.random.split(key, 6)
    wp1, bp1 = _dense(k[0], width + 1, width)   # pooling FNN layer 1 ([v, rel_pos])
    wp2, bp2 = _dense(k[1], width, width)
    pe1, peb1 = _dense(k[2], 1, width)          # coarse-edge encoder (scalar rel. pos.)
    pe2, peb2 = _dense(k[3], width, width)
    wu1, bu1 = _dense(k[4], width + 1, width)   # unpooling FNN layer 1 ([parent_v, rel_pos])
    wu2, bu2 = _dense(k[5], width, width)
    raw = dict(wp1=wp1, bp1=bp1, wp2=wp2, bp2=bp2, pe1=pe1, peb1=peb1,
               pe2=pe2, peb2=peb2, wu1=wu1, bu1=bu1, wu2=wu2, bu2=bu2)
    resamp_w = jnp.stack([wp1[:width], wp2, pe2, wu1[:width], wu2]).astype(jnp.bfloat16)
    resamp_b = jnp.stack([wp1[width], bp1, bp2, pe1[0], peb1, peb2,
                          wu1[width], bu1, bu2]).astype(jnp.float32)          # (9, W)
    return raw, resamp_w, resamp_b


def build_graph_operands(src, dst, num_nodes, width):
    gsrc = jax.nn.one_hot(src, num_nodes, dtype=jnp.float32)
    gdst = jax.nn.one_hot(dst, num_nodes, dtype=jnp.float32)
    g2 = jnp.concatenate([gsrc, gdst], axis=1).astype(jnp.bfloat16)   # (E, 2N) fused gather
    sct = gdst.T.astype(jnp.bfloat16)                                 # (N, E) sum scatter
    deg = gdst.sum(axis=0)
    invdeg = jnp.broadcast_to((1.0 / jnp.maximum(deg, 1.0))[:, None],
                              (num_nodes, width)).astype(jnp.float32)  # pre-broadcast
    return g2, sct, invdeg


def build_pool_operands(cluster, num_coarse, width):
    oh = jax.nn.one_hot(cluster, num_coarse, dtype=jnp.float32)       # (Nf, Nc)
    cnt = oh.sum(axis=0)
    poolsct = oh.T.astype(jnp.bfloat16)                               # (Nc, Nf) sum scatter
    unpool = oh.astype(jnp.bfloat16)                                  # (Nf, Nc) parent gather
    invcnt = jnp.broadcast_to((1.0 / jnp.maximum(cnt, 1.0))[:, None],
                              (num_coarse, width)).astype(jnp.float32)
    return poolsct, unpool, invcnt


# --------------------------------------------------------------------------------------
# Pure-JAX f32 reference (same GNS-style semantics) for a tolerance check
# --------------------------------------------------------------------------------------
def _reference_forward(v, e, src_f, dst_f, src_c, dst_c, cluster, num_coarse,
                       relpos, ceattr, fine_layers, coarse_layers, rp, depths):
    def interaction(v, e, src, dst, p):
        n = v.shape[0]
        edge_in = jnp.concatenate([v[src], v[dst], e], axis=1)
        h = _selu(edge_in @ p["we1"] + p["be1"])
        e_new = e + h @ p["we2"] + p["be2"]
        agg = jax.ops.segment_sum(e_new, dst, num_segments=n)
        deg = jax.ops.segment_sum(jnp.ones((e.shape[0],), jnp.float32), dst, num_segments=n)
        agg = agg / jnp.maximum(deg, 1.0)[:, None]
        h2 = _selu(jnp.concatenate([v, agg], axis=1) @ p["wn1"] + p["bn1"])
        v_new = v + h2 @ p["wn2"] + p["bn2"]
        return v_new, e_new

    down_depth = depths[0]
    for l in range(down_depth):
        v, e = interaction(v, e, src_f, dst_f, fine_layers[l])
    v_skip, e_skip = v, e
    hp = _selu(jnp.concatenate([v, relpos], axis=1) @ rp["wp1"] + rp["bp1"])
    m = hp @ rp["wp2"] + rp["bp2"]
    cnt = jax.ops.segment_sum(jnp.ones((v.shape[0],), jnp.float32), cluster,
                              num_segments=num_coarse)
    v_c = jax.ops.segment_sum(m, cluster, num_segments=num_coarse) / jnp.maximum(cnt, 1.0)[:, None]
    he = _selu(ceattr @ rp["pe1"] + rp["peb1"])
    e_c = he @ rp["pe2"] + rp["peb2"]
    for p in coarse_layers:
        v_c, e_c = interaction(v_c, e_c, src_c, dst_c, p)
    g = v_c[cluster]
    hu = _selu(jnp.concatenate([g, relpos], axis=1) @ rp["wu1"] + rp["bu1"])
    v = v_skip + hu @ rp["wu2"] + rp["bu2"]
    e = e_skip
    for l in range(down_depth, 2 * down_depth):
        v, e = interaction(v, e, src_f, dst_f, fine_layers[l])
    return v, e


if __name__ == "__main__":
    key = jax.random.PRNGKey(0)
    W = 128            # fnns_width: keeps every vreg / store lane-dense
    depths = [2, 2]    # 1 down block (depth 2), bottleneck (depth 2), 1 up block (depth 2)
    Nf, Ef = 64, 128   # fine graph: nodes / edges
    Nc, Ec = 16, 32    # coarse graph: nodes / edges

    ks = jax.random.split(key, 10)
    v0 = jax.random.normal(ks[0], (Nf, W), jnp.float32)
    e0 = jax.random.normal(ks[1], (Ef, W), jnp.float32)
    src_f = jax.random.randint(ks[2], (Ef,), 0, Nf)
    dst_f = jax.random.randint(ks[3], (Ef,), 0, Nf)
    src_c = jax.random.randint(ks[4], (Ec,), 0, Nc)
    dst_c = jax.random.randint(ks[5], (Ec,), 0, Nc)
    cluster = jnp.arange(Nf) // (Nf // Nc)                          # fine -> coarse parent
    relpos = jax.random.normal(ks[6], (Nf, 1), jnp.float32)         # scalar_rel_pos=True
    ceattr = jax.random.normal(ks[7], (Ec, 1), jnp.float32)         # scalar coarse edge attr

    n_fine = 2 * depths[0]                                          # down + up fine layers
    pkeys = jax.random.split(ks[8], n_fine + depths[1] + 1)
    fine_layers = [init_interaction_params(pkeys[i], W) for i in range(n_fine)]
    coarse_layers = [init_interaction_params(pkeys[n_fine + i], W) for i in range(depths[1])]
    resamp_raw, resamp_w, resamp_b = init_resampling_params(pkeys[-1], W)

    fine_w, fine_b = pack_interaction_stack(fine_layers, W)
    coarse_w, coarse_b = pack_interaction_stack(coarse_layers, W)

    g2_f, sct_f, invdeg_f = build_graph_operands(src_f, dst_f, Nf, W)
    g2_c, sct_c, invdeg_c = build_graph_operands(src_c, dst_c, Nc, W)
    poolsct, unpool, invcnt = build_pool_operands(cluster, Nc, W)

    # one f32 slab: invdeg_f | invdeg_c | invcnt | relpos | ceattr (all pre-broadcast to W)
    aux = jnp.concatenate([invdeg_f, invdeg_c, invcnt,
                           jnp.broadcast_to(relpos, (Nf, W)),
                           jnp.broadcast_to(ceattr, (Ec, W))], axis=0).astype(jnp.float32)

    operands = (v0, e0, g2_f, sct_f, g2_c, sct_c, poolsct, unpool, aux,
                fine_w, fine_b, coarse_w, coarse_b, resamp_w, resamp_b)

    v_out, e_out = multi_scale_gnn_forward(operands)
    jax.block_until_ready((v_out, e_out))
    assert v_out.shape == (Nf, W) and e_out.shape == (Ef, W)
    assert bool(jnp.all(jnp.isfinite(v_out))) and bool(jnp.all(jnp.isfinite(e_out)))

    # Tolerance check vs. a pure-f32 reference (kernel uses bf16 MXU inputs + f32 accumulation).
    v_ref, e_ref = _reference_forward(v0, e0, src_f, dst_f, src_c, dst_c, cluster, Nc,
                                      relpos, ceattr, fine_layers, coarse_layers,
                                      resamp_raw, depths)
    v_err = float(jnp.max(jnp.abs(v_out - v_ref)) / (jnp.max(jnp.abs(v_ref)) + 1e-6))
    e_err = float(jnp.max(jnp.abs(e_out - e_ref)) / (jnp.max(jnp.abs(e_ref)) + 1e-6))
    assert v_err < 0.1 and e_err < 0.1, (v_err, e_err)
    print("KERNEL_OK")
</pallas_src>

<mosaic_0001>
module attributes {stable_mosaic.version = 11 : i64} {
  func.func @_fused_kernel(%arg0: memref<64x128xf32, #tpu.memory_space<vmem>>, %arg1: memref<128x128xf32, #tpu.memory_space<vmem>>, %arg2: memref<128x128xbf16, #tpu.memory_space<vmem>>, %arg3: memref<64x128xbf16, #tpu.memory_space<vmem>>, %arg4: memref<32x32xbf16, #tpu.memory_space<vmem>>, %arg5: memref<16x32xbf16, #tpu.memory_space<vmem>>, %arg6: memref<16x64xbf16, #tpu.memory_space<vmem>>, %arg7: memref<64x16xbf16, #tpu.memory_space<vmem>>, %arg8: memref<192x128xf32, #tpu.memory_space<vmem>>, %arg9: memref<4x128x896xbf16, #tpu.memory_space<vmem>>, %arg10: memref<4x4x128xf32, #tpu.memory_space<vmem>>, %arg11: memref<2x128x896xbf16, #tpu.memory_space<vmem>>, %arg12: memref<2x4x128xf32, #tpu.memory_space<vmem>>, %arg13: memref<5x128x128xbf16, #tpu.memory_space<vmem>>, %arg14: memref<9x128xf32, #tpu.memory_space<vmem>>, %arg15: memref<64x128xf32, #tpu.memory_space<vmem>>, %arg16: memref<128x128xf32, #tpu.memory_space<vmem>>, %arg17: memref<64x128xf32, #tpu.memory_space<vmem>>, %arg18: memref<128x128xf32, #tpu.memory_space<vmem>>) attributes {dimension_semantics = [], scalar_prefetch = 0 : i64, scratch_operands = 2 : i64, tpu.core_type = #tpu.core_type<tc>} {
    %c0 = arith.constant 0 : index
    %c0_0 = arith.constant 0 : index
    %0 = vector.load %arg2[%c0, %c0_0] : memref<128x128xbf16, #tpu.memory_space<vmem>>, vector<128x128xbf16>
    %c0_1 = arith.constant 0 : index
    %c0_2 = arith.constant 0 : index
    %1 = vector.load %arg3[%c0_1, %c0_2] : memref<64x128xbf16, #tpu.memory_space<vmem>>, vector<64x128xbf16>
    %c0_3 = arith.constant 0 : index
    %c0_4 = arith.constant 0 : index
    %2 = vector.load %arg4[%c0_3, %c0_4] : memref<32x32xbf16, #tpu.memory_space<vmem>>, vector<32x32xbf16>
    %c0_5 = arith.constant 0 : index
    %c0_6 = arith.constant 0 : index
    %3 = vector.load %arg5[%c0_5, %c0_6] : memref<16x32xbf16, #tpu.memory_space<vmem>>, vector<16x32xbf16>
    %c0_7 = arith.constant 0 : index
    %c0_8 = arith.constant 0 : index
    %4 = vector.load %arg8[%c0_7, %c0_8] : memref<192x128xf32, #tpu.memory_space<vmem>>, vector<64x128xf32>
    %c64 = arith.constant 64 : index
    %c0_9 = arith.constant 0 : index
    %5 = vector.load %arg8[%c64, %c0_9] : memref<192x128xf32, #tpu.memory_space<vmem>>, vector<16x128xf32>
    %c80 = arith.constant 80 : index
    %c0_10 = arith.constant 0 : index
    %6 = vector.load %arg8[%c80, %c0_10] : memref<192x128xf32, #tpu.memory_space<vmem>>, vector<16x128xf32>
    %c96 = arith.constant 96 : index
    %c0_11 = arith.constant 0 : index
    %7 = vector.load %arg8[%c96, %c0_11] : memref<192x128xf32, #tpu.memory_space<vmem>>, vector<64x128xf32>
    %c160 = arith.constant 160 : index
    %c0_12 = arith.constant 0 : index
    %8 = vector.load %arg8[%c160, %c0_12] : memref<192x128xf32, #tpu.memory_space<vmem>>, vector<32x128xf32>
    %c0_13 = arith.constant 0 : index
    %c0_14 = arith.constant 0 : index
    %9 = vector.load %arg0[%c0_13, %c0_14] : memref<64x128xf32, #tpu.memory_space<vmem>>, vector<64x128xf32>
    %c0_15 = arith.constant 0 : index
    %c0_16 = arith.constant 0 : index
    %10 = vector.load %arg1[%c0_15, %c0_16] : memref<128x128xf32, #tpu.memory_space<vmem>>, vector<128x128xf32>
    %11 = arith.truncf %9 : vector<64x128xf32> to vector<64x128xbf16>
    %12 = arith.truncf %10 : vector<128x128xf32> to vector<128x128xbf16>
    %c0_17 = arith.constant 0 : index
    %c0_18 = arith.constant 0 : index
    %c0_19 = arith.constant 0 : index
    %13 = vector.load %arg10[%c0_17, %c0_18, %c0_19] : memref<4x4x128xf32, #tpu.memory_space<vmem>>, vector<1x4x128xf32>
    %14 = vector.shape_cast %13 : vector<1x4x128xf32> to vector<4x128xf32>
    %c0_20 = arith.constant 0 : index
    %c0_21 = arith.constant 0 : index
    %c0_22 = arith.constant 0 : index
    %15 = vector.load %arg9[%c0_20, %c0_21, %c0_22] : memref<4x128x896xbf16, #tpu.memory_space<vmem>>, vector<1x128x256xbf16>
    %16 = vector.shape_cast %15 : vector<1x128x256xbf16> to vector<128x256xbf16>
    %cst = arith.constant dense<0.000000e+00> : vector<64x256xf32>
    %17 = tpu.matmul %11, %16, %cst {dimension_numbers = #tpu.dot_dimension_numbers<[1], [0], [0], [1], [0, 0, 1, 1], [], []>} : vector<64x128xbf16>, vector<128x256xbf16>, vector<64x256xf32> -> vector<64x256xf32>
    %18 = arith.truncf %17 : vector<64x256xf32> to vector<64x256xbf16>
    %19 = vector.extract_strided_slice %18 {offsets = [0, 0], sizes = [64, 128], strides = [1, 1]} : vector<64x256xbf16> to vector<64x128xbf16>
    %20 = vector.extract_strided_slice %18 {offsets = [0, 128], sizes = [64, 128], strides = [1, 1]} : vector<64x256xbf16> to vector<64x128xbf16>
    %21 = tpu.concatenate %19, %20 in 0 : vector<64x128xbf16>, vector<64x128xbf16> -> vector<128x128xbf16>
    %cst_23 = arith.constant dense<0.000000e+00> : vector<128x128xf32>
    %22 = tpu.matmul %0, %21, %cst_23 {dimension_numbers = #tpu.dot_dimension_numbers<[1], [0], [0], [1], [0, 0, 1, 1], [], []>} : vector<128x128xbf16>, vector<128x128xbf16>, vector<128x128xf32> -> vector<128x128xf32>
    %c0_24 = arith.constant 0 : index
    %c0_25 = arith.constant 0 : index
    %c256 = arith.constant 256 : index
    %23 = vector.load %arg9[%c0_24, %c0_25, %c256] : memref<4x128x896xbf16, #tpu.memory_space<vmem>>, vector<1x128x128xbf16>
    %24 = vector.shape_cast %23 : vector<1x128x128xbf16> to vector<128x128xbf16>
    %cst_26 = arith.constant dense<0.000000e+00> : vector<128x128xf32>
    %25 = tpu.matmul %12, %24, %cst_26 {dimension_numbers = #tpu.dot_dimension_numbers<[1], [0], [0], [1], [0, 0, 1, 1], [], []>} : vector<128x128xbf16>, vector<128x128xbf16>, vector<128x128xf32> -> vector<128x128xf32>
    %26 = arith.addf %22, %25 : vector<128x128xf32>
    %27 = vector.extract_strided_slice %14 {offsets = [0, 0], sizes = [1, 128], strides = [1, 1]} : vector<4x128xf32> to vector<1x128xf32>
    %28 = vector.broadcast %27 : vector<1x128xf32> to vector<128x128xf32>
    %29 = arith.addf %26, %28 : vector<128x128xf32>
    %cst_27 = arith.constant 0.000000e+00 : f32
    %30 = vector.broadcast %cst_27 : f32 to vector<128x128xf32>
    %31 = arith.cmpf ogt, %29, %30 : vector<128x128xf32>
    %32 = math.exp %29 : vector<128x128xf32>
    %cst_28 = arith.constant 1.000000e+00 : f32
    %33 = vector.broadcast %cst_28 : f32 to vector<128x128xf32>
    %34 = arith.subf %32, %33 : vector<128x128xf32>
    %cst_29 = arith.constant 1.67326319 : f32
    %35 = vector.broadcast %cst_29 : f32 to vector<128x128xf32>
    %36 = arith.mulf %35, %34 : vector<128x128xf32>
    %37 = arith.select %31, %29, %36 : vector<128x128xi1>, vector<128x128xf32>
    %cst_30 = arith.constant 1.05070102 : f32
    %38 = vector.broadcast %cst_30 : f32 to vector<128x128xf32>
    %39 = arith.mulf %38, %37 : vector<128x128xf32>
    %40 = arith.truncf %39 : vector<128x128xf32> to vector<128x128xbf16>
    %c0_31 = arith.constant 0 : index
    %c0_32 = arith.constant 0 : index
    %c384 = arith.constant 384 : index
    %41 = vector.load %arg9[%c0_31, %c0_32, %c384] : memref<4x128x896xbf16, #tpu.memory_space<vmem>>, vector<1x128x128xbf16>
    %42 = vector.shape_cast %41 : vector<1x128x128xbf16> to vector<128x128xbf16>
    %cst_33 = arith.constant dense<0.000000e+00> : vector<128x128xf32>
    %43 = tpu.matmul %40, %42, %cst_33 {dimension_numbers = #tpu.dot_dimension_numbers<[1], [0], [0], [1], [0, 0, 1, 1], [], []>} : vector<128x128xbf16>, vector<128x128xbf16>, vector<128x128xf32> -> vector<128x128xf32>
    %44 = arith.addf %10, %43 : vector<128x128xf32>
    %45 = vector.extract_strided_slice %14 {offsets = [1, 0], sizes = [1, 128], strides = [1, 1]} : vector<4x128xf32> to vector<1x128xf32>
    %46 = vector.broadcast %45 : vector<1x128xf32> to vector<128x128xf32>
    %47 = arith.addf %44, %46 : vector<128x128xf32>
    %48 = arith.truncf %47 : vector<128x128xf32> to vector<128x128xbf16>
    %cst_34 = arith.constant dense<0.000000e+00> : vector<64x128xf32>
    %49 = tpu.matmul %1, %48, %cst_34 {dimension_numbers = #tpu.dot_dimension_numbers<[1], [0], [0], [1], [0, 0, 1, 1], [], []>} : vector<64x128xbf16>, vector<128x128xbf16>, vector<64x128xf32> -> vector<64x128xf32>
    %50 = arith.mulf %49, %4 : vector<64x128xf32>
    %c0_35 = arith.constant 0 : index
    %c0_36 = arith.constant 0 : index
    %c512 = arith.constant 512 : index
    %51 = vector.load %arg9[%c0_35, %c0_36, %c512] : memref<4x128x896xbf16, #tpu.memory_space<vmem>>, vector<1x128x128xbf16>
    %52 = vector.shape_cast %51 : vector<1x128x128xbf16> to vector<128x128xbf16>
    %cst_37 = arith.constant dense<0.000000e+00> : vector<64x128xf32>
    %53 = tpu.matmul %11, %52, %cst_37 {dimension_numbers = #tpu.dot_dimension_numbers<[1], [0], [0], [1], [0, 0, 1, 1], [], []>} : vector<64x128xbf16>, vector<128x128xbf16>, vector<64x128xf32> -> vector<64x128xf32>
    %54 = arith.truncf %50 : vector<64x128xf32> to vector<64x128xbf16>
    %c0_38 = arith.constant 0 : index
    %c0_39 = arith.constant 0 : index
    %c640 = arith.constant 640 : index
    %55 = vector.load %arg9[%c0_38, %c0_39, %c640] : memref<4x128x896xbf16, #tpu.memory_space<vmem>>, vector<1x128x128xbf16>
    %56 = vector.shape_cast %55 : vector<1x128x128xbf16> to vector<128x128xbf16>
    %cst_40 = arith.constant dense<0.000000e+00> : vector<64x128xf32>
    %57 = tpu.matmul %54, %56, %cst_40 {dimension_numbers = #tpu.dot_dimension_numbers<[1], [0], [0], [1], [0, 0, 1, 1], [], []>} : vector<64x128xbf16>, vector<128x128xbf16>, vector<64x128xf32> -> vector<64x128xf32>
    %58 = arith.addf %53, %57 : vector<64x128xf32>
    %59 = vector.extract_strided_slice %14 {offsets = [2, 0], sizes = [1, 128], strides = [1, 1]} : vector<4x128xf32> to vector<1x128xf32>
    %60 = vector.broadcast %59 : vector<1x128xf32> to vector<64x128xf32>
    %61 = arith.addf %58, %60 : vector<64x128xf32>
    %cst_41 = arith.constant 0.000000e+00 : f32
    %62 = vector.broadcast %cst_41 : f32 to vector<64x128xf32>
    %63 = arith.cmpf ogt, %61, %62 : vector<64x128xf32>
    %64 = math.exp %61 : vector<64x128xf32>
    %cst_42 = arith.constant 1.000000e+00 : f32
    %65 = vector.broadcast %cst_42 : f32 to vector<64x128xf32>
    %66 = arith.subf %64, %65 : vector<64x128xf32>
    %cst_43 = arith.constant 1.67326319 : f32
    %67 = vector.broadcast %cst_43 : f32 to vector<64x128xf32>
    %68 = arith.mulf %67, %66 : vector<64x128xf32>
    %69 = arith.select %63, %61, %68 : vector<64x128xi1>, vector<64x128xf32>
    %cst_44 = arith.constant 1.05070102 : f32
    %70 = vector.broadcast %cst_44 : f32 to vector<64x128xf32>
    %71 = arith.mulf %70, %69 : vector<64x128xf32>
    %72 = arith.truncf %71 : vector<64x128xf32> to vector<64x128xbf16>
    %c0_45 = arith.constant 0 : index
    %c0_46 = arith.constant 0 : index
    %c768 = arith.constant 768 : index
    %73 = vector.load %arg9[%c0_45, %c0_46, %c768] : memref<4x128x896xbf16, #tpu.memory_space<vmem>>, vector<1x128x128xbf16>
    %74 = vector.shape_cast %73 : vector<1x128x128xbf16> to vector<128x128xbf16>
    %cst_47 = arith.constant dense<0.000000e+00> : vector<64x128xf32>
    %75 = tpu.matmul %72, %74, %cst_47 {dimension_numbers = #tpu.dot_dimension_numbers<[1], [0], [0], [1], [0, 0, 1, 1], [], []>} : vector<64x128xbf16>, vector<128x128xbf16>, vector<64x128xf32> -> vector<64x128xf32>
    %76 = arith.addf %9, %75 : vector<64x128xf32>
    %77 = vector.extract_strided_slice %14 {offsets = [3, 0], sizes = [1, 128], strides = [1, 1]} : vector<4x128xf32> to vector<1x128xf32>
    %78 = vector.broadcast %77 : vector<1x128xf32> to vector<64x128xf32>
    %79 = arith.addf %76, %78 : vector<64x128xf32>
    %80 = arith.truncf %79 : vector<64x128xf32> to vector<64x128xbf16>
    %81 = arith.truncf %47 : vector<128x128xf32> to vector<128x128xbf16>
    %c1 = arith.constant 1 : index
    %c0_48 = arith.constant 0 : index
    %c0_49 = arith.constant 0 : index
    %82 = vector.load %arg10[%c1, %c0_48, %c0_49] : memref<4x4x128xf32, #tpu.memory_space<vmem>>, vector<1x4x128xf32>
    %83 = vector.shape_cast %82 : vector<1x4x128xf32> to vector<4x128xf32>
    %c1_50 = arith.constant 1 : index
    %c0_51 = arith.constant 0 : index
    %c0_52 = arith.constant 0 : index
    %84 = vector.load %arg9[%c1_50, %c0_51, %c0_52] : memref<4x128x896xbf16, #tpu.memory_space<vmem>>, vector<1x128x256xbf16>
    %85 = vector.shape_cast %84 : vector<1x128x256xbf16> to vector<128x256xbf16>
    %cst_53 = arith.constant dense<0.000000e+00> : vector<64x256xf32>
    %86 = tpu.matmul %80, %85, %cst_53 {dimension_numbers = #tpu.dot_dimension_numbers<[1], [0], [0], [1], [0, 0, 1, 1], [], []>} : vector<64x128xbf16>, vector<128x256xbf16>, vector<64x256xf32> -> vector<64x256xf32>
    %87 = arith.truncf %86 : vector<64x256xf32> to vector<64x256xbf16>
    %88 = vector.extract_strided_slice %87 {offsets = [0, 0], sizes = [64, 128], strides = [1, 1]} : vector<64x256xbf16> to vector<64x128xbf16>
    %89 = vector.extract_strided_slice %87 {offsets = [0, 128], sizes = [64, 128], strides = [1, 1]} : vector<64x256xbf16> to vector<64x128xbf16>
    %90 = tpu.concatenate %88, %89 in 0 : vector<64x128xbf16>, vector<64x128xbf16> -> vector<128x128xbf16>
    %cst_54 = arith.constant dense<0.000000e+00> : vector<128x128xf32>
    %91 = tpu.matmul %0, %90, %cst_54 {dimension_numbers = #tpu.dot_dimension_numbers<[1], [0], [0], [1], [0, 0, 1, 1], [], []>} : vector<128x128xbf16>, vector<128x128xbf16>, vector<128x128xf32> -> vector<128x128xf32>
    %c1_55 = arith.constant 1 : index
    %c0_56 = arith.constant 0 : index
    %c256_57 = arith.constant 256 : index
    %92 = vector.load %arg9[%c1_55, %c0_56, %c256_57] : memref<4x128x896xbf16, #tpu.memory_space<vmem>>, vector<1x128x128xbf16>
    %93 = vector.shape_cast %92 : vector<1x128x128xbf16> to vector<128x128xbf16>
    %cst_58 = arith.constant dense<0.000000e+00> : vector<128x128xf32>
    %94 = tpu.matmul %81, %93, %cst_58 {dimension_numbers = #tpu.dot_dimension_numbers<[1], [0], [0], [1], [0, 0, 1, 1], [], []>} : vector<128x128xbf16>, vector<128x128xbf16>, vector<128x128xf32> -> vector<128x128xf32>
    %95 = arith.addf %91, %94 : vector<128x128xf32>
    %96 = vector.extract_strided_slice %83 {offsets = [0, 0], sizes = [1, 128], strides = [1, 1]} : vector<4x128xf32> to vector<1x128xf32>
    %97 = vector.broadcast %96 : vector<1x128xf32> to vector<128x128xf32>
    %98 = arith.addf %95, %97 : vector<128x128xf32>
    %cst_59 = arith.constant 0.000000e+00 : f32
    %99 = vector.broadcast %cst_59 : f32 to vector<128x128xf32>
    %100 = arith.cmpf ogt, %98, %99 : vector<128x128xf32>
    %101 = math.exp %98 : vector<128x128xf32>
    %cst_60 = arith.constant 1.000000e+00 : f32
    %102 = vector.broadcast %cst_60 : f32 to vector<128x128xf32>
    %103 = arith.subf %101, %102 : vector<128x128xf32>
    %cst_61 = arith.constant 1.67326319 : f32
    %104 = vector.broadcast %cst_61 : f32 to vector<128x128xf32>
    %105 = arith.mulf %104, %103 : vector<128x128xf32>
    %106 = arith.select %100, %98, %105 : vector<128x128xi1>, vector<128x128xf32>
    %cst_62 = arith.constant 1.05070102 : f32
    %107 = vector.broadcast %cst_62 : f32 to vector<128x128xf32>
    %108 = arith.mulf %107, %106 : vector<128x128xf32>
    %109 = arith.truncf %108 : vector<128x128xf32> to vector<128x128xbf16>
    %c1_63 = arith.constant 1 : index
    %c0_64 = arith.constant 0 : index
    %c384_65 = arith.constant 384 : index
    %110 = vector.load %arg9[%c1_63, %c0_64, %c384_65] : memref<4x128x896xbf16, #tpu.memory_space<vmem>>, vector<1x128x128xbf16>
    %111 = vector.shape_cast %110 : vector<1x128x128xbf16> to vector<128x128xbf16>
    %cst_66 = arith.constant dense<0.000000e+00> : vector<128x128xf32>
    %112 = tpu.matmul %109, %111, %cst_66 {dimension_numbers = #tpu.dot_dimension_numbers<[1], [0], [0], [1], [0, 0, 1, 1], [], []>} : vector<128x128xbf16>, vector<128x128xbf16>, vector<128x128xf32> -> vector<128x128xf32>
    %113 = arith.addf %47, %112 : vector<128x128xf32>
    %114 = vector.extract_strided_slice %83 {offsets = [1, 0], sizes = [1, 128], strides = [1, 1]} : vector<4x128xf32> to vector<1x128xf32>
    %115 = vector.broadcast %114 : vector<1x128xf32> to vector<128x128xf32>
    %116 = arith.addf %113, %115 : vector<128x128xf32>
    %117 = arith.truncf %116 : vector<128x128xf32> to vector<128x128xbf16>
    %cst_67 = arith.constant dense<0.000000e+00> : vector<64x128xf32>
    %118 = tpu.matmul %1, %117, %cst_67 {dimension_numbers = #tpu.dot_dimension_numbers<[1], [0], [0], [1], [0, 0, 1, 1], [], []>} : vector<64x128xbf16>, vector<128x128xbf16>, vector<64x128xf32> -> vector<64x128xf32>
    %119 = arith.mulf %118, %4 : vector<64x128xf32>
    %c1_68 = arith.constant 1 : index
    %c0_69 = arith.constant 0 : index
    %c512_70 = arith.constant 512 : index
    %120 = vector.load %arg9[%c1_68, %c0_69, %c512_70] : memref<4x128x896xbf16, #tpu.memory_space<vmem>>, vector<1x128x128xbf16>
    %121 = vector.shape_cast %120 : vector<1x128x128xbf16> to vector<128x128xbf16>
    %cst_71 = arith.constant dense<0.000000e+00> : vector<64x128xf32>
    %122 = tpu.matmul %80, %121, %cst_71 {dimension_numbers = #tpu.dot_dimension_numbers<[1], [0], [0], [1], [0, 0, 1, 1], [], []>} : vector<64x128xbf16>, vector<128x128xbf16>, vector<64x128xf32> -> vector<64x128xf32>
    %123 = arith.truncf %119 : vector<64x128xf32> to vector<64x128xbf16>
    %c1_72 = arith.constant 1 : index
    %c0_73 = arith.constant 0 : index
    %c640_74 = arith.constant 640 : index
    %124 = vector.load %arg9[%c1_72, %c0_73, %c640_74] : memref<4x128x896xbf16, #tpu.memory_space<vmem>>, vector<1x128x128xbf16>
    %125 = vector.shape_cast %124 : vector<1x128x128xbf16> to vector<128x128xbf16>
    %cst_75 = arith.constant dense<0.000000e+00> : vector<64x128xf32>
    %126 = tpu.matmul %123, %125, %cst_75 {dimension_numbers = #tpu.dot_dimension_numbers<[1], [0], [0], [1], [0, 0, 1, 1], [], []>} : vector<64x128xbf16>, vector<128x128xbf16>, vector<64x128xf32> -> vector<64x128xf32>
    %127 = arith.addf %122, %126 : vector<64x128xf32>
    %128 = vector.extract_strided_slice %83 {offsets = [2, 0], sizes = [1, 128], strides = [1, 1]} : vector<4x128xf32> to vector<1x128xf32>
    %129 = vector.broadcast %128 : vector<1x128xf32> to vector<64x128xf32>
    %130 = arith.addf %127, %129 : vector<64x128xf32>
    %cst_76 = arith.constant 0.000000e+00 : f32
    %131 = vector.broadcast %cst_76 : f32 to vector<64x128xf32>
    %132 = arith.cmpf ogt, %130, %131 : vector<64x128xf32>
    %133 = math.exp %130 : vector<64x128xf32>
    %cst_77 = arith.constant 1.000000e+00 : f32
    %134 = vector.broadcast %cst_77 : f32 to vector<64x128xf32>
    %135 = arith.subf %133, %134 : vector<64x128xf32>
    %cst_78 = arith.constant 1.67326319 : f32
    %136 = vector.broadcast %cst_78 : f32 to vector<64x128xf32>
    %137 = arith.mulf %136, %135 : vector<64x128xf32>
    %138 = arith.select %132, %130, %137 : vector<64x128xi1>, vector<64x128xf32>
    %cst_79 = arith.constant 1.05070102 : f32
    %139 = vector.broadcast %cst_79 : f32 to vector<64x128xf32>
    %140 = arith.mulf %139, %138 : vector<64x128xf32>
    %141 = arith.truncf %140 : vector<64x128xf32> to vector<64x128xbf16>
    %c1_80 = arith.constant 1 : index
    %c0_81 = arith.constant 0 : index
    %c768_82 = arith.constant 768 : index
    %142 = vector.load %arg9[%c1_80, %c0_81, %c768_82] : memref<4x128x896xbf16, #tpu.memory_space<vmem>>, vector<1x128x128xbf16>
    %143 = vector.shape_cast %142 : vector<1x128x128xbf16> to vector<128x128xbf16>
    %cst_83 = arith.constant dense<0.000000e+00> : vector<64x128xf32>
    %144 = tpu.matmul %141, %143, %cst_83 {dimension_numbers = #tpu.dot_dimension_numbers<[1], [0], [0], [1], [0, 0, 1, 1], [], []>} : vector<64x128xbf16>, vector<128x128xbf16>, vector<64x128xf32> -> vector<64x128xf32>
    %145 = arith.addf %79, %144 : vector<64x128xf32>
    %146 = vector.extract_strided_slice %83 {offsets = [3, 0], sizes = [1, 128], strides = [1, 1]} : vector<4x128xf32> to vector<1x128xf32>
    %147 = vector.broadcast %146 : vector<1x128xf32> to vector<64x128xf32>
    %148 = arith.addf %145, %147 : vector<64x128xf32>
    %c0_84 = arith.constant 0 : index
    %c0_85 = arith.constant 0 : index
    %149 = vector.load %arg17[%c0_84, %c0_85] : memref<64x128xf32, #tpu.memory_space<vmem>>, vector<64x128xf32>
    tpu.vector_store %arg17[%c0_84, %c0_85], %148 {strides = array<i32>} : memref<64x128xf32, #tpu.memory_space<vmem>>, vector<64x128xf32>,
    %c0_86 = arith.constant 0 : index
    %c0_87 = arith.constant 0 : index
    %150 = vector.load %arg18[%c0_86, %c0_87] : memref<128x128xf32, #tpu.memory_space<vmem>>, vector<128x128xf32>
    tpu.vector_store %arg18[%c0_86, %c0_87], %116 {strides = array<i32>} : memref<128x128xf32, #tpu.memory_space<vmem>>, vector<128x128xf32>,
    %151 = arith.truncf %148 : vector<64x128xf32> to vector<64x128xbf16>
    %c0_88 = arith.constant 0 : index
    %c0_89 = arith.constant 0 : index
    %c0_90 = arith.constant 0 : index
    %152 = vector.load %arg13[%c0_88, %c0_89, %c0_90] : memref<5x128x128xbf16, #tpu.memory_space<vmem>>, vector<1x128x128xbf16>
    %153 = vector.shape_cast %152 : vector<1x128x128xbf16> to vector<128x128xbf16>
    %cst_91 = arith.constant dense<0.000000e+00> : vector<64x128xf32>
    %154 = tpu.matmul %151, %153, %cst_91 {dimension_numbers = #tpu.dot_dimension_numbers<[1], [0], [0], [1], [0, 0, 1, 1], [], []>} : vector<64x128xbf16>, vector<128x128xbf16>, vector<64x128xf32> -> vector<64x128xf32>
    %c0_92 = arith.constant 0 : index
    %c0_93 = arith.constant 0 : index
    %155 = vector.load %arg14[%c0_92, %c0_93] : memref<9x128xf32, #tpu.memory_space<vmem>>, vector<1x128xf32>
    %156 = vector.broadcast %155 : vector<1x128xf32> to vector<64x128xf32>
    %157 = arith.mulf %7, %156 : vector<64x128xf32>
    %158 = arith.addf %154, %157 : vector<64x128xf32>
    %c1_94 = arith.constant 1 : index
    %c0_95 = arith.constant 0 : index
    %159 = vector.load %arg14[%c1_94, %c0_95] : memref<9x128xf32, #tpu.memory_space<vmem>>, vector<1x128xf32>
    %160 = vector.broadcast %159 : vector<1x128xf32> to vector<64x128xf32>
    %161 = arith.addf %158, %160 : vector<64x128xf32>
    %cst_96 = arith.constant 0.000000e+00 : f32
    %162 = vector.broadcast %cst_96 : f32 to vector<64x128xf32>
    %163 = arith.cmpf ogt, %161, %162 : vector<64x128xf32>
    %164 = math.exp %161 : vector<64x128xf32>
    %cst_97 = arith.constant 1.000000e+00 : f32
    %165 = vector.broadcast %cst_97 : f32 to vector<64x128xf32>
    %166 = arith.subf %164, %165 : vector<64x128xf32>
    %cst_98 = arith.constant 1.67326319 : f32
    %167 = vector.broadcast %cst_98 : f32 to vector<64x128xf32>
    %168 = arith.mulf %167, %166 : vector<64x128xf32>
    %169 = arith.select %163, %161, %168 : vector<64x128xi1>, vector<64x128xf32>
    %cst_99 = arith.constant 1.05070102 : f32
    %170 = vector.broadcast %cst_99 : f32 to vector<64x128xf32>
    %171 = arith.mulf %170, %169 : vector<64x128xf32>
    %172 = arith.truncf %171 : vector<64x128xf32> to vector<64x128xbf16>
    %c1_100 = arith.constant 1 : index
    %c0_101 = arith.constant 0 : index
    %c0_102 = arith.constant 0 : index
    %173 = vector.load %arg13[%c1_100, %c0_101, %c0_102] : memref<5x128x128xbf16, #tpu.memory_space<vmem>>, vector<1x128x128xbf16>
    %174 = vector.shape_cast %173 : vector<1x128x128xbf16> to vector<128x128xbf16>
    %cst_103 = arith.constant dense<0.000000e+00> : vector<64x128xf32>
    %175 = tpu.matmul %172, %174, %cst_103 {dimension_numbers = #tpu.dot_dimension_numbers<[1], [0], [0], [1], [0, 0, 1, 1], [], []>} : vector<64x128xbf16>, vector<128x128xbf16>, vector<64x128xf32> -> vector<64x128xf32>
    %c2 = arith.constant 2 : index
    %c0_104 = arith.constant 0 : index
    %176 = vector.load %arg14[%c2, %c0_104] : memref<9x128xf32, #tpu.memory_space<vmem>>, vector<1x128xf32>
    %177 = vector.broadcast %176 : vector<1x128xf32> to vector<64x128xf32>
    %178 = arith.addf %175, %177 : vector<64x128xf32>
    %c0_105 = arith.constant 0 : index
    %c0_106 = arith.constant 0 : index
    %179 = vector.load %arg6[%c0_105, %c0_106] : memref<16x64xbf16, #tpu.memory_space<vmem>>, vector<16x64xbf16>
    %180 = arith.truncf %178 : vector<64x128xf32> to vector<64x128xbf16>
    %cst_107 = arith.constant dense<0.000000e+00> : vector<16x128xf32>
    %181 = tpu.matmul %179, %180, %cst_107 {dimension_numbers = #tpu.dot_dimension_numbers<[1], [0], [0], [1], [0, 0, 1, 1], [], []>} : vector<16x64xbf16>, vector<64x128xbf16>, vector<16x128xf32> -> vector<16x128xf32>
    %182 = arith.mulf %181, %6 : vector<16x128xf32>
    %c3 = arith.constant 3 : index
    %c0_108 = arith.constant 0 : index
    %183 = vector.load %arg14[%c3, %c0_108] : memref<9x128xf32, #tpu.memory_space<vmem>>, vector<1x128xf32>
    %184 = vector.broadcast %183 : vector<1x128xf32> to vector<32x128xf32>
    %185 = arith.mulf %8, %184 : vector<32x128xf32>
    %c4 = arith.constant 4 : index
    %c0_109 = arith.constant 0 : index
    %186 = vector.load %arg14[%c4, %c0_109] : memref<9x128xf32, #tpu.memory_space<vmem>>, vector<1x128xf32>
    %187 = vector.broadcast %186 : vector<1x128xf32> to vector<32x128xf32>
    %188 = arith.addf %185, %187 : vector<32x128xf32>
    %cst_110 = arith.constant 0.000000e+00 : f32
    %189 = vector.broadcast %cst_110 : f32 to vector<32x128xf32>
    %190 = arith.cmpf ogt, %188, %189 : vector<32x128xf32>
    %191 = math.exp %188 : vector<32x128xf32>
    %cst_111 = arith.constant 1.000000e+00 : f32
    %192 = vector.broadcast %cst_111 : f32 to vector<32x128xf32>
    %193 = arith.subf %191, %192 : vector<32x128xf32>
    %cst_112 = arith.constant 1.67326319 : f32
    %194 = vector.broadcast %cst_112 : f32 to vector<32x128xf32>
    %195 = arith.mulf %194, %193 : vector<32x128xf32>
    %196 = arith.select %190, %188, %195 : vector<32x128xi1>, vector<32x128xf32>
    %cst_113 = arith.constant 1.05070102 : f32
    %197 = vector.broadcast %cst_113 : f32 to vector<32x128xf32>
    %198 = arith.mulf %197, %196 : vector<32x128xf32>
    %199 = arith.truncf %198 : vector<32x128xf32> to vector<32x128xbf16>
    %c2_114 = arith.constant 2 : index
    %c0_115 = arith.constant 0 : index
    %c0_116 = arith.constant 0 : index
    %200 = vector.load %arg13[%c2_114, %c0_115, %c0_116] : memref<5x128x128xbf16, #tpu.memory_space<vmem>>, vector<1x128x128xbf16>
    %201 = vector.shape_cast %200 : vector<1x128x128xbf16> to vector<128x128xbf16>
    %cst_117 = arith.constant dense<0.000000e+00> : vector<32x128xf32>
    %202 = tpu.matmul %199, %201, %cst_117 {dimension_numbers = #tpu.dot_dimension_numbers<[1], [0], [0], [1], [0, 0, 1, 1], [], []>} : vector<32x128xbf16>, vector<128x128xbf16>, vector<32x128xf32> -> vector<32x128xf32>
    %c5 = arith.constant 5 : index
    %c0_118 = arith.constant 0 : index
    %203 = vector.load %arg14[%c5, %c0_118] : memref<9x128xf32, #tpu.memory_space<vmem>>, vector<1x128xf32>
    %204 = vector.broadcast %203 : vector<1x128xf32> to vector<32x128xf32>
    %205 = arith.addf %202, %204 : vector<32x128xf32>
    %206 = arith.truncf %182 : vector<16x128xf32> to vector<16x128xbf16>
    %207 = arith.truncf %205 : vector<32x128xf32> to vector<32x128xbf16>
    %c0_119 = arith.constant 0 : index
    %c0_120 = arith.constant 0 : index
    %c0_121 = arith.constant 0 : index
    %208 = vector.load %arg12[%c0_119, %c0_120, %c0_121] : memref<2x4x128xf32, #tpu.memory_space<vmem>>, vector<1x4x128xf32>
    %209 = vector.shape_cast %208 : vector<1x4x128xf32> to vector<4x128xf32>
    %c0_122 = arith.constant 0 : index
    %c0_123 = arith.constant 0 : index
    %c0_124 = arith.constant 0 : index
    %210 = vector.load %arg11[%c0_122, %c0_123, %c0_124] : memref<2x128x896xbf16, #tpu.memory_space<vmem>>, vector<1x128x256xbf16>
    %211 = vector.shape_cast %210 : vector<1x128x256xbf16> to vector<128x256xbf16>
    %cst_125 = arith.constant dense<0.000000e+00> : vector<16x256xf32>
    %212 = tpu.matmul %206, %211, %cst_125 {dimension_numbers = #tpu.dot_dimension_numbers<[1], [0], [0], [1], [0, 0, 1, 1], [], []>} : vector<16x128xbf16>, vector<128x256xbf16>, vector<16x256xf32> -> vector<16x256xf32>
    %213 = arith.truncf %212 : vector<16x256xf32> to vector<16x256xbf16>
    %214 = vector.extract_strided_slice %213 {offsets = [0, 0], sizes = [16, 128], strides = [1, 1]} : vector<16x256xbf16> to vector<16x128xbf16>
    %215 = vector.extract_strided_slice %213 {offsets = [0, 128], sizes = [16, 128], strides = [1, 1]} : vector<16x256xbf16> to vector<16x128xbf16>
    %216 = tpu.concatenate %214, %215 in 0 : vector<16x128xbf16>, vector<16x128xbf16> -> vector<32x128xbf16>
    %cst_126 = arith.constant dense<0.000000e+00> : vector<32x128xf32>
    %217 = tpu.matmul %2, %216, %cst_126 {dimension_numbers = #tpu.dot_dimension_numbers<[1], [0], [0], [1], [0, 0, 1, 1], [], []>} : vector<32x32xbf16>, vector<32x128xbf16>, vector<32x128xf32> -> vector<32x128xf32>
    %c0_127 = arith.constant 0 : index
    %c0_128 = arith.constant 0 : index
    %c256_129 = arith.constant 256 : index
    %218 = vector.load %arg11[%c0_127, %c0_128, %c256_129] : memref<2x128x896xbf16, #tpu.memory_space<vmem>>, vector<1x128x128xbf16>
    %219 = vector.shape_cast %218 : vector<1x128x128xbf16> to vector<128x128xbf16>
    %cst_130 = arith.constant dense<0.000000e+00> : vector<32x128xf32>
    %220 = tpu.matmul %207, %219, %cst_130 {dimension_numbers = #tpu.dot_dimension_numbers<[1], [0], [0], [1], [0, 0, 1, 1], [], []>} : vector<32x128xbf16>, vector<128x128xbf16>, vector<32x128xf32> -> vector<32x128xf32>
    %221 = arith.addf %217, %220 : vector<32x128xf32>
    %222 = vector.extract_strided_slice %209 {offsets = [0, 0], sizes = [1, 128], strides = [1, 1]} : vector<4x128xf32> to vector<1x128xf32>
    %223 = vector.broadcast %222 : vector<1x128xf32> to vector<32x128xf32>
    %224 = arith.addf %221, %223 : vector<32x128xf32>
    %cst_131 = arith.constant 0.000000e+00 : f32
    %225 = vector.broadcast %cst_131 : f32 to vector<32x128xf32>
    %226 = arith.cmpf ogt, %224, %225 : vector<32x128xf32>
    %227 = math.exp %224 : vector<32x128xf32>
    %cst_132 = arith.constant 1.000000e+00 : f32
    %228 = vector.broadcast %cst_132 : f32 to vector<32x128xf32>
    %229 = arith.subf %227, %228 : vector<32x128xf32>
    %cst_133 = arith.constant 1.67326319 : f32
    %230 = vector.broadcast %cst_133 : f32 to vector<32x128xf32>
    %231 = arith.mulf %230, %229 : vector<32x128xf32>
    %232 = arith.select %226, %224, %231 : vector<32x128xi1>, vector<32x128xf32>
    %cst_134 = arith.constant 1.05070102 : f32
    %233 = vector.broadcast %cst_134 : f32 to vector<32x128xf32>
    %234 = arith.mulf %233, %232 : vector<32x128xf32>
    %235 = arith.truncf %234 : vector<32x128xf32> to vector<32x128xbf16>
    %c0_135 = arith.constant 0 : index
    %c0_136 = arith.constant 0 : index
    %c384_137 = arith.constant 384 : index
    %236 = vector.load %arg11[%c0_135, %c0_136, %c384_137] : memref<2x128x896xbf16, #tpu.memory_space<vmem>>, vector<1x128x128xbf16>
    %237 = vector.shape_cast %236 : vector<1x128x128xbf16> to vector<128x128xbf16>
    %cst_138 = arith.constant dense<0.000000e+00> : vector<32x128xf32>
    %238 = tpu.matmul %235, %237, %cst_138 {dimension_numbers = #tpu.dot_dimension_numbers<[1], [0], [0], [1], [0, 0, 1, 1], [], []>} : vector<32x128xbf16>, vector<128x128xbf16>, vector<32x128xf32> -> vector<32x128xf32>
    %239 = arith.addf %205, %238 : vector<32x128xf32>
    %240 = vector.extract_strided_slice %209 {offsets = [1, 0], sizes = [1, 128], strides = [1, 1]} : vector<4x128xf32> to vector<1x128xf32>
    %241 = vector.broadcast %240 : vector<1x128xf32> to vector<32x128xf32>
    %242 = arith.addf %239, %241 : vector<32x128xf32>
    %243 = arith.truncf %242 : vector<32x128xf32> to vector<32x128xbf16>
    %cst_139 = arith.constant dense<0.000000e+00> : vector<16x128xf32>
    %244 = tpu.matmul %3, %243, %cst_139 {dimension_numbers = #tpu.dot_dimension_numbers<[1], [0], [0], [1], [0, 0, 1, 1], [], []>} : vector<16x32xbf16>, vector<32x128xbf16>, vector<16x128xf32> -> vector<16x128xf32>
    %245 = arith.mulf %244, %5 : vector<16x128xf32>
    %c0_140 = arith.constant 0 : index
    %c0_141 = arith.constant 0 : index
    %c512_142 = arith.constant 512 : index
    %246 = vector.load %arg11[%c0_140, %c0_141, %c512_142] : memref<2x128x896xbf16, #tpu.memory_space<vmem>>, vector<1x128x128xbf16>
    %247 = vector.shape_cast %246 : vector<1x128x128xbf16> to vector<128x128xbf16>
    %cst_143 = arith.constant dense<0.000000e+00> : vector<16x128xf32>
    %248 = tpu.matmul %206, %247, %cst_143 {dimension_numbers = #tpu.dot_dimension_numbers<[1], [0], [0], [1], [0, 0, 1, 1], [], []>} : vector<16x128xbf16>, vector<128x128xbf16>, vector<16x128xf32> -> vector<16x128xf32>
    %249 = arith.truncf %245 : vector<16x128xf32> to vector<16x128xbf16>
    %c0_144 = arith.constant 0 : index
    %c0_145 = arith.constant 0 : index
    %c640_146 = arith.constant 640 : index
    %250 = vector.load %arg11[%c0_144, %c0_145, %c640_146] : memref<2x128x896xbf16, #tpu.memory_space<vmem>>, vector<1x128x128xbf16>
    %251 = vector.shape_cast %250 : vector<1x128x128xbf16> to vector<128x128xbf16>
    %cst_147 = arith.constant dense<0.000000e+00> : vector<16x128xf32>
    %252 = tpu.matmul %249, %251, %cst_147 {dimension_numbers = #tpu.dot_dimension_numbers<[1], [0], [0], [1], [0, 0, 1, 1], [], []>} : vector<16x128xbf16>, vector<128x128xbf16>, vector<16x128xf32> -> vector<16x128xf32>
    %253 = arith.addf %248, %252 : vector<16x128xf32>
    %254 = vector.extract_strided_slice %209 {offsets = [2, 0], sizes = [1, 128], strides = [1, 1]} : vector<4x128xf32> to vector<1x128xf32>
    %255 = vector.broadcast %254 : vector<1x128xf32> to vector<16x128xf32>
    %256 = arith.addf %253, %255 : vector<16x128xf32>
    %cst_148 = arith.constant 0.000000e+00 : f32
    %257 = vector.broadcast %cst_148 : f32 to vector<16x128xf32>
    %258 = arith.cmpf ogt, %256, %257 : vector<16x128xf32>
    %259 = math.exp %256 : vector<16x128xf32>
    %cst_149 = arith.constant 1.000000e+00 : f32
    %260 = vector.broadcast %cst_149 : f32 to vector<16x128xf32>
    %261 = arith.subf %259, %260 : vector<16x128xf32>
    %cst_150 = arith.constant 1.67326319 : f32
    %262 = vector.broadcast %cst_150 : f32 to vector<16x128xf32>
    %263 = arith.mulf %262, %261 : vector<16x128xf32>
    %264 = arith.select %258, %256, %263 : vector<16x128xi1>, vector<16x128xf32>
    %cst_151 = arith.constant 1.05070102 : f32
    %265 = vector.broadcast %cst_151 : f32 to vector<16x128xf32>
    %266 = arith.mulf %265, %264 : vector<16x128xf32>
    %267 = arith.truncf %266 : vector<16x128xf32> to vector<16x128xbf16>
    %c0_152 = arith.constant 0 : index
    %c0_153 = arith.constant 0 : index
    %c768_154 = arith.constant 768 : index
    %268 = vector.load %arg11[%c0_152, %c0_153, %c768_154] : memref<2x128x896xbf16, #tpu.memory_space<vmem>>, vector<1x128x128xbf16>
    %269 = vector.shape_cast %268 : vector<1x128x128xbf16> to vector<128x128xbf16>
    %cst_155 = arith.constant dense<0.000000e+00> : vector<16x128xf32>
    %270 = tpu.matmul %267, %269, %cst_155 {dimension_numbers = #tpu.dot_dimension_numbers<[1], [0], [0], [1], [0, 0, 1, 1], [], []>} : vector<16x128xbf16>, vector<128x128xbf16>, vector<16x128xf32> -> vector<16x128xf32>
    %271 = arith.addf %182, %270 : vector<16x128xf32>
    %272 = vector.extract_strided_slice %209 {offsets = [3, 0], sizes = [1, 128], strides = [1, 1]} : vector<4x128xf32> to vector<1x128xf32>
    %273 = vector.broadcast %272 : vector<1x128xf32> to vector<16x128xf32>
    %274 = arith.addf %271, %273 : vector<16x128xf32>
    %275 = arith.truncf %274 : vector<16x128xf32> to vector<16x128xbf16>
    %276 = arith.truncf %242 : vector<32x128xf32> to vector<32x128xbf16>
    %c1_156 = arith.constant 1 : index
    %c0_157 = arith.constant 0 : index
    %c0_158 = arith.constant 0 : index
    %277 = vector.load %arg12[%c1_156, %c0_157, %c0_158] : memref<2x4x128xf32, #tpu.memory_space<vmem>>, vector<1x4x128xf32>
    %278 = vector.shape_cast %277 : vector<1x4x128xf32> to vector<4x128xf32>
    %c1_159 = arith.constant 1 : index
    %c0_160 = arith.constant 0 : index
    %c0_161 = arith.constant 0 : index
    %279 = vector.load %arg11[%c1_159, %c0_160, %c0_161] : memref<2x128x896xbf16, #tpu.memory_space<vmem>>, vector<1x128x256xbf16>
    %280 = vector.shape_cast %279 : vector<1x128x256xbf16> to vector<128x256xbf16>
    %cst_162 = arith.constant dense<0.000000e+00> : vector<16x256xf32>
    %281 = tpu.matmul %275, %280, %cst_162 {dimension_numbers = #tpu.dot_dimension_numbers<[1], [0], [0], [1], [0, 0, 1, 1], [], []>} : vector<16x128xbf16>, vector<128x256xbf16>, vector<16x256xf32> -> vector<16x256xf32>
    %282 = arith.truncf %281 : vector<16x256xf32> to vector<16x256xbf16>
    %283 = vector.extract_strided_slice %282 {offsets = [0, 0], sizes = [16, 128], strides = [1, 1]} : vector<16x256xbf16> to vector<16x128xbf16>
    %284 = vector.extract_strided_slice %282 {offsets = [0, 128], sizes = [16, 128], strides = [1, 1]} : vector<16x256xbf16> to vector<16x128xbf16>
    %285 = tpu.concatenate %283, %284 in 0 : vector<16x128xbf16>, vector<16x128xbf16> -> vector<32x128xbf16>
    %cst_163 = arith.constant dense<0.000000e+00> : vector<32x128xf32>
    %286 = tpu.matmul %2, %285, %cst_163 {dimension_numbers = #tpu.dot_dimension_numbers<[1], [0], [0], [1], [0, 0, 1, 1], [], []>} : vector<32x32xbf16>, vector<32x128xbf16>, vector<32x128xf32> -> vector<32x128xf32>
    %c1_164 = arith.constant 1 : index
    %c0_165 = arith.constant 0 : index
    %c256_166 = arith.constant 256 : index
    %287 = vector.load %arg11[%c1_164, %c0_165, %c256_166] : memref<2x128x896xbf16, #tpu.memory_space<vmem>>, vector<1x128x128xbf16>
    %288 = vector.shape_cast %287 : vector<1x128x128xbf16> to vector<128x128xbf16>
    %cst_167 = arith.constant dense<0.000000e+00> : vector<32x128xf32>
    %289 = tpu.matmul %276, %288, %cst_167 {dimension_numbers = #tpu.dot_dimension_numbers<[1], [0], [0], [1], [0, 0, 1, 1], [], []>} : vector<32x128xbf16>, vector<128x128xbf16>, vector<32x128xf32> -> vector<32x128xf32>
    %290 = arith.addf %286, %289 : vector<32x128xf32>
    %291 = vector.extract_strided_slice %278 {offsets = [0, 0], sizes = [1, 128], strides = [1, 1]} : vector<4x128xf32> to vector<1x128xf32>
    %292 = vector.broadcast %291 : vector<1x128xf32> to vector<32x128xf32>
    %293 = arith.addf %290, %292 : vector<32x128xf32>
    %cst_168 = arith.constant 0.000000e+00 : f32
    %294 = vector.broadcast %cst_168 : f32 to vector<32x128xf32>
    %295 = arith.cmpf ogt, %293, %294 : vector<32x128xf32>
    %296 = math.exp %293 : vector<32x128xf32>
    %cst_169 = arith.constant 1.000000e+00 : f32
    %297 = vector.broadcast %cst_169 : f32 to vector<32x128xf32>
    %298 = arith.subf %296, %297 : vector<32x128xf32>
    %cst_170 = arith.constant 1.67326319 : f32
    %299 = vector.broadcast %cst_170 : f32 to vector<32x128xf32>
    %300 = arith.mulf %299, %298 : vector<32x128xf32>
    %301 = arith.select %295, %293, %300 : vector<32x128xi1>, vector<32x128xf32>
    %cst_171 = arith.constant 1.05070102 : f32
    %302 = vector.broadcast %cst_171 : f32 to vector<32x128xf32>
    %303 = arith.mulf %302, %301 : vector<32x128xf32>
    %304 = arith.truncf %303 : vector<32x128xf32> to vector<32x128xbf16>
    %c1_172 = arith.constant 1 : index
    %c0_173 = arith.constant 0 : index
    %c384_174 = arith.constant 384 : index
    %305 = vector.load %arg11[%c1_172, %c0_173, %c384_174] : memref<2x128x896xbf16, #tpu.memory_space<vmem>>, vector<1x128x128xbf16>
    %306 = vector.shape_cast %305 : vector<1x128x128xbf16> to vector<128x128xbf16>
    %cst_175 = arith.constant dense<0.000000e+00> : vector<32x128xf32>
    %307 = tpu.matmul %304, %306, %cst_175 {dimension_numbers = #tpu.dot_dimension_numbers<[1], [0], [0], [1], [0, 0, 1, 1], [], []>} : vector<32x128xbf16>, vector<128x128xbf16>, vector<32x128xf32> -> vector<32x128xf32>
    %308 = arith.addf %242, %307 : vector<32x128xf32>
    %309 = vector.extract_strided_slice %278 {offsets = [1, 0], sizes = [1, 128], strides = [1, 1]} : vector<4x128xf32> to vector<1x128xf32>
    %310 = vector.broadcast %309 : vector<1x128xf32> to vector<32x128xf32>
    %311 = arith.addf %308, %310 : vector<32x128xf32>
    %312 = arith.truncf %311 : vector<32x128xf32> to vector<32x128xbf16>
    %cst_176 = arith.constant dense<0.000000e+00> : vector<16x128xf32>
    %313 = tpu.matmul %3, %312, %cst_176 {dimension_numbers = #tpu.dot_dimension_numbers<[1], [0], [0], [1], [0, 0, 1, 1], [], []>} : vector<16x32xbf16>, vector<32x128xbf16>, vector<16x128xf32> -> vector<16x128xf32>
    %314 = arith.mulf %313, %5 : vector<16x128xf32>
    %c1_177 = arith.constant 1 : index
    %c0_178 = arith.constant 0 : index
    %c512_179 = arith.constant 512 : index
    %315 = vector.load %arg11[%c1_177, %c0_178, %c512_179] : memref<2x128x896xbf16, #tpu.memory_space<vmem>>, vector<1x128x128xbf16>
    %316 = vector.shape_cast %315 : vector<1x128x128xbf16> to vector<128x128xbf16>
    %cst_180 = arith.constant dense<0.000000e+00> : vector<16x128xf32>
    %317 = tpu.matmul %275, %316, %cst_180 {dimension_numbers = #tpu.dot_dimension_numbers<[1], [0], [0], [1], [0, 0, 1, 1], [], []>} : vector<16x128xbf16>, vector<128x128xbf16>, vector<16x128xf32> -> vector<16x128xf32>
    %318 = arith.truncf %314 : vector<16x128xf32> to vector<16x128xbf16>
    %c1_181 = arith.constant 1 : index
    %c0_182 = arith.constant 0 : index
    %c640_183 = arith.constant 640 : index
    %319 = vector.load %arg11[%c1_181, %c0_182, %c640_183] : memref<2x128x896xbf16, #tpu.memory_space<vmem>>, vector<1x128x128xbf16>
    %320 = vector.shape_cast %319 : vector<1x128x128xbf16> to vector<128x128xbf16>
    %cst_184 = arith.constant dense<0.000000e+00> : vector<16x128xf32>
    %321 = tpu.matmul %318, %320, %cst_184 {dimension_numbers = #tpu.dot_dimension_numbers<[1], [0], [0], [1], [0, 0, 1, 1], [], []>} : vector<16x128xbf16>, vector<128x128xbf16>, vector<16x128xf32> -> vector<16x128xf32>
    %322 = arith.addf %317, %321 : vector<16x128xf32>
    %323 = vector.extract_strided_slice %278 {offsets = [2, 0], sizes = [1, 128], strides = [1, 1]} : vector<4x128xf32> to vector<1x128xf32>
    %324 = vector.broadcast %323 : vector<1x128xf32> to vector<16x128xf32>
    %325 = arith.addf %322, %324 : vector<16x128xf32>
    %cst_185 = arith.constant 0.000000e+00 : f32
    %326 = vector.broadcast %cst_185 : f32 to vector<16x128xf32>
    %327 = arith.cmpf ogt, %325, %326 : vector<16x128xf32>
    %328 = math.exp %325 : vector<16x128xf32>
    %cst_186 = arith.constant 1.000000e+00 : f32
    %329 = vector.broadcast %cst_186 : f32 to vector<16x128xf32>
    %330 = arith.subf %328, %329 : vector<16x128xf32>
    %cst_187 = arith.constant 1.67326319 : f32
    %331 = vector.broadcast %cst_187 : f32 to vector<16x128xf32>
    %332 = arith.mulf %331, %330 : vector<16x128xf32>
    %333 = arith.select %327, %325, %332 : vector<16x128xi1>, vector<16x128xf32>
    %cst_188 = arith.constant 1.05070102 : f32
    %334 = vector.broadcast %cst_188 : f32 to vector<16x128xf32>
    %335 = arith.mulf %334, %333 : vector<16x128xf32>
    %336 = arith.truncf %335 : vector<16x128xf32> to vector<16x128xbf16>
    %c1_189 = arith.constant 1 : index
    %c0_190 = arith.constant 0 : index
    %c768_191 = arith.constant 768 : index
    %337 = vector.load %arg11[%c1_189, %c0_190, %c768_191] : memref<2x128x896xbf16, #tpu.memory_space<vmem>>, vector<1x128x128xbf16>
    %338 = vector.shape_cast %337 : vector<1x128x128xbf16> to vector<128x128xbf16>
    %cst_192 = arith.constant dense<0.000000e+00> : vector<16x128xf32>
    %339 = tpu.matmul %336, %338, %cst_192 {dimension_numbers = #tpu.dot_dimension_numbers<[1], [0], [0], [1], [0, 0, 1, 1], [], []>} : vector<16x128xbf16>, vector<128x128xbf16>, vector<16x128xf32> -> vector<16x128xf32>
    %340 = arith.addf %274, %339 : vector<16x128xf32>
    %341 = vector.extract_strided_slice %278 {offsets = [3, 0], sizes = [1, 128], strides = [1, 1]} : vector<4x128xf32> to vector<1x128xf32>
    %342 = vector.broadcast %341 : vector<1x128xf32> to vector<16x128xf32>
    %343 = arith.addf %340, %342 : vector<16x128xf32>
    %344 = arith.truncf %343 : vector<16x128xf32> to vector<16x128xbf16>
    %c3_193 = arith.constant 3 : index
    %c0_194 = arith.constant 0 : index
    %c0_195 = arith.constant 0 : index
    %345 = vector.load %arg13[%c3_193, %c0_194, %c0_195] : memref<5x128x128xbf16, #tpu.memory_space<vmem>>, vector<1x128x128xbf16>
    %346 = vector.shape_cast %345 : vector<1x128x128xbf16> to vector<128x128xbf16>
    %cst_196 = arith.constant dense<0.000000e+00> : vector<16x128xf32>
    %347 = tpu.matmul %344, %346, %cst_196 {dimension_numbers = #tpu.dot_dimension_numbers<[1], [0], [0], [1], [0, 0, 1, 1], [], []>} : vector<16x128xbf16>, vector<128x128xbf16>, vector<16x128xf32> -> vector<16x128xf32>
    %348 = arith.truncf %347 : vector<16x128xf32> to vector<16x128xbf16>
    %c0_197 = arith.constant 0 : index
    %c0_198 = arith.constant 0 : index
    %349 = vector.load %arg7[%c0_197, %c0_198] : memref<64x16xbf16, #tpu.memory_space<vmem>>, vector<64x16xbf16>
    %cst_199 = arith.constant dense<0.000000e+00> : vector<64x128xf32>
    %350 = tpu.matmul %349, %348, %cst_199 {dimension_numbers = #tpu.dot_dimension_numbers<[1], [0], [0], [1], [0, 0, 1, 1], [], []>} : vector<64x16xbf16>, vector<16x128xbf16>, vector<64x128xf32> -> vector<64x128xf32>
    %c6 = arith.constant 6 : index
    %c0_200 = arith.constant 0 : index
    %351 = vector.load %arg14[%c6, %c0_200] : memref<9x128xf32, #tpu.memory_space<vmem>>, vector<1x128xf32>
    %352 = vector.broadcast %351 : vector<1x128xf32> to vector<64x128xf32>
    %353 = arith.mulf %7, %352 : vector<64x128xf32>
    %354 = arith.addf %350, %353 : vector<64x128xf32>
    %c7 = arith.constant 7 : index
    %c0_201 = arith.constant 0 : index
    %355 = vector.load %arg14[%c7, %c0_201] : memref<9x128xf32, #tpu.memory_space<vmem>>, vector<1x128xf32>
    %356 = vector.broadcast %355 : vector<1x128xf32> to vector<64x128xf32>
    %357 = arith.addf %354, %356 : vector<64x128xf32>
    %cst_202 = arith.constant 0.000000e+00 : f32
    %358 = vector.broadcast %cst_202 : f32 to vector<64x128xf32>
    %359 = arith.cmpf ogt, %357, %358 : vector<64x128xf32>
    %360 = math.exp %357 : vector<64x128xf32>
    %cst_203 = arith.constant 1.000000e+00 : f32
    %361 = vector.broadcast %cst_203 : f32 to vector<64x128xf32>
    %362 = arith.subf %360, %361 : vector<64x128xf32>
    %cst_204 = arith.constant 1.67326319 : f32
    %363 = vector.broadcast %cst_204 : f32 to vector<64x128xf32>
    %364 = arith.mulf %363, %362 : vector<64x128xf32>
    %365 = arith.select %359, %357, %364 : vector<64x128xi1>, vector<64x128xf32>
    %cst_205 = arith.constant 1.05070102 : f32
    %366 = vector.broadcast %cst_205 : f32 to vector<64x128xf32>
    %367 = arith.mulf %366, %365 : vector<64x128xf32>
    %c0_206 = arith.constant 0 : index
    %c0_207 = arith.constant 0 : index
    %368 = vector.load %arg17[%c0_206, %c0_207] : memref<64x128xf32, #tpu.memory_space<vmem>>, vector<64x128xf32>
    %369 = arith.truncf %367 : vector<64x128xf32> to vector<64x128xbf16>
    %c4_208 = arith.constant 4 : index
    %c0_209 = arith.constant 0 : index
    %c0_210 = arith.constant 0 : index
    %370 = vector.load %arg13[%c4_208, %c0_209, %c0_210] : memref<5x128x128xbf16, #tpu.memory_space<vmem>>, vector<1x128x128xbf16>
    %371 = vector.shape_cast %370 : vector<1x128x128xbf16> to vector<128x128xbf16>
    %cst_211 = arith.constant dense<0.000000e+00> : vector<64x128xf32>
    %372 = tpu.matmul %369, %371, %cst_211 {dimension_numbers = #tpu.dot_dimension_numbers<[1], [0], [0], [1], [0, 0, 1, 1], [], []>} : vector<64x128xbf16>, vector<128x128xbf16>, vector<64x128xf32> -> vector<64x128xf32>
    %373 = arith.addf %368, %372 : vector<64x128xf32>
    %c8 = arith.constant 8 : index
    %c0_212 = arith.constant 0 : index
    %374 = vector.load %arg14[%c8, %c0_212] : memref<9x128xf32, #tpu.memory_space<vmem>>, vector<1x128xf32>
    %375 = vector.broadcast %374 : vector<1x128xf32> to vector<64x128xf32>
    %376 = arith.addf %373, %375 : vector<64x128xf32>
    %c0_213 = arith.constant 0 : index
    %c0_214 = arith.constant 0 : index
    %377 = vector.load %arg18[%c0_213, %c0_214] : memref<128x128xf32, #tpu.memory_space<vmem>>, vector<128x128xf32>
    %378 = arith.truncf %376 : vector<64x128xf32> to vector<64x128xbf16>
    %379 = arith.truncf %377 : vector<128x128xf32> to vector<128x128xbf16>
    %c2_215 = arith.constant 2 : index
    %c0_216 = arith.constant 0 : index
    %c0_217 = arith.constant 0 : index
    %380 = vector.load %arg10[%c2_215, %c0_216, %c0_217] : memref<4x4x128xf32, #tpu.memory_space<vmem>>, vector<1x4x128xf32>
    %381 = vector.shape_cast %380 : vector<1x4x128xf32> to vector<4x128xf32>
    %c2_218 = arith.constant 2 : index
    %c0_219 = arith.constant 0 : index
    %c0_220 = arith.constant 0 : index
    %382 = vector.load %arg9[%c2_218, %c0_219, %c0_220] : memref<4x128x896xbf16, #tpu.memory_space<vmem>>, vector<1x128x256xbf16>
    %383 = vector.shape_cast %382 : vector<1x128x256xbf16> to vector<128x256xbf16>
    %cst_221 = arith.constant dense<0.000000e+00> : vector<64x256xf32>
    %384 = tpu.matmul %378, %383, %cst_221 {dimension_numbers = #tpu.dot_dimension_numbers<[1], [0], [0], [1], [0, 0, 1, 1], [], []>} : vector<64x128xbf16>, vector<128x256xbf16>, vector<64x256xf32> -> vector<64x256xf32>
    %385 = arith.truncf %384 : vector<64x256xf32> to vector<64x256xbf16>
    %386 = vector.extract_strided_slice %385 {offsets = [0, 0], sizes = [64, 128], strides = [1, 1]} : vector<64x256xbf16> to vector<64x128xbf16>
    %387 = vector.extract_strided_slice %385 {offsets = [0, 128], sizes = [64, 128], strides = [1, 1]} : vector<64x256xbf16> to vector<64x128xbf16>
    %388 = tpu.concatenate %386, %387 in 0 : vector<64x128xbf16>, vector<64x128xbf16> -> vector<128x128xbf16>
    %cst_222 = arith.constant dense<0.000000e+00> : vector<128x128xf32>
    %389 = tpu.matmul %0, %388, %cst_222 {dimension_numbers = #tpu.dot_dimension_numbers<[1], [0], [0], [1], [0, 0, 1, 1], [], []>} : vector<128x128xbf16>, vector<128x128xbf16>, vector<128x128xf32> -> vector<128x128xf32>
    %c2_223 = arith.constant 2 : index
    %c0_224 = arith.constant 0 : index
    %c256_225 = arith.constant 256 : index
    %390 = vector.load %arg9[%c2_223, %c0_224, %c256_225] : memref<4x128x896xbf16, #tpu.memory_space<vmem>>, vector<1x128x128xbf16>
    %391 = vector.shape_cast %390 : vector<1x128x128xbf16> to vector<128x128xbf16>
    %cst_226 = arith.constant dense<0.000000e+00> : vector<128x128xf32>
    %392 = tpu.matmul %379, %391, %cst_226 {dimension_numbers = #tpu.dot_dimension_numbers<[1], [0], [0], [1], [0, 0, 1, 1], [], []>} : vector<128x128xbf16>, vector<128x128xbf16>, vector<128x128xf32> -> vector<128x128xf32>
    %393 = arith.addf %389, %392 : vector<128x128xf32>
    %394 = vector.extract_strided_slice %381 {offsets = [0, 0], sizes = [1, 128], strides = [1, 1]} : vector<4x128xf32> to vector<1x128xf32>
    %395 = vector.broadcast %394 : vector<1x128xf32> to vector<128x128xf32>
    %396 = arith.addf %393, %395 : vector<128x128xf32>
    %cst_227 = arith.constant 0.000000e+00 : f32
    %397 = vector.broadcast %cst_227 : f32 to vector<128x128xf32>
    %398 = arith.cmpf ogt, %396, %397 : vector<128x128xf32>
    %399 = math.exp %396 : vector<128x128xf32>
    %cst_228 = arith.constant 1.000000e+00 : f32
    %400 = vector.broadcast %cst_228 : f32 to vector<128x128xf32>
    %401 = arith.subf %399, %400 : vector<128x128xf32>
    %cst_229 = arith.constant 1.67326319 : f32
    %402 = vector.broadcast %cst_229 : f32 to vector<128x128xf32>
    %403 = arith.mulf %402, %401 : vector<128x128xf32>
    %404 = arith.select %398, %396, %403 : vector<128x128xi1>, vector<128x128xf32>
    %cst_230 = arith.constant 1.05070102 : f32
    %405 = vector.broadcast %cst_230 : f32 to vector<128x128xf32>
    %406 = arith.mulf %405, %404 : vector<128x128xf32>
    %407 = arith.truncf %406 : vector<128x128xf32> to vector<128x128xbf16>
    %c2_231 = arith.constant 2 : index
    %c0_232 = arith.constant 0 : index
    %c384_233 = arith.constant 384 : index
    %408 = vector.load %arg9[%c2_231, %c0_232, %c384_233] : memref<4x128x896xbf16, #tpu.memory_space<vmem>>, vector<1x128x128xbf16>
    %409 = vector.shape_cast %408 : vector<1x128x128xbf16> to vector<128x128xbf16>
    %cst_234 = arith.constant dense<0.000000e+00> : vector<128x128xf32>
    %410 = tpu.matmul %407, %409, %cst_234 {dimension_numbers = #tpu.dot_dimension_numbers<[1], [0], [0], [1], [0, 0, 1, 1], [], []>} : vector<128x128xbf16>, vector<128x128xbf16>, vector<128x128xf32> -> vector<128x128xf32>
    %411 = arith.addf %377, %410 : vector<128x128xf32>
    %412 = vector.extract_strided_slice %381 {offsets = [1, 0], sizes = [1, 128], strides = [1, 1]} : vector<4x128xf32> to vector<1x128xf32>
    %413 = vector.broadcast %412 : vector<1x128xf32> to vector<128x128xf32>
    %414 = arith.addf %411, %413 : vector<128x128xf32>
    %415 = arith.truncf %414 : vector<128x128xf32> to vector<128x128xbf16>
    %cst_235 = arith.constant dense<0.000000e+00> : vector<64x128xf32>
    %416 = tpu.matmul %1, %415, %cst_235 {dimension_numbers = #tpu.dot_dimension_numbers<[1], [0], [0], [1], [0, 0, 1, 1], [], []>} : vector<64x128xbf16>, vector<128x128xbf16>, vector<64x128xf32> -> vector<64x128xf32>
    %417 = arith.mulf %416, %4 : vector<64x128xf32>
    %c2_236 = arith.constant 2 : index
    %c0_237 = arith.constant 0 : index
    %c512_238 = arith.constant 512 : index
    %418 = vector.load %arg9[%c2_236, %c0_237, %c512_238] : memref<4x128x896xbf16, #tpu.memory_space<vmem>>, vector<1x128x128xbf16>
    %419 = vector.shape_cast %418 : vector<1x128x128xbf16> to vector<128x128xbf16>
    %cst_239 = arith.constant dense<0.000000e+00> : vector<64x128xf32>
    %420 = tpu.matmul %378, %419, %cst_239 {dimension_numbers = #tpu.dot_dimension_numbers<[1], [0], [0], [1], [0, 0, 1, 1], [], []>} : vector<64x128xbf16>, vector<128x128xbf16>, vector<64x128xf32> -> vector<64x128xf32>
    %421 = arith.truncf %417 : vector<64x128xf32> to vector<64x128xbf16>
    %c2_240 = arith.constant 2 : index
    %c0_241 = arith.constant 0 : index
    %c640_242 = arith.constant 640 : index
    %422 = vector.load %arg9[%c2_240, %c0_241, %c640_242] : memref<4x128x896xbf16, #tpu.memory_space<vmem>>, vector<1x128x128xbf16>
    %423 = vector.shape_cast %422 : vector<1x128x128xbf16> to vector<128x128xbf16>
    %cst_243 = arith.constant dense<0.000000e+00> : vector<64x128xf32>
    %424 = tpu.matmul %421, %423, %cst_243 {dimension_numbers = #tpu.dot_dimension_numbers<[1], [0], [0], [1], [0, 0, 1, 1], [], []>} : vector<64x128xbf16>, vector<128x128xbf16>, vector<64x128xf32> -> vector<64x128xf32>
    %425 = arith.addf %420, %424 : vector<64x128xf32>
    %426 = vector.extract_strided_slice %381 {offsets = [2, 0], sizes = [1, 128], strides = [1, 1]} : vector<4x128xf32> to vector<1x128xf32>
    %427 = vector.broadcast %426 : vector<1x128xf32> to vector<64x128xf32>
    %428 = arith.addf %425, %427 : vector<64x128xf32>
    %cst_244 = arith.constant 0.000000e+00 : f32
    %429 = vector.broadcast %cst_244 : f32 to vector<64x128xf32>
    %430 = arith.cmpf ogt, %428, %429 : vector<64x128xf32>
    %431 = math.exp %428 : vector<64x128xf32>
    %cst_245 = arith.constant 1.000000e+00 : f32
    %432 = vector.broadcast %cst_245 : f32 to vector<64x128xf32>
    %433 = arith.subf %431, %432 : vector<64x128xf32>
    %cst_246 = arith.constant 1.67326319 : f32
    %434 = vector.broadcast %cst_246 : f32 to vector<64x128xf32>
    %435 = arith.mulf %434, %433 : vector<64x128xf32>
    %436 = arith.select %430, %428, %435 : vector<64x128xi1>, vector<64x128xf32>
    %cst_247 = arith.constant 1.05070102 : f32
    %437 = vector.broadcast %cst_247 : f32 to vector<64x128xf32>
    %438 = arith.mulf %437, %436 : vector<64x128xf32>
    %439 = arith.truncf %438 : vector<64x128xf32> to vector<64x128xbf16>
    %c2_248 = arith.constant 2 : index
    %c0_249 = arith.constant 0 : index
    %c768_250 = arith.constant 768 : index
    %440 = vector.load %arg9[%c2_248, %c0_249, %c768_250] : memref<4x128x896xbf16, #tpu.memory_space<vmem>>, vector<1x128x128xbf16>
    %441 = vector.shape_cast %440 : vector<1x128x128xbf16> to vector<128x128xbf16>
    %cst_251 = arith.constant dense<0.000000e+00> : vector<64x128xf32>
    %442 = tpu.matmul %439, %441, %cst_251 {dimension_numbers = #tpu.dot_dimension_numbers<[1], [0], [0], [1], [0, 0, 1, 1], [], []>} : vector<64x128xbf16>, vector<128x128xbf16>, vector<64x128xf32> -> vector<64x128xf32>
    %443 = arith.addf %376, %442 : vector<64x128xf32>
    %444 = vector.extract_strided_slice %381 {offsets = [3, 0], sizes = [1, 128], strides = [1, 1]} : vector<4x128xf32> to vector<1x128xf32>
    %445 = vector.broadcast %444 : vector<1x128xf32> to vector<64x128xf32>
    %446 = arith.addf %443, %445 : vector<64x128xf32>
    %447 = arith.truncf %446 : vector<64x128xf32> to vector<64x128xbf16>
    %448 = arith.truncf %414 : vector<128x128xf32> to vector<128x128xbf16>
    %c3_252 = arith.constant 3 : index
    %c0_253 = arith.constant 0 : index
    %c0_254 = arith.constant 0 : index
    %449 = vector.load %arg10[%c3_252, %c0_253, %c0_254] : memref<4x4x128xf32, #tpu.memory_space<vmem>>, vector<1x4x128xf32>
    %450 = vector.shape_cast %449 : vector<1x4x128xf32> to vector<4x128xf32>
    %c3_255 = arith.constant 3 : index
    %c0_256 = arith.constant 0 : index
    %c0_257 = arith.constant 0 : index
    %451 = vector.load %arg9[%c3_255, %c0_256, %c0_257] : memref<4x128x896xbf16, #tpu.memory_space<vmem>>, vector<1x128x256xbf16>
    %452 = vector.shape_cast %451 : vector<1x128x256xbf16> to vector<128x256xbf16>
    %cst_258 = arith.constant dense<0.000000e+00> : vector<64x256xf32>
    %453 = tpu.matmul %447, %452, %cst_258 {dimension_numbers = #tpu.dot_dimension_numbers<[1], [0], [0], [1], [0, 0, 1, 1], [], []>} : vector<64x128xbf16>, vector<128x256xbf16>, vector<64x256xf32> -> vector<64x256xf32>
    %454 = arith.truncf %453 : vector<64x256xf32> to vector<64x256xbf16>
    %455 = vector.extract_strided_slice %454 {offsets = [0, 0], sizes = [64, 128], strides = [1, 1]} : vector<64x256xbf16> to vector<64x128xbf16>
    %456 = vector.extract_strided_slice %454 {offsets = [0, 128], sizes = [64, 128], strides = [1, 1]} : vector<64x256xbf16> to vector<64x128xbf16>
    %457 = tpu.concatenate %455, %456 in 0 : vector<64x128xbf16>, vector<64x128xbf16> -> vector<128x128xbf16>
    %cst_259 = arith.constant dense<0.000000e+00> : vector<128x128xf32>
    %458 = tpu.matmul %0, %457, %cst_259 {dimension_numbers = #tpu.dot_dimension_numbers<[1], [0], [0], [1], [0, 0, 1, 1], [], []>} : vector<128x128xbf16>, vector<128x128xbf16>, vector<128x128xf32> -> vector<128x128xf32>
    %c3_260 = arith.constant 3 : index
    %c0_261 = arith.constant 0 : index
    %c256_262 = arith.constant 256 : index
    %459 = vector.load %arg9[%c3_260, %c0_261, %c256_262] : memref<4x128x896xbf16, #tpu.memory_space<vmem>>, vector<1x128x128xbf16>
    %460 = vector.shape_cast %459 : vector<1x128x128xbf16> to vector<128x128xbf16>
    %cst_263 = arith.constant dense<0.000000e+00> : vector<128x128xf32>
    %461 = tpu.matmul %448, %460, %cst_263 {dimension_numbers = #tpu.dot_dimension_numbers<[1], [0], [0], [1], [0, 0, 1, 1], [], []>} : vector<128x128xbf16>, vector<128x128xbf16>, vector<128x128xf32> -> vector<128x128xf32>
    %462 = arith.addf %458, %461 : vector<128x128xf32>
    %463 = vector.extract_strided_slice %450 {offsets = [0, 0], sizes = [1, 128], strides = [1, 1]} : vector<4x128xf32> to vector<1x128xf32>
    %464 = vector.broadcast %463 : vector<1x128xf32> to vector<128x128xf32>
    %465 = arith.addf %462, %464 : vector<128x128xf32>
    %cst_264 = arith.constant 0.000000e+00 : f32
    %466 = vector.broadcast %cst_264 : f32 to vector<128x128xf32>
    %467 = arith.cmpf ogt, %465, %466 : vector<128x128xf32>
    %468 = math.exp %465 : vector<128x128xf32>
    %cst_265 = arith.constant 1.000000e+00 : f32
    %469 = vector.broadcast %cst_265 : f32 to vector<128x128xf32>
    %470 = arith.subf %468, %469 : vector<128x128xf32>
    %cst_266 = arith.constant 1.67326319 : f32
    %471 = vector.broadcast %cst_266 : f32 to vector<128x128xf32>
    %472 = arith.mulf %471, %470 : vector<128x128xf32>
    %473 = arith.select %467, %465, %472 : vector<128x128xi1>, vector<128x128xf32>
    %cst_267 = arith.constant 1.05070102 : f32
    %474 = vector.broadcast %cst_267 : f32 to vector<128x128xf32>
    %475 = arith.mulf %474, %473 : vector<128x128xf32>
    %476 = arith.truncf %475 : vector<128x128xf32> to vector<128x128xbf16>
    %c3_268 = arith.constant 3 : index
    %c0_269 = arith.constant 0 : index
    %c384_270 = arith.constant 384 : index
    %477 = vector.load %arg9[%c3_268, %c0_269, %c384_270] : memref<4x128x896xbf16, #tpu.memory_space<vmem>>, vector<1x128x128xbf16>
    %478 = vector.shape_cast %477 : vector<1x128x128xbf16> to vector<128x128xbf16>
    %cst_271 = arith.constant dense<0.000000e+00> : vector<128x128xf32>
    %479 = tpu.matmul %476, %478, %cst_271 {dimension_numbers = #tpu.dot_dimension_numbers<[1], [0], [0], [1], [0, 0, 1, 1], [], []>} : vector<128x128xbf16>, vector<128x128xbf16>, vector<128x128xf32> -> vector<128x128xf32>
    %480 = arith.addf %414, %479 : vector<128x128xf32>
    %481 = vector.extract_strided_slice %450 {offsets = [1, 0], sizes = [1, 128], strides = [1, 1]} : vector<4x128xf32> to vector<1x128xf32>
    %482 = vector.broadcast %481 : vector<1x128xf32> to vector<128x128xf32>
    %483 = arith.addf %480, %482 : vector<128x128xf32>
    %484 = arith.truncf %483 : vector<128x128xf32> to vector<128x128xbf16>
    %cst_272 = arith.constant dense<0.000000e+00> : vector<64x128xf32>
    %485 = tpu.matmul %1, %484, %cst_272 {dimension_numbers = #tpu.dot_dimension_numbers<[1], [0], [0], [1], [0, 0, 1, 1], [], []>} : vector<64x128xbf16>, vector<128x128xbf16>, vector<64x128xf32> -> vector<64x128xf32>
    %486 = arith.mulf %485, %4 : vector<64x128xf32>
    %c3_273 = arith.constant 3 : index
    %c0_274 = arith.constant 0 : index
    %c512_275 = arith.constant 512 : index
    %487 = vector.load %arg9[%c3_273, %c0_274, %c512_275] : memref<4x128x896xbf16, #tpu.memory_space<vmem>>, vector<1x128x128xbf16>
    %488 = vector.shape_cast %487 : vector<1x128x128xbf16> to vector<128x128xbf16>
    %cst_276 = arith.constant dense<0.000000e+00> : vector<64x128xf32>
    %489 = tpu.matmul %447, %488, %cst_276 {dimension_numbers = #tpu.dot_dimension_numbers<[1], [0], [0], [1], [0, 0, 1, 1], [], []>} : vector<64x128xbf16>, vector<128x128xbf16>, vector<64x128xf32> -> vector<64x128xf32>
    %490 = arith.truncf %486 : vector<64x128xf32> to vector<64x128xbf16>
    %c3_277 = arith.constant 3 : index
    %c0_278 = arith.constant 0 : index
    %c640_279 = arith.constant 640 : index
    %491 = vector.load %arg9[%c3_277, %c0_278, %c640_279] : memref<4x128x896xbf16, #tpu.memory_space<vmem>>, vector<1x128x128xbf16>
    %492 = vector.shape_cast %491 : vector<1x128x128xbf16> to vector<128x128xbf16>
    %cst_280 = arith.constant dense<0.000000e+00> : vector<64x128xf32>
    %493 = tpu.matmul %490, %492, %cst_280 {dimension_numbers = #tpu.dot_dimension_numbers<[1], [0], [0], [1], [0, 0, 1, 1], [], []>} : vector<64x128xbf16>, vector<128x128xbf16>, vector<64x128xf32> -> vector<64x128xf32>
    %494 = arith.addf %489, %493 : vector<64x128xf32>
    %495 = vector.extract_strided_slice %450 {offsets = [2, 0], sizes = [1, 128], strides = [1, 1]} : vector<4x128xf32> to vector<1x128xf32>
    %496 = vector.broadcast %495 : vector<1x128xf32> to vector<64x128xf32>
    %497 = arith.addf %494, %496 : vector<64x128xf32>
    %cst_281 = arith.constant 0.000000e+00 : f32
    %498 = vector.broadcast %cst_281 : f32 to vector<64x128xf32>
    %499 = arith.cmpf ogt, %497, %498 : vector<64x128xf32>
    %500 = math.exp %497 : vector<64x128xf32>
    %cst_282 = arith.constant 1.000000e+00 : f32
    %501 = vector.broadcast %cst_282 : f32 to vector<64x128xf32>
    %502 = arith.subf %500, %501 : vector<64x128xf32>
    %cst_283 = arith.constant 1.67326319 : f32
    %503 = vector.broadcast %cst_283 : f32 to vector<64x128xf32>
    %504 = arith.mulf %503, %502 : vector<64x128xf32>
    %505 = arith.select %499, %497, %504 : vector<64x128xi1>, vector<64x128xf32>
    %cst_284 = arith.constant 1.05070102 : f32
    %506 = vector.broadcast %cst_284 : f32 to vector<64x128xf32>
    %507 = arith.mulf %506, %505 : vector<64x128xf32>
    %508 = arith.truncf %507 : vector<64x128xf32> to vector<64x128xbf16>
    %c3_285 = arith.constant 3 : index
    %c0_286 = arith.constant 0 : index
    %c768_287 = arith.constant 768 : index
    %509 = vector.load %arg9[%c3_285, %c0_286, %c768_287] : memref<4x128x896xbf16, #tpu.memory_space<vmem>>, vector<1x128x128xbf16>
    %510 = vector.shape_cast %509 : vector<1x128x128xbf16> to vector<128x128xbf16>
    %cst_288 = arith.constant dense<0.000000e+00> : vector<64x128xf32>
    %511 = tpu.matmul %508, %510, %cst_288 {dimension_numbers = #tpu.dot_dimension_numbers<[1], [0], [0], [1], [0, 0, 1, 1], [], []>} : vector<64x128xbf16>, vector<128x128xbf16>, vector<64x128xf32> -> vector<64x128xf32>
    %512 = arith.addf %446, %511 : vector<64x128xf32>
    %513 = vector.extract_strided_slice %450 {offsets = [3, 0], sizes = [1, 128], strides = [1, 1]} : vector<4x128xf32> to vector<1x128xf32>
    %514 = vector.broadcast %513 : vector<1x128xf32> to vector<64x128xf32>
    %515 = arith.addf %512, %514 : vector<64x128xf32>
    %c0_289 = arith.constant 0 : index
    %c0_290 = arith.constant 0 : index
    %516 = vector.load %arg15[%c0_289, %c0_290] : memref<64x128xf32, #tpu.memory_space<vmem>>, vector<64x128xf32>
    tpu.vector_store %arg15[%c0_289, %c0_290], %515 {strides = array<i32>} : memref<64x128xf32, #tpu.memory_space<vmem>>, vector<64x128xf32>,
    %c0_291 = arith.constant 0 : index
    %c0_292 = arith.constant 0 : index
    %517 = vector.load %arg16[%c0_291, %c0_292] : memref<128x128xf32, #tpu.memory_space<vmem>>, vector<128x128xf32>
    tpu.vector_store %arg16[%c0_291, %c0_292], %483 {strides = array<i32>} : memref<128x128xf32, #tpu.memory_space<vmem>>, vector<128x128xf32>,
    return
  }
}

</mosaic_0001>

<llo_original>
// kernel: tpu_custom_call.1
$region0: #{tpu_custom_call.1}
  #allocation0 [shape = 'u32[]', space=smem, size = 0x4, offset = 0x4, fixed_abs, tag = 'smem constant byte address 0x4 - core index']
  #allocation1 [shape = 'u32[72,128]{1,0:T(1,128)}', space=vmem, size = 0x9000, scoped, tag = 'internal scratch']
  #allocation2 [shape = 'f32[64,128]{1,0:T(8,128)}', space=vmem, size = 0x8000, scoped, tag = 'scratch operand']
  #allocation3 [shape = 'f32[128,128]{1,0:T(8,128)}', space=vmem, size = 0x10000, scoped, tag = 'scratch operand']
  %s0 = inlined_call_operand.hbm [shape: f32[64,128], index: 0, kind: input, shape index: {}]
  %s1 = inlined_call_operand.hbm [shape: f32[128,128], index: 1, kind: input, shape index: {}]
  %s2 = inlined_call_operand.hbm [shape: bf16[128,128], index: 2, kind: input, shape index: {}]
  %s3 = inlined_call_operand.vmem [shape: bf16[64,128], index: 3, kind: input, shape index: {}]
  %s4 = inlined_call_operand.hbm [shape: bf16[32,32], index: 4, kind: input, shape index: {}]
  %s5 = inlined_call_operand.hbm [shape: bf16[16,32], index: 5, kind: input, shape index: {}]
  %s6 = inlined_call_operand.hbm [shape: bf16[16,64], index: 6, kind: input, shape index: {}]
  %s7 = inlined_call_operand.vmem [shape: bf16[64,16], index: 7, kind: input, shape index: {}]
  %s8 = inlined_call_operand.hbm [shape: f32[192,128], index: 8, kind: input, shape index: {}]
  %s9 = inlined_call_operand.hbm [shape: bf16[4,128,896], index: 9, kind: input, shape index: {}]
  %s10 = inlined_call_operand.vmem [shape: f32[4,4,128], index: 10, kind: input, shape index: {}]
  %s11 = inlined_call_operand.hbm [shape: bf16[2,128,896], index: 11, kind: input, shape index: {}]
  %s12 = inlined_call_operand.hbm [shape: f32[2,4,128], index: 12, kind: input, shape index: {}]
  %s13 = inlined_call_operand.hbm [shape: bf16[5,128,128], index: 13, kind: input, shape index: {}]
  %s14 = inlined_call_operand.hbm [shape: f32[9,128], index: 14, kind: input, shape index: {}]
  %s15 = inlined_call_operand.hbm [shape: f32[64,128], index: 15, kind: output, shape index: {0}]
  %s16 = inlined_call_operand.hbm [shape: f32[128,128], index: 16, kind: output, shape index: {1}]
  %17 = xla_tuple %s15, %s16
  %s18 = sld [smem:[#allocation0]]
  $region126: #{tpu_custom_call.1} parent=0
    _
  %s20 = ssub.s32 1, %s18
  %s21 = scalar_select 0, %s20, %s18
  $region1: #{tpu_custom_call.1} parent=0
    #allocation4 [shape = 'u8[32768]{0}', space=vmem, size = 0x8000, scoped, tag = 'input window, operand 0, single buffered']
    #allocation5 [shape = 's32[1]{0}', space=sflag, size = 0x4, scoped, tag = 'scoped memory for tpu_custom_call.1']
    #allocation6 [shape = 's32[1]{0}', space=sflag, size = 0x4, scoped, tag = 'scoped memory for tpu_custom_call.1']
    #allocation7 [shape = 'u8[65536]{0}', space=vmem, size = 0x10000, scoped, tag = 'input window, operand 1, single buffered']
    #allocation8 [shape = 's32[1]{0}', space=sflag, size = 0x4, scoped, tag = 'scoped memory for tpu_custom_call.1']
    #allocation9 [shape = 'u8[32768]{0}', space=vmem, size = 0x8000, scoped, tag = 'input window, operand 2, single buffered']
    #allocation10 [shape = 'u8[8192]{0}', space=vmem, size = 0x2000, scoped, tag = 'input window, operand 4, single buffered']
    #allocation11 [shape = 's32[1]{0}', space=sflag, size = 0x4, scoped, tag = 'scoped memory for tpu_custom_call.1']
    #allocation12 [shape = 'u8[4096]{0}', space=vmem, size = 0x1000, scoped, tag = 'input window, operand 5, single buffered']
    #allocation13 [shape = 'u8[4096]{0}', space=vmem, size = 0x1000, scoped, tag = 'input window, operand 6, single buffered']
    #allocation14 [shape = 's32[1]{0}', space=sflag, size = 0x4, scoped, tag = 'scoped memory for tpu_custom_call.1']
    #allocation15 [shape = 'u8[98304]{0}', space=vmem, size = 0x18000, scoped, tag = 'input window, operand 8, single buffered']
    #allocation16 [shape = 'u8[917504]{0}', space=vmem, size = 0xe0000, scoped, tag = 'input window, operand 9, single buffered']
    #allocation17 [shape = 's32[1]{0}', space=sflag, size = 0x4, scoped, tag = 'scoped memory for tpu_custom_call.1']
    #allocation18 [shape = 'u8[458752]{0}', space=vmem, size = 0x70000, scoped, tag = 'input window, operand 11, single buffered']
    #allocation19 [shape = 'u8[4096]{0}', space=vmem, size = 0x1000, scoped, tag = 'input window, operand 12, single buffered']
    #allocation20 [shape = 's32[1]{0}', space=sflag, size = 0x4, scoped, tag = 'scoped memory for tpu_custom_call.1']
    #allocation21 [shape = 'u8[163840]{0}', space=vmem, size = 0x28000, scoped, tag = 'input window, operand 13, single buffered']
    #allocation22 [shape = 'u8[8192]{0}', space=vmem, size = 0x2000, scoped, tag = 'input window, operand 14, single buffered']
    #allocation23 [shape = 's32[1]{0}', space=sflag, size = 0x4, scoped, tag = 'scoped memory for tpu_custom_call.1']
    #allocation24 [shape = 'u8[32768]{0}', space=vmem, size = 0x8000, scoped, tag = 'output window, operand 0, single buffered']
    #allocation25 [shape = 'u8[65536]{0}', space=vmem, size = 0x10000, scoped, tag = 'output window, operand 1, single buffered']
    #allocation26 [shape = 's32[1]{0}', space=sflag, size = 0x4, scoped, tag = 'scoped memory for tpu_custom_call.1']
    %22 = vsyncpa [#allocation5], 0
    %23 = vsyncpa [#allocation8], 0
    %24 = vsyncpa [#allocation11], 0
    %25 = vsyncpa [#allocation14], 0
    %26 = vsyncpa [#allocation17], 0
    %27 = vsyncpa [#allocation20], 0
    %28 = vsyncpa [#allocation23], 0
    %29 = vsyncpa [#allocation6], 0
    %30 = vsyncpa [#allocation26], 0
    // Predicated region
    $region2: #{tpu_custom_call.1} parent=1 // pred_check
      _
    $region3: #{tpu_custom_call.1} parent=1 // pred_check_branch
      %32 = sbr.rel (0) target = $region5
    $region4: #{tpu_custom_call.1} parent=1 // pred_region
      %34 = vsyncadd [#allocation5], 0
      %s35 = sshll.u32 %s0, 4
      %s36 = int_to_ptr.hbm [resolvable:$true] %s35
      %s37 = sshll.u32 [#allocation4], 4
      %s38 = int_to_ptr.vmem [resolvable:$true] %s37
      %43 = dma.hbm_to_vmem [thread:$0]  %s36, 1024, %s38, [#allocation5], 128, 128, 8
    $region5: #{tpu_custom_call.1} parent=1 // pred_fallthru
      _
    // Predicated region
    $region6: #{tpu_custom_call.1} parent=1 // pred_check
      _
    $region7: #{tpu_custom_call.1} parent=1 // pred_check_branch
      %45 = sbr.rel (0) target = $region9
    $region8: #{tpu_custom_call.1} parent=1 // pred_region
      %47 = vsyncadd [#allocation8], 0
      %s48 = sshll.u32 %s1, 4
      %s49 = int_to_ptr.hbm [resolvable:$true] %s48
      %s50 = sshll.u32 [#allocation7], 4
      %s51 = int_to_ptr.vmem [resolvable:$true] %s50
      %56 = dma.hbm_to_vmem [thread:$0]  %s49, 2048, %s51, [#allocation8], 128, 128, 8
    $region9: #{tpu_custom_call.1} parent=1 // pred_fallthru
      _
    // Predicated region
    $region10: #{tpu_custom_call.1} parent=1 // pred_check
      _
    $region11: #{tpu_custom_call.1} parent=1 // pred_check_branch
      %58 = sbr.rel (0) target = $region13
    $region12: #{tpu_custom_call.1} parent=1 // pred_region
      %60 = vsyncadd [#allocation8], 0
      %s61 = sshll.u32 %s2, 4
      %s62 = int_to_ptr.hbm [resolvable:$true] %s61
      %s63 = sshll.u32 [#allocation9], 4
      %s64 = int_to_ptr.vmem [resolvable:$true] %s63
      %69 = dma.hbm_to_vmem [thread:$0]  %s62, 1024, %s64, [#allocation8], 64, 64, 4
    $region13: #{tpu_custom_call.1} parent=1 // pred_fallthru
      _
    // Predicated region
    $region14: #{tpu_custom_call.1} parent=1 // pred_check
      _
    $region15: #{tpu_custom_call.1} parent=1 // pred_check_branch
      %71 = sbr.rel (0) target = $region17
    $region16: #{tpu_custom_call.1} parent=1 // pred_region
      _
    $region17: #{tpu_custom_call.1} parent=1 // pred_fallthru
      _
    // Predicated region
    $region18: #{tpu_custom_call.1} parent=1 // pred_check
      _
    $region19: #{tpu_custom_call.1} parent=1 // pred_check_branch
      %73 = sbr.rel (0) target = $region21
    $region20: #{tpu_custom_call.1} parent=1 // pred_region
      %75 = vsyncadd [#allocation11], 0
      %s76 = sshll.u32 %s4, 4
      %s77 = int_to_ptr.hbm [resolvable:$true] %s76
      %s78 = sshll.u32 [#allocation10], 4
      %s79 = int_to_ptr.vmem [resolvable:$true] %s78
      %84 = dma.hbm_to_vmem [thread:$0]  %s77, 256, %s79, [#allocation11], 64, 64, 4
    $region21: #{tpu_custom_call.1} parent=1 // pred_fallthru
      _
    // Predicated region
    $region22: #{tpu_custom_call.1} parent=1 // pred_check
      _
    $region23: #{tpu_custom_call.1} parent=1 // pred_check_branch
      %86 = sbr.rel (0) target = $region25
    $region24: #{tpu_custom_call.1} parent=1 // pred_region
      %88 = vsyncadd [#allocation11], 0
      %s89 = sshll.u32 %s5, 4
      %s90 = int_to_ptr.hbm [resolvable:$true] %s89
      %s91 = sshll.u32 [#allocation12], 4
      %s92 = int_to_ptr.vmem [resolvable:$true] %s91
      %97 = dma.hbm_to_vmem [thread:$0]  %s90, 128, %s92, [#allocation11], 64, 64, 4
    $region25: #{tpu_custom_call.1} parent=1 // pred_fallthru
      _
    // Predicated region
    $region26: #{tpu_custom_call.1} parent=1 // pred_check
      _
    $region27: #{tpu_custom_call.1} parent=1 // pred_check_branch
      %99 = sbr.rel (0) target = $region29
    $region28: #{tpu_custom_call.1} parent=1 // pred_region
      %101 = vsyncadd [#allocation14], 0
      %s102 = sshll.u32 %s6, 4
      %s103 = int_to_ptr.hbm [resolvable:$true] %s102
      %s104 = sshll.u32 [#allocation13], 4
      %s105 = int_to_ptr.vmem [resolvable:$true] %s104
      %110 = dma.hbm_to_vmem [thread:$0]  %s103, 128, %s105, [#allocation14], 64, 64, 4
    $region29: #{tpu_custom_call.1} parent=1 // pred_fallthru
      _
    // Predicated region
    $region30: #{tpu_custom_call.1} parent=1 // pred_check
      _
    $region31: #{tpu_custom_call.1} parent=1 // pred_check_branch
      %112 = sbr.rel (0) target = $region33
    $region32: #{tpu_custom_call.1} parent=1 // pred_region
      _
    $region33: #{tpu_custom_call.1} parent=1 // pred_fallthru
      _
    // Predicated region
    $region34: #{tpu_custom_call.1} parent=1 // pred_check
      _
    $region35: #{tpu_custom_call.1} parent=1 // pred_check_branch
      %114 = sbr.rel (0) target = $region37
    $region36: #{tpu_custom_call.1} parent=1 // pred_region
      %116 = vsyncadd [#allocation14], 0
      %s117 = sshll.u32 %s8, 4
      %s118 = int_to_ptr.hbm [resolvable:$true] %s117
      %s119 = sshll.u32 [#allocation15], 4
      %s120 = int_to_ptr.vmem [resolvable:$true] %s119
      %125 = dma.hbm_to_vmem [thread:$0]  %s118, 3072, %s120, [#allocation14], 128, 128, 8
    $region37: #{tpu_custom_call.1} parent=1 // pred_fallthru
      _
    // Predicated region
    $region38: #{tpu_custom_call.1} parent=1 // pred_check
      _
    $region39: #{tpu_custom_call.1} parent=1 // pred_check_branch
      %127 = sbr.rel (0) target = $region41
    $region40: #{tpu_custom_call.1} parent=1 // pred_region
      %129 = vsyncadd [#allocation17], 0
      %s130 = sshll.u32 %s9, 4
      %s131 = int_to_ptr.hbm [resolvable:$true] %s130
      %s132 = sshll.u32 [#allocation16], 4
      %s133 = int_to_ptr.vmem [resolvable:$true] %s132
      %138 = dma.hbm_to_vmem [thread:$0]  %s131, 28672, %s133, [#allocation17], 448, 448, 28
    $region41: #{tpu_custom_call.1} parent=1 // pred_fallthru
      _
    // Predicated region
    $region42: #{tpu_custom_call.1} parent=1 // pred_check
      _
    $region43: #{tpu_custom_call.1} parent=1 // pred_check_branch
      %140 = sbr.rel (0) target = $region45
    $region44: #{tpu_custom_call.1} parent=1 // pred_region
      _
    $region45: #{tpu_custom_call.1} parent=1 // pred_fallthru
      _
    // Predicated region
    $region46: #{tpu_custom_call.1} parent=1 // pred_check
      _
    $region47: #{tpu_custom_call.1} parent=1 // pred_check_branch
      %142 = sbr.rel (0) target = $region49
    $region48: #{tpu_custom_call.1} parent=1 // pred_region
      %144 = vsyncadd [#allocation17], 0
      %s145 = sshll.u32 %s11, 4
      %s146 = int_to_ptr.hbm [resolvable:$true] %s145
      %s147 = sshll.u32 [#allocation18], 4
      %s148 = int_to_ptr.vmem [resolvable:$true] %s147
      %153 = dma.hbm_to_vmem [thread:$0]  %s146, 14336, %s148, [#allocation17], 448, 448, 28
    $region49: #{tpu_custom_call.1} parent=1 // pred_fallthru
      _
    // Predicated region
    $region50: #{tpu_custom_call.1} parent=1 // pred_check
      _
    $region51: #{tpu_custom_call.1} parent=1 // pred_check_branch
      %155 = sbr.rel (0) target = $region53
    $region52: #{tpu_custom_call.1} parent=1 // pred_region
      %157 = vsyncadd [#allocation20], 0
      %s158 = sshll.u32 %s12, 4
      %s159 = int_to_ptr.hbm [resolvable:$true] %s158
      %s160 = sshll.u32 [#allocation19], 4
      %s161 = int_to_ptr.vmem [resolvable:$true] %s160
      %166 = dma.hbm_to_vmem [thread:$0]  %s159, 128, %s161, [#allocation20], 64, 64, 4
    $region53: #{tpu_custom_call.1} parent=1 // pred_fallthru
      _
    // Predicated region
    $region54: #{tpu_custom_call.1} parent=1 // pred_check
      _
    $region55: #{tpu_custom_call.1} parent=1 // pred_check_branch
      %168 = sbr.rel (0) target = $region57
    $region56: #{tpu_custom_call.1} parent=1 // pred_region
      %170 = vsyncadd [#allocation20], 0
      %s171 = sshll.u32 %s13, 4
      %s172 = int_to_ptr.hbm [resolvable:$true] %s171
      %s173 = sshll.u32 [#allocation21], 4
      %s174 = int_to_ptr.vmem [resolvable:$true] %s173
      %179 = dma.hbm_to_vmem [thread:$0]  %s172, 5120, %s174, [#allocation20], 64, 64, 4
    $region57: #{tpu_custom_call.1} parent=1 // pred_fallthru
      _
    // Predicated region
    $region58: #{tpu_custom_call.1} parent=1 // pred_check
      _
    $region59: #{tpu_custom_call.1} parent=1 // pred_check_branch
      %181 = sbr.rel (0) target = $region61
    $region60: #{tpu_custom_call.1} parent=1 // pred_region
      %183 = vsyncadd [#allocation23], 0
      %s184 = sshll.u32 %s14, 4
      %s185 = int_to_ptr.hbm [resolvable:$true] %s184
      %s186 = sshll.u32 [#allocation22], 4
      %s187 = int_to_ptr.vmem [resolvable:$true] %s186
      %192 = dma.hbm_to_vmem [thread:$0]  %s185, 256, %s187, [#allocation23], 128, 128, 8
    $region61: #{tpu_custom_call.1} parent=1 // pred_fallthru
      _
    // Predicated region
    $region62: #{tpu_custom_call.1} parent=1 // pred_check
      _
    $region63: #{tpu_custom_call.1} parent=1 // pred_check_branch
      %194 = sbr.rel (0) target = $region65
    $region64: #{tpu_custom_call.1} parent=1 // pred_region
      %196 = dma.done [#allocation5], 1024
    $region65: #{tpu_custom_call.1} parent=1 // pred_fallthru
      _
    // Predicated region
    $region66: #{tpu_custom_call.1} parent=1 // pred_check
      _
    $region67: #{tpu_custom_call.1} parent=1 // pred_check_branch
      %198 = sbr.rel (0) target = $region69
    $region68: #{tpu_custom_call.1} parent=1 // pred_region
      %200 = dma.done [#allocation8], 2048
    $region69: #{tpu_custom_call.1} parent=1 // pred_fallthru
      _
    // Predicated region
    $region70: #{tpu_custom_call.1} parent=1 // pred_check
      _
    $region71: #{tpu_custom_call.1} parent=1 // pred_check_branch
      %202 = sbr.rel (0) target = $region73
    $region72: #{tpu_custom_call.1} parent=1 // pred_region
      %204 = dma.done [#allocation8], 1024
    $region73: #{tpu_custom_call.1} parent=1 // pred_fallthru
      _
    // Predicated region
    $region74: #{tpu_custom_call.1} parent=1 // pred_check
      _
    $region75: #{tpu_custom_call.1} parent=1 // pred_check_branch
      %206 = sbr.rel (0) target = $region77
    $region76: #{tpu_custom_call.1} parent=1 // pred_region
      %208 = dma.done [#allocation11], 256
    $region77: #{tpu_custom_call.1} parent=1 // pred_fallthru
      _
    // Predicated region
    $region78: #{tpu_custom_call.1} parent=1 // pred_check
      _
    $region79: #{tpu_custom_call.1} parent=1 // pred_check_branch
      %210 = sbr.rel (0) target = $region81
    $region80: #{tpu_custom_call.1} parent=1 // pred_region
      %212 = dma.done [#allocation11], 128
    $region81: #{tpu_custom_call.1} parent=1 // pred_fallthru
      _
    // Predicated region
    $region82: #{tpu_custom_call.1} parent=1 // pred_check
      _
    $region83: #{tpu_custom_call.1} parent=1 // pred_check_branch
      %214 = sbr.rel (0) target = $region85
    $region84: #{tpu_custom_call.1} parent=1 // pred_region
      %216 = dma.done [#allocation14], 128
    $region85: #{tpu_custom_call.1} parent=1 // pred_fallthru
      _
    // Predicated region
    $region86: #{tpu_custom_call.1} parent=1 // pred_check
      _
    $region87: #{tpu_custom_call.1} parent=1 // pred_check_branch
      %218 = sbr.rel (0) target = $region89
    $region88: #{tpu_custom_call.1} parent=1 // pred_region
      %220 = dma.done [#allocation14], 3072
    $region89: #{tpu_custom_call.1} parent=1 // pred_fallthru
      _
    // Predicated region
    $region90: #{tpu_custom_call.1} parent=1 // pred_check
      _
    $region91: #{tpu_custom_call.1} parent=1 // pred_check_branch
      %222 = sbr.rel (0) target = $region93
    $region92: #{tpu_custom_call.1} parent=1 // pred_region
      %224 = dma.done [#allocation17], 28672
    $region93: #{tpu_custom_call.1} parent=1 // pred_fallthru
      _
    // Predicated region
    $region94: #{tpu_custom_call.1} parent=1 // pred_check
      _
    $region95: #{tpu_custom_call.1} parent=1 // pred_check_branch
      %226 = sbr.rel (0) target = $region97
    $region96: #{tpu_custom_call.1} parent=1 // pred_region
      %228 = dma.done [#allocation17], 14336
    $region97: #{tpu_custom_call.1} parent=1 // pred_fallthru
      _
    // Predicated region
    $region98: #{tpu_custom_call.1} parent=1 // pred_check
      _
    $region99: #{tpu_custom_call.1} parent=1 // pred_check_branch
      %230 = sbr.rel (0) target = $region101
    $region100: #{tpu_custom_call.1} parent=1 // pred_region
      %232 = dma.done [#allocation20], 128
    $region101: #{tpu_custom_call.1} parent=1 // pred_fallthru
      _
    // Predicated region
    $region102: #{tpu_custom_call.1} parent=1 // pred_check
      _
    $region103: #{tpu_custom_call.1} parent=1 // pred_check_branch
      %234 = sbr.rel (0) target = $region105
    $region104: #{tpu_custom_call.1} parent=1 // pred_region
      %236 = dma.done [#allocation20], 5120
    $region105: #{tpu_custom_call.1} parent=1 // pred_fallthru
      _
    // Predicated region
    $region106: #{tpu_custom_call.1} parent=1 // pred_check
      _
    $region107: #{tpu_custom_call.1} parent=1 // pred_check_branch
      %238 = sbr.rel (0) target = $region109
    $region108: #{tpu_custom_call.1} parent=1 // pred_region
      %240 = dma.done [#allocation23], 256
    $region109: #{tpu_custom_call.1} parent=1 // pred_fallthru
      _
    %v242 = vld [vmem:[#allocation9] sm:$0xf]
    %v243 = vld [vmem:[#allocation9 + $0x4] sm:$0xf]
    %v244 = vld [vmem:[#allocation9 + $0x8] sm:$0xf]
    %v245 = vld [vmem:[#allocation9 + $0xc] sm:$0xf]
    %v246 = vld [vmem:[#allocation9 + $0x10] sm:$0xf]
    %v247 = vld [vmem:[#allocation9 + $0x14] sm:$0xf]
    %v248 = vld [vmem:[#allocation9 + $0x18] sm:$0xf]
    %v249 = vld [vmem:[#allocation9 + $0x1c] sm:$0xf]
    %v250 = vld [vmem:[#allocation9 + $0x20] sm:$0xf]
    %v251 = vld [vmem:[#allocation9 + $0x24] sm:$0xf]
    %v252 = vld [vmem:[#allocation9 + $0x28] sm:$0xf]
    %v253 = vld [vmem:[#allocation9 + $0x2c] sm:$0xf]
    %v254 = vld [vmem:[#allocation9 + $0x30] sm:$0xf]
    %v255 = vld [vmem:[#allocation9 + $0x34] sm:$0xf]
    %v256 = vld [vmem:[#allocation9 + $0x38] sm:$0xf]
    %v257 = vld [vmem:[#allocation9 + $0x3c] sm:$0xf]
    %v258 = vld [vmem:[%s3] sm:$0xf]
    %v259 = vld [vmem:[%s3 + $0x4] sm:$0xf]
    %v260 = vld [vmem:[%s3 + $0x8] sm:$0xf]
    %v261 = vld [vmem:[%s3 + $0xc] sm:$0xf]
    %v262 = vld [vmem:[%s3 + $0x10] sm:$0xf]
    %v263 = vld [vmem:[%s3 + $0x14] sm:$0xf]
    %v264 = vld [vmem:[%s3 + $0x18] sm:$0xf]
    %v265 = vld [vmem:[%s3 + $0x1c] sm:$0xf]
    %v266 = vld [vmem:[#allocation10] sm:$0xf]
    %v267 = vld [vmem:[#allocation10 + $0x4] sm:$0xf]
    %v268 = vld [vmem:[#allocation10 + $0x8] sm:$0xf]
    %v269 = vld [vmem:[#allocation10 + $0xc] sm:$0xf]
    %v270 = vld [vmem:[#allocation12] sm:$0xf]
    %v271 = vld [vmem:[#allocation12 + $0x4] sm:$0xf]
    %v272 = vld [vmem:[#allocation15] sm:$0xff]
    %v273 = vld [vmem:[#allocation15 + $0x8] sm:$0xff]
    %v274 = vld [vmem:[#allocation15 + $0x10] sm:$0xff]
    %v275 = vld [vmem:[#allocation15 + $0x18] sm:$0xff]
    %v276 = vld [vmem:[#allocation15 + $0x20] sm:$0xff]
    %v277 = vld [vmem:[#allocation15 + $0x28] sm:$0xff]
    %v278 = vld [vmem:[#allocation15 + $0x30] sm:$0xff]
    %v279 = vld [vmem:[#allocation15 + $0x38] sm:$0xff]
    %v280 = vld [vmem:[#allocation15 + $0x40] sm:$0xff]
    %v281 = vld [vmem:[#allocation15 + $0x48] sm:$0xff]
    %v282 = vld [vmem:[#allocation15 + $0x50] sm:$0xff]
    %v283 = vld [vmem:[#allocation15 + $0x58] sm:$0xff]
    %v284 = vld [vmem:[#allocation15 + $0x60] sm:$0xff]
    %v285 = vld [vmem:[#allocation15 + $0x68] sm:$0xff]
    %v286 = vld [vmem:[#allocation15 + $0x70] sm:$0xff]
    %v287 = vld [vmem:[#allocation15 + $0x78] sm:$0xff]
    %v288 = vld [vmem:[#allocation15 + $0x80] sm:$0xff]
    %v289 = vld [vmem:[#allocation15 + $0x88] sm:$0xff]
    %v290 = vld [vmem:[#allocation15 + $0x90] sm:$0xff]
    %v291 = vld [vmem:[#allocation15 + $0x98] sm:$0xff]
    %v292 = vld [vmem:[#allocation15 + $0xa0] sm:$0xff]
    %v293 = vld [vmem:[#allocation15 + $0xa8] sm:$0xff]
    %v294 = vld [vmem:[#allocation15 + $0xb0] sm:$0xff]
    %v295 = vld [vmem:[#allocation15 + $0xb8] sm:$0xff]
    %v296 = vld [vmem:[#allocation4] sm:$0xff]
    %v297 = vld [vmem:[#allocation4 + $0x8] sm:$0xff]
    %v298 = vld [vmem:[#allocation4 + $0x10] sm:$0xff]
    %v299 = vld [vmem:[#allocation4 + $0x18] sm:$0xff]
    %v300 = vld [vmem:[#allocation4 + $0x20] sm:$0xff]
    %v301 = vld [vmem:[#allocation4 + $0x28] sm:$0xff]
    %v302 = vld [vmem:[#allocation4 + $0x30] sm:$0xff]
    %v303 = vld [vmem:[#allocation4 + $0x38] sm:$0xff]
    %v304 = vld [vmem:[#allocation7] sm:$0xff]
    %v305 = vld [vmem:[#allocation7 + $0x8] sm:$0xff]
    %v306 = vld [vmem:[#allocation7 + $0x10] sm:$0xff]
    %v307 = vld [vmem:[#allocation7 + $0x18] sm:$0xff]
    %v308 = vld [vmem:[#allocation7 + $0x20] sm:$0xff]
    %v309 = vld [vmem:[#allocation7 + $0x28] sm:$0xff]
    %v310 = vld [vmem:[#allocation7 + $0x30] sm:$0xff]
    %v311 = vld [vmem:[#allocation7 + $0x38] sm:$0xff]
    %v312 = vld [vmem:[#allocation7 + $0x40] sm:$0xff]
    %v313 = vld [vmem:[#allocation7 + $0x48] sm:$0xff]
    %v314 = vld [vmem:[#allocation7 + $0x50] sm:$0xff]
    %v315 = vld [vmem:[#allocation7 + $0x58] sm:$0xff]
    %v316 = vld [vmem:[#allocation7 + $0x60] sm:$0xff]
    %v317 = vld [vmem:[#allocation7 + $0x68] sm:$0xff]
    %v318 = vld [vmem:[#allocation7 + $0x70] sm:$0xff]
    %v319 = vld [vmem:[#allocation7 + $0x78] sm:$0xff]
    %v320 = vpack.c.bf16 %v297, %v296
    %v321 = vpack.c.bf16 %v299, %v298
    %v322 = vpack.c.bf16 %v301, %v300
    %v323 = vpack.c.bf16 %v303, %v302
    %v324 = vpack.c.bf16 %v305, %v304
    %v325 = vpack.c.bf16 %v307, %v306
    %v326 = vpack.c.bf16 %v309, %v308
    %v327 = vpack.c.bf16 %v311, %v310
    %v328 = vpack.c.bf16 %v313, %v312
    %v329 = vpack.c.bf16 %v315, %v314
    %v330 = vpack.c.bf16 %v317, %v316
    %v331 = vpack.c.bf16 %v319, %v318
    %v332 = vld [vmem:[%s10] sm:$0xf]
    %v333 = vld [vmem:[#allocation16] sm:$0xff]
    %v334 = vld [vmem:[#allocation16 + $0x1c] sm:$0xff]
    %v335 = vld [vmem:[#allocation16 + $0x38] sm:$0xff]
    %v336 = vld [vmem:[#allocation16 + $0x54] sm:$0xff]
    %v337 = vld [vmem:[#allocation16 + $0x70] sm:$0xff]
    %v338 = vld [vmem:[#allocation16 + $0x8c] sm:$0xff]
    %v339 = vld [vmem:[#allocation16 + $0xa8] sm:$0xff]
    %v340 = vld [vmem:[#allocation16 + $0xc4] sm:$0xff]
    %v341 = vld [vmem:[#allocation16 + $0xe0] sm:$0xff]
    %v342 = vld [vmem:[#allocation16 + $0xfc] sm:$0xff]
    %v343 = vld [vmem:[#allocation16 + $0x118] sm:$0xff]
    %v344 = vld [vmem:[#allocation16 + $0x134] sm:$0xff]
    %v345 = vld [vmem:[#allocation16 + $0x150] sm:$0xff]
    %v346 = vld [vmem:[#allocation16 + $0x16c] sm:$0xff]
    %v347 = vld [vmem:[#allocation16 + $0x188] sm:$0xff]
    %v348 = vld [vmem:[#allocation16 + $0x1a4] sm:$0xff]
    %v365 = vunpack.c.l.b16 %v333
    %v366 = vunpack.c.h.b16 %v333
    %v367 = vunpack.c.l.b16 %v334
    %v368 = vunpack.c.h.b16 %v334
    %v369 = vunpack.c.l.b16 %v335
    %v370 = vunpack.c.h.b16 %v335
    %v371 = vunpack.c.l.b16 %v336
    %v372 = vunpack.c.h.b16 %v336
    %v373 = vunpack.c.l.b16 %v337
    %v374 = vunpack.c.h.b16 %v337
    %v375 = vunpack.c.l.b16 %v338
    %v376 = vunpack.c.h.b16 %v338
    %v377 = vunpack.c.l.b16 %v339
    %v378 = vunpack.c.h.b16 %v339
    %v379 = vunpack.c.l.b16 %v340
    %v380 = vunpack.c.h.b16 %v340
    %v381 = vunpack.c.l.b16 %v341
    %v382 = vunpack.c.h.b16 %v341
    %v383 = vunpack.c.l.b16 %v342
    %v384 = vunpack.c.h.b16 %v342
    %v385 = vunpack.c.l.b16 %v343
    %v386 = vunpack.c.h.b16 %v343
    %v387 = vunpack.c.l.b16 %v344
    %v388 = vunpack.c.h.b16 %v344
    %v389 = vunpack.c.l.b16 %v345
    %v390 = vunpack.c.h.b16 %v345
    %v391 = vunpack.c.l.b16 %v346
    %v392 = vunpack.c.h.b16 %v346
    %v393 = vunpack.c.l.b16 %v347
    %v394 = vunpack.c.h.b16 %v347
    %v395 = vunpack.c.l.b16 %v348
    %v396 = vunpack.c.h.b16 %v348
    %v397 = vpack.c.b16 %v367, %v365
    %v398 = vpack.c.b16 %v368, %v366
    %v399 = vpack.c.b16 %v371, %v369
    %v400 = vpack.c.b16 %v372, %v370
    %v401 = vpack.c.b16 %v375, %v373
    %v402 = vpack.c.b16 %v376, %v374
    %v403 = vpack.c.b16 %v379, %v377
    %v404 = vpack.c.b16 %v380, %v378
    %v405 = vpack.c.b16 %v383, %v381
    %v406 = vpack.c.b16 %v384, %v382
    %v407 = vpack.c.b16 %v387, %v385
    %v408 = vpack.c.b16 %v388, %v386
    %v409 = vpack.c.b16 %v391, %v389
    %v410 = vpack.c.b16 %v392, %v390
    %v411 = vpack.c.b16 %v395, %v393
    %v412 = vpack.c.b16 %v396, %v394
    %429 = vmatpush.bf16.msra.mxu0 %v411
    %430 = vmatpush.bf16.msra.mxu0 %v409
    %431 = vmatpush.bf16.msra.mxu0 %v407
    %432 = vmatpush.bf16.msra.mxu0 %v405
    %433 = vmatpush.bf16.msra.mxu0 %v403
    %434 = vmatpush.bf16.msra.mxu0 %v401
    %435 = vmatpush.bf16.msra.mxu0 %v399
    %436 = vmatpush.bf16.msra.mxu0 %v397
    %437 = vmatmul.bf16.gmra.mxu0 %v320
    %v438 = vpop.f32.mrf.mxu0
    %v439 = vadd.f32 0.0, %v438
    %v440 = vpop.f32.mrf.mxu0
    %v441 = vadd.f32 0.0, %v440
    %442 = vmatmul.bf16.gmra.mxu0 %v321
    %v443 = vpop.f32.mrf.mxu0
    %v444 = vadd.f32 0.0, %v443
    %v445 = vpop.f32.mrf.mxu0
    %v446 = vadd.f32 0.0, %v445
    %447 = vmatmul.bf16.gmra.mxu0 %v322
    %v448 = vpop.f32.mrf.mxu0
    %v449 = vadd.f32 0.0, %v448
    %v450 = vpop.f32.mrf.mxu0
    %v451 = vadd.f32 0.0, %v450
    %452 = vmatmul.bf16.gmra.mxu0 %v323
    %v453 = vpop.f32.mrf.mxu0
    %v454 = vadd.f32 0.0, %v453
    %v455 = vpop.f32.mrf.mxu0
    %v456 = vadd.f32 0.0, %v455
    %457 = vdwg.mxu0
    %458 = vmatpush.bf16.msra.mxu0 %v412
    %459 = vmatpush.bf16.msra.mxu0 %v410
    %460 = vmatpush.bf16.msra.mxu0 %v408
    %461 = vmatpush.bf16.msra.mxu0 %v406
    %462 = vmatpush.bf16.msra.mxu0 %v404
    %463 = vmatpush.bf16.msra.mxu0 %v402
    %464 = vmatpush.bf16.msra.mxu0 %v400
    %465 = vmatpush.bf16.msra.mxu0 %v398
    %466 = vmatmul.bf16.gmra.mxu0 %v320
    %v467 = vpop.f32.mrf.mxu0
    %v468 = vadd.f32 0.0, %v467
    %v469 = vpop.f32.mrf.mxu0
    %v470 = vadd.f32 0.0, %v469
    %471 = vmatmul.bf16.gmra.mxu0 %v321
    %v472 = vpop.f32.mrf.mxu0
    %v473 = vadd.f32 0.0, %v472
    %v474 = vpop.f32.mrf.mxu0
    %v475 = vadd.f32 0.0, %v474
    %476 = vmatmul.bf16.gmra.mxu0 %v322
    %v477 = vpop.f32.mrf.mxu0
    %v478 = vadd.f32 0.0, %v477
    %v479 = vpop.f32.mrf.mxu0
    %v480 = vadd.f32 0.0, %v479
    %481 = vmatmul.bf16.gmra.mxu0 %v323
    %v482 = vpop.f32.mrf.mxu0
    %v483 = vadd.f32 0.0, %v482
    %v484 = vpop.f32.mrf.mxu0
    %v485 = vadd.f32 0.0, %v484
    %486 = vdwg.mxu0
    %v487 = vpack.c.bf16 %v468, %v439
    %v488 = vpack.c.bf16 %v470, %v441
    %v489 = vpack.c.bf16 %v473, %v444
    %v490 = vpack.c.bf16 %v475, %v446
    %v491 = vpack.c.bf16 %v478, %v449
    %v492 = vpack.c.bf16 %v480, %v451
    %v493 = vpack.c.bf16 %v483, %v454
    %v494 = vpack.c.bf16 %v485, %v456
    %v503 = vunpack.c.l.b16 %v487
    %v504 = vunpack.c.l.b16 %v488
    %v505 = vunpack.c.l.b16 %v489
    %v506 = vunpack.c.l.b16 %v490
    %v507 = vunpack.c.l.b16 %v491
    %v508 = vunpack.c.l.b16 %v492
    %v509 = vunpack.c.l.b16 %v493
    %v510 = vunpack.c.l.b16 %v494
    %v511 = vpack.c.b16 %v504, %v503
    %v512 = vpack.c.b16 %v506, %v505
    %v513 = vpack.c.b16 %v508, %v507
    %v514 = vpack.c.b16 %v510, %v509
    %v519 = vunpack.c.h.b16 %v487
    %v520 = vunpack.c.h.b16 %v488
    %v521 = vunpack.c.h.b16 %v489
    %v522 = vunpack.c.h.b16 %v490
    %v523 = vunpack.c.h.b16 %v491
    %v524 = vunpack.c.h.b16 %v492
    %v525 = vunpack.c.h.b16 %v493
    %v526 = vunpack.c.h.b16 %v494
    %v527 = vpack.c.b16 %v520, %v519
    %v528 = vpack.c.b16 %v522, %v521
    %v529 = vpack.c.b16 %v524, %v523
    %v530 = vpack.c.b16 %v526, %v525
    %v535 = vld [vmem:[#allocation16 + $0x8] sm:$0xf]
    %v536 = vld [vmem:[#allocation16 + $0x24] sm:$0xf]
    %v537 = vld [vmem:[#allocation16 + $0x40] sm:$0xf]
    %v538 = vld [vmem:[#allocation16 + $0x5c] sm:$0xf]
    %v539 = vld [vmem:[#allocation16 + $0x78] sm:$0xf]
    %v540 = vld [vmem:[#allocation16 + $0x94] sm:$0xf]
    %v541 = vld [vmem:[#allocation16 + $0xb0] sm:$0xf]
    %v542 = vld [vmem:[#allocation16 + $0xcc] sm:$0xf]
    %v543 = vld [vmem:[#allocation16 + $0xe8] sm:$0xf]
    %v544 = vld [vmem:[#allocation16 + $0x104] sm:$0xf]
    %v545 = vld [vmem:[#allocation16 + $0x120] sm:$0xf]
    %v546 = vld [vmem:[#allocation16 + $0x13c] sm:$0xf]
    %v547 = vld [vmem:[#allocation16 + $0x158] sm:$0xf]
    %v548 = vld [vmem:[#allocation16 + $0x174] sm:$0xf]
    %v549 = vld [vmem:[#allocation16 + $0x190] sm:$0xf]
    %v550 = vld [vmem:[#allocation16 + $0x1ac] sm:$0xf]
    %v567 = vunpack.c.l.b16 %v535
    %v568 = vunpack.c.l.b16 %v536
    %v569 = vunpack.c.l.b16 %v537
    %v570 = vunpack.c.l.b16 %v538
    %v571 = vunpack.c.l.b16 %v539
    %v572 = vunpack.c.l.b16 %v540
    %v573 = vunpack.c.l.b16 %v541
    %v574 = vunpack.c.l.b16 %v542
    %v575 = vunpack.c.l.b16 %v543
    %v576 = vunpack.c.l.b16 %v544
    %v577 = vunpack.c.l.b16 %v545
    %v578 = vunpack.c.l.b16 %v546
    %v579 = vunpack.c.l.b16 %v547
    %v580 = vunpack.c.l.b16 %v548
    %v581 = vunpack.c.l.b16 %v549
    %v582 = vunpack.c.l.b16 %v550
    %v583 = vpack.c.b16 %v568, %v567
    %v584 = vpack.c.b16 %v570, %v569
    %v585 = vpack.c.b16 %v572, %v571
    %v586 = vpack.c.b16 %v574, %v573
    %v587 = vpack.c.b16 %v576, %v575
    %v588 = vpack.c.b16 %v578, %v577
    %v589 = vpack.c.b16 %v580, %v579
    %v590 = vpack.c.b16 %v582, %v581
    %599 = vmatpush.bf16.msra.mxu0 %v590
    %600 = vmatpush.bf16.msra.mxu0 %v589
    %601 = vmatpush.bf16.msra.mxu0 %v588
    %602 = vmatpush.bf16.msra.mxu0 %v587
    %603 = vmatpush.bf16.msra.mxu0 %v586
    %604 = vmatpush.bf16.msra.mxu0 %v585
    %605 = vmatpush.bf16.msra.mxu0 %v584
    %606 = vmatpush.bf16.msra.mxu0 %v583
    %607 = vmatmul.bf16.gmra.mxu0 %v324
    %v608 = vpop.f32.mrf.mxu0
    %v609 = vadd.f32 0.0, %v608
    %v610 = vpop.f32.mrf.mxu0
    %v611 = vadd.f32 0.0, %v610
    %612 = vmatmul.bf16.gmra.mxu0 %v325
    %v613 = vpop.f32.mrf.mxu0
    %v614 = vadd.f32 0.0, %v613
    %v615 = vpop.f32.mrf.mxu0
    %v616 = vadd.f32 0.0, %v615
    %617 = vmatmul.bf16.gmra.mxu0 %v326
    %v618 = vpop.f32.mrf.mxu0
    %v619 = vadd.f32 0.0, %v618
    %v620 = vpop.f32.mrf.mxu0
    %v621 = vadd.f32 0.0, %v620
    %622 = vmatmul.bf16.gmra.mxu0 %v327
    %v623 = vpop.f32.mrf.mxu0
    %v624 = vadd.f32 0.0, %v623
    %v625 = vpop.f32.mrf.mxu0
    %v626 = vadd.f32 0.0, %v625
    %627 = vmatmul.bf16.gmra.mxu0 %v328
    %v628 = vpop.f32.mrf.mxu0
    %v629 = vadd.f32 0.0, %v628
    %v630 = vpop.f32.mrf.mxu0
    %v631 = vadd.f32 0.0, %v630
    %632 = vmatmul.bf16.gmra.mxu0 %v329
    %v633 = vpop.f32.mrf.mxu0
    %v634 = vadd.f32 0.0, %v633
    %v635 = vpop.f32.mrf.mxu0
    %v636 = vadd.f32 0.0, %v635
    %637 = vmatmul.bf16.gmra.mxu0 %v330
    %v638 = vpop.f32.mrf.mxu0
    %v639 = vadd.f32 0.0, %v638
    %v640 = vpop.f32.mrf.mxu0
    %v641 = vadd.f32 0.0, %v640
    %642 = vmatmul.bf16.gmra.mxu0 %v331
    %v643 = vpop.f32.mrf.mxu0
    %v644 = vadd.f32 0.0, %v643
    %v645 = vpop.f32.mrf.mxu0
    %v646 = vadd.f32 0.0, %v645
    %647 = vdwg.mxu0
    %v664 = vunpack.c.l.b16 %v242
    %v665 = vunpack.c.l.b16 %v243
    %v666 = vunpack.c.l.b16 %v244
    %v667 = vunpack.c.l.b16 %v245
    %v668 = vunpack.c.l.b16 %v246
    %v669 = vunpack.c.l.b16 %v247
    %v670 = vunpack.c.l.b16 %v248
    %v671 = vunpack.c.l.b16 %v249
    %v672 = vunpack.c.l.b16 %v250
    %v673 = vunpack.c.l.b16 %v251
    %v674 = vunpack.c.l.b16 %v252
    %v675 = vunpack.c.l.b16 %v253
    %v676 = vunpack.c.l.b16 %v254
    %v677 = vunpack.c.l.b16 %v255
    %v678 = vunpack.c.l.b16 %v256
    %v679 = vunpack.c.l.b16 %v257
    %v680 = vpack.c.b16 %v665, %v664
    %v681 = vpack.c.b16 %v667, %v666
    %v682 = vpack.c.b16 %v669, %v668
    %v683 = vpack.c.b16 %v671, %v670
    %v684 = vpack.c.b16 %v673, %v672
    %v685 = vpack.c.b16 %v675, %v674
    %v686 = vpack.c.b16 %v677, %v676
    %v687 = vpack.c.b16 %v679, %v678
    %696 = vmatpush.bf16.msra.mxu0 %v530
    %697 = vmatpush.bf16.msra.mxu0 %v529
    %698 = vmatpush.bf16.msra.mxu0 %v528
    %699 = vmatpush.bf16.msra.mxu0 %v527
    %700 = vmatpush.bf16.msra.mxu0 %v514
    %701 = vmatpush.bf16.msra.mxu0 %v513
    %702 = vmatpush.bf16.msra.mxu0 %v512
    %703 = vmatpush.bf16.msra.mxu0 %v511
    %704 = vmatmul.bf16.gmra.mxu0 %v680
    %v705 = vpop.f32.mrf.mxu0
    %v706 = vadd.f32 %v609, %v705
    %v707 = vpop.f32.mrf.mxu0
    %v708 = vadd.f32 %v611, %v707
    %709 = vmatmul.bf16.gmra.mxu0 %v681
    %v710 = vpop.f32.mrf.mxu0
    %v711 = vadd.f32 %v614, %v710
    %v712 = vpop.f32.mrf.mxu0
    %v713 = vadd.f32 %v616, %v712
    %714 = vmatmul.bf16.gmra.mxu0 %v682
    %v715 = vpop.f32.mrf.mxu0
    %v716 = vadd.f32 %v619, %v715
    %v717 = vpop.f32.mrf.mxu0
    %v718 = vadd.f32 %v621, %v717
    %719 = vmatmul.bf16.gmra.mxu0 %v683
    %v720 = vpop.f32.mrf.mxu0
    %v721 = vadd.f32 %v624, %v720
    %v722 = vpop.f32.mrf.mxu0
    %v723 = vadd.f32 %v626, %v722
    %724 = vmatmul.bf16.gmra.mxu0 %v684
    %v725 = vpop.f32.mrf.mxu0
    %v726 = vadd.f32 %v629, %v725
    %v727 = vpop.f32.mrf.mxu0
    %v728 = vadd.f32 %v631, %v727
    %729 = vmatmul.bf16.gmra.mxu0 %v685
    %v730 = vpop.f32.mrf.mxu0
    %v731 = vadd.f32 %v634, %v730
    %v732 = vpop.f32.mrf.mxu0
    %v733 = vadd.f32 %v636, %v732
    %734 = vmatmul.bf16.gmra.mxu0 %v686
    %v735 = vpop.f32.mrf.mxu0
    %v736 = vadd.f32 %v639, %v735
    %v737 = vpop.f32.mrf.mxu0
    %v738 = vadd.f32 %v641, %v737
    %739 = vmatmul.bf16.gmra.mxu0 %v687
    %v740 = vpop.f32.mrf.mxu0
    %v741 = vadd.f32 %v644, %v740
    %v742 = vpop.f32.mrf.mxu0
    %v743 = vadd.f32 %v646, %v742
    %744 = vdwg.mxu0
    %v745 = vperm.slane %v332, 0
    %v746 = vadd.f32 %v706, %v745
    %v747 = vadd.f32 %v708, %v745
    %v748 = vadd.f32 %v711, %v745
    %v749 = vadd.f32 %v713, %v745
    %v750 = vadd.f32 %v716, %v745
    %v751 = vadd.f32 %v718, %v745
    %v752 = vadd.f32 %v721, %v745
    %v753 = vadd.f32 %v723, %v745
    %v754 = vadd.f32 %v726, %v745
    %v755 = vadd.f32 %v728, %v745
    %v756 = vadd.f32 %v731, %v745
    %v757 = vadd.f32 %v733, %v745
    %v758 = vadd.f32 %v736, %v745
    %v759 = vadd.f32 %v738, %v745
    %v760 = vadd.f32 %v741, %v745
    %v761 = vadd.f32 %v743, %v745
    %vm762 = vcmp.gt.f32.partialorder %v746, 0.0
    %vm763 = vcmp.gt.f32.partialorder %v747, 0.0
    %vm764 = vcmp.gt.f32.partialorder %v748, 0.0
    %vm765 = vcmp.gt.f32.partialorder %v749, 0.0
    %vm766 = vcmp.gt.f32.partialorder %v750, 0.0
    %vm767 = vcmp.gt.f32.partialorder %v751, 0.0
    %vm768 = vcmp.gt.f32.partialorder %v752, 0.0
    %vm769 = vcmp.gt.f32.partialorder %v753, 0.0
    %vm770 = vcmp.gt.f32.partialorder %v754, 0.0
    %vm771 = vcmp.gt.f32.partialorder %v755, 0.0
    %vm772 = vcmp.gt.f32.partialorder %v756, 0.0
    %vm773 = vcmp.gt.f32.partialorder %v757, 0.0
    %vm774 = vcmp.gt.f32.partialorder %v758, 0.0
    %vm775 = vcmp.gt.f32.partialorder %v759, 0.0
    %vm776 = vcmp.gt.f32.partialorder %v760, 0.0
    %vm777 = vcmp.gt.f32.partialorder %v761, 0.0
    %v778 = vmul.f32 %v746, 1.442695
    %v779 = vpow.pop %v778
    %v780 = vmul.f32 %v747, 1.442695
    %v781 = vpow.pop %v780
    %v782 = vmul.f32 %v748, 1.442695
    %v783 = vpow.pop %v782
    %v784 = vmul.f32 %v749, 1.442695
    %v785 = vpow.pop %v784
    %v786 = vmul.f32 %v750, 1.442695
    %v787 = vpow.pop %v786
    %v788 = vmul.f32 %v751, 1.442695
    %v789 = vpow.pop %v788
    %v790 = vmul.f32 %v752, 1.442695
    %v791 = vpow.pop %v790
    %v792 = vmul.f32 %v753, 1.442695
    %v793 = vpow.pop %v792
    %v794 = vmul.f32 %v754, 1.442695
    %v795 = vpow.pop %v794
    %v796 = vmul.f32 %v755, 1.442695
    %v797 = vpow.pop %v796
    %v798 = vmul.f32 %v756, 1.442695
    %v799 = vpow.pop %v798
    %v800 = vmul.f32 %v757, 1.442695
    %v801 = vpow.pop %v800
    %v802 = vmul.f32 %v758, 1.442695
    %v803 = vpow.pop %v802
    %v804 = vmul.f32 %v759, 1.442695
    %v805 = vpow.pop %v804
    %v806 = vmul.f32 %v760, 1.442695
    %v807 = vpow.pop %v806
    %v808 = vmul.f32 %v761, 1.442695
    %v809 = vpow.pop %v808
    %v810 = vsub.f32 %v779, 1.0
    %v811 = vsub.f32 %v781, 1.0
    %v812 = vsub.f32 %v783, 1.0
    %v813 = vsub.f32 %v785, 1.0
    %v814 = vsub.f32 %v787, 1.0
    %v815 = vsub.f32 %v789, 1.0
    %v816 = vsub.f32 %v791, 1.0
    %v817 = vsub.f32 %v793, 1.0
    %v818 = vsub.f32 %v795, 1.0
    %v819 = vsub.f32 %v797, 1.0
    %v820 = vsub.f32 %v799, 1.0
    %v821 = vsub.f32 %v801, 1.0
    %v822 = vsub.f32 %v803, 1.0
    %v823 = vsub.f32 %v805, 1.0
    %v824 = vsub.f32 %v807, 1.0
    %v825 = vsub.f32 %v809, 1.0
    %v826 = vmul.f32 %v810, 1.6732632
    %v827 = vmul.f32 %v811, 1.6732632
    %v828 = vmul.f32 %v812, 1.6732632
    %v829 = vmul.f32 %v813, 1.6732632
    %v830 = vmul.f32 %v814, 1.6732632
    %v831 = vmul.f32 %v815, 1.6732632
    %v832 = vmul.f32 %v816, 1.6732632
    %v833 = vmul.f32 %v817, 1.6732632
    %v834 = vmul.f32 %v818, 1.6732632
    %v835 = vmul.f32 %v819, 1.6732632
    %v836 = vmul.f32 %v820, 1.6732632
    %v837 = vmul.f32 %v821, 1.6732632
    %v838 = vmul.f32 %v822, 1.6732632
    %v839 = vmul.f32 %v823, 1.6732632
    %v840 = vmul.f32 %v824, 1.6732632
    %v841 = vmul.f32 %v825, 1.6732632
    %v842 = vsel %vm762, %v746, %v826
    %v843 = vsel %vm763, %v747, %v827
    %v844 = vsel %vm764, %v748, %v828
    %v845 = vsel %vm765, %v749, %v829
    %v846 = vsel %vm766, %v750, %v830
    %v847 = vsel %vm767, %v751, %v831
    %v848 = vsel %vm768, %v752, %v832
    %v849 = vsel %vm769, %v753, %v833
    %v850 = vsel %vm770, %v754, %v834
    %v851 = vsel %vm771, %v755, %v835
    %v852 = vsel %vm772, %v756, %v836
    %v853 = vsel %vm773, %v757, %v837
    %v854 = vsel %vm774, %v758, %v838
    %v855 = vsel %vm775, %v759, %v839
    %v856 = vsel %vm776, %v760, %v840
    %v857 = vsel %vm777, %v761, %v841
    %v858 = vmul.f32 %v842, 1.050701
    %v859 = vmul.f32 %v843, 1.050701
    %v860 = vmul.f32 %v844, 1.050701
    %v861 = vmul.f32 %v845, 1.050701
    %v862 = vmul.f32 %v846, 1.050701
    %v863 = vmul.f32 %v847, 1.050701
    %v864 = vmul.f32 %v848, 1.050701
    %v865 = vmul.f32 %v849, 1.050701
    %v866 = vmul.f32 %v850, 1.050701
    %v867 = vmul.f32 %v851, 1.050701
    %v868 = vmul.f32 %v852, 1.050701
    %v869 = vmul.f32 %v853, 1.050701
    %v870 = vmul.f32 %v854, 1.050701
    %v871 = vmul.f32 %v855, 1.050701
    %v872 = vmul.f32 %v856, 1.050701
    %v873 = vmul.f32 %v857, 1.050701
    %v874 = vpack.c.bf16 %v859, %v858
    %v875 = vpack.c.bf16 %v861, %v860
    %v876 = vpack.c.bf16 %v863, %v862
    %v877 = vpack.c.bf16 %v865, %v864
    %v878 = vpack.c.bf16 %v867, %v866
    %v879 = vpack.c.bf16 %v869, %v868
    %v880 = vpack.c.bf16 %v871, %v870
    %v881 = vpack.c.bf16 %v873, %v872
    %v882 = vld [vmem:[#allocation16 + $0xc] sm:$0xf]
    %v883 = vld [vmem:[#allocation16 + $0x28] sm:$0xf]
    %v884 = vld [vmem:[#allocation16 + $0x44] sm:$0xf]
    %v885 = vld [vmem:[#allocation16 + $0x60] sm:$0xf]
    %v886 = vld [vmem:[#allocation16 + $0x7c] sm:$0xf]
    %v887 = vld [vmem:[#allocation16 + $0x98] sm:$0xf]
    %v888 = vld [vmem:[#allocation16 + $0xb4] sm:$0xf]
    %v889 = vld [vmem:[#allocation16 + $0xd0] sm:$0xf]
    %v890 = vld [vmem:[#allocation16 + $0xec] sm:$0xf]
    %v891 = vld [vmem:[#allocation16 + $0x108] sm:$0xf]
    %v892 = vld [vmem:[#allocation16 + $0x124] sm:$0xf]
    %v893 = vld [vmem:[#allocation16 + $0x140] sm:$0xf]
    %v894 = vld [vmem:[#allocation16 + $0x15c] sm:$0xf]
    %v895 = vld [vmem:[#allocation16 + $0x178] sm:$0xf]
    %v896 = vld [vmem:[#allocation16 + $0x194] sm:$0xf]
    %v897 = vld [vmem:[#allocation16 + $0x1b0] sm:$0xf]
    %v914 = vunpack.c.l.b16 %v882
    %v915 = vunpack.c.l.b16 %v883
    %v916 = vunpack.c.l.b16 %v884
    %v917 = vunpack.c.l.b16 %v885
    %v918 = vunpack.c.l.b16 %v886
    %v919 = vunpack.c.l.b16 %v887
    %v920 = vunpack.c.l.b16 %v888
    %v921 = vunpack.c.l.b16 %v889
    %v922 = vunpack.c.l.b16 %v890
    %v923 = vunpack.c.l.b16 %v891
    %v924 = vunpack.c.l.b16 %v892
    %v925 = vunpack.c.l.b16 %v893
    %v926 = vunpack.c.l.b16 %v894
    %v927 = vunpack.c.l.b16 %v895
    %v928 = vunpack.c.l.b16 %v896
    %v929 = vunpack.c.l.b16 %v897
    %v930 = vpack.c.b16 %v915, %v914
    %v931 = vpack.c.b16 %v917, %v916
    %v932 = vpack.c.b16 %v919, %v918
    %v933 = vpack.c.b16 %v921, %v920
    %v934 = vpack.c.b16 %v923, %v922
    %v935 = vpack.c.b16 %v925, %v924
    %v936 = vpack.c.b16 %v927, %v926
    %v937 = vpack.c.b16 %v929, %v928
    %946 = vmatpush.bf16.msra.mxu0 %v937
    %947 = vmatpush.bf16.msra.mxu0 %v936
    %948 = vmatpush.bf16.msra.mxu0 %v935
    %949 = vmatpush.bf16.msra.mxu0 %v934
    %950 = vmatpush.bf16.msra.mxu0 %v933
    %951 = vmatpush.bf16.msra.mxu0 %v932
    %952 = vmatpush.bf16.msra.mxu0 %v931
    %953 = vmatpush.bf16.msra.mxu0 %v930
    %954 = vmatmul.bf16.gmra.mxu0 %v874
    %v955 = vpop.f32.mrf.mxu0
    %v956 = vadd.f32 0.0, %v955
    %v957 = vpop.f32.mrf.mxu0
    %v958 = vadd.f32 0.0, %v957
    %959 = vmatmul.bf16.gmra.mxu0 %v875
    %v960 = vpop.f32.mrf.mxu0
    %v961 = vadd.f32 0.0, %v960
    %v962 = vpop.f32.mrf.mxu0
    %v963 = vadd.f32 0.0, %v962
    %964 = vmatmul.bf16.gmra.mxu0 %v876
    %v965 = vpop.f32.mrf.mxu0
    %v966 = vadd.f32 0.0, %v965
    %v967 = vpop.f32.mrf.mxu0
    %v968 = vadd.f32 0.0, %v967
    %969 = vmatmul.bf16.gmra.mxu0 %v877
    %v970 = vpop.f32.mrf.mxu0
    %v971 = vadd.f32 0.0, %v970
    %v972 = vpop.f32.mrf.mxu0
    %v973 = vadd.f32 0.0, %v972
    %974 = vmatmul.bf16.gmra.mxu0 %v878
    %v975 = vpop.f32.mrf.mxu0
    %v976 = vadd.f32 0.0, %v975
    %v977 = vpop.f32.mrf.mxu0
    %v978 = vadd.f32 0.0, %v977
    %979 = vmatmul.bf16.gmra.mxu0 %v879
    %v980 = vpop.f32.mrf.mxu0
    %v981 = vadd.f32 0.0, %v980
    %v982 = vpop.f32.mrf.mxu0
    %v983 = vadd.f32 0.0, %v982
    %984 = vmatmul.bf16.gmra.mxu0 %v880
    %v985 = vpop.f32.mrf.mxu0
    %v986 = vadd.f32 0.0, %v985
    %v987 = vpop.f32.mrf.mxu0
    %v988 = vadd.f32 0.0, %v987
    %989 = vmatmul.bf16.gmra.mxu0 %v881
    %v990 = vpop.f32.mrf.mxu0
    %v991 = vadd.f32 0.0, %v990
    %v992 = vpop.f32.mrf.mxu0
    %v993 = vadd.f32 0.0, %v992
    %994 = vdwg.mxu0
    %v995 = vadd.f32 %v304, %v956
    %v996 = vadd.f32 %v305, %v958
    %v997 = vadd.f32 %v306, %v961
    %v998 = vadd.f32 %v307, %v963
    %v999 = vadd.f32 %v308, %v966
    %v1000 = vadd.f32 %v309, %v968
    %v1001 = vadd.f32 %v310, %v971
    %v1002 = vadd.f32 %v311, %v973
    %v1003 = vadd.f32 %v312, %v976
    %v1004 = vadd.f32 %v313, %v978
    %v1005 = vadd.f32 %v314, %v981
    %v1006 = vadd.f32 %v315, %v983
    %v1007 = vadd.f32 %v316, %v986
    %v1008 = vadd.f32 %v317, %v988
    %v1009 = vadd.f32 %v318, %v991
    %v1010 = vadd.f32 %v319, %v993
    %v1011 = vperm.slane %v332, 1
    %v1012 = vadd.f32 %v995, %v1011
    %v1013 = vadd.f32 %v996, %v1011
    %v1014 = vadd.f32 %v997, %v1011
    %v1015 = vadd.f32 %v998, %v1011
    %v1016 = vadd.f32 %v999, %v1011
    %v1017 = vadd.f32 %v1000, %v1011
    %v1018 = vadd.f32 %v1001, %v1011
    %v1019 = vadd.f32 %v1002, %v1011
    %v1020 = vadd.f32 %v1003, %v1011
    %v1021 = vadd.f32 %v1004, %v1011
    %v1022 = vadd.f32 %v1005, %v1011
    %v1023 = vadd.f32 %v1006, %v1011
    %v1024 = vadd.f32 %v1007, %v1011
    %v1025 = vadd.f32 %v1008, %v1011
    %v1026 = vadd.f32 %v1009, %v1011
    %v1027 = vadd.f32 %v1010, %v1011
    %v1028 = vpack.c.bf16 %v1013, %v1012
    %v1029 = vpack.c.bf16 %v1015, %v1014
    %v1030 = vpack.c.bf16 %v1017, %v1016
    %v1031 = vpack.c.bf16 %v1019, %v1018
    %v1032 = vpack.c.bf16 %v1021, %v1020
    %v1033 = vpack.c.bf16 %v1023, %v1022
    %v1034 = vpack.c.bf16 %v1025, %v1024
    %v1035 = vpack.c.bf16 %v1027, %v1026
    %v1044 = vunpack.c.l.b16 %v258
    %v1045 = vunpack.c.l.b16 %v259
    %v1046 = vunpack.c.l.b16 %v260
    %v1047 = vunpack.c.l.b16 %v261
    %v1048 = vunpack.c.l.b16 %v262
    %v1049 = vunpack.c.l.b16 %v263
    %v1050 = vunpack.c.l.b16 %v264
    %v1051 = vunpack.c.l.b16 %v265
    %v1052 = vpack.c.b16 %v1045, %v1044
    %v1053 = vpack.c.b16 %v1047, %v1046
    %v1054 = vpack.c.b16 %v1049, %v1048
    %v1055 = vpack.c.b16 %v1051, %v1050
    %1060 = vmatpush.bf16.msra.mxu0 %v1035
    %1061 = vmatpush.bf16.msra.mxu0 %v1034
    %1062 = vmatpush.bf16.msra.mxu0 %v1033
    %1063 = vmatpush.bf16.msra.mxu0 %v1032
    %1064 = vmatpush.bf16.msra.mxu0 %v1031
    %1065 = vmatpush.bf16.msra.mxu0 %v1030
    %1066 = vmatpush.bf16.msra.mxu0 %v1029
    %1067 = vmatpush.bf16.msra.mxu0 %v1028
    %1068 = vmatmul.bf16.gmra.mxu0 %v1052
    %v1069 = vpop.f32.mrf.mxu0
    %v1070 = vadd.f32 0.0, %v1069
    %v1071 = vpop.f32.mrf.mxu0
    %v1072 = vadd.f32 0.0, %v1071
    %1073 = vmatmul.bf16.gmra.mxu0 %v1053
    %v1074 = vpop.f32.mrf.mxu0
    %v1075 = vadd.f32 0.0, %v1074
    %v1076 = vpop.f32.mrf.mxu0
    %v1077 = vadd.f32 0.0, %v1076
    %1078 = vmatmul.bf16.gmra.mxu0 %v1054
    %v1079 = vpop.f32.mrf.mxu0
    %v1080 = vadd.f32 0.0, %v1079
    %v1081 = vpop.f32.mrf.mxu0
    %v1082 = vadd.f32 0.0, %v1081
    %1083 = vmatmul.bf16.gmra.mxu0 %v1055
    %v1084 = vpop.f32.mrf.mxu0
    %v1085 = vadd.f32 0.0, %v1084
    %v1086 = vpop.f32.mrf.mxu0
    %v1087 = vadd.f32 0.0, %v1086
    %1088 = vdwg.mxu0
    %v1089 = vmul.f32 %v1070, %v272
    %v1090 = vmul.f32 %v1072, %v273
    %v1091 = vmul.f32 %v1075, %v274
    %v1092 = vmul.f32 %v1077, %v275
    %v1093 = vmul.f32 %v1080, %v276
    %v1094 = vmul.f32 %v1082, %v277
    %v1095 = vmul.f32 %v1085, %v278
    %v1096 = vmul.f32 %v1087, %v279
    %v1097 = vld [vmem:[#allocation16 + $0x10] sm:$0xf]
    %v1098 = vld [vmem:[#allocation16 + $0x2c] sm:$0xf]
    %v1099 = vld [vmem:[#allocation16 + $0x48] sm:$0xf]
    %v1100 = vld [vmem:[#allocation16 + $0x64] sm:$0xf]
    %v1101 = vld [vmem:[#allocation16 + $0x80] sm:$0xf]
    %v1102 = vld [vmem:[#allocation16 + $0x9c] sm:$0xf]
    %v1103 = vld [vmem:[#allocation16 + $0xb8] sm:$0xf]
    %v1104 = vld [vmem:[#allocation16 + $0xd4] sm:$0xf]
    %v1105 = vld [vmem:[#allocation16 + $0xf0] sm:$0xf]
    %v1106 = vld [vmem:[#allocation16 + $0x10c] sm:$0xf]
    %v1107 = vld [vmem:[#allocation16 + $0x128] sm:$0xf]
    %v1108 = vld [vmem:[#allocation16 + $0x144] sm:$0xf]
    %v1109 = vld [vmem:[#allocation16 + $0x160] sm:$0xf]
    %v1110 = vld [vmem:[#allocation16 + $0x17c] sm:$0xf]
    %v1111 = vld [vmem:[#allocation16 + $0x198] sm:$0xf]
    %v1112 = vld [vmem:[#allocation16 + $0x1b4] sm:$0xf]
    %v1113 = vpack.c.bf16 %v1090, %v1089
    %v1114 = vpack.c.bf16 %v1092, %v1091
    %v1115 = vpack.c.bf16 %v1094, %v1093
    %v1116 = vpack.c.bf16 %v1096, %v1095
    %v1117 = vld [vmem:[#allocation16 + $0x14] sm:$0xf]
    %v1118 = vld [vmem:[#allocation16 + $0x30] sm:$0xf]
    %v1119 = vld [vmem:[#allocation16 + $0x4c] sm:$0xf]
    %v1120 = vld [vmem:[#allocation16 + $0x68] sm:$0xf]
    %v1121 = vld [vmem:[#allocation16 + $0x84] sm:$0xf]
    %v1122 = vld [vmem:[#allocation16 + $0xa0] sm:$0xf]
    %v1123 = vld [vmem:[#allocation16 + $0xbc] sm:$0xf]
    %v1124 = vld [vmem:[#allocation16 + $0xd8] sm:$0xf]
    %v1125 = vld [vmem:[#allocation16 + $0xf4] sm:$0xf]
    %v1126 = vld [vmem:[#allocation16 + $0x110] sm:$0xf]
    %v1127 = vld [vmem:[#allocation16 + $0x12c] sm:$0xf]
    %v1128 = vld [vmem:[#allocation16 + $0x148] sm:$0xf]
    %v1129 = vld [vmem:[#allocation16 + $0x164] sm:$0xf]
    %v1130 = vld [vmem:[#allocation16 + $0x180] sm:$0xf]
    %v1131 = vld [vmem:[#allocation16 + $0x19c] sm:$0xf]
    %v1132 = vld [vmem:[#allocation16 + $0x1b8] sm:$0xf]
    %v1149 = vunpack.c.l.b16 %v1117
    %v1150 = vunpack.c.l.b16 %v1118
    %v1151 = vunpack.c.l.b16 %v1119
    %v1152 = vunpack.c.l.b16 %v1120
    %v1153 = vunpack.c.l.b16 %v1121
    %v1154 = vunpack.c.l.b16 %v1122
    %v1155 = vunpack.c.l.b16 %v1123
    %v1156 = vunpack.c.l.b16 %v1124
    %v1157 = vunpack.c.l.b16 %v1125
    %v1158 = vunpack.c.l.b16 %v1126
    %v1159 = vunpack.c.l.b16 %v1127
    %v1160 = vunpack.c.l.b16 %v1128
    %v1161 = vunpack.c.l.b16 %v1129
    %v1162 = vunpack.c.l.b16 %v1130
    %v1163 = vunpack.c.l.b16 %v1131
    %v1164 = vunpack.c.l.b16 %v1132
    %v1165 = vpack.c.b16 %v1150, %v1149
    %v1166 = vpack.c.b16 %v1152, %v1151
    %v1167 = vpack.c.b16 %v1154, %v1153
    %v1168 = vpack.c.b16 %v1156, %v1155
    %v1169 = vpack.c.b16 %v1158, %v1157
    %v1170 = vpack.c.b16 %v1160, %v1159
    %v1171 = vpack.c.b16 %v1162, %v1161
    %v1172 = vpack.c.b16 %v1164, %v1163
    %1181 = vmatpush.bf16.msra.mxu0 %v1172
    %1182 = vmatpush.bf16.msra.mxu0 %v1171
    %1183 = vmatpush.bf16.msra.mxu0 %v1170
    %1184 = vmatpush.bf16.msra.mxu0 %v1169
    %1185 = vmatpush.bf16.msra.mxu0 %v1168
    %1186 = vmatpush.bf16.msra.mxu0 %v1167
    %1187 = vmatpush.bf16.msra.mxu0 %v1166
    %1188 = vmatpush.bf16.msra.mxu0 %v1165
    %1189 = vmatmul.bf16.gmra.mxu0 %v1113
    %v1190 = vpop.f32.mrf.mxu0
    %v1191 = vadd.f32 0.0, %v1190
    %v1192 = vpop.f32.mrf.mxu0
    %v1193 = vadd.f32 0.0, %v1192
    %1194 = vmatmul.bf16.gmra.mxu0 %v1114
    %v1195 = vpop.f32.mrf.mxu0
    %v1196 = vadd.f32 0.0, %v1195
    %v1197 = vpop.f32.mrf.mxu0
    %v1198 = vadd.f32 0.0, %v1197
    %1199 = vmatmul.bf16.gmra.mxu0 %v1115
    %v1200 = vpop.f32.mrf.mxu0
    %v1201 = vadd.f32 0.0, %v1200
    %v1202 = vpop.f32.mrf.mxu0
    %v1203 = vadd.f32 0.0, %v1202
    %1204 = vmatmul.bf16.gmra.mxu0 %v1116
    %v1205 = vpop.f32.mrf.mxu0
    %v1206 = vadd.f32 0.0, %v1205
    %v1207 = vpop.f32.mrf.mxu0
    %v1208 = vadd.f32 0.0, %v1207
    %1209 = vdwg.mxu0
    %v1226 = vunpack.c.l.b16 %v1097
    %v1227 = vunpack.c.l.b16 %v1098
    %v1228 = vunpack.c.l.b16 %v1099
    %v1229 = vunpack.c.l.b16 %v1100
    %v1230 = vunpack.c.l.b16 %v1101
    %v1231 = vunpack.c.l.b16 %v1102
    %v1232 = vunpack.c.l.b16 %v1103
    %v1233 = vunpack.c.l.b16 %v1104
    %v1234 = vunpack.c.l.b16 %v1105
    %v1235 = vunpack.c.l.b16 %v1106
    %v1236 = vunpack.c.l.b16 %v1107
    %v1237 = vunpack.c.l.b16 %v1108
    %v1238 = vunpack.c.l.b16 %v1109
    %v1239 = vunpack.c.l.b16 %v1110
    %v1240 = vunpack.c.l.b16 %v1111
    %v1241 = vunpack.c.l.b16 %v1112
    %v1242 = vpack.c.b16 %v1227, %v1226
    %v1243 = vpack.c.b16 %v1229, %v1228
    %v1244 = vpack.c.b16 %v1231, %v1230
    %v1245 = vpack.c.b16 %v1233, %v1232
    %v1246 = vpack.c.b16 %v1235, %v1234
    %v1247 = vpack.c.b16 %v1237, %v1236
    %v1248 = vpack.c.b16 %v1239, %v1238
    %v1249 = vpack.c.b16 %v1241, %v1240
    %1258 = vmatpush.bf16.msra.mxu0 %v1249
    %1259 = vmatpush.bf16.msra.mxu0 %v1248
    %1260 = vmatpush.bf16.msra.mxu0 %v1247
    %1261 = vmatpush.bf16.msra.mxu0 %v1246
    %1262 = vmatpush.bf16.msra.mxu0 %v1245
    %1263 = vmatpush.bf16.msra.mxu0 %v1244
    %1264 = vmatpush.bf16.msra.mxu0 %v1243
    %1265 = vmatpush.bf16.msra.mxu0 %v1242
    %1266 = vmatmul.bf16.gmra.mxu0 %v320
    %v1267 = vpop.f32.mrf.mxu0
    %v1268 = vadd.f32 %v1191, %v1267
    %v1269 = vpop.f32.mrf.mxu0
    %v1270 = vadd.f32 %v1193, %v1269
    %1271 = vmatmul.bf16.gmra.mxu0 %v321
    %v1272 = vpop.f32.mrf.mxu0
    %v1273 = vadd.f32 %v1196, %v1272
    %v1274 = vpop.f32.mrf.mxu0
    %v1275 = vadd.f32 %v1198, %v1274
    %1276 = vmatmul.bf16.gmra.mxu0 %v322
    %v1277 = vpop.f32.mrf.mxu0
    %v1278 = vadd.f32 %v1201, %v1277
    %v1279 = vpop.f32.mrf.mxu0
    %v1280 = vadd.f32 %v1203, %v1279
    %1281 = vmatmul.bf16.gmra.mxu0 %v323
    %v1282 = vpop.f32.mrf.mxu0
    %v1283 = vadd.f32 %v1206, %v1282
    %v1284 = vpop.f32.mrf.mxu0
    %v1285 = vadd.f32 %v1208, %v1284
    %1286 = vdwg.mxu0
    %v1287 = vperm.slane %v332, 2
    %v1288 = vadd.f32 %v1268, %v1287
    %v1289 = vadd.f32 %v1270, %v1287
    %v1290 = vadd.f32 %v1273, %v1287
    %v1291 = vadd.f32 %v1275, %v1287
    %v1292 = vadd.f32 %v1278, %v1287
    %v1293 = vadd.f32 %v1280, %v1287
    %v1294 = vadd.f32 %v1283, %v1287
    %v1295 = vadd.f32 %v1285, %v1287
    %vm1296 = vcmp.gt.f32.partialorder %v1288, 0.0
    %vm1297 = vcmp.gt.f32.partialorder %v1289, 0.0
    %vm1298 = vcmp.gt.f32.partialorder %v1290, 0.0
    %vm1299 = vcmp.gt.f32.partialorder %v1291, 0.0
    %vm1300 = vcmp.gt.f32.partialorder %v1292, 0.0
    %vm1301 = vcmp.gt.f32.partialorder %v1293, 0.0
    %vm1302 = vcmp.gt.f32.partialorder %v1294, 0.0
    %vm1303 = vcmp.gt.f32.partialorder %v1295, 0.0
    %v1304 = vmul.f32 %v1288, 1.442695
    %v1305 = vpow.pop %v1304
    %v1306 = vmul.f32 %v1289, 1.442695
    %v1307 = vpow.pop %v1306
    %v1308 = vmul.f32 %v1290, 1.442695
    %v1309 = vpow.pop %v1308
    %v1310 = vmul.f32 %v1291, 1.442695
    %v1311 = vpow.pop %v1310
    %v1312 = vmul.f32 %v1292, 1.442695
    %v1313 = vpow.pop %v1312
    %v1314 = vmul.f32 %v1293, 1.442695
    %v1315 = vpow.pop %v1314
    %v1316 = vmul.f32 %v1294, 1.442695
    %v1317 = vpow.pop %v1316
    %v1318 = vmul.f32 %v1295, 1.442695
    %v1319 = vpow.pop %v1318
    %v1320 = vsub.f32 %v1305, 1.0
    %v1321 = vsub.f32 %v1307, 1.0
    %v1322 = vsub.f32 %v1309, 1.0
    %v1323 = vsub.f32 %v1311, 1.0
    %v1324 = vsub.f32 %v1313, 1.0
    %v1325 = vsub.f32 %v1315, 1.0
    %v1326 = vsub.f32 %v1317, 1.0
    %v1327 = vsub.f32 %v1319, 1.0
    %v1328 = vmul.f32 %v1320, 1.6732632
    %v1329 = vmul.f32 %v1321, 1.6732632
    %v1330 = vmul.f32 %v1322, 1.6732632
    %v1331 = vmul.f32 %v1323, 1.6732632
    %v1332 = vmul.f32 %v1324, 1.6732632
    %v1333 = vmul.f32 %v1325, 1.6732632
    %v1334 = vmul.f32 %v1326, 1.6732632
    %v1335 = vmul.f32 %v1327, 1.6732632
    %v1336 = vsel %vm1296, %v1288, %v1328
    %v1337 = vsel %vm1297, %v1289, %v1329
    %v1338 = vsel %vm1298, %v1290, %v1330
    %v1339 = vsel %vm1299, %v1291, %v1331
    %v1340 = vsel %vm1300, %v1292, %v1332
    %v1341 = vsel %vm1301, %v1293, %v1333
    %v1342 = vsel %vm1302, %v1294, %v1334
    %v1343 = vsel %vm1303, %v1295, %v1335
    %v1344 = vmul.f32 %v1336, 1.050701
    %v1345 = vmul.f32 %v1337, 1.050701
    %v1346 = vmul.f32 %v1338, 1.050701
    %v1347 = vmul.f32 %v1339, 1.050701
    %v1348 = vmul.f32 %v1340, 1.050701
    %v1349 = vmul.f32 %v1341, 1.050701
    %v1350 = vmul.f32 %v1342, 1.050701
    %v1351 = vmul.f32 %v1343, 1.050701
    %v1352 = vpack.c.bf16 %v1345, %v1344
    %v1353 = vpack.c.bf16 %v1347, %v1346
    %v1354 = vpack.c.bf16 %v1349, %v1348
    %v1355 = vpack.c.bf16 %v1351, %v1350
    %v1356 = vld [vmem:[#allocation16 + $0x18] sm:$0xf]
    %v1357 = vld [vmem:[#allocation16 + $0x34] sm:$0xf]
    %v1358 = vld [vmem:[#allocation16 + $0x50] sm:$0xf]
    %v1359 = vld [vmem:[#allocation16 + $0x6c] sm:$0xf]
    %v1360 = vld [vmem:[#allocation16 + $0x88] sm:$0xf]
    %v1361 = vld [vmem:[#allocation16 + $0xa4] sm:$0xf]
    %v1362 = vld [vmem:[#allocation16 + $0xc0] sm:$0xf]
    %v1363 = vld [vmem:[#allocation16 + $0xdc] sm:$0xf]
    %v1364 = vld [vmem:[#allocation16 + $0xf8] sm:$0xf]
    %v1365 = vld [vmem:[#allocation16 + $0x114] sm:$0xf]
    %v1366 = vld [vmem:[#allocation16 + $0x130] sm:$0xf]
    %v1367 = vld [vmem:[#allocation16 + $0x14c] sm:$0xf]
    %v1368 = vld [vmem:[#allocation16 + $0x168] sm:$0xf]
    %v1369 = vld [vmem:[#allocation16 + $0x184] sm:$0xf]
    %v1370 = vld [vmem:[#allocation16 + $0x1a0] sm:$0xf]
    %v1371 = vld [vmem:[#allocation16 + $0x1bc] sm:$0xf]
    %v1388 = vunpack.c.l.b16 %v1356
    %v1389 = vunpack.c.l.b16 %v1357
    %v1390 = vunpack.c.l.b16 %v1358
    %v1391 = vunpack.c.l.b16 %v1359
    %v1392 = vunpack.c.l.b16 %v1360
    %v1393 = vunpack.c.l.b16 %v1361
    %v1394 = vunpack.c.l.b16 %v1362
    %v1395 = vunpack.c.l.b16 %v1363
    %v1396 = vunpack.c.l.b16 %v1364
    %v1397 = vunpack.c.l.b16 %v1365
    %v1398 = vunpack.c.l.b16 %v1366
    %v1399 = vunpack.c.l.b16 %v1367
    %v1400 = vunpack.c.l.b16 %v1368
    %v1401 = vunpack.c.l.b16 %v1369
    %v1402 = vunpack.c.l.b16 %v1370
    %v1403 = vunpack.c.l.b16 %v1371
    %v1404 = vpack.c.b16 %v1389, %v1388
    %v1405 = vpack.c.b16 %v1391, %v1390
    %v1406 = vpack.c.b16 %v1393, %v1392
    %v1407 = vpack.c.b16 %v1395, %v1394
    %v1408 = vpack.c.b16 %v1397, %v1396
    %v1409 = vpack.c.b16 %v1399, %v1398
    %v1410 = vpack.c.b16 %v1401, %v1400
    %v1411 = vpack.c.b16 %v1403, %v1402
    %1420 = vmatpush.bf16.msra.mxu0 %v1411
    %1421 = vmatpush.bf16.msra.mxu0 %v1410
    %1422 = vmatpush.bf16.msra.mxu0 %v1409
    %1423 = vmatpush.bf16.msra.mxu0 %v1408
    %1424 = vmatpush.bf16.msra.mxu0 %v1407
    %1425 = vmatpush.bf16.msra.mxu0 %v1406
    %1426 = vmatpush.bf16.msra.mxu0 %v1405
    %1427 = vmatpush.bf16.msra.mxu0 %v1404
    %1428 = vmatmul.bf16.gmra.mxu0 %v1352
    %v1429 = vpop.f32.mrf.mxu0
    %v1430 = vadd.f32 0.0, %v1429
    %v1431 = vpop.f32.mrf.mxu0
    %v1432 = vadd.f32 0.0, %v1431
    %1433 = vmatmul.bf16.gmra.mxu0 %v1353
    %v1434 = vpop.f32.mrf.mxu0
    %v1435 = vadd.f32 0.0, %v1434
    %v1436 = vpop.f32.mrf.mxu0
    %v1437 = vadd.f32 0.0, %v1436
    %1438 = vmatmul.bf16.gmra.mxu0 %v1354
    %v1439 = vpop.f32.mrf.mxu0
    %v1440 = vadd.f32 0.0, %v1439
    %v1441 = vpop.f32.mrf.mxu0
    %v1442 = vadd.f32 0.0, %v1441
    %1443 = vmatmul.bf16.gmra.mxu0 %v1355
    %v1444 = vpop.f32.mrf.mxu0
    %v1445 = vadd.f32 0.0, %v1444
    %v1446 = vpop.f32.mrf.mxu0
    %v1447 = vadd.f32 0.0, %v1446
    %1448 = vdwg.mxu0
    %v1449 = vadd.f32 %v296, %v1430
    %v1450 = vadd.f32 %v297, %v1432
    %v1451 = vadd.f32 %v298, %v1435
    %v1452 = vadd.f32 %v299, %v1437
    %v1453 = vadd.f32 %v300, %v1440
    %v1454 = vadd.f32 %v301, %v1442
    %v1455 = vadd.f32 %v302, %v1445
    %v1456 = vadd.f32 %v303, %v1447
    %v1457 = vperm.slane %v332, 3
    %v1458 = vadd.f32 %v1449, %v1457
    %v1459 = vadd.f32 %v1450, %v1457
    %v1460 = vadd.f32 %v1451, %v1457
    %v1461 = vadd.f32 %v1452, %v1457
    %v1462 = vadd.f32 %v1453, %v1457
    %v1463 = vadd.f32 %v1454, %v1457
    %v1464 = vadd.f32 %v1455, %v1457
    %v1465 = vadd.f32 %v1456, %v1457
    %v1466 = vpack.c.bf16 %v1459, %v1458
    %v1467 = vpack.c.bf16 %v1461, %v1460
    %v1468 = vpack.c.bf16 %v1463, %v1462
    %v1469 = vpack.c.bf16 %v1465, %v1464
    %s1470 = scalar_lea.vmem %s10, 4
    %v1471 = vld [vmem:[%s1470] sm:$0xf]
    %s1472 = scalar_lea.vmem [#allocation16], 448
    %v1473 = vld [vmem:[%s1472] sm:$0xff]
    %v1474 = vld [vmem:[%s1472 + $0x1c] sm:$0xff]
    %v1475 = vld [vmem:[%s1472 + $0x38] sm:$0xff]
    %v1476 = vld [vmem:[%s1472 + $0x54] sm:$0xff]
    %v1477 = vld [vmem:[%s1472 + $0x70] sm:$0xff]
    %v1478 = vld [vmem:[%s1472 + $0x8c] sm:$0xff]
    %v1479 = vld [vmem:[%s1472 + $0xa8] sm:$0xff]
    %v1480 = vld [vmem:[%s1472 + $0xc4] sm:$0xff]
    %v1481 = vld [vmem:[%s1472 + $0xe0] sm:$0xff]
    %v1482 = vld [vmem:[%s1472 + $0xfc] sm:$0xff]
    %v1483 = vld [vmem:[%s1472 + $0x118] sm:$0xff]
    %v1484 = vld [vmem:[%s1472 + $0x134] sm:$0xff]
    %v1485 = vld [vmem:[%s1472 + $0x150] sm:$0xff]
    %v1486 = vld [vmem:[%s1472 + $0x16c] sm:$0xff]
    %v1487 = vld [vmem:[%s1472 + $0x188] sm:$0xff]
    %v1488 = vld [vmem:[%s1472 + $0x1a4] sm:$0xff]
    %v1505 = vunpack.c.l.b16 %v1473
    %v1506 = vunpack.c.h.b16 %v1473
    %v1507 = vunpack.c.l.b16 %v1474
    %v1508 = vunpack.c.h.b16 %v1474
    %v1509 = vunpack.c.l.b16 %v1475
    %v1510 = vunpack.c.h.b16 %v1475
    %v1511 = vunpack.c.l.b16 %v1476
    %v1512 = vunpack.c.h.b16 %v1476
    %v1513 = vunpack.c.l.b16 %v1477
    %v1514 = vunpack.c.h.b16 %v1477
    %v1515 = vunpack.c.l.b16 %v1478
    %v1516 = vunpack.c.h.b16 %v1478
    %v1517 = vunpack.c.l.b16 %v1479
    %v1518 = vunpack.c.h.b16 %v1479
    %v1519 = vunpack.c.l.b16 %v1480
    %v1520 = vunpack.c.h.b16 %v1480
    %v1521 = vunpack.c.l.b16 %v1481
    %v1522 = vunpack.c.h.b16 %v1481
    %v1523 = vunpack.c.l.b16 %v1482
    %v1524 = vunpack.c.h.b16 %v1482
    %v1525 = vunpack.c.l.b16 %v1483
    %v1526 = vunpack.c.h.b16 %v1483
    %v1527 = vunpack.c.l.b16 %v1484
    %v1528 = vunpack.c.h.b16 %v1484
    %v1529 = vunpack.c.l.b16 %v1485
    %v1530 = vunpack.c.h.b16 %v1485
    %v1531 = vunpack.c.l.b16 %v1486
    %v1532 = vunpack.c.h.b16 %v1486
    %v1533 = vunpack.c.l.b16 %v1487
    %v1534 = vunpack.c.h.b16 %v1487
    %v1535 = vunpack.c.l.b16 %v1488
    %v1536 = vunpack.c.h.b16 %v1488
    %v1537 = vpack.c.b16 %v1507, %v1505
    %v1538 = vpack.c.b16 %v1508, %v1506
    %v1539 = vpack.c.b16 %v1511, %v1509
    %v1540 = vpack.c.b16 %v1512, %v1510
    %v1541 = vpack.c.b16 %v1515, %v1513
    %v1542 = vpack.c.b16 %v1516, %v1514
    %v1543 = vpack.c.b16 %v1519, %v1517
    %v1544 = vpack.c.b16 %v1520, %v1518
    %v1545 = vpack.c.b16 %v1523, %v1521
    %v1546 = vpack.c.b16 %v1524, %v1522
    %v1547 = vpack.c.b16 %v1527, %v1525
    %v1548 = vpack.c.b16 %v1528, %v1526
    %v1549 = vpack.c.b16 %v1531, %v1529
    %v1550 = vpack.c.b16 %v1532, %v1530
    %v1551 = vpack.c.b16 %v1535, %v1533
    %v1552 = vpack.c.b16 %v1536, %v1534
    %1569 = vmatpush.bf16.msra.mxu0 %v1551
    %1570 = vmatpush.bf16.msra.mxu0 %v1549
    %1571 = vmatpush.bf16.msra.mxu0 %v1547
    %1572 = vmatpush.bf16.msra.mxu0 %v1545
    %1573 = vmatpush.bf16.msra.mxu0 %v1543
    %1574 = vmatpush.bf16.msra.mxu0 %v1541
    %1575 = vmatpush.bf16.msra.mxu0 %v1539
    %1576 = vmatpush.bf16.msra.mxu0 %v1537
    %1577 = vmatmul.bf16.gmra.mxu0 %v1466
    %v1578 = vpop.f32.mrf.mxu0
    %v1579 = vadd.f32 0.0, %v1578
    %v1580 = vpop.f32.mrf.mxu0
    %v1581 = vadd.f32 0.0, %v1580
    %1582 = vmatmul.bf16.gmra.mxu0 %v1467
    %v1583 = vpop.f32.mrf.mxu0
    %v1584 = vadd.f32 0.0, %v1583
    %v1585 = vpop.f32.mrf.mxu0
    %v1586 = vadd.f32 0.0, %v1585
    %1587 = vmatmul.bf16.gmra.mxu0 %v1468
    %v1588 = vpop.f32.mrf.mxu0
    %v1589 = vadd.f32 0.0, %v1588
    %v1590 = vpop.f32.mrf.mxu0
    %v1591 = vadd.f32 0.0, %v1590
    %1592 = vmatmul.bf16.gmra.mxu0 %v1469
    %v1593 = vpop.f32.mrf.mxu0
    %v1594 = vadd.f32 0.0, %v1593
    %v1595 = vpop.f32.mrf.mxu0
    %v1596 = vadd.f32 0.0, %v1595
    %1597 = vdwg.mxu0
    %1598 = vmatpush.bf16.msra.mxu0 %v1552
    %1599 = vmatpush.bf16.msra.mxu0 %v1550
    %1600 = vmatpush.bf16.msra.mxu0 %v1548
    %1601 = vmatpush.bf16.msra.mxu0 %v1546
    %1602 = vmatpush.bf16.msra.mxu0 %v1544
    %1603 = vmatpush.bf16.msra.mxu0 %v1542
    %1604 = vmatpush.bf16.msra.mxu0 %v1540
    %1605 = vmatpush.bf16.msra.mxu0 %v1538
    %1606 = vmatmul.bf16.gmra.mxu0 %v1466
    %v1607 = vpop.f32.mrf.mxu0
    %v1608 = vadd.f32 0.0, %v1607
    %v1609 = vpop.f32.mrf.mxu0
    %v1610 = vadd.f32 0.0, %v1609
    %1611 = vmatmul.bf16.gmra.mxu0 %v1467
    %v1612 = vpop.f32.mrf.mxu0
    %v1613 = vadd.f32 0.0, %v1612
    %v1614 = vpop.f32.mrf.mxu0
    %v1615 = vadd.f32 0.0, %v1614
    %1616 = vmatmul.bf16.gmra.mxu0 %v1468
    %v1617 = vpop.f32.mrf.mxu0
    %v1618 = vadd.f32 0.0, %v1617
    %v1619 = vpop.f32.mrf.mxu0
    %v1620 = vadd.f32 0.0, %v1619
    %1621 = vmatmul.bf16.gmra.mxu0 %v1469
    %v1622 = vpop.f32.mrf.mxu0
    %v1623 = vadd.f32 0.0, %v1622
    %v1624 = vpop.f32.mrf.mxu0
    %v1625 = vadd.f32 0.0, %v1624
    %1626 = vdwg.mxu0
    %v1627 = vpack.c.bf16 %v1608, %v1579
    %v1628 = vpack.c.bf16 %v1610, %v1581
    %v1629 = vpack.c.bf16 %v1613, %v1584
    %v1630 = vpack.c.bf16 %v1615, %v1586
    %v1631 = vpack.c.bf16 %v1618, %v1589
    %v1632 = vpack.c.bf16 %v1620, %v1591
    %v1633 = vpack.c.bf16 %v1623, %v1594
    %v1634 = vpack.c.bf16 %v1625, %v1596
    %v1643 = vunpack.c.l.b16 %v1627
    %v1644 = vunpack.c.l.b16 %v1628
    %v1645 = vunpack.c.l.b16 %v1629
    %v1646 = vunpack.c.l.b16 %v1630
    %v1647 = vunpack.c.l.b16 %v1631
    %v1648 = vunpack.c.l.b16 %v1632
    %v1649 = vunpack.c.l.b16 %v1633
    %v1650 = vunpack.c.l.b16 %v1634
    %v1651 = vpack.c.b16 %v1644, %v1643
    %v1652 = vpack.c.b16 %v1646, %v1645
    %v1653 = vpack.c.b16 %v1648, %v1647
    %v1654 = vpack.c.b16 %v1650, %v1649
    %v1659 = vunpack.c.h.b16 %v1627
    %v1660 = vunpack.c.h.b16 %v1628
    %v1661 = vunpack.c.h.b16 %v1629
    %v1662 = vunpack.c.h.b16 %v1630
    %v1663 = vunpack.c.h.b16 %v1631
    %v1664 = vunpack.c.h.b16 %v1632
    %v1665 = vunpack.c.h.b16 %v1633
    %v1666 = vunpack.c.h.b16 %v1634
    %v1667 = vpack.c.b16 %v1660, %v1659
    %v1668 = vpack.c.b16 %v1662, %v1661
    %v1669 = vpack.c.b16 %v1664, %v1663
    %v1670 = vpack.c.b16 %v1666, %v1665
    %v1675 = vld [vmem:[%s1472 + $0x8] sm:$0xf]
    %v1676 = vld [vmem:[%s1472 + $0x24] sm:$0xf]
    %v1677 = vld [vmem:[%s1472 + $0x40] sm:$0xf]
    %v1678 = vld [vmem:[%s1472 + $0x5c] sm:$0xf]
    %v1679 = vld [vmem:[%s1472 + $0x78] sm:$0xf]
    %v1680 = vld [vmem:[%s1472 + $0x94] sm:$0xf]
    %v1681 = vld [vmem:[%s1472 + $0xb0] sm:$0xf]
    %v1682 = vld [vmem:[%s1472 + $0xcc] sm:$0xf]
    %v1683 = vld [vmem:[%s1472 + $0xe8] sm:$0xf]
    %v1684 = vld [vmem:[%s1472 + $0x104] sm:$0xf]
    %v1685 = vld [vmem:[%s1472 + $0x120] sm:$0xf]
    %v1686 = vld [vmem:[%s1472 + $0x13c] sm:$0xf]
    %v1687 = vld [vmem:[%s1472 + $0x158] sm:$0xf]
    %v1688 = vld [vmem:[%s1472 + $0x174] sm:$0xf]
    %v1689 = vld [vmem:[%s1472 + $0x190] sm:$0xf]
    %v1690 = vld [vmem:[%s1472 + $0x1ac] sm:$0xf]
    %v1707 = vunpack.c.l.b16 %v1675
    %v1708 = vunpack.c.l.b16 %v1676
    %v1709 = vunpack.c.l.b16 %v1677
    %v1710 = vunpack.c.l.b16 %v1678
    %v1711 = vunpack.c.l.b16 %v1679
    %v1712 = vunpack.c.l.b16 %v1680
    %v1713 = vunpack.c.l.b16 %v1681
    %v1714 = vunpack.c.l.b16 %v1682
    %v1715 = vunpack.c.l.b16 %v1683
    %v1716 = vunpack.c.l.b16 %v1684
    %v1717 = vunpack.c.l.b16 %v1685
    %v1718 = vunpack.c.l.b16 %v1686
    %v1719 = vunpack.c.l.b16 %v1687
    %v1720 = vunpack.c.l.b16 %v1688
    %v1721 = vunpack.c.l.b16 %v1689
    %v1722 = vunpack.c.l.b16 %v1690
    %v1723 = vpack.c.b16 %v1708, %v1707
    %v1724 = vpack.c.b16 %v1710, %v1709
    %v1725 = vpack.c.b16 %v1712, %v1711
    %v1726 = vpack.c.b16 %v1714, %v1713
    %v1727 = vpack.c.b16 %v1716, %v1715
    %v1728 = vpack.c.b16 %v1718, %v1717
    %v1729 = vpack.c.b16 %v1720, %v1719
    %v1730 = vpack.c.b16 %v1722, %v1721
    %1739 = vmatpush.bf16.msra.mxu0 %v1730
    %1740 = vmatpush.bf16.msra.mxu0 %v1729
    %1741 = vmatpush.bf16.msra.mxu0 %v1728
    %1742 = vmatpush.bf16.msra.mxu0 %v1727
    %1743 = vmatpush.bf16.msra.mxu0 %v1726
    %1744 = vmatpush.bf16.msra.mxu0 %v1725
    %1745 = vmatpush.bf16.msra.mxu0 %v1724
    %1746 = vmatpush.bf16.msra.mxu0 %v1723
    %1747 = vmatmul.bf16.gmra.mxu0 %v1028
    %v1748 = vpop.f32.mrf.mxu0
    %v1749 = vadd.f32 0.0, %v1748
    %v1750 = vpop.f32.mrf.mxu0
    %v1751 = vadd.f32 0.0, %v1750
    %1752 = vmatmul.bf16.gmra.mxu0 %v1029
    %v1753 = vpop.f32.mrf.mxu0
    %v1754 = vadd.f32 0.0, %v1753
    %v1755 = vpop.f32.mrf.mxu0
    %v1756 = vadd.f32 0.0, %v1755
    %1757 = vmatmul.bf16.gmra.mxu0 %v1030
    %v1758 = vpop.f32.mrf.mxu0
    %v1759 = vadd.f32 0.0, %v1758
    %v1760 = vpop.f32.mrf.mxu0
    %v1761 = vadd.f32 0.0, %v1760
    %1762 = vmatmul.bf16.gmra.mxu0 %v1031
    %v1763 = vpop.f32.mrf.mxu0
    %v1764 = vadd.f32 0.0, %v1763
    %v1765 = vpop.f32.mrf.mxu0
    %v1766 = vadd.f32 0.0, %v1765
    %1767 = vmatmul.bf16.gmra.mxu0 %v1032
    %v1768 = vpop.f32.mrf.mxu0
    %v1769 = vadd.f32 0.0, %v1768
    %v1770 = vpop.f32.mrf.mxu0
    %v1771 = vadd.f32 0.0, %v1770
    %1772 = vmatmul.bf16.gmra.mxu0 %v1033
    %v1773 = vpop.f32.mrf.mxu0
    %v1774 = vadd.f32 0.0, %v1773
    %v1775 = vpop.f32.mrf.mxu0
    %v1776 = vadd.f32 0.0, %v1775
    %1777 = vmatmul.bf16.gmra.mxu0 %v1034
    %v1778 = vpop.f32.mrf.mxu0
    %v1779 = vadd.f32 0.0, %v1778
    %v1780 = vpop.f32.mrf.mxu0
    %v1781 = vadd.f32 0.0, %v1780
    %1782 = vmatmul.bf16.gmra.mxu0 %v1035
    %v1783 = vpop.f32.mrf.mxu0
    %v1784 = vadd.f32 0.0, %v1783
    %v1785 = vpop.f32.mrf.mxu0
    %v1786 = vadd.f32 0.0, %v1785
    %1787 = vdwg.mxu0
    %1788 = vmatpush.bf16.msra.mxu0 %v1670
    %1789 = vmatpush.bf16.msra.mxu0 %v1669
    %1790 = vmatpush.bf16.msra.mxu0 %v1668
    %1791 = vmatpush.bf16.msra.mxu0 %v1667
    %1792 = vmatpush.bf16.msra.mxu0 %v1654
    %1793 = vmatpush.bf16.msra.mxu0 %v1653
    %1794 = vmatpush.bf16.msra.mxu0 %v1652
    %1795 = vmatpush.bf16.msra.mxu0 %v1651
    %1796 = vmatmul.bf16.gmra.mxu0 %v680
    %v1797 = vpop.f32.mrf.mxu0
    %v1798 = vadd.f32 %v1749, %v1797
    %v1799 = vpop.f32.mrf.mxu0
    %v1800 = vadd.f32 %v1751, %v1799
    %1801 = vmatmul.bf16.gmra.mxu0 %v681
    %v1802 = vpop.f32.mrf.mxu0
    %v1803 = vadd.f32 %v1754, %v1802
    %v1804 = vpop.f32.mrf.mxu0
    %v1805 = vadd.f32 %v1756, %v1804
    %1806 = vmatmul.bf16.gmra.mxu0 %v682
    %v1807 = vpop.f32.mrf.mxu0
    %v1808 = vadd.f32 %v1759, %v1807
    %v1809 = vpop.f32.mrf.mxu0
    %v1810 = vadd.f32 %v1761, %v1809
    %1811 = vmatmul.bf16.gmra.mxu0 %v683
    %v1812 = vpop.f32.mrf.mxu0
    %v1813 = vadd.f32 %v1764, %v1812
    %v1814 = vpop.f32.mrf.mxu0
    %v1815 = vadd.f32 %v1766, %v1814
    %1816 = vmatmul.bf16.gmra.mxu0 %v684
    %v1817 = vpop.f32.mrf.mxu0
    %v1818 = vadd.f32 %v1769, %v1817
    %v1819 = vpop.f32.mrf.mxu0
    %v1820 = vadd.f32 %v1771, %v1819
    %1821 = vmatmul.bf16.gmra.mxu0 %v685
    %v1822 = vpop.f32.mrf.mxu0
    %v1823 = vadd.f32 %v1774, %v1822
    %v1824 = vpop.f32.mrf.mxu0
    %v1825 = vadd.f32 %v1776, %v1824
    %1826 = vmatmul.bf16.gmra.mxu0 %v686
    %v1827 = vpop.f32.mrf.mxu0
    %v1828 = vadd.f32 %v1779, %v1827
    %v1829 = vpop.f32.mrf.mxu0
    %v1830 = vadd.f32 %v1781, %v1829
    %1831 = vmatmul.bf16.gmra.mxu0 %v687
    %v1832 = vpop.f32.mrf.mxu0
    %v1833 = vadd.f32 %v1784, %v1832
    %v1834 = vpop.f32.mrf.mxu0
    %v1835 = vadd.f32 %v1786, %v1834
    %1836 = vdwg.mxu0
    %v1837 = vperm.slane %v1471, 0
    %v1838 = vadd.f32 %v1798, %v1837
    %v1839 = vadd.f32 %v1800, %v1837
    %v1840 = vadd.f32 %v1803, %v1837
    %v1841 = vadd.f32 %v1805, %v1837
    %v1842 = vadd.f32 %v1808, %v1837
    %v1843 = vadd.f32 %v1810, %v1837
    %v1844 = vadd.f32 %v1813, %v1837
    %v1845 = vadd.f32 %v1815, %v1837
    %v1846 = vadd.f32 %v1818, %v1837
    %v1847 = vadd.f32 %v1820, %v1837
    %v1848 = vadd.f32 %v1823, %v1837
    %v1849 = vadd.f32 %v1825, %v1837
    %v1850 = vadd.f32 %v1828, %v1837
    %v1851 = vadd.f32 %v1830, %v1837
    %v1852 = vadd.f32 %v1833, %v1837
    %v1853 = vadd.f32 %v1835, %v1837
    %vm1854 = vcmp.gt.f32.partialorder %v1838, 0.0
    %vm1855 = vcmp.gt.f32.partialorder %v1839, 0.0
    %vm1856 = vcmp.gt.f32.partialorder %v1840, 0.0
    %vm1857 = vcmp.gt.f32.partialorder %v1841, 0.0
    %vm1858 = vcmp.gt.f32.partialorder %v1842, 0.0
    %vm1859 = vcmp.gt.f32.partialorder %v1843, 0.0
    %vm1860 = vcmp.gt.f32.partialorder %v1844, 0.0
    %vm1861 = vcmp.gt.f32.partialorder %v1845, 0.0
    %vm1862 = vcmp.gt.f32.partialorder %v1846, 0.0
    %vm1863 = vcmp.gt.f32.partialorder %v1847, 0.0
    %vm1864 = vcmp.gt.f32.partialorder %v1848, 0.0
    %vm1865 = vcmp.gt.f32.partialorder %v1849, 0.0
    %vm1866 = vcmp.gt.f32.partialorder %v1850, 0.0
    %vm1867 = vcmp.gt.f32.partialorder %v1851, 0.0
    %vm1868 = vcmp.gt.f32.partialorder %v1852, 0.0
    %vm1869 = vcmp.gt.f32.partialorder %v1853, 0.0
    %v1870 = vmul.f32 %v1838, 1.442695
    %v1871 = vpow.pop %v1870
    %v1872 = vmul.f32 %v1839, 1.442695
    %v1873 = vpow.pop %v1872
    %v1874 = vmul.f32 %v1840, 1.442695
    %v1875 = vpow.pop %v1874
    %v1876 = vmul.f32 %v1841, 1.442695
    %v1877 = vpow.pop %v1876
    %v1878 = vmul.f32 %v1842, 1.442695
    %v1879 = vpow.pop %v1878
    %v1880 = vmul.f32 %v1843, 1.442695
    %v1881 = vpow.pop %v1880
    %v1882 = vmul.f32 %v1844, 1.442695
    %v1883 = vpow.pop %v1882
    %v1884 = vmul.f32 %v1845, 1.442695
    %v1885 = vpow.pop %v1884
    %v1886 = vmul.f32 %v1846, 1.442695
    %v1887 = vpow.pop %v1886
    %v1888 = vmul.f32 %v1847, 1.442695
    %v1889 = vpow.pop %v1888
    %v1890 = vmul.f32 %v1848, 1.442695
    %v1891 = vpow.pop %v1890
    %v1892 = vmul.f32 %v1849, 1.442695
    %v1893 = vpow.pop %v1892
    %v1894 = vmul.f32 %v1850, 1.442695
    %v1895 = vpow.pop %v1894
    %v1896 = vmul.f32 %v1851, 1.442695
    %v1897 = vpow.pop %v1896
    %v1898 = vmul.f32 %v1852, 1.442695
    %v1899 = vpow.pop %v1898
    %v1900 = vmul.f32 %v1853, 1.442695
    %v1901 = vpow.pop %v1900
    %v1902 = vsub.f32 %v1871, 1.0
    %v1903 = vsub.f32 %v1873, 1.0
    %v1904 = vsub.f32 %v1875, 1.0
    %v1905 = vsub.f32 %v1877, 1.0
    %v1906 = vsub.f32 %v1879, 1.0
    %v1907 = vsub.f32 %v1881, 1.0
    %v1908 = vsub.f32 %v1883, 1.0
    %v1909 = vsub.f32 %v1885, 1.0
    %v1910 = vsub.f32 %v1887, 1.0
    %v1911 = vsub.f32 %v1889, 1.0
    %v1912 = vsub.f32 %v1891, 1.0
    %v1913 = vsub.f32 %v1893, 1.0
    %v1914 = vsub.f32 %v1895, 1.0
    %v1915 = vsub.f32 %v1897, 1.0
    %v1916 = vsub.f32 %v1899, 1.0
    %v1917 = vsub.f32 %v1901, 1.0
    %v1918 = vmul.f32 %v1902, 1.6732632
    %v1919 = vmul.f32 %v1903, 1.6732632
    %v1920 = vmul.f32 %v1904, 1.6732632
    %v1921 = vmul.f32 %v1905, 1.6732632
    %v1922 = vmul.f32 %v1906, 1.6732632
    %v1923 = vmul.f32 %v1907, 1.6732632
    %v1924 = vmul.f32 %v1908, 1.6732632
    %v1925 = vmul.f32 %v1909, 1.6732632
    %v1926 = vmul.f32 %v1910, 1.6732632
    %v1927 = vmul.f32 %v1911, 1.6732632
    %v1928 = vmul.f32 %v1912, 1.6732632
    %v1929 = vmul.f32 %v1913, 1.6732632
    %v1930 = vmul.f32 %v1914, 1.6732632
    %v1931 = vmul.f32 %v1915, 1.6732632
    %v1932 = vmul.f32 %v1916, 1.6732632
    %v1933 = vmul.f32 %v1917, 1.6732632
    %v1934 = vsel %vm1854, %v1838, %v1918
    %v1935 = vsel %vm1855, %v1839, %v1919
    %v1936 = vsel %vm1856, %v1840, %v1920
    %v1937 = vsel %vm1857, %v1841, %v1921
    %v1938 = vsel %vm1858, %v1842, %v1922
    %v1939 = vsel %vm1859, %v1843, %v1923
    %v1940 = vsel %vm1860, %v1844, %v1924
    %v1941 = vsel %vm1861, %v1845, %v1925
    %v1942 = vsel %vm1862, %v1846, %v1926
    %v1943 = vsel %vm1863, %v1847, %v1927
    %v1944 = vsel %vm1864, %v1848, %v1928
    %v1945 = vsel %vm1865, %v1849, %v1929
    %v1946 = vsel %vm1866, %v1850, %v1930
    %v1947 = vsel %vm1867, %v1851, %v1931
    %v1948 = vsel %vm1868, %v1852, %v1932
    %v1949 = vsel %vm1869, %v1853, %v1933
    %v1950 = vmul.f32 %v1934, 1.050701
    %v1951 = vmul.f32 %v1935, 1.050701
    %v1952 = vmul.f32 %v1936, 1.050701
    %v1953 = vmul.f32 %v1937, 1.050701
    %v1954 = vmul.f32 %v1938, 1.050701
    %v1955 = vmul.f32 %v1939, 1.050701
    %v1956 = vmul.f32 %v1940, 1.050701
    %v1957 = vmul.f32 %v1941, 1.050701
    %v1958 = vmul.f32 %v1942, 1.050701
    %v1959 = vmul.f32 %v1943, 1.050701
    %v1960 = vmul.f32 %v1944, 1.050701
    %v1961 = vmul.f32 %v1945, 1.050701
    %v1962 = vmul.f32 %v1946, 1.050701
    %v1963 = vmul.f32 %v1947, 1.050701
    %v1964 = vmul.f32 %v1948, 1.050701
    %v1965 = vmul.f32 %v1949, 1.050701
    %v1966 = vpack.c.bf16 %v1951, %v1950
    %v1967 = vpack.c.bf16 %v1953, %v1952
    %v1968 = vpack.c.bf16 %v1955, %v1954
    %v1969 = vpack.c.bf16 %v1957, %v1956
    %v1970 = vpack.c.bf16 %v1959, %v1958
    %v1971 = vpack.c.bf16 %v1961, %v1960
    %v1972 = vpack.c.bf16 %v1963, %v1962
    %v1973 = vpack.c.bf16 %v1965, %v1964
    %v1974 = vld [vmem:[%s1472 + $0xc] sm:$0xf]
    %v1975 = vld [vmem:[%s1472 + $0x28] sm:$0xf]
    %v1976 = vld [vmem:[%s1472 + $0x44] sm:$0xf]
    %v1977 = vld [vmem:[%s1472 + $0x60] sm:$0xf]
    %v1978 = vld [vmem:[%s1472 + $0x7c] sm:$0xf]
    %v1979 = vld [vmem:[%s1472 + $0x98] sm:$0xf]
    %v1980 = vld [vmem:[%s1472 + $0xb4] sm:$0xf]
    %v1981 = vld [vmem:[%s1472 + $0xd0] sm:$0xf]
    %v1982 = vld [vmem:[%s1472 + $0xec] sm:$0xf]
    %v1983 = vld [vmem:[%s1472 + $0x108] sm:$0xf]
    %v1984 = vld [vmem:[%s1472 + $0x124] sm:$0xf]
    %v1985 = vld [vmem:[%s1472 + $0x140] sm:$0xf]
    %v1986 = vld [vmem:[%s1472 + $0x15c] sm:$0xf]
    %v1987 = vld [vmem:[%s1472 + $0x178] sm:$0xf]
    %v1988 = vld [vmem:[%s1472 + $0x194] sm:$0xf]
    %v1989 = vld [vmem:[%s1472 + $0x1b0] sm:$0xf]
    %v2006 = vunpack.c.l.b16 %v1974
    %v2007 = vunpack.c.l.b16 %v1975
    %v2008 = vunpack.c.l.b16 %v1976
    %v2009 = vunpack.c.l.b16 %v1977
    %v2010 = vunpack.c.l.b16 %v1978
    %v2011 = vunpack.c.l.b16 %v1979
    %v2012 = vunpack.c.l.b16 %v1980
    %v2013 = vunpack.c.l.b16 %v1981
    %v2014 = vunpack.c.l.b16 %v1982
    %v2015 = vunpack.c.l.b16 %v1983
    %v2016 = vunpack.c.l.b16 %v1984
    %v2017 = vunpack.c.l.b16 %v1985
    %v2018 = vunpack.c.l.b16 %v1986
    %v2019 = vunpack.c.l.b16 %v1987
    %v2020 = vunpack.c.l.b16 %v1988
    %v2021 = vunpack.c.l.b16 %v1989
    %v2022 = vpack.c.b16 %v2007, %v2006
    %v2023 = vpack.c.b16 %v2009, %v2008
    %v2024 = vpack.c.b16 %v2011, %v2010
    %v2025 = vpack.c.b16 %v2013, %v2012
    %v2026 = vpack.c.b16 %v2015, %v2014
    %v2027 = vpack.c.b16 %v2017, %v2016
    %v2028 = vpack.c.b16 %v2019, %v2018
    %v2029 = vpack.c.b16 %v2021, %v2020
    %2038 = vmatpush.bf16.msra.mxu0 %v2029
    %2039 = vmatpush.bf16.msra.mxu0 %v2028
    %2040 = vmatpush.bf16.msra.mxu0 %v2027
    %2041 = vmatpush.bf16.msra.mxu0 %v2026
    %2042 = vmatpush.bf16.msra.mxu0 %v2025
    %2043 = vmatpush.bf16.msra.mxu0 %v2024
    %2044 = vmatpush.bf16.msra.mxu0 %v2023
    %2045 = vmatpush.bf16.msra.mxu0 %v2022
    %2046 = vmatmul.bf16.gmra.mxu0 %v1966
    %v2047 = vpop.f32.mrf.mxu0
    %v2048 = vadd.f32 0.0, %v2047
    %v2049 = vpop.f32.mrf.mxu0
    %v2050 = vadd.f32 0.0, %v2049
    %2051 = vmatmul.bf16.gmra.mxu0 %v1967
    %v2052 = vpop.f32.mrf.mxu0
    %v2053 = vadd.f32 0.0, %v2052
    %v2054 = vpop.f32.mrf.mxu0
    %v2055 = vadd.f32 0.0, %v2054
    %2056 = vmatmul.bf16.gmra.mxu0 %v1968
    %v2057 = vpop.f32.mrf.mxu0
    %v2058 = vadd.f32 0.0, %v2057
    %v2059 = vpop.f32.mrf.mxu0
    %v2060 = vadd.f32 0.0, %v2059
    %2061 = vmatmul.bf16.gmra.mxu0 %v1969
    %v2062 = vpop.f32.mrf.mxu0
    %v2063 = vadd.f32 0.0, %v2062
    %v2064 = vpop.f32.mrf.mxu0
    %v2065 = vadd.f32 0.0, %v2064
    %2066 = vmatmul.bf16.gmra.mxu0 %v1970
    %v2067 = vpop.f32.mrf.mxu0
    %v2068 = vadd.f32 0.0, %v2067
    %v2069 = vpop.f32.mrf.mxu0
    %v2070 = vadd.f32 0.0, %v2069
    %2071 = vmatmul.bf16.gmra.mxu0 %v1971
    %v2072 = vpop.f32.mrf.mxu0
    %v2073 = vadd.f32 0.0, %v2072
    %v2074 = vpop.f32.mrf.mxu0
    %v2075 = vadd.f32 0.0, %v2074
    %2076 = vmatmul.bf16.gmra.mxu0 %v1972
    %v2077 = vpop.f32.mrf.mxu0
    %v2078 = vadd.f32 0.0, %v2077
    %v2079 = vpop.f32.mrf.mxu0
    %v2080 = vadd.f32 0.0, %v2079
    %2081 = vmatmul.bf16.gmra.mxu0 %v1973
    %v2082 = vpop.f32.mrf.mxu0
    %v2083 = vadd.f32 0.0, %v2082
    %v2084 = vpop.f32.mrf.mxu0
    %v2085 = vadd.f32 0.0, %v2084
    %2086 = vdwg.mxu0
    %v2087 = vadd.f32 %v1012, %v2048
    %v2088 = vadd.f32 %v1013, %v2050
    %v2089 = vadd.f32 %v1014, %v2053
    %v2090 = vadd.f32 %v1015, %v2055
    %v2091 = vadd.f32 %v1016, %v2058
    %v2092 = vadd.f32 %v1017, %v2060
    %v2093 = vadd.f32 %v1018, %v2063
    %v2094 = vadd.f32 %v1019, %v2065
    %v2095 = vadd.f32 %v1020, %v2068
    %v2096 = vadd.f32 %v1021, %v2070
    %v2097 = vadd.f32 %v1022, %v2073
    %v2098 = vadd.f32 %v1023, %v2075
    %v2099 = vadd.f32 %v1024, %v2078
    %v2100 = vadd.f32 %v1025, %v2080
    %v2101 = vadd.f32 %v1026, %v2083
    %v2102 = vadd.f32 %v1027, %v2085
    %v2103 = vperm.slane %v1471, 1
    %v2104 = vadd.f32 %v2087, %v2103
    %v2105 = vadd.f32 %v2088, %v2103
    %v2106 = vadd.f32 %v2089, %v2103
    %v2107 = vadd.f32 %v2090, %v2103
    %v2108 = vadd.f32 %v2091, %v2103
    %v2109 = vadd.f32 %v2092, %v2103
    %v2110 = vadd.f32 %v2093, %v2103
    %v2111 = vadd.f32 %v2094, %v2103
    %v2112 = vadd.f32 %v2095, %v2103
    %v2113 = vadd.f32 %v2096, %v2103
    %v2114 = vadd.f32 %v2097, %v2103
    %v2115 = vadd.f32 %v2098, %v2103
    %v2116 = vadd.f32 %v2099, %v2103
    %v2117 = vadd.f32 %v2100, %v2103
    %v2118 = vadd.f32 %v2101, %v2103
    %v2119 = vadd.f32 %v2102, %v2103
    %v2120 = vpack.c.bf16 %v2105, %v2104
    %v2121 = vpack.c.bf16 %v2107, %v2106
    %v2122 = vpack.c.bf16 %v2109, %v2108
    %v2123 = vpack.c.bf16 %v2111, %v2110
    %v2124 = vpack.c.bf16 %v2113, %v2112
    %v2125 = vpack.c.bf16 %v2115, %v2114
    %v2126 = vpack.c.bf16 %v2117, %v2116
    %v2127 = vpack.c.bf16 %v2119, %v2118
    %2128 = vmatpush.bf16.msra.mxu0 %v2127
    %2129 = vmatpush.bf16.msra.mxu0 %v2126
    %2130 = vmatpush.bf16.msra.mxu0 %v2125
    %2131 = vmatpush.bf16.msra.mxu0 %v2124
    %2132 = vmatpush.bf16.msra.mxu0 %v2123
    %2133 = vmatpush.bf16.msra.mxu0 %v2122
    %2134 = vmatpush.bf16.msra.mxu0 %v2121
    %2135 = vmatpush.bf16.msra.mxu0 %v2120
    %2136 = vmatmul.bf16.gmra.mxu0 %v1052
    %v2137 = vpop.f32.mrf.mxu0
    %v2138 = vadd.f32 0.0, %v2137
    %v2139 = vpop.f32.mrf.mxu0
    %v2140 = vadd.f32 0.0, %v2139
    %2141 = vmatmul.bf16.gmra.mxu0 %v1053
    %v2142 = vpop.f32.mrf.mxu0
    %v2143 = vadd.f32 0.0, %v2142
    %v2144 = vpop.f32.mrf.mxu0
    %v2145 = vadd.f32 0.0, %v2144
    %2146 = vmatmul.bf16.gmra.mxu0 %v1054
    %v2147 = vpop.f32.mrf.mxu0
    %v2148 = vadd.f32 0.0, %v2147
    %v2149 = vpop.f32.mrf.mxu0
    %v2150 = vadd.f32 0.0, %v2149
    %2151 = vmatmul.bf16.gmra.mxu0 %v1055
    %v2152 = vpop.f32.mrf.mxu0
    %v2153 = vadd.f32 0.0, %v2152
    %v2154 = vpop.f32.mrf.mxu0
    %v2155 = vadd.f32 0.0, %v2154
    %2156 = vdwg.mxu0
    %v2157 = vmul.f32 %v2138, %v272
    %v2158 = vmul.f32 %v2140, %v273
    %v2159 = vmul.f32 %v2143, %v274
    %v2160 = vmul.f32 %v2145, %v275
    %v2161 = vmul.f32 %v2148, %v276
    %v2162 = vmul.f32 %v2150, %v277
    %v2163 = vmul.f32 %v2153, %v278
    %v2164 = vmul.f32 %v2155, %v279
    %v2165 = vld [vmem:[%s1472 + $0x10] sm:$0xf]
    %v2166 = vld [vmem:[%s1472 + $0x2c] sm:$0xf]
    %v2167 = vld [vmem:[%s1472 + $0x48] sm:$0xf]
    %v2168 = vld [vmem:[%s1472 + $0x64] sm:$0xf]
    %v2169 = vld [vmem:[%s1472 + $0x80] sm:$0xf]
    %v2170 = vld [vmem:[%s1472 + $0x9c] sm:$0xf]
    %v2171 = vld [vmem:[%s1472 + $0xb8] sm:$0xf]
    %v2172 = vld [vmem:[%s1472 + $0xd4] sm:$0xf]
    %v2173 = vld [vmem:[%s1472 + $0xf0] sm:$0xf]
    %v2174 = vld [vmem:[%s1472 + $0x10c] sm:$0xf]
    %v2175 = vld [vmem:[%s1472 + $0x128] sm:$0xf]
    %v2176 = vld [vmem:[%s1472 + $0x144] sm:$0xf]
    %v2177 = vld [vmem:[%s1472 + $0x160] sm:$0xf]
    %v2178 = vld [vmem:[%s1472 + $0x17c] sm:$0xf]
    %v2179 = vld [vmem:[%s1472 + $0x198] sm:$0xf]
    %v2180 = vld [vmem:[%s1472 + $0x1b4] sm:$0xf]
    %v2181 = vpack.c.bf16 %v2158, %v2157
    %v2182 = vpack.c.bf16 %v2160, %v2159
    %v2183 = vpack.c.bf16 %v2162, %v2161
    %v2184 = vpack.c.bf16 %v2164, %v2163
    %v2185 = vld [vmem:[%s1472 + $0x14] sm:$0xf]
    %v2186 = vld [vmem:[%s1472 + $0x30] sm:$0xf]
    %v2187 = vld [vmem:[%s1472 + $0x4c] sm:$0xf]
    %v2188 = vld [vmem:[%s1472 + $0x68] sm:$0xf]
    %v2189 = vld [vmem:[%s1472 + $0x84] sm:$0xf]
    %v2190 = vld [vmem:[%s1472 + $0xa0] sm:$0xf]
    %v2191 = vld [vmem:[%s1472 + $0xbc] sm:$0xf]
    %v2192 = vld [vmem:[%s1472 + $0xd8] sm:$0xf]
    %v2193 = vld [vmem:[%s1472 + $0xf4] sm:$0xf]
    %v2194 = vld [vmem:[%s1472 + $0x110] sm:$0xf]
    %v2195 = vld [vmem:[%s1472 + $0x12c] sm:$0xf]
    %v2196 = vld [vmem:[%s1472 + $0x148] sm:$0xf]
    %v2197 = vld [vmem:[%s1472 + $0x164] sm:$0xf]
    %v2198 = vld [vmem:[%s1472 + $0x180] sm:$0xf]
    %v2199 = vld [vmem:[%s1472 + $0x19c] sm:$0xf]
    %v2200 = vld [vmem:[%s1472 + $0x1b8] sm:$0xf]
    %v2217 = vunpack.c.l.b16 %v2185
    %v2218 = vunpack.c.l.b16 %v2186
    %v2219 = vunpack.c.l.b16 %v2187
    %v2220 = vunpack.c.l.b16 %v2188
    %v2221 = vunpack.c.l.b16 %v2189
    %v2222 = vunpack.c.l.b16 %v2190
    %v2223 = vunpack.c.l.b16 %v2191
    %v2224 = vunpack.c.l.b16 %v2192
    %v2225 = vunpack.c.l.b16 %v2193
    %v2226 = vunpack.c.l.b16 %v2194
    %v2227 = vunpack.c.l.b16 %v2195
    %v2228 = vunpack.c.l.b16 %v2196
    %v2229 = vunpack.c.l.b16 %v2197
    %v2230 = vunpack.c.l.b16 %v2198
    %v2231 = vunpack.c.l.b16 %v2199
    %v2232 = vunpack.c.l.b16 %v2200
    %v2233 = vpack.c.b16 %v2218, %v2217
    %v2234 = vpack.c.b16 %v2220, %v2219
    %v2235 = vpack.c.b16 %v2222, %v2221
    %v2236 = vpack.c.b16 %v2224, %v2223
    %v2237 = vpack.c.b16 %v2226, %v2225
    %v2238 = vpack.c.b16 %v2228, %v2227
    %v2239 = vpack.c.b16 %v2230, %v2229
    %v2240 = vpack.c.b16 %v2232, %v2231
    %2249 = vmatpush.bf16.msra.mxu0 %v2240
    %2250 = vmatpush.bf16.msra.mxu0 %v2239
    %2251 = vmatpush.bf16.msra.mxu0 %v2238
    %2252 = vmatpush.bf16.msra.mxu0 %v2237
    %2253 = vmatpush.bf16.msra.mxu0 %v2236
    %2254 = vmatpush.bf16.msra.mxu0 %v2235
    %2255 = vmatpush.bf16.msra.mxu0 %v2234
    %2256 = vmatpush.bf16.msra.mxu0 %v2233
    %2257 = vmatmul.bf16.gmra.mxu0 %v2181
    %v2258 = vpop.f32.mrf.mxu0
    %v2259 = vadd.f32 0.0, %v2258
    %v2260 = vpop.f32.mrf.mxu0
    %v2261 = vadd.f32 0.0, %v2260
    %2262 = vmatmul.bf16.gmra.mxu0 %v2182
    %v2263 = vpop.f32.mrf.mxu0
    %v2264 = vadd.f32 0.0, %v2263
    %v2265 = vpop.f32.mrf.mxu0
    %v2266 = vadd.f32 0.0, %v2265
    %2267 = vmatmul.bf16.gmra.mxu0 %v2183
    %v2268 = vpop.f32.mrf.mxu0
    %v2269 = vadd.f32 0.0, %v2268
    %v2270 = vpop.f32.mrf.mxu0
    %v2271 = vadd.f32 0.0, %v2270
    %2272 = vmatmul.bf16.gmra.mxu0 %v2184
    %v2273 = vpop.f32.mrf.mxu0
    %v2274 = vadd.f32 0.0, %v2273
    %v2275 = vpop.f32.mrf.mxu0
    %v2276 = vadd.f32 0.0, %v2275
    %2277 = vdwg.mxu0
    %v2294 = vunpack.c.l.b16 %v2165
    %v2295 = vunpack.c.l.b16 %v2166
    %v2296 = vunpack.c.l.b16 %v2167
    %v2297 = vunpack.c.l.b16 %v2168
    %v2298 = vunpack.c.l.b16 %v2169
    %v2299 = vunpack.c.l.b16 %v2170
    %v2300 = vunpack.c.l.b16 %v2171
    %v2301 = vunpack.c.l.b16 %v2172
    %v2302 = vunpack.c.l.b16 %v2173
    %v2303 = vunpack.c.l.b16 %v2174
    %v2304 = vunpack.c.l.b16 %v2175
    %v2305 = vunpack.c.l.b16 %v2176
    %v2306 = vunpack.c.l.b16 %v2177
    %v2307 = vunpack.c.l.b16 %v2178
    %v2308 = vunpack.c.l.b16 %v2179
    %v2309 = vunpack.c.l.b16 %v2180
    %v2310 = vpack.c.b16 %v2295, %v2294
    %v2311 = vpack.c.b16 %v2297, %v2296
    %v2312 = vpack.c.b16 %v2299, %v2298
    %v2313 = vpack.c.b16 %v2301, %v2300
    %v2314 = vpack.c.b16 %v2303, %v2302
    %v2315 = vpack.c.b16 %v2305, %v2304
    %v2316 = vpack.c.b16 %v2307, %v2306
    %v2317 = vpack.c.b16 %v2309, %v2308
    %2326 = vmatpush.bf16.msra.mxu0 %v2317
    %2327 = vmatpush.bf16.msra.mxu0 %v2316
    %2328 = vmatpush.bf16.msra.mxu0 %v2315
    %2329 = vmatpush.bf16.msra.mxu0 %v2314
    %2330 = vmatpush.bf16.msra.mxu0 %v2313
    %2331 = vmatpush.bf16.msra.mxu0 %v2312
    %2332 = vmatpush.bf16.msra.mxu0 %v2311
    %2333 = vmatpush.bf16.msra.mxu0 %v2310
    %2334 = vmatmul.bf16.gmra.mxu0 %v1466
    %v2335 = vpop.f32.mrf.mxu0
    %v2336 = vadd.f32 %v2259, %v2335
    %v2337 = vpop.f32.mrf.mxu0
    %v2338 = vadd.f32 %v2261, %v2337
    %2339 = vmatmul.bf16.gmra.mxu0 %v1467
    %v2340 = vpop.f32.mrf.mxu0
    %v2341 = vadd.f32 %v2264, %v2340
    %v2342 = vpop.f32.mrf.mxu0
    %v2343 = vadd.f32 %v2266, %v2342
    %2344 = vmatmul.bf16.gmra.mxu0 %v1468
    %v2345 = vpop.f32.mrf.mxu0
    %v2346 = vadd.f32 %v2269, %v2345
    %v2347 = vpop.f32.mrf.mxu0
    %v2348 = vadd.f32 %v2271, %v2347
    %2349 = vmatmul.bf16.gmra.mxu0 %v1469
    %v2350 = vpop.f32.mrf.mxu0
    %v2351 = vadd.f32 %v2274, %v2350
    %v2352 = vpop.f32.mrf.mxu0
    %v2353 = vadd.f32 %v2276, %v2352
    %2354 = vdwg.mxu0
    %v2355 = vperm.slane %v1471, 2
    %v2356 = vadd.f32 %v2336, %v2355
    %v2357 = vadd.f32 %v2338, %v2355
    %v2358 = vadd.f32 %v2341, %v2355
    %v2359 = vadd.f32 %v2343, %v2355
    %v2360 = vadd.f32 %v2346, %v2355
    %v2361 = vadd.f32 %v2348, %v2355
    %v2362 = vadd.f32 %v2351, %v2355
    %v2363 = vadd.f32 %v2353, %v2355
    %vm2364 = vcmp.gt.f32.partialorder %v2356, 0.0
    %vm2365 = vcmp.gt.f32.partialorder %v2357, 0.0
    %vm2366 = vcmp.gt.f32.partialorder %v2358, 0.0
    %vm2367 = vcmp.gt.f32.partialorder %v2359, 0.0
    %vm2368 = vcmp.gt.f32.partialorder %v2360, 0.0
    %vm2369 = vcmp.gt.f32.partialorder %v2361, 0.0
    %vm2370 = vcmp.gt.f32.partialorder %v2362, 0.0
    %vm2371 = vcmp.gt.f32.partialorder %v2363, 0.0
    %v2372 = vmul.f32 %v2356, 1.442695
    %v2373 = vpow.pop %v2372
    %v2374 = vmul.f32 %v2357, 1.442695
    %v2375 = vpow.pop %v2374
    %v2376 = vmul.f32 %v2358, 1.442695
    %v2377 = vpow.pop %v2376
    %v2378 = vmul.f32 %v2359, 1.442695
    %v2379 = vpow.pop %v2378
    %v2380 = vmul.f32 %v2360, 1.442695
    %v2381 = vpow.pop %v2380
    %v2382 = vmul.f32 %v2361, 1.442695
    %v2383 = vpow.pop %v2382
    %v2384 = vmul.f32 %v2362, 1.442695
    %v2385 = vpow.pop %v2384
    %v2386 = vmul.f32 %v2363, 1.442695
    %v2387 = vpow.pop %v2386
    %v2388 = vsub.f32 %v2373, 1.0
    %v2389 = vsub.f32 %v2375, 1.0
    %v2390 = vsub.f32 %v2377, 1.0
    %v2391 = vsub.f32 %v2379, 1.0
    %v2392 = vsub.f32 %v2381, 1.0
    %v2393 = vsub.f32 %v2383, 1.0
    %v2394 = vsub.f32 %v2385, 1.0
    %v2395 = vsub.f32 %v2387, 1.0
    %v2396 = vmul.f32 %v2388, 1.6732632
    %v2397 = vmul.f32 %v2389, 1.6732632
    %v2398 = vmul.f32 %v2390, 1.6732632
    %v2399 = vmul.f32 %v2391, 1.6732632
    %v2400 = vmul.f32 %v2392, 1.6732632
    %v2401 = vmul.f32 %v2393, 1.6732632
    %v2402 = vmul.f32 %v2394, 1.6732632
    %v2403 = vmul.f32 %v2395, 1.6732632
    %v2404 = vsel %vm2364, %v2356, %v2396
    %v2405 = vsel %vm2365, %v2357, %v2397
    %v2406 = vsel %vm2366, %v2358, %v2398
    %v2407 = vsel %vm2367, %v2359, %v2399
    %v2408 = vsel %vm2368, %v2360, %v2400
    %v2409 = vsel %vm2369, %v2361, %v2401
    %v2410 = vsel %vm2370, %v2362, %v2402
    %v2411 = vsel %vm2371, %v2363, %v2403
    %v2412 = vmul.f32 %v2404, 1.050701
    %v2413 = vmul.f32 %v2405, 1.050701
    %v2414 = vmul.f32 %v2406, 1.050701
    %v2415 = vmul.f32 %v2407, 1.050701
    %v2416 = vmul.f32 %v2408, 1.050701
    %v2417 = vmul.f32 %v2409, 1.050701
    %v2418 = vmul.f32 %v2410, 1.050701
    %v2419 = vmul.f32 %v2411, 1.050701
    %v2420 = vpack.c.bf16 %v2413, %v2412
    %v2421 = vpack.c.bf16 %v2415, %v2414
    %v2422 = vpack.c.bf16 %v2417, %v2416
    %v2423 = vpack.c.bf16 %v2419, %v2418
    %v2424 = vld [vmem:[%s1472 + $0x18] sm:$0xf]
    %v2425 = vld [vmem:[%s1472 + $0x34] sm:$0xf]
    %v2426 = vld [vmem:[%s1472 + $0x50] sm:$0xf]
    %v2427 = vld [vmem:[%s1472 + $0x6c] sm:$0xf]
    %v2428 = vld [vmem:[%s1472 + $0x88] sm:$0xf]
    %v2429 = vld [vmem:[%s1472 + $0xa4] sm:$0xf]
    %v2430 = vld [vmem:[%s1472 + $0xc0] sm:$0xf]
    %v2431 = vld [vmem:[%s1472 + $0xdc] sm:$0xf]
    %v2432 = vld [vmem:[%s1472 + $0xf8] sm:$0xf]
    %v2433 = vld [vmem:[%s1472 + $0x114] sm:$0xf]
    %v2434 = vld [vmem:[%s1472 + $0x130] sm:$0xf]
    %v2435 = vld [vmem:[%s1472 + $0x14c] sm:$0xf]
    %v2436 = vld [vmem:[%s1472 + $0x168] sm:$0xf]
    %v2437 = vld [vmem:[%s1472 + $0x184] sm:$0xf]
    %v2438 = vld [vmem:[%s1472 + $0x1a0] sm:$0xf]
    %v2439 = vld [vmem:[%s1472 + $0x1bc] sm:$0xf]
    %v2456 = vunpack.c.l.b16 %v2424
    %v2457 = vunpack.c.l.b16 %v2425
    %v2458 = vunpack.c.l.b16 %v2426
    %v2459 = vunpack.c.l.b16 %v2427
    %v2460 = vunpack.c.l.b16 %v2428
    %v2461 = vunpack.c.l.b16 %v2429
    %v2462 = vunpack.c.l.b16 %v2430
    %v2463 = vunpack.c.l.b16 %v2431
    %v2464 = vunpack.c.l.b16 %v2432
    %v2465 = vunpack.c.l.b16 %v2433
    %v2466 = vunpack.c.l.b16 %v2434
    %v2467 = vunpack.c.l.b16 %v2435
    %v2468 = vunpack.c.l.b16 %v2436
    %v2469 = vunpack.c.l.b16 %v2437
    %v2470 = vunpack.c.l.b16 %v2438
    %v2471 = vunpack.c.l.b16 %v2439
    %v2472 = vpack.c.b16 %v2457, %v2456
    %v2473 = vpack.c.b16 %v2459, %v2458
    %v2474 = vpack.c.b16 %v2461, %v2460
    %v2475 = vpack.c.b16 %v2463, %v2462
    %v2476 = vpack.c.b16 %v2465, %v2464
    %v2477 = vpack.c.b16 %v2467, %v2466
    %v2478 = vpack.c.b16 %v2469, %v2468
    %v2479 = vpack.c.b16 %v2471, %v2470
    %2488 = vmatpush.bf16.msra.mxu0 %v2479
    %2489 = vmatpush.bf16.msra.mxu0 %v2478
    %2490 = vmatpush.bf16.msra.mxu0 %v2477
    %2491 = vmatpush.bf16.msra.mxu0 %v2476
    %2492 = vmatpush.bf16.msra.mxu0 %v2475
    %2493 = vmatpush.bf16.msra.mxu0 %v2474
    %2494 = vmatpush.bf16.msra.mxu0 %v2473
    %2495 = vmatpush.bf16.msra.mxu0 %v2472
    %2496 = vmatmul.bf16.gmra.mxu0 %v2420
    %v2497 = vpop.f32.mrf.mxu0
    %v2498 = vadd.f32 0.0, %v2497
    %v2499 = vpop.f32.mrf.mxu0
    %v2500 = vadd.f32 0.0, %v2499
    %2501 = vmatmul.bf16.gmra.mxu0 %v2421
    %v2502 = vpop.f32.mrf.mxu0
    %v2503 = vadd.f32 0.0, %v2502
    %v2504 = vpop.f32.mrf.mxu0
    %v2505 = vadd.f32 0.0, %v2504
    %2506 = vmatmul.bf16.gmra.mxu0 %v2422
    %v2507 = vpop.f32.mrf.mxu0
    %v2508 = vadd.f32 0.0, %v2507
    %v2509 = vpop.f32.mrf.mxu0
    %v2510 = vadd.f32 0.0, %v2509
    %2511 = vmatmul.bf16.gmra.mxu0 %v2423
    %v2512 = vpop.f32.mrf.mxu0
    %v2513 = vadd.f32 0.0, %v2512
    %v2514 = vpop.f32.mrf.mxu0
    %v2515 = vadd.f32 0.0, %v2514
    %2516 = vdwg.mxu0
    %v2517 = vadd.f32 %v1458, %v2498
    %v2518 = vadd.f32 %v1459, %v2500
    %v2519 = vadd.f32 %v1460, %v2503
    %v2520 = vadd.f32 %v1461, %v2505
    %v2521 = vadd.f32 %v1462, %v2508
    %v2522 = vadd.f32 %v1463, %v2510
    %v2523 = vadd.f32 %v1464, %v2513
    %v2524 = vadd.f32 %v1465, %v2515
    %v2525 = vperm.slane %v1471, 3
    %v2526 = vadd.f32 %v2517, %v2525
    %v2527 = vadd.f32 %v2518, %v2525
    %v2528 = vadd.f32 %v2519, %v2525
    %v2529 = vadd.f32 %v2520, %v2525
    %v2530 = vadd.f32 %v2521, %v2525
    %v2531 = vadd.f32 %v2522, %v2525
    %v2532 = vadd.f32 %v2523, %v2525
    %v2533 = vadd.f32 %v2524, %v2525
    %2534 = vst [vmem:[#allocation2] sm:$0xff] %v2526
    %2535 = vst [vmem:[#allocation2 + $0x8] sm:$0xff] %v2527
    %2536 = vst [vmem:[#allocation2 + $0x10] sm:$0xff] %v2528
    %2537 = vst [vmem:[#allocation2 + $0x18] sm:$0xff] %v2529
    %2538 = vst [vmem:[#allocation2 + $0x20] sm:$0xff] %v2530
    %2539 = vst [vmem:[#allocation2 + $0x28] sm:$0xff] %v2531
    %2540 = vst [vmem:[#allocation2 + $0x30] sm:$0xff] %v2532
    %2541 = vst [vmem:[#allocation2 + $0x38] sm:$0xff] %v2533
    %2542 = vst [vmem:[#allocation3] sm:$0xff] %v2104
    %2543 = vst [vmem:[#allocation3 + $0x8] sm:$0xff] %v2105
    %2544 = vst [vmem:[#allocation3 + $0x10] sm:$0xff] %v2106
    %2545 = vst [vmem:[#allocation3 + $0x18] sm:$0xff] %v2107
    %2546 = vst [vmem:[#allocation3 + $0x20] sm:$0xff] %v2108
    %2547 = vst [vmem:[#allocation3 + $0x28] sm:$0xff] %v2109
    %2548 = vst [vmem:[#allocation3 + $0x30] sm:$0xff] %v2110
    %2549 = vst [vmem:[#allocation3 + $0x38] sm:$0xff] %v2111
    %2550 = vst [vmem:[#allocation3 + $0x40] sm:$0xff] %v2112
    %2551 = vst [vmem:[#allocation3 + $0x48] sm:$0xff] %v2113
    %2552 = vst [vmem:[#allocation3 + $0x50] sm:$0xff] %v2114
    %2553 = vst [vmem:[#allocation3 + $0x58] sm:$0xff] %v2115
    %2554 = vst [vmem:[#allocation3 + $0x60] sm:$0xff] %v2116
    %2555 = vst [vmem:[#allocation3 + $0x68] sm:$0xff] %v2117
    %2556 = vst [vmem:[#allocation3 + $0x70] sm:$0xff] %v2118
    %2557 = vst [vmem:[#allocation3 + $0x78] sm:$0xff] %v2119
    %v2558 = vpack.c.bf16 %v2527, %v2526
    %v2559 = vpack.c.bf16 %v2529, %v2528
    %v2560 = vpack.c.bf16 %v2531, %v2530
    %v2561 = vpack.c.bf16 %v2533, %v2532
    %v2562 = vld [vmem:[#allocation21] sm:$0xf]
    %v2563 = vld [vmem:[#allocation21 + $0x4] sm:$0xf]
    %v2564 = vld [vmem:[#allocation21 + $0x8] sm:$0xf]
    %v2565 = vld [vmem:[#allocation21 + $0xc] sm:$0xf]
    %v2566 = vld [vmem:[#allocation21 + $0x10] sm:$0xf]
    %v2567 = vld [vmem:[#allocation21 + $0x14] sm:$0xf]
    %v2568 = vld [vmem:[#allocation21 + $0x18] sm:$0xf]
    %v2569 = vld [vmem:[#allocation21 + $0x1c] sm:$0xf]
    %v2570 = vld [vmem:[#allocation21 + $0x20] sm:$0xf]
    %v2571 = vld [vmem:[#allocation21 + $0x24] sm:$0xf]
    %v2572 = vld [vmem:[#allocation21 + $0x28] sm:$0xf]
    %v2573 = vld [vmem:[#allocation21 + $0x2c] sm:$0xf]
    %v2574 = vld [vmem:[#allocation21 + $0x30] sm:$0xf]
    %v2575 = vld [vmem:[#allocation21 + $0x34] sm:$0xf]
    %v2576 = vld [vmem:[#allocation21 + $0x38] sm:$0xf]
    %v2577 = vld [vmem:[#allocation21 + $0x3c] sm:$0xf]
    %v2578 = vld [vmem:[#allocation22] sm:$0x1]
    %v2579 = vperm.slane %v2578, 0
    %v2580 = vmul.f32 %v284, %v2579
    %v2581 = vmul.f32 %v285, %v2579
    %v2582 = vmul.f32 %v286, %v2579
    %v2583 = vmul.f32 %v287, %v2579
    %v2584 = vmul.f32 %v288, %v2579
    %v2585 = vmul.f32 %v289, %v2579
    %v2586 = vmul.f32 %v290, %v2579
    %v2587 = vmul.f32 %v291, %v2579
    %v2604 = vunpack.c.l.b16 %v2562
    %v2605 = vunpack.c.l.b16 %v2563
    %v2606 = vunpack.c.l.b16 %v2564
    %v2607 = vunpack.c.l.b16 %v2565
    %v2608 = vunpack.c.l.b16 %v2566
    %v2609 = vunpack.c.l.b16 %v2567
    %v2610 = vunpack.c.l.b16 %v2568
    %v2611 = vunpack.c.l.b16 %v2569
    %v2612 = vunpack.c.l.b16 %v2570
    %v2613 = vunpack.c.l.b16 %v2571
    %v2614 = vunpack.c.l.b16 %v2572
    %v2615 = vunpack.c.l.b16 %v2573
    %v2616 = vunpack.c.l.b16 %v2574
    %v2617 = vunpack.c.l.b16 %v2575
    %v2618 = vunpack.c.l.b16 %v2576
    %v2619 = vunpack.c.l.b16 %v2577
    %v2620 = vpack.c.b16 %v2605, %v2604
    %v2621 = vpack.c.b16 %v2607, %v2606
    %v2622 = vpack.c.b16 %v2609, %v2608
    %v2623 = vpack.c.b16 %v2611, %v2610
    %v2624 = vpack.c.b16 %v2613, %v2612
    %v2625 = vpack.c.b16 %v2615, %v2614
    %v2626 = vpack.c.b16 %v2617, %v2616
    %v2627 = vpack.c.b16 %v2619, %v2618
    %2636 = vmatpush.bf16.msra.mxu0 %v2627
    %2637 = vmatpush.bf16.msra.mxu0 %v2626
    %2638 = vmatpush.bf16.msra.mxu0 %v2625
    %2639 = vmatpush.bf16.msra.mxu0 %v2624
    %2640 = vmatpush.bf16.msra.mxu0 %v2623
    %2641 = vmatpush.bf16.msra.mxu0 %v2622
    %2642 = vmatpush.bf16.msra.mxu0 %v2621
    %2643 = vmatpush.bf16.msra.mxu0 %v2620
    %2644 = vmatmul.bf16.gmra.mxu0 %v2558
    %v2645 = vpop.f32.mrf.mxu0
    %v2646 = vadd.f32 %v2580, %v2645
    %v2647 = vpop.f32.mrf.mxu0
    %v2648 = vadd.f32 %v2581, %v2647
    %2649 = vmatmul.bf16.gmra.mxu0 %v2559
    %v2650 = vpop.f32.mrf.mxu0
    %v2651 = vadd.f32 %v2582, %v2650
    %v2652 = vpop.f32.mrf.mxu0
    %v2653 = vadd.f32 %v2583, %v2652
    %2654 = vmatmul.bf16.gmra.mxu0 %v2560
    %v2655 = vpop.f32.mrf.mxu0
    %v2656 = vadd.f32 %v2584, %v2655
    %v2657 = vpop.f32.mrf.mxu0
    %v2658 = vadd.f32 %v2585, %v2657
    %2659 = vmatmul.bf16.gmra.mxu0 %v2561
    %v2660 = vpop.f32.mrf.mxu0
    %v2661 = vadd.f32 %v2586, %v2660
    %v2662 = vpop.f32.mrf.mxu0
    %v2663 = vadd.f32 %v2587, %v2662
    %2664 = vdwg.mxu0
    %v2665 = vld [vmem:[#allocation22 + $0x1] sm:$0x1]
    %v2666 = vperm.slane %v2665, 0
    %v2667 = vadd.f32 %v2646, %v2666
    %v2668 = vadd.f32 %v2648, %v2666
    %v2669 = vadd.f32 %v2651, %v2666
    %v2670 = vadd.f32 %v2653, %v2666
    %v2671 = vadd.f32 %v2656, %v2666
    %v2672 = vadd.f32 %v2658, %v2666
    %v2673 = vadd.f32 %v2661, %v2666
    %v2674 = vadd.f32 %v2663, %v2666
    %vm2675 = vcmp.gt.f32.partialorder %v2667, 0.0
    %vm2676 = vcmp.gt.f32.partialorder %v2668, 0.0
    %vm2677 = vcmp.gt.f32.partialorder %v2669, 0.0
    %vm2678 = vcmp.gt.f32.partialorder %v2670, 0.0
    %vm2679 = vcmp.gt.f32.partialorder %v2671, 0.0
    %vm2680 = vcmp.gt.f32.partialorder %v2672, 0.0
    %vm2681 = vcmp.gt.f32.partialorder %v2673, 0.0
    %vm2682 = vcmp.gt.f32.partialorder %v2674, 0.0
    %v2683 = vmul.f32 %v2667, 1.442695
    %v2684 = vpow.pop %v2683
    %v2685 = vmul.f32 %v2668, 1.442695
    %v2686 = vpow.pop %v2685
    %v2687 = vmul.f32 %v2669, 1.442695
    %v2688 = vpow.pop %v2687
    %v2689 = vmul.f32 %v2670, 1.442695
    %v2690 = vpow.pop %v2689
    %v2691 = vmul.f32 %v2671, 1.442695
    %v2692 = vpow.pop %v2691
    %v2693 = vmul.f32 %v2672, 1.442695
    %v2694 = vpow.pop %v2693
    %v2695 = vmul.f32 %v2673, 1.442695
    %v2696 = vpow.pop %v2695
    %v2697 = vmul.f32 %v2674, 1.442695
    %v2698 = vpow.pop %v2697
    %v2699 = vsub.f32 %v2684, 1.0
    %v2700 = vsub.f32 %v2686, 1.0
    %v2701 = vsub.f32 %v2688, 1.0
    %v2702 = vsub.f32 %v2690, 1.0
    %v2703 = vsub.f32 %v2692, 1.0
    %v2704 = vsub.f32 %v2694, 1.0
    %v2705 = vsub.f32 %v2696, 1.0
    %v2706 = vsub.f32 %v2698, 1.0
    %v2707 = vmul.f32 %v2699, 1.6732632
    %v2708 = vmul.f32 %v2700, 1.6732632
    %v2709 = vmul.f32 %v2701, 1.6732632
    %v2710 = vmul.f32 %v2702, 1.6732632
    %v2711 = vmul.f32 %v2703, 1.6732632
    %v2712 = vmul.f32 %v2704, 1.6732632
    %v2713 = vmul.f32 %v2705, 1.6732632
    %v2714 = vmul.f32 %v2706, 1.6732632
    %v2715 = vsel %vm2675, %v2667, %v2707
    %v2716 = vsel %vm2676, %v2668, %v2708
    %v2717 = vsel %vm2677, %v2669, %v2709
    %v2718 = vsel %vm2678, %v2670, %v2710
    %v2719 = vsel %vm2679, %v2671, %v2711
    %v2720 = vsel %vm2680, %v2672, %v2712
    %v2721 = vsel %vm2681, %v2673, %v2713
    %v2722 = vsel %vm2682, %v2674, %v2714
    %v2723 = vmul.f32 %v2715, 1.050701
    %v2724 = vmul.f32 %v2716, 1.050701
    %v2725 = vmul.f32 %v2717, 1.050701
    %v2726 = vmul.f32 %v2718, 1.050701
    %v2727 = vmul.f32 %v2719, 1.050701
    %v2728 = vmul.f32 %v2720, 1.050701
    %v2729 = vmul.f32 %v2721, 1.050701
    %v2730 = vmul.f32 %v2722, 1.050701
    %v2731 = vpack.c.bf16 %v2724, %v2723
    %v2732 = vpack.c.bf16 %v2726, %v2725
    %v2733 = vpack.c.bf16 %v2728, %v2727
    %v2734 = vpack.c.bf16 %v2730, %v2729
    %s2735 = scalar_lea.vmem [#allocation21], 64
    %v2736 = vld [vmem:[%s2735] sm:$0xf]
    %v2737 = vld [vmem:[%s2735 + $0x4] sm:$0xf]
    %v2738 = vld [vmem:[%s2735 + $0x8] sm:$0xf]
    %v2739 = vld [vmem:[%s2735 + $0xc] sm:$0xf]
    %v2740 = vld [vmem:[%s2735 + $0x10] sm:$0xf]
    %v2741 = vld [vmem:[%s2735 + $0x14] sm:$0xf]
    %v2742 = vld [vmem:[%s2735 + $0x18] sm:$0xf]
    %v2743 = vld [vmem:[%s2735 + $0x1c] sm:$0xf]
    %v2744 = vld [vmem:[%s2735 + $0x20] sm:$0xf]
    %v2745 = vld [vmem:[%s2735 + $0x24] sm:$0xf]
    %v2746 = vld [vmem:[%s2735 + $0x28] sm:$0xf]
    %v2747 = vld [vmem:[%s2735 + $0x2c] sm:$0xf]
    %v2748 = vld [vmem:[%s2735 + $0x30] sm:$0xf]
    %v2749 = vld [vmem:[%s2735 + $0x34] sm:$0xf]
    %v2750 = vld [vmem:[%s2735 + $0x38] sm:$0xf]
    %v2751 = vld [vmem:[%s2735 + $0x3c] sm:$0xf]
    %v2752 = vld [vmem:[#allocation22 + $0x2] sm:$0x1]
    %v2753 = vperm.slane %v2752, 0
    %v2770 = vunpack.c.l.b16 %v2736
    %v2771 = vunpack.c.l.b16 %v2737
    %v2772 = vunpack.c.l.b16 %v2738
    %v2773 = vunpack.c.l.b16 %v2739
    %v2774 = vunpack.c.l.b16 %v2740
    %v2775 = vunpack.c.l.b16 %v2741
    %v2776 = vunpack.c.l.b16 %v2742
    %v2777 = vunpack.c.l.b16 %v2743
    %v2778 = vunpack.c.l.b16 %v2744
    %v2779 = vunpack.c.l.b16 %v2745
    %v2780 = vunpack.c.l.b16 %v2746
    %v2781 = vunpack.c.l.b16 %v2747
    %v2782 = vunpack.c.l.b16 %v2748
    %v2783 = vunpack.c.l.b16 %v2749
    %v2784 = vunpack.c.l.b16 %v2750
    %v2785 = vunpack.c.l.b16 %v2751
    %v2786 = vpack.c.b16 %v2771, %v2770
    %v2787 = vpack.c.b16 %v2773, %v2772
    %v2788 = vpack.c.b16 %v2775, %v2774
    %v2789 = vpack.c.b16 %v2777, %v2776
    %v2790 = vpack.c.b16 %v2779, %v2778
    %v2791 = vpack.c.b16 %v2781, %v2780
    %v2792 = vpack.c.b16 %v2783, %v2782
    %v2793 = vpack.c.b16 %v2785, %v2784
    %2802 = vmatpush.bf16.msra.mxu0 %v2793
    %2803 = vmatpush.bf16.msra.mxu0 %v2792
    %2804 = vmatpush.bf16.msra.mxu0 %v2791
    %2805 = vmatpush.bf16.msra.mxu0 %v2790
    %2806 = vmatpush.bf16.msra.mxu0 %v2789
    %2807 = vmatpush.bf16.msra.mxu0 %v2788
    %2808 = vmatpush.bf16.msra.mxu0 %v2787
    %2809 = vmatpush.bf16.msra.mxu0 %v2786
    %2810 = vmatmul.bf16.gmra.mxu0 %v2731
    %v2811 = vpop.f32.mrf.mxu0
    %v2812 = vadd.f32 %v2753, %v2811
    %v2813 = vpop.f32.mrf.mxu0
    %v2814 = vadd.f32 %v2753, %v2813
    %2815 = vmatmul.bf16.gmra.mxu0 %v2732
    %v2816 = vpop.f32.mrf.mxu0
    %v2817 = vadd.f32 %v2753, %v2816
    %v2818 = vpop.f32.mrf.mxu0
    %v2819 = vadd.f32 %v2753, %v2818
    %2820 = vmatmul.bf16.gmra.mxu0 %v2733
    %v2821 = vpop.f32.mrf.mxu0
    %v2822 = vadd.f32 %v2753, %v2821
    %v2823 = vpop.f32.mrf.mxu0
    %v2824 = vadd.f32 %v2753, %v2823
    %2825 = vmatmul.bf16.gmra.mxu0 %v2734
    %v2826 = vpop.f32.mrf.mxu0
    %v2827 = vadd.f32 %v2753, %v2826
    %v2828 = vpop.f32.mrf.mxu0
    %v2829 = vadd.f32 %v2753, %v2828
    %2830 = vdwg.mxu0
    %v2831 = vld [vmem:[#allocation13] sm:$0xf]
    %v2832 = vld [vmem:[#allocation13 + $0x4] sm:$0xf]
    %v2833 = vpack.c.bf16 %v2814, %v2812
    %v2834 = vpack.c.bf16 %v2819, %v2817
    %v2835 = vpack.c.bf16 %v2824, %v2822
    %v2836 = vpack.c.bf16 %v2829, %v2827
    %v2839 = vunpack.c.l.b16 %v2831
    %v2840 = vunpack.c.l.b16 %v2832
    %v2841 = vpack.c.b16 %v2840, %v2839
    %vm2842 = vcmask 523264
    %v2844 = vsel %vm2842, %v2841, 0
    %2846 = vmatpush.bf16.msra.mxu0 0
    %2847 = vmatpush.bf16.msra.mxu0 0
    %2848 = vmatpush.bf16.msra.mxu0 0
    %2849 = vmatpush.bf16.msra.mxu0 0
    %2850 = vmatpush.bf16.msra.mxu0 %v2836
    %2851 = vmatpush.bf16.msra.mxu0 %v2835
    %2852 = vmatpush.bf16.msra.mxu0 %v2834
    %2853 = vmatpush.bf16.msra.mxu0 %v2833
    %2854 = vmatmul.bf16.gmra.mxu0 %v2844
    %v2855 = vpop.f32.mrf.mxu0
    %v2856 = vadd.f32 0.0, %v2855
    %v2857 = vpop.f32.mrf.mxu0
    %v2858 = vadd.f32 0.0, %v2857
    %2859 = vdwg.mxu0
    %v2860 = vmul.f32 %v2856, %v282
    %v2861 = vmul.f32 %v2858, %v283
    %v2862 = vld [vmem:[#allocation22 + $0x3] sm:$0x1]
    %v2863 = vperm.slane %v2862, 0
    %v2864 = vmul.f32 %v292, %v2863
    %v2865 = vmul.f32 %v293, %v2863
    %v2866 = vmul.f32 %v294, %v2863
    %v2867 = vmul.f32 %v295, %v2863
    %v2868 = vld [vmem:[#allocation22 + $0x4] sm:$0x1]
    %v2869 = vperm.slane %v2868, 0
    %v2870 = vadd.f32 %v2864, %v2869
    %v2871 = vadd.f32 %v2865, %v2869
    %v2872 = vadd.f32 %v2866, %v2869
    %v2873 = vadd.f32 %v2867, %v2869
    %vm2874 = vcmp.gt.f32.partialorder %v2870, 0.0
    %vm2875 = vcmp.gt.f32.partialorder %v2871, 0.0
    %vm2876 = vcmp.gt.f32.partialorder %v2872, 0.0
    %vm2877 = vcmp.gt.f32.partialorder %v2873, 0.0
    %v2878 = vmul.f32 %v2870, 1.442695
    %v2879 = vpow.pop %v2878
    %v2880 = vmul.f32 %v2871, 1.442695
    %v2881 = vpow.pop %v2880
    %v2882 = vmul.f32 %v2872, 1.442695
    %v2883 = vpow.pop %v2882
    %v2884 = vmul.f32 %v2873, 1.442695
    %v2885 = vpow.pop %v2884
    %v2886 = vsub.f32 %v2879, 1.0
    %v2887 = vsub.f32 %v2881, 1.0
    %v2888 = vsub.f32 %v2883, 1.0
    %v2889 = vsub.f32 %v2885, 1.0
    %v2890 = vmul.f32 %v2886, 1.6732632
    %v2891 = vmul.f32 %v2887, 1.6732632
    %v2892 = vmul.f32 %v2888, 1.6732632
    %v2893 = vmul.f32 %v2889, 1.6732632
    %v2894 = vsel %vm2874, %v2870, %v2890
    %v2895 = vsel %vm2875, %v2871, %v2891
    %v2896 = vsel %vm2876, %v2872, %v2892
    %v2897 = vsel %vm2877, %v2873, %v2893
    %v2898 = vmul.f32 %v2894, 1.050701
    %v2899 = vmul.f32 %v2895, 1.050701
    %v2900 = vmul.f32 %v2896, 1.050701
    %v2901 = vmul.f32 %v2897, 1.050701
    %v2902 = vpack.c.bf16 %v2899, %v2898
    %v2903 = vpack.c.bf16 %v2901, %v2900
    %s2904 = scalar_lea.vmem [#allocation21], 128
    %v2905 = vld [vmem:[%s2904] sm:$0xf]
    %v2906 = vld [vmem:[%s2904 + $0x4] sm:$0xf]
    %v2907 = vld [vmem:[%s2904 + $0x8] sm:$0xf]
    %v2908 = vld [vmem:[%s2904 + $0xc] sm:$0xf]
    %v2909 = vld [vmem:[%s2904 + $0x10] sm:$0xf]
    %v2910 = vld [vmem:[%s2904 + $0x14] sm:$0xf]
    %v2911 = vld [vmem:[%s2904 + $0x18] sm:$0xf]
    %v2912 = vld [vmem:[%s2904 + $0x1c] sm:$0xf]
    %v2913 = vld [vmem:[%s2904 + $0x20] sm:$0xf]
    %v2914 = vld [vmem:[%s2904 + $0x24] sm:$0xf]
    %v2915 = vld [vmem:[%s2904 + $0x28] sm:$0xf]
    %v2916 = vld [vmem:[%s2904 + $0x2c] sm:$0xf]
    %v2917 = vld [vmem:[%s2904 + $0x30] sm:$0xf]
    %v2918 = vld [vmem:[%s2904 + $0x34] sm:$0xf]
    %v2919 = vld [vmem:[%s2904 + $0x38] sm:$0xf]
    %v2920 = vld [vmem:[%s2904 + $0x3c] sm:$0xf]
    %v2921 = vld [vmem:[#allocation22 + $0x5] sm:$0x1]
    %v2922 = vperm.slane %v2921, 0
    %v2939 = vunpack.c.l.b16 %v2905
    %v2940 = vunpack.c.l.b16 %v2906
    %v2941 = vunpack.c.l.b16 %v2907
    %v2942 = vunpack.c.l.b16 %v2908
    %v2943 = vunpack.c.l.b16 %v2909
    %v2944 = vunpack.c.l.b16 %v2910
    %v2945 = vunpack.c.l.b16 %v2911
    %v2946 = vunpack.c.l.b16 %v2912
    %v2947 = vunpack.c.l.b16 %v2913
    %v2948 = vunpack.c.l.b16 %v2914
    %v2949 = vunpack.c.l.b16 %v2915
    %v2950 = vunpack.c.l.b16 %v2916
    %v2951 = vunpack.c.l.b16 %v2917
    %v2952 = vunpack.c.l.b16 %v2918
    %v2953 = vunpack.c.l.b16 %v2919
    %v2954 = vunpack.c.l.b16 %v2920
    %v2955 = vpack.c.b16 %v2940, %v2939
    %v2956 = vpack.c.b16 %v2942, %v2941
    %v2957 = vpack.c.b16 %v2944, %v2943
    %v2958 = vpack.c.b16 %v2946, %v2945
    %v2959 = vpack.c.b16 %v2948, %v2947
    %v2960 = vpack.c.b16 %v2950, %v2949
    %v2961 = vpack.c.b16 %v2952, %v2951
    %v2962 = vpack.c.b16 %v2954, %v2953
    %2971 = vmatpush.bf16.msra.mxu0 %v2962
    %2972 = vmatpush.bf16.msra.mxu0 %v2961
    %2973 = vmatpush.bf16.msra.mxu0 %v2960
    %2974 = vmatpush.bf16.msra.mxu0 %v2959
    %2975 = vmatpush.bf16.msra.mxu0 %v2958
    %2976 = vmatpush.bf16.msra.mxu0 %v2957
    %2977 = vmatpush.bf16.msra.mxu0 %v2956
    %2978 = vmatpush.bf16.msra.mxu0 %v2955
    %2979 = vmatmul.bf16.gmra.mxu0 %v2902
    %v2980 = vpop.f32.mrf.mxu0
    %v2981 = vadd.f32 %v2922, %v2980
    %v2982 = vpop.f32.mrf.mxu0
    %v2983 = vadd.f32 %v2922, %v2982
    %2984 = vmatmul.bf16.gmra.mxu0 %v2903
    %v2985 = vpop.f32.mrf.mxu0
    %v2986 = vadd.f32 %v2922, %v2985
    %v2987 = vpop.f32.mrf.mxu0
    %v2988 = vadd.f32 %v2922, %v2987
    %2989 = vdwg.mxu0
    %v2990 = vpack.c.bf16 %v2861, %v2860
    %v2991 = vpack.c.bf16 %v2983, %v2981
    %v2992 = vpack.c.bf16 %v2988, %v2986
    %v2993 = vld [vmem:[#allocation19] sm:$0xf]
    %v2994 = vld [vmem:[#allocation18] sm:$0xff]
    %v2995 = vld [vmem:[#allocation18 + $0x1c] sm:$0xff]
    %v2996 = vld [vmem:[#allocation18 + $0x38] sm:$0xff]
    %v2997 = vld [vmem:[#allocation18 + $0x54] sm:$0xff]
    %v2998 = vld [vmem:[#allocation18 + $0x70] sm:$0xff]
    %v2999 = vld [vmem:[#allocation18 + $0x8c] sm:$0xff]
    %v3000 = vld [vmem:[#allocation18 + $0xa8] sm:$0xff]
    %v3001 = vld [vmem:[#allocation18 + $0xc4] sm:$0xff]
    %v3002 = vld [vmem:[#allocation18 + $0xe0] sm:$0xff]
    %v3003 = vld [vmem:[#allocation18 + $0xfc] sm:$0xff]
    %v3004 = vld [vmem:[#allocation18 + $0x118] sm:$0xff]
    %v3005 = vld [vmem:[#allocation18 + $0x134] sm:$0xff]
    %v3006 = vld [vmem:[#allocation18 + $0x150] sm:$0xff]
    %v3007 = vld [vmem:[#allocation18 + $0x16c] sm:$0xff]
    %v3008 = vld [vmem:[#allocation18 + $0x188] sm:$0xff]
    %v3009 = vld [vmem:[#allocation18 + $0x1a4] sm:$0xff]
    %v3026 = vunpack.c.l.b16 %v2994
    %v3027 = vunpack.c.h.b16 %v2994
    %v3028 = vunpack.c.l.b16 %v2995
    %v3029 = vunpack.c.h.b16 %v2995
    %v3030 = vunpack.c.l.b16 %v2996
    %v3031 = vunpack.c.h.b16 %v2996
    %v3032 = vunpack.c.l.b16 %v2997
    %v3033 = vunpack.c.h.b16 %v2997
    %v3034 = vunpack.c.l.b16 %v2998
    %v3035 = vunpack.c.h.b16 %v2998
    %v3036 = vunpack.c.l.b16 %v2999
    %v3037 = vunpack.c.h.b16 %v2999
    %v3038 = vunpack.c.l.b16 %v3000
    %v3039 = vunpack.c.h.b16 %v3000
    %v3040 = vunpack.c.l.b16 %v3001
    %v3041 = vunpack.c.h.b16 %v3001
    %v3042 = vunpack.c.l.b16 %v3002
    %v3043 = vunpack.c.h.b16 %v3002
    %v3044 = vunpack.c.l.b16 %v3003
    %v3045 = vunpack.c.h.b16 %v3003
    %v3046 = vunpack.c.l.b16 %v3004
    %v3047 = vunpack.c.h.b16 %v3004
    %v3048 = vunpack.c.l.b16 %v3005
    %v3049 = vunpack.c.h.b16 %v3005
    %v3050 = vunpack.c.l.b16 %v3006
    %v3051 = vunpack.c.h.b16 %v3006
    %v3052 = vunpack.c.l.b16 %v3007
    %v3053 = vunpack.c.h.b16 %v3007
    %v3054 = vunpack.c.l.b16 %v3008
    %v3055 = vunpack.c.h.b16 %v3008
    %v3056 = vunpack.c.l.b16 %v3009
    %v3057 = vunpack.c.h.b16 %v3009
    %v3058 = vpack.c.b16 %v3028, %v3026
    %v3059 = vpack.c.b16 %v3029, %v3027
    %v3060 = vpack.c.b16 %v3032, %v3030
    %v3061 = vpack.c.b16 %v3033, %v3031
    %v3062 = vpack.c.b16 %v3036, %v3034
    %v3063 = vpack.c.b16 %v3037, %v3035
    %v3064 = vpack.c.b16 %v3040, %v3038
    %v3065 = vpack.c.b16 %v3041, %v3039
    %v3066 = vpack.c.b16 %v3044, %v3042
    %v3067 = vpack.c.b16 %v3045, %v3043
    %v3068 = vpack.c.b16 %v3048, %v3046
    %v3069 = vpack.c.b16 %v3049, %v3047
    %v3070 = vpack.c.b16 %v3052, %v3050
    %v3071 = vpack.c.b16 %v3053, %v3051
    %v3072 = vpack.c.b16 %v3056, %v3054
    %v3073 = vpack.c.b16 %v3057, %v3055
    %3090 = vmatpush.bf16.msra.mxu0 %v3072
    %3091 = vmatpush.bf16.msra.mxu0 %v3070
    %3092 = vmatpush.bf16.msra.mxu0 %v3068
    %3093 = vmatpush.bf16.msra.mxu0 %v3066
    %3094 = vmatpush.bf16.msra.mxu0 %v3064
    %3095 = vmatpush.bf16.msra.mxu0 %v3062
    %3096 = vmatpush.bf16.msra.mxu0 %v3060
    %3097 = vmatpush.bf16.msra.mxu0 %v3058
    %3098 = vmatmul.bf16.gmra.mxu0 %v2990
    %v3099 = vpop.f32.mrf.mxu0
    %v3100 = vadd.f32 0.0, %v3099
    %v3101 = vpop.f32.mrf.mxu0
    %v3102 = vadd.f32 0.0, %v3101
    %3103 = vdwg.mxu0
    %3104 = vmatpush.bf16.msra.mxu0 %v3073
    %3105 = vmatpush.bf16.msra.mxu0 %v3071
    %3106 = vmatpush.bf16.msra.mxu0 %v3069
    %3107 = vmatpush.bf16.msra.mxu0 %v3067
    %3108 = vmatpush.bf16.msra.mxu0 %v3065
    %3109 = vmatpush.bf16.msra.mxu0 %v3063
    %3110 = vmatpush.bf16.msra.mxu0 %v3061
    %3111 = vmatpush.bf16.msra.mxu0 %v3059
    %3112 = vmatmul.bf16.gmra.mxu0 %v2990
    %v3113 = vpop.f32.mrf.mxu0
    %v3114 = vadd.f32 0.0, %v3113
    %v3115 = vpop.f32.mrf.mxu0
    %v3116 = vadd.f32 0.0, %v3115
    %3117 = vdwg.mxu0
    %v3118 = vpack.c.bf16 %v3114, %v3100
    %v3119 = vpack.c.bf16 %v3116, %v3102
    %v3122 = vunpack.c.l.b16 %v3118
    %v3123 = vunpack.c.l.b16 %v3119
    %v3124 = vpack.c.b16 %v3123, %v3122
    %v3126 = vunpack.c.h.b16 %v3118
    %v3127 = vunpack.c.h.b16 %v3119
    %v3128 = vpack.c.b16 %v3127, %v3126
    %v3130 = vld [vmem:[#allocation18 + $0x8] sm:$0xf]
    %v3131 = vld [vmem:[#allocation18 + $0x24] sm:$0xf]
    %v3132 = vld [vmem:[#allocation18 + $0x40] sm:$0xf]
    %v3133 = vld [vmem:[#allocation18 + $0x5c] sm:$0xf]
    %v3134 = vld [vmem:[#allocation18 + $0x78] sm:$0xf]
    %v3135 = vld [vmem:[#allocation18 + $0x94] sm:$0xf]
    %v3136 = vld [vmem:[#allocation18 + $0xb0] sm:$0xf]
    %v3137 = vld [vmem:[#allocation18 + $0xcc] sm:$0xf]
    %v3138 = vld [vmem:[#allocation18 + $0xe8] sm:$0xf]
    %v3139 = vld [vmem:[#allocation18 + $0x104] sm:$0xf]
    %v3140 = vld [vmem:[#allocation18 + $0x120] sm:$0xf]
    %v3141 = vld [vmem:[#allocation18 + $0x13c] sm:$0xf]
    %v3142 = vld [vmem:[#allocation18 + $0x158] sm:$0xf]
    %v3143 = vld [vmem:[#allocation18 + $0x174] sm:$0xf]
    %v3144 = vld [vmem:[#allocation18 + $0x190] sm:$0xf]
    %v3145 = vld [vmem:[#allocation18 + $0x1ac] sm:$0xf]
    %v3162 = vunpack.c.l.b16 %v3130
    %v3163 = vunpack.c.l.b16 %v3131
    %v3164 = vunpack.c.l.b16 %v3132
    %v3165 = vunpack.c.l.b16 %v3133
    %v3166 = vunpack.c.l.b16 %v3134
    %v3167 = vunpack.c.l.b16 %v3135
    %v3168 = vunpack.c.l.b16 %v3136
    %v3169 = vunpack.c.l.b16 %v3137
    %v3170 = vunpack.c.l.b16 %v3138
    %v3171 = vunpack.c.l.b16 %v3139
    %v3172 = vunpack.c.l.b16 %v3140
    %v3173 = vunpack.c.l.b16 %v3141
    %v3174 = vunpack.c.l.b16 %v3142
    %v3175 = vunpack.c.l.b16 %v3143
    %v3176 = vunpack.c.l.b16 %v3144
    %v3177 = vunpack.c.l.b16 %v3145
    %v3178 = vpack.c.b16 %v3163, %v3162
    %v3179 = vpack.c.b16 %v3165, %v3164
    %v3180 = vpack.c.b16 %v3167, %v3166
    %v3181 = vpack.c.b16 %v3169, %v3168
    %v3182 = vpack.c.b16 %v3171, %v3170
    %v3183 = vpack.c.b16 %v3173, %v3172
    %v3184 = vpack.c.b16 %v3175, %v3174
    %v3185 = vpack.c.b16 %v3177, %v3176
    %3194 = vmatpush.bf16.msra.mxu0 %v3185
    %3195 = vmatpush.bf16.msra.mxu0 %v3184
    %3196 = vmatpush.bf16.msra.mxu0 %v3183
    %3197 = vmatpush.bf16.msra.mxu0 %v3182
    %3198 = vmatpush.bf16.msra.mxu0 %v3181
    %3199 = vmatpush.bf16.msra.mxu0 %v3180
    %3200 = vmatpush.bf16.msra.mxu0 %v3179
    %3201 = vmatpush.bf16.msra.mxu0 %v3178
    %3202 = vmatmul.bf16.gmra.mxu0 %v2991
    %v3203 = vpop.f32.mrf.mxu0
    %v3204 = vadd.f32 0.0, %v3203
    %v3205 = vpop.f32.mrf.mxu0
    %v3206 = vadd.f32 0.0, %v3205
    %3207 = vmatmul.bf16.gmra.mxu0 %v2992
    %v3208 = vpop.f32.mrf.mxu0
    %v3209 = vadd.f32 0.0, %v3208
    %v3210 = vpop.f32.mrf.mxu0
    %v3211 = vadd.f32 0.0, %v3210
    %3212 = vdwg.mxu0
    %v3217 = vunpack.c.l.b16 %v266
    %v3218 = vunpack.c.l.b16 %v267
    %v3219 = vunpack.c.l.b16 %v268
    %v3220 = vunpack.c.l.b16 %v269
    %v3221 = vpack.c.b16 %v3218, %v3217
    %v3222 = vpack.c.b16 %v3220, %v3219
    %vm3223 = vcmask 261120
    %v3225 = vsel %vm3223, %v3221, 0
    %v3228 = vsel %vm3223, %v3222, 0
    %3230 = vmatpush.bf16.msra.mxu0 0
    %3231 = vmatpush.bf16.msra.mxu0 0
    %3232 = vmatpush.bf16.msra.mxu0 0
    %3233 = vmatpush.bf16.msra.mxu0 0
    %3234 = vmatpush.bf16.msra.mxu0 0
    %3235 = vmatpush.bf16.msra.mxu0 0
    %3236 = vmatpush.bf16.msra.mxu0 %v3128
    %3237 = vmatpush.bf16.msra.mxu0 %v3124
    %3238 = vmatmul.bf16.gmra.mxu0 %v3225
    %v3239 = vpop.f32.mrf.mxu0
    %v3240 = vadd.f32 %v3204, %v3239
    %v3241 = vpop.f32.mrf.mxu0
    %v3242 = vadd.f32 %v3206, %v3241
    %3243 = vmatmul.bf16.gmra.mxu0 %v3228
    %v3244 = vpop.f32.mrf.mxu0
    %v3245 = vadd.f32 %v3209, %v3244
    %v3246 = vpop.f32.mrf.mxu0
    %v3247 = vadd.f32 %v3211, %v3246
    %3248 = vdwg.mxu0
    %v3249 = vperm.slane %v2993, 0
    %v3250 = vadd.f32 %v3240, %v3249
    %v3251 = vadd.f32 %v3242, %v3249
    %v3252 = vadd.f32 %v3245, %v3249
    %v3253 = vadd.f32 %v3247, %v3249
    %vm3254 = vcmp.gt.f32.partialorder %v3250, 0.0
    %vm3255 = vcmp.gt.f32.partialorder %v3251, 0.0
    %vm3256 = vcmp.gt.f32.partialorder %v3252, 0.0
    %vm3257 = vcmp.gt.f32.partialorder %v3253, 0.0
    %v3258 = vmul.f32 %v3250, 1.442695
    %v3259 = vpow.pop %v3258
    %v3260 = vmul.f32 %v3251, 1.442695
    %v3261 = vpow.pop %v3260
    %v3262 = vmul.f32 %v3252, 1.442695
    %v3263 = vpow.pop %v3262
    %v3264 = vmul.f32 %v3253, 1.442695
    %v3265 = vpow.pop %v3264
    %v3266 = vsub.f32 %v3259, 1.0
    %v3267 = vsub.f32 %v3261, 1.0
    %v3268 = vsub.f32 %v3263, 1.0
    %v3269 = vsub.f32 %v3265, 1.0
    %v3270 = vmul.f32 %v3266, 1.6732632
    %v3271 = vmul.f32 %v3267, 1.6732632
    %v3272 = vmul.f32 %v3268, 1.6732632
    %v3273 = vmul.f32 %v3269, 1.6732632
    %v3274 = vsel %vm3254, %v3250, %v3270
    %v3275 = vsel %vm3255, %v3251, %v3271
    %v3276 = vsel %vm3256, %v3252, %v3272
    %v3277 = vsel %vm3257, %v3253, %v3273
    %v3278 = vmul.f32 %v3274, 1.050701
    %v3279 = vmul.f32 %v3275, 1.050701
    %v3280 = vmul.f32 %v3276, 1.050701
    %v3281 = vmul.f32 %v3277, 1.050701
    %v3282 = vpack.c.bf16 %v3279, %v3278
    %v3283 = vpack.c.bf16 %v3281, %v3280
    %v3284 = vld [vmem:[#allocation18 + $0xc] sm:$0xf]
    %v3285 = vld [vmem:[#allocation18 + $0x28] sm:$0xf]
    %v3286 = vld [vmem:[#allocation18 + $0x44] sm:$0xf]
    %v3287 = vld [vmem:[#allocation18 + $0x60] sm:$0xf]
    %v3288 = vld [vmem:[#allocation18 + $0x7c] sm:$0xf]
    %v3289 = vld [vmem:[#allocation18 + $0x98] sm:$0xf]
    %v3290 = vld [vmem:[#allocation18 + $0xb4] sm:$0xf]
    %v3291 = vld [vmem:[#allocation18 + $0xd0] sm:$0xf]
    %v3292 = vld [vmem:[#allocation18 + $0xec] sm:$0xf]
    %v3293 = vld [vmem:[#allocation18 + $0x108] sm:$0xf]
    %v3294 = vld [vmem:[#allocation18 + $0x124] sm:$0xf]
    %v3295 = vld [vmem:[#allocation18 + $0x140] sm:$0xf]
    %v3296 = vld [vmem:[#allocation18 + $0x15c] sm:$0xf]
    %v3297 = vld [vmem:[#allocation18 + $0x178] sm:$0xf]
    %v3298 = vld [vmem:[#allocation18 + $0x194] sm:$0xf]
    %v3299 = vld [vmem:[#allocation18 + $0x1b0] sm:$0xf]
    %v3316 = vunpack.c.l.b16 %v3284
    %v3317 = vunpack.c.l.b16 %v3285
    %v3318 = vunpack.c.l.b16 %v3286
    %v3319 = vunpack.c.l.b16 %v3287
    %v3320 = vunpack.c.l.b16 %v3288
    %v3321 = vunpack.c.l.b16 %v3289
    %v3322 = vunpack.c.l.b16 %v3290
    %v3323 = vunpack.c.l.b16 %v3291
    %v3324 = vunpack.c.l.b16 %v3292
    %v3325 = vunpack.c.l.b16 %v3293
    %v3326 = vunpack.c.l.b16 %v3294
    %v3327 = vunpack.c.l.b16 %v3295
    %v3328 = vunpack.c.l.b16 %v3296
    %v3329 = vunpack.c.l.b16 %v3297
    %v3330 = vunpack.c.l.b16 %v3298
    %v3331 = vunpack.c.l.b16 %v3299
    %v3332 = vpack.c.b16 %v3317, %v3316
    %v3333 = vpack.c.b16 %v3319, %v3318
    %v3334 = vpack.c.b16 %v3321, %v3320
    %v3335 = vpack.c.b16 %v3323, %v3322
    %v3336 = vpack.c.b16 %v3325, %v3324
    %v3337 = vpack.c.b16 %v3327, %v3326
    %v3338 = vpack.c.b16 %v3329, %v3328
    %v3339 = vpack.c.b16 %v3331, %v3330
    %3348 = vmatpush.bf16.msra.mxu0 %v3339
    %3349 = vmatpush.bf16.msra.mxu0 %v3338
    %3350 = vmatpush.bf16.msra.mxu0 %v3337
    %3351 = vmatpush.bf16.msra.mxu0 %v3336
    %3352 = vmatpush.bf16.msra.mxu0 %v3335
    %3353 = vmatpush.bf16.msra.mxu0 %v3334
    %3354 = vmatpush.bf16.msra.mxu0 %v3333
    %3355 = vmatpush.bf16.msra.mxu0 %v3332
    %3356 = vmatmul.bf16.gmra.mxu0 %v3282
    %v3357 = vpop.f32.mrf.mxu0
    %v3358 = vadd.f32 0.0, %v3357
    %v3359 = vpop.f32.mrf.mxu0
    %v3360 = vadd.f32 0.0, %v3359
    %3361 = vmatmul.bf16.gmra.mxu0 %v3283
    %v3362 = vpop.f32.mrf.mxu0
    %v3363 = vadd.f32 0.0, %v3362
    %v3364 = vpop.f32.mrf.mxu0
    %v3365 = vadd.f32 0.0, %v3364
    %3366 = vdwg.mxu0
    %v3367 = vadd.f32 %v2981, %v3358
    %v3368 = vadd.f32 %v2983, %v3360
    %v3369 = vadd.f32 %v2986, %v3363
    %v3370 = vadd.f32 %v2988, %v3365
    %v3371 = vperm.slane %v2993, 1
    %v3372 = vadd.f32 %v3367, %v3371
    %v3373 = vadd.f32 %v3368, %v3371
    %v3374 = vadd.f32 %v3369, %v3371
    %v3375 = vadd.f32 %v3370, %v3371
    %v3376 = vpack.c.bf16 %v3373, %v3372
    %v3377 = vpack.c.bf16 %v3375, %v3374
    %v3380 = vunpack.c.l.b16 %v270
    %v3381 = vunpack.c.l.b16 %v271
    %v3382 = vpack.c.b16 %v3381, %v3380
    %v3384 = vsel %vm3223, %v3382, 0
    %3386 = vmatpush.bf16.msra.mxu0 0
    %3387 = vmatpush.bf16.msra.mxu0 0
    %3388 = vmatpush.bf16.msra.mxu0 0
    %3389 = vmatpush.bf16.msra.mxu0 0
    %3390 = vmatpush.bf16.msra.mxu0 0
    %3391 = vmatpush.bf16.msra.mxu0 0
    %3392 = vmatpush.bf16.msra.mxu0 %v3377
    %3393 = vmatpush.bf16.msra.mxu0 %v3376
    %3394 = vmatmul.bf16.gmra.mxu0 %v3384
    %v3395 = vpop.f32.mrf.mxu0
    %v3396 = vadd.f32 0.0, %v3395
    %v3397 = vpop.f32.mrf.mxu0
    %v3398 = vadd.f32 0.0, %v3397
    %3399 = vdwg.mxu0
    %v3400 = vmul.f32 %v3396, %v280
    %v3401 = vmul.f32 %v3398, %v281
    %v3402 = vld [vmem:[#allocation18 + $0x10] sm:$0xf]
    %v3403 = vld [vmem:[#allocation18 + $0x2c] sm:$0xf]
    %v3404 = vld [vmem:[#allocation18 + $0x48] sm:$0xf]
    %v3405 = vld [vmem:[#allocation18 + $0x64] sm:$0xf]
    %v3406 = vld [vmem:[#allocation18 + $0x80] sm:$0xf]
    %v3407 = vld [vmem:[#allocation18 + $0x9c] sm:$0xf]
    %v3408 = vld [vmem:[#allocation18 + $0xb8] sm:$0xf]
    %v3409 = vld [vmem:[#allocation18 + $0xd4] sm:$0xf]
    %v3410 = vld [vmem:[#allocation18 + $0xf0] sm:$0xf]
    %v3411 = vld [vmem:[#allocation18 + $0x10c] sm:$0xf]
    %v3412 = vld [vmem:[#allocation18 + $0x128] sm:$0xf]
    %v3413 = vld [vmem:[#allocation18 + $0x144] sm:$0xf]
    %v3414 = vld [vmem:[#allocation18 + $0x160] sm:$0xf]
    %v3415 = vld [vmem:[#allocation18 + $0x17c] sm:$0xf]
    %v3416 = vld [vmem:[#allocation18 + $0x198] sm:$0xf]
    %v3417 = vld [vmem:[#allocation18 + $0x1b4] sm:$0xf]
    %v3418 = vpack.c.bf16 %v3401, %v3400
    %v3419 = vld [vmem:[#allocation18 + $0x14] sm:$0xf]
    %v3420 = vld [vmem:[#allocation18 + $0x30] sm:$0xf]
    %v3421 = vld [vmem:[#allocation18 + $0x4c] sm:$0xf]
    %v3422 = vld [vmem:[#allocation18 + $0x68] sm:$0xf]
    %v3423 = vld [vmem:[#allocation18 + $0x84] sm:$0xf]
    %v3424 = vld [vmem:[#allocation18 + $0xa0] sm:$0xf]
    %v3425 = vld [vmem:[#allocation18 + $0xbc] sm:$0xf]
    %v3426 = vld [vmem:[#allocation18 + $0xd8] sm:$0xf]
    %v3427 = vld [vmem:[#allocation18 + $0xf4] sm:$0xf]
    %v3428 = vld [vmem:[#allocation18 + $0x110] sm:$0xf]
    %v3429 = vld [vmem:[#allocation18 + $0x12c] sm:$0xf]
    %v3430 = vld [vmem:[#allocation18 + $0x148] sm:$0xf]
    %v3431 = vld [vmem:[#allocation18 + $0x164] sm:$0xf]
    %v3432 = vld [vmem:[#allocation18 + $0x180] sm:$0xf]
    %v3433 = vld [vmem:[#allocation18 + $0x19c] sm:$0xf]
    %v3434 = vld [vmem:[#allocation18 + $0x1b8] sm:$0xf]
    %v3451 = vunpack.c.l.b16 %v3419
    %v3452 = vunpack.c.l.b16 %v3420
    %v3453 = vunpack.c.l.b16 %v3421
    %v3454 = vunpack.c.l.b16 %v3422
    %v3455 = vunpack.c.l.b16 %v3423
    %v3456 = vunpack.c.l.b16 %v3424
    %v3457 = vunpack.c.l.b16 %v3425
    %v3458 = vunpack.c.l.b16 %v3426
    %v3459 = vunpack.c.l.b16 %v3427
    %v3460 = vunpack.c.l.b16 %v3428
    %v3461 = vunpack.c.l.b16 %v3429
    %v3462 = vunpack.c.l.b16 %v3430
    %v3463 = vunpack.c.l.b16 %v3431
    %v3464 = vunpack.c.l.b16 %v3432
    %v3465 = vunpack.c.l.b16 %v3433
    %v3466 = vunpack.c.l.b16 %v3434
    %v3467 = vpack.c.b16 %v3452, %v3451
    %v3468 = vpack.c.b16 %v3454, %v3453
    %v3469 = vpack.c.b16 %v3456, %v3455
    %v3470 = vpack.c.b16 %v3458, %v3457
    %v3471 = vpack.c.b16 %v3460, %v3459
    %v3472 = vpack.c.b16 %v3462, %v3461
    %v3473 = vpack.c.b16 %v3464, %v3463
    %v3474 = vpack.c.b16 %v3466, %v3465
    %3483 = vmatpush.bf16.msra.mxu0 %v3474
    %3484 = vmatpush.bf16.msra.mxu0 %v3473
    %3485 = vmatpush.bf16.msra.mxu0 %v3472
    %3486 = vmatpush.bf16.msra.mxu0 %v3471
    %3487 = vmatpush.bf16.msra.mxu0 %v3470
    %3488 = vmatpush.bf16.msra.mxu0 %v3469
    %3489 = vmatpush.bf16.msra.mxu0 %v3468
    %3490 = vmatpush.bf16.msra.mxu0 %v3467
    %3491 = vmatmul.bf16.gmra.mxu0 %v3418
    %v3492 = vpop.f32.mrf.mxu0
    %v3493 = vadd.f32 0.0, %v3492
    %v3494 = vpop.f32.mrf.mxu0
    %v3495 = vadd.f32 0.0, %v3494
    %3496 = vdwg.mxu0
    %v3513 = vunpack.c.l.b16 %v3402
    %v3514 = vunpack.c.l.b16 %v3403
    %v3515 = vunpack.c.l.b16 %v3404
    %v3516 = vunpack.c.l.b16 %v3405
    %v3517 = vunpack.c.l.b16 %v3406
    %v3518 = vunpack.c.l.b16 %v3407
    %v3519 = vunpack.c.l.b16 %v3408
    %v3520 = vunpack.c.l.b16 %v3409
    %v3521 = vunpack.c.l.b16 %v3410
    %v3522 = vunpack.c.l.b16 %v3411
    %v3523 = vunpack.c.l.b16 %v3412
    %v3524 = vunpack.c.l.b16 %v3413
    %v3525 = vunpack.c.l.b16 %v3414
    %v3526 = vunpack.c.l.b16 %v3415
    %v3527 = vunpack.c.l.b16 %v3416
    %v3528 = vunpack.c.l.b16 %v3417
    %v3529 = vpack.c.b16 %v3514, %v3513
    %v3530 = vpack.c.b16 %v3516, %v3515
    %v3531 = vpack.c.b16 %v3518, %v3517
    %v3532 = vpack.c.b16 %v3520, %v3519
    %v3533 = vpack.c.b16 %v3522, %v3521
    %v3534 = vpack.c.b16 %v3524, %v3523
    %v3535 = vpack.c.b16 %v3526, %v3525
    %v3536 = vpack.c.b16 %v3528, %v3527
    %3545 = vmatpush.bf16.msra.mxu0 %v3536
    %3546 = vmatpush.bf16.msra.mxu0 %v3535
    %3547 = vmatpush.bf16.msra.mxu0 %v3534
    %3548 = vmatpush.bf16.msra.mxu0 %v3533
    %3549 = vmatpush.bf16.msra.mxu0 %v3532
    %3550 = vmatpush.bf16.msra.mxu0 %v3531
    %3551 = vmatpush.bf16.msra.mxu0 %v3530
    %3552 = vmatpush.bf16.msra.mxu0 %v3529
    %3553 = vmatmul.bf16.gmra.mxu0 %v2990
    %v3554 = vpop.f32.mrf.mxu0
    %v3555 = vadd.f32 %v3493, %v3554
    %v3556 = vpop.f32.mrf.mxu0
    %v3557 = vadd.f32 %v3495, %v3556
    %3558 = vdwg.mxu0
    %v3559 = vperm.slane %v2993, 2
    %v3560 = vadd.f32 %v3555, %v3559
    %v3561 = vadd.f32 %v3557, %v3559
    %vm3562 = vcmp.gt.f32.partialorder %v3560, 0.0
    %vm3563 = vcmp.gt.f32.partialorder %v3561, 0.0
    %v3564 = vmul.f32 %v3560, 1.442695
    %v3565 = vpow.pop %v3564
    %v3566 = vmul.f32 %v3561, 1.442695
    %v3567 = vpow.pop %v3566
    %v3568 = vsub.f32 %v3565, 1.0
    %v3569 = vsub.f32 %v3567, 1.0
    %v3570 = vmul.f32 %v3568, 1.6732632
    %v3571 = vmul.f32 %v3569, 1.6732632
    %v3572 = vsel %vm3562, %v3560, %v3570
    %v3573 = vsel %vm3563, %v3561, %v3571
    %v3574 = vmul.f32 %v3572, 1.050701
    %v3575 = vmul.f32 %v3573, 1.050701
    %v3576 = vpack.c.bf16 %v3575, %v3574
    %v3577 = vld [vmem:[#allocation18 + $0x18] sm:$0xf]
    %v3578 = vld [vmem:[#allocation18 + $0x34] sm:$0xf]
    %v3579 = vld [vmem:[#allocation18 + $0x50] sm:$0xf]
    %v3580 = vld [vmem:[#allocation18 + $0x6c] sm:$0xf]
    %v3581 = vld [vmem:[#allocation18 + $0x88] sm:$0xf]
    %v3582 = vld [vmem:[#allocation18 + $0xa4] sm:$0xf]
    %v3583 = vld [vmem:[#allocation18 + $0xc0] sm:$0xf]
    %v3584 = vld [vmem:[#allocation18 + $0xdc] sm:$0xf]
    %v3585 = vld [vmem:[#allocation18 + $0xf8] sm:$0xf]
    %v3586 = vld [vmem:[#allocation18 + $0x114] sm:$0xf]
    %v3587 = vld [vmem:[#allocation18 + $0x130] sm:$0xf]
    %v3588 = vld [vmem:[#allocation18 + $0x14c] sm:$0xf]
    %v3589 = vld [vmem:[#allocation18 + $0x168] sm:$0xf]
    %v3590 = vld [vmem:[#allocation18 + $0x184] sm:$0xf]
    %v3591 = vld [vmem:[#allocation18 + $0x1a0] sm:$0xf]
    %v3592 = vld [vmem:[#allocation18 + $0x1bc] sm:$0xf]
    %v3609 = vunpack.c.l.b16 %v3577
    %v3610 = vunpack.c.l.b16 %v3578
    %v3611 = vunpack.c.l.b16 %v3579
    %v3612 = vunpack.c.l.b16 %v3580
    %v3613 = vunpack.c.l.b16 %v3581
    %v3614 = vunpack.c.l.b16 %v3582
    %v3615 = vunpack.c.l.b16 %v3583
    %v3616 = vunpack.c.l.b16 %v3584
    %v3617 = vunpack.c.l.b16 %v3585
    %v3618 = vunpack.c.l.b16 %v3586
    %v3619 = vunpack.c.l.b16 %v3587
    %v3620 = vunpack.c.l.b16 %v3588
    %v3621 = vunpack.c.l.b16 %v3589
    %v3622 = vunpack.c.l.b16 %v3590
    %v3623 = vunpack.c.l.b16 %v3591
    %v3624 = vunpack.c.l.b16 %v3592
    %v3625 = vpack.c.b16 %v3610, %v3609
    %v3626 = vpack.c.b16 %v3612, %v3611
    %v3627 = vpack.c.b16 %v3614, %v3613
    %v3628 = vpack.c.b16 %v3616, %v3615
    %v3629 = vpack.c.b16 %v3618, %v3617
    %v3630 = vpack.c.b16 %v3620, %v3619
    %v3631 = vpack.c.b16 %v3622, %v3621
    %v3632 = vpack.c.b16 %v3624, %v3623
    %3641 = vmatpush.bf16.msra.mxu0 %v3632
    %3642 = vmatpush.bf16.msra.mxu0 %v3631
    %3643 = vmatpush.bf16.msra.mxu0 %v3630
    %3644 = vmatpush.bf16.msra.mxu0 %v3629
    %3645 = vmatpush.bf16.msra.mxu0 %v3628
    %3646 = vmatpush.bf16.msra.mxu0 %v3627
    %3647 = vmatpush.bf16.msra.mxu0 %v3626
    %3648 = vmatpush.bf16.msra.mxu0 %v3625
    %3649 = vmatmul.bf16.gmra.mxu0 %v3576
    %v3650 = vpop.f32.mrf.mxu0
    %v3651 = vadd.f32 0.0, %v3650
    %v3652 = vpop.f32.mrf.mxu0
    %v3653 = vadd.f32 0.0, %v3652
    %3654 = vdwg.mxu0
    %v3655 = vadd.f32 %v2860, %v3651
    %v3656 = vadd.f32 %v2861, %v3653
    %v3657 = vperm.slane %v2993, 3
    %v3658 = vadd.f32 %v3655, %v3657
    %v3659 = vadd.f32 %v3656, %v3657
    %v3660 = vpack.c.bf16 %v3659, %v3658
    %s3661 = scalar_lea.vmem [#allocation19], 4
    %v3662 = vld [vmem:[%s3661] sm:$0xf]
    %s3663 = scalar_lea.vmem [#allocation18], 448
    %v3664 = vld [vmem:[%s3663] sm:$0xff]
    %v3665 = vld [vmem:[%s3663 + $0x1c] sm:$0xff]
    %v3666 = vld [vmem:[%s3663 + $0x38] sm:$0xff]
    %v3667 = vld [vmem:[%s3663 + $0x54] sm:$0xff]
    %v3668 = vld [vmem:[%s3663 + $0x70] sm:$0xff]
    %v3669 = vld [vmem:[%s3663 + $0x8c] sm:$0xff]
    %v3670 = vld [vmem:[%s3663 + $0xa8] sm:$0xff]
    %v3671 = vld [vmem:[%s3663 + $0xc4] sm:$0xff]
    %v3672 = vld [vmem:[%s3663 + $0xe0] sm:$0xff]
    %v3673 = vld [vmem:[%s3663 + $0xfc] sm:$0xff]
    %v3674 = vld [vmem:[%s3663 + $0x118] sm:$0xff]
    %v3675 = vld [vmem:[%s3663 + $0x134] sm:$0xff]
    %v3676 = vld [vmem:[%s3663 + $0x150] sm:$0xff]
    %v3677 = vld [vmem:[%s3663 + $0x16c] sm:$0xff]
    %v3678 = vld [vmem:[%s3663 + $0x188] sm:$0xff]
    %v3679 = vld [vmem:[%s3663 + $0x1a4] sm:$0xff]
    %v3696 = vunpack.c.l.b16 %v3664
    %v3697 = vunpack.c.h.b16 %v3664
    %v3698 = vunpack.c.l.b16 %v3665
    %v3699 = vunpack.c.h.b16 %v3665
    %v3700 = vunpack.c.l.b16 %v3666
    %v3701 = vunpack.c.h.b16 %v3666
    %v3702 = vunpack.c.l.b16 %v3667
    %v3703 = vunpack.c.h.b16 %v3667
    %v3704 = vunpack.c.l.b16 %v3668
    %v3705 = vunpack.c.h.b16 %v3668
    %v3706 = vunpack.c.l.b16 %v3669
    %v3707 = vunpack.c.h.b16 %v3669
    %v3708 = vunpack.c.l.b16 %v3670
    %v3709 = vunpack.c.h.b16 %v3670
    %v3710 = vunpack.c.l.b16 %v3671
    %v3711 = vunpack.c.h.b16 %v3671
    %v3712 = vunpack.c.l.b16 %v3672
    %v3713 = vunpack.c.h.b16 %v3672
    %v3714 = vunpack.c.l.b16 %v3673
    %v3715 = vunpack.c.h.b16 %v3673
    %v3716 = vunpack.c.l.b16 %v3674
    %v3717 = vunpack.c.h.b16 %v3674
    %v3718 = vunpack.c.l.b16 %v3675
    %v3719 = vunpack.c.h.b16 %v3675
    %v3720 = vunpack.c.l.b16 %v3676
    %v3721 = vunpack.c.h.b16 %v3676
    %v3722 = vunpack.c.l.b16 %v3677
    %v3723 = vunpack.c.h.b16 %v3677
    %v3724 = vunpack.c.l.b16 %v3678
    %v3725 = vunpack.c.h.b16 %v3678
    %v3726 = vunpack.c.l.b16 %v3679
    %v3727 = vunpack.c.h.b16 %v3679
    %v3728 = vpack.c.b16 %v3698, %v3696
    %v3729 = vpack.c.b16 %v3699, %v3697
    %v3730 = vpack.c.b16 %v3702, %v3700
    %v3731 = vpack.c.b16 %v3703, %v3701
    %v3732 = vpack.c.b16 %v3706, %v3704
    %v3733 = vpack.c.b16 %v3707, %v3705
    %v3734 = vpack.c.b16 %v3710, %v3708
    %v3735 = vpack.c.b16 %v3711, %v3709
    %v3736 = vpack.c.b16 %v3714, %v3712
    %v3737 = vpack.c.b16 %v3715, %v3713
    %v3738 = vpack.c.b16 %v3718, %v3716
    %v3739 = vpack.c.b16 %v3719, %v3717
    %v3740 = vpack.c.b16 %v3722, %v3720
    %v3741 = vpack.c.b16 %v3723, %v3721
    %v3742 = vpack.c.b16 %v3726, %v3724
    %v3743 = vpack.c.b16 %v3727, %v3725
    %3760 = vmatpush.bf16.msra.mxu0 %v3742
    %3761 = vmatpush.bf16.msra.mxu0 %v3740
    %3762 = vmatpush.bf16.msra.mxu0 %v3738
    %3763 = vmatpush.bf16.msra.mxu0 %v3736
    %3764 = vmatpush.bf16.msra.mxu0 %v3734
    %3765 = vmatpush.bf16.msra.mxu0 %v3732
    %3766 = vmatpush.bf16.msra.mxu0 %v3730
    %3767 = vmatpush.bf16.msra.mxu0 %v3728
    %3768 = vmatmul.bf16.gmra.mxu0 %v3660
    %v3769 = vpop.f32.mrf.mxu0
    %v3770 = vadd.f32 0.0, %v3769
    %v3771 = vpop.f32.mrf.mxu0
    %v3772 = vadd.f32 0.0, %v3771
    %3773 = vdwg.mxu0
    %3774 = vmatpush.bf16.msra.mxu0 %v3743
    %3775 = vmatpush.bf16.msra.mxu0 %v3741
    %3776 = vmatpush.bf16.msra.mxu0 %v3739
    %3777 = vmatpush.bf16.msra.mxu0 %v3737
    %3778 = vmatpush.bf16.msra.mxu0 %v3735
    %3779 = vmatpush.bf16.msra.mxu0 %v3733
    %3780 = vmatpush.bf16.msra.mxu0 %v3731
    %3781 = vmatpush.bf16.msra.mxu0 %v3729
    %3782 = vmatmul.bf16.gmra.mxu0 %v3660
    %v3783 = vpop.f32.mrf.mxu0
    %v3784 = vadd.f32 0.0, %v3783
    %v3785 = vpop.f32.mrf.mxu0
    %v3786 = vadd.f32 0.0, %v3785
    %3787 = vdwg.mxu0
    %v3788 = vpack.c.bf16 %v3784, %v3770
    %v3789 = vpack.c.bf16 %v3786, %v3772
    %v3792 = vunpack.c.l.b16 %v3788
    %v3793 = vunpack.c.l.b16 %v3789
    %v3794 = vpack.c.b16 %v3793, %v3792
    %v3796 = vunpack.c.h.b16 %v3788
    %v3797 = vunpack.c.h.b16 %v3789
    %v3798 = vpack.c.b16 %v3797, %v3796
    %v3800 = vld [vmem:[%s3663 + $0x8] sm:$0xf]
    %v3801 = vld [vmem:[%s3663 + $0x24] sm:$0xf]
    %v3802 = vld [vmem:[%s3663 + $0x40] sm:$0xf]
    %v3803 = vld [vmem:[%s3663 + $0x5c] sm:$0xf]
    %v3804 = vld [vmem:[%s3663 + $0x78] sm:$0xf]
    %v3805 = vld [vmem:[%s3663 + $0x94] sm:$0xf]
    %v3806 = vld [vmem:[%s3663 + $0xb0] sm:$0xf]
    %v3807 = vld [vmem:[%s3663 + $0xcc] sm:$0xf]
    %v3808 = vld [vmem:[%s3663 + $0xe8] sm:$0xf]
    %v3809 = vld [vmem:[%s3663 + $0x104] sm:$0xf]
    %v3810 = vld [vmem:[%s3663 + $0x120] sm:$0xf]
    %v3811 = vld [vmem:[%s3663 + $0x13c] sm:$0xf]
    %v3812 = vld [vmem:[%s3663 + $0x158] sm:$0xf]
    %v3813 = vld [vmem:[%s3663 + $0x174] sm:$0xf]
    %v3814 = vld [vmem:[%s3663 + $0x190] sm:$0xf]
    %v3815 = vld [vmem:[%s3663 + $0x1ac] sm:$0xf]
    %v3832 = vunpack.c.l.b16 %v3800
    %v3833 = vunpack.c.l.b16 %v3801
    %v3834 = vunpack.c.l.b16 %v3802
    %v3835 = vunpack.c.l.b16 %v3803
    %v3836 = vunpack.c.l.b16 %v3804
    %v3837 = vunpack.c.l.b16 %v3805
    %v3838 = vunpack.c.l.b16 %v3806
    %v3839 = vunpack.c.l.b16 %v3807
    %v3840 = vunpack.c.l.b16 %v3808
    %v3841 = vunpack.c.l.b16 %v3809
    %v3842 = vunpack.c.l.b16 %v3810
    %v3843 = vunpack.c.l.b16 %v3811
    %v3844 = vunpack.c.l.b16 %v3812
    %v3845 = vunpack.c.l.b16 %v3813
    %v3846 = vunpack.c.l.b16 %v3814
    %v3847 = vunpack.c.l.b16 %v3815
    %v3848 = vpack.c.b16 %v3833, %v3832
    %v3849 = vpack.c.b16 %v3835, %v3834
    %v3850 = vpack.c.b16 %v3837, %v3836
    %v3851 = vpack.c.b16 %v3839, %v3838
    %v3852 = vpack.c.b16 %v3841, %v3840
    %v3853 = vpack.c.b16 %v3843, %v3842
    %v3854 = vpack.c.b16 %v3845, %v3844
    %v3855 = vpack.c.b16 %v3847, %v3846
    %3864 = vmatpush.bf16.msra.mxu0 %v3855
    %3865 = vmatpush.bf16.msra.mxu0 %v3854
    %3866 = vmatpush.bf16.msra.mxu0 %v3853
    %3867 = vmatpush.bf16.msra.mxu0 %v3852
    %3868 = vmatpush.bf16.msra.mxu0 %v3851
    %3869 = vmatpush.bf16.msra.mxu0 %v3850
    %3870 = vmatpush.bf16.msra.mxu0 %v3849
    %3871 = vmatpush.bf16.msra.mxu0 %v3848
    %3872 = vmatmul.bf16.gmra.mxu0 %v3376
    %v3873 = vpop.f32.mrf.mxu0
    %v3874 = vadd.f32 0.0, %v3873
    %v3875 = vpop.f32.mrf.mxu0
    %v3876 = vadd.f32 0.0, %v3875
    %3877 = vmatmul.bf16.gmra.mxu0 %v3377
    %v3878 = vpop.f32.mrf.mxu0
    %v3879 = vadd.f32 0.0, %v3878
    %v3880 = vpop.f32.mrf.mxu0
    %v3881 = vadd.f32 0.0, %v3880
    %3882 = vdwg.mxu0
    %3883 = vmatpush.bf16.msra.mxu0 0
    %3884 = vmatpush.bf16.msra.mxu0 0
    %3885 = vmatpush.bf16.msra.mxu0 0
    %3886 = vmatpush.bf16.msra.mxu0 0
    %3887 = vmatpush.bf16.msra.mxu0 0
    %3888 = vmatpush.bf16.msra.mxu0 0
    %3889 = vmatpush.bf16.msra.mxu0 %v3798
    %3890 = vmatpush.bf16.msra.mxu0 %v3794
    %3891 = vmatmul.bf16.gmra.mxu0 %v3225
    %v3892 = vpop.f32.mrf.mxu0
    %v3893 = vadd.f32 %v3874, %v3892
    %v3894 = vpop.f32.mrf.mxu0
    %v3895 = vadd.f32 %v3876, %v3894
    %3896 = vmatmul.bf16.gmra.mxu0 %v3228
    %v3897 = vpop.f32.mrf.mxu0
    %v3898 = vadd.f32 %v3879, %v3897
    %v3899 = vpop.f32.mrf.mxu0
    %v3900 = vadd.f32 %v3881, %v3899
    %3901 = vdwg.mxu0
    %v3902 = vperm.slane %v3662, 0
    %v3903 = vadd.f32 %v3893, %v3902
    %v3904 = vadd.f32 %v3895, %v3902
    %v3905 = vadd.f32 %v3898, %v3902
    %v3906 = vadd.f32 %v3900, %v3902
    %vm3907 = vcmp.gt.f32.partialorder %v3903, 0.0
    %vm3908 = vcmp.gt.f32.partialorder %v3904, 0.0
    %vm3909 = vcmp.gt.f32.partialorder %v3905, 0.0
    %vm3910 = vcmp.gt.f32.partialorder %v3906, 0.0
    %v3911 = vmul.f32 %v3903, 1.442695
    %v3912 = vpow.pop %v3911
    %v3913 = vmul.f32 %v3904, 1.442695
    %v3914 = vpow.pop %v3913
    %v3915 = vmul.f32 %v3905, 1.442695
    %v3916 = vpow.pop %v3915
    %v3917 = vmul.f32 %v3906, 1.442695
    %v3918 = vpow.pop %v3917
    %v3919 = vsub.f32 %v3912, 1.0
    %v3920 = vsub.f32 %v3914, 1.0
    %v3921 = vsub.f32 %v3916, 1.0
    %v3922 = vsub.f32 %v3918, 1.0
    %v3923 = vmul.f32 %v3919, 1.6732632
    %v3924 = vmul.f32 %v3920, 1.6732632
    %v3925 = vmul.f32 %v3921, 1.6732632
    %v3926 = vmul.f32 %v3922, 1.6732632
    %v3927 = vsel %vm3907, %v3903, %v3923
    %v3928 = vsel %vm3908, %v3904, %v3924
    %v3929 = vsel %vm3909, %v3905, %v3925
    %v3930 = vsel %vm3910, %v3906, %v3926
    %v3931 = vmul.f32 %v3927, 1.050701
    %v3932 = vmul.f32 %v3928, 1.050701
    %v3933 = vmul.f32 %v3929, 1.050701
    %v3934 = vmul.f32 %v3930, 1.050701
    %v3935 = vpack.c.bf16 %v3932, %v3931
    %v3936 = vpack.c.bf16 %v3934, %v3933
    %v3937 = vld [vmem:[%s3663 + $0xc] sm:$0xf]
    %v3938 = vld [vmem:[%s3663 + $0x28] sm:$0xf]
    %v3939 = vld [vmem:[%s3663 + $0x44] sm:$0xf]
    %v3940 = vld [vmem:[%s3663 + $0x60] sm:$0xf]
    %v3941 = vld [vmem:[%s3663 + $0x7c] sm:$0xf]
    %v3942 = vld [vmem:[%s3663 + $0x98] sm:$0xf]
    %v3943 = vld [vmem:[%s3663 + $0xb4] sm:$0xf]
    %v3944 = vld [vmem:[%s3663 + $0xd0] sm:$0xf]
    %v3945 = vld [vmem:[%s3663 + $0xec] sm:$0xf]
    %v3946 = vld [vmem:[%s3663 + $0x108] sm:$0xf]
    %v3947 = vld [vmem:[%s3663 + $0x124] sm:$0xf]
    %v3948 = vld [vmem:[%s3663 + $0x140] sm:$0xf]
    %v3949 = vld [vmem:[%s3663 + $0x15c] sm:$0xf]
    %v3950 = vld [vmem:[%s3663 + $0x178] sm:$0xf]
    %v3951 = vld [vmem:[%s3663 + $0x194] sm:$0xf]
    %v3952 = vld [vmem:[%s3663 + $0x1b0] sm:$0xf]
    %v3969 = vunpack.c.l.b16 %v3937
    %v3970 = vunpack.c.l.b16 %v3938
    %v3971 = vunpack.c.l.b16 %v3939
    %v3972 = vunpack.c.l.b16 %v3940
    %v3973 = vunpack.c.l.b16 %v3941
    %v3974 = vunpack.c.l.b16 %v3942
    %v3975 = vunpack.c.l.b16 %v3943
    %v3976 = vunpack.c.l.b16 %v3944
    %v3977 = vunpack.c.l.b16 %v3945
    %v3978 = vunpack.c.l.b16 %v3946
    %v3979 = vunpack.c.l.b16 %v3947
    %v3980 = vunpack.c.l.b16 %v3948
    %v3981 = vunpack.c.l.b16 %v3949
    %v3982 = vunpack.c.l.b16 %v3950
    %v3983 = vunpack.c.l.b16 %v3951
    %v3984 = vunpack.c.l.b16 %v3952
    %v3985 = vpack.c.b16 %v3970, %v3969
    %v3986 = vpack.c.b16 %v3972, %v3971
    %v3987 = vpack.c.b16 %v3974, %v3973
    %v3988 = vpack.c.b16 %v3976, %v3975
    %v3989 = vpack.c.b16 %v3978, %v3977
    %v3990 = vpack.c.b16 %v3980, %v3979
    %v3991 = vpack.c.b16 %v3982, %v3981
    %v3992 = vpack.c.b16 %v3984, %v3983
    %4001 = vmatpush.bf16.msra.mxu0 %v3992
    %4002 = vmatpush.bf16.msra.mxu0 %v3991
    %4003 = vmatpush.bf16.msra.mxu0 %v3990
    %4004 = vmatpush.bf16.msra.mxu0 %v3989
    %4005 = vmatpush.bf16.msra.mxu0 %v3988
    %4006 = vmatpush.bf16.msra.mxu0 %v3987
    %4007 = vmatpush.bf16.msra.mxu0 %v3986
    %4008 = vmatpush.bf16.msra.mxu0 %v3985
    %4009 = vmatmul.bf16.gmra.mxu0 %v3935
    %v4010 = vpop.f32.mrf.mxu0
    %v4011 = vadd.f32 0.0, %v4010
    %v4012 = vpop.f32.mrf.mxu0
    %v4013 = vadd.f32 0.0, %v4012
    %4014 = vmatmul.bf16.gmra.mxu0 %v3936
    %v4015 = vpop.f32.mrf.mxu0
    %v4016 = vadd.f32 0.0, %v4015
    %v4017 = vpop.f32.mrf.mxu0
    %v4018 = vadd.f32 0.0, %v4017
    %4019 = vdwg.mxu0
    %v4020 = vadd.f32 %v3372, %v4011
    %v4021 = vadd.f32 %v3373, %v4013
    %v4022 = vadd.f32 %v3374, %v4016
    %v4023 = vadd.f32 %v3375, %v4018
    %v4024 = vperm.slane %v3662, 1
    %v4025 = vadd.f32 %v4020, %v4024
    %v4026 = vadd.f32 %v4021, %v4024
    %v4027 = vadd.f32 %v4022, %v4024
    %v4028 = vadd.f32 %v4023, %v4024
    %v4029 = vpack.c.bf16 %v4026, %v4025
    %v4030 = vpack.c.bf16 %v4028, %v4027
    %4031 = vmatpush.bf16.msra.mxu0 0
    %4032 = vmatpush.bf16.msra.mxu0 0
    %4033 = vmatpush.bf16.msra.mxu0 0
    %4034 = vmatpush.bf16.msra.mxu0 0
    %4035 = vmatpush.bf16.msra.mxu0 0
    %4036 = vmatpush.bf16.msra.mxu0 0
    %4037 = vmatpush.bf16.msra.mxu0 %v4030
    %4038 = vmatpush.bf16.msra.mxu0 %v4029
    %4039 = vmatmul.bf16.gmra.mxu0 %v3384
    %v4040 = vpop.f32.mrf.mxu0
    %v4041 = vadd.f32 0.0, %v4040
    %v4042 = vpop.f32.mrf.mxu0
    %v4043 = vadd.f32 0.0, %v4042
    %4044 = vdwg.mxu0
    %v4045 = vmul.f32 %v4041, %v280
    %v4046 = vmul.f32 %v4043, %v281
    %v4047 = vld [vmem:[%s3663 + $0x10] sm:$0xf]
    %v4048 = vld [vmem:[%s3663 + $0x2c] sm:$0xf]
    %v4049 = vld [vmem:[%s3663 + $0x48] sm:$0xf]
    %v4050 = vld [vmem:[%s3663 + $0x64] sm:$0xf]
    %v4051 = vld [vmem:[%s3663 + $0x80] sm:$0xf]
    %v4052 = vld [vmem:[%s3663 + $0x9c] sm:$0xf]
    %v4053 = vld [vmem:[%s3663 + $0xb8] sm:$0xf]
    %v4054 = vld [vmem:[%s3663 + $0xd4] sm:$0xf]
    %v4055 = vld [vmem:[%s3663 + $0xf0] sm:$0xf]
    %v4056 = vld [vmem:[%s3663 + $0x10c] sm:$0xf]
    %v4057 = vld [vmem:[%s3663 + $0x128] sm:$0xf]
    %v4058 = vld [vmem:[%s3663 + $0x144] sm:$0xf]
    %v4059 = vld [vmem:[%s3663 + $0x160] sm:$0xf]
    %v4060 = vld [vmem:[%s3663 + $0x17c] sm:$0xf]
    %v4061 = vld [vmem:[%s3663 + $0x198] sm:$0xf]
    %v4062 = vld [vmem:[%s3663 + $0x1b4] sm:$0xf]
    %v4063 = vpack.c.bf16 %v4046, %v4045
    %v4064 = vld [vmem:[%s3663 + $0x14] sm:$0xf]
    %v4065 = vld [vmem:[%s3663 + $0x30] sm:$0xf]
    %v4066 = vld [vmem:[%s3663 + $0x4c] sm:$0xf]
    %v4067 = vld [vmem:[%s3663 + $0x68] sm:$0xf]
    %v4068 = vld [vmem:[%s3663 + $0x84] sm:$0xf]
    %v4069 = vld [vmem:[%s3663 + $0xa0] sm:$0xf]
    %v4070 = vld [vmem:[%s3663 + $0xbc] sm:$0xf]
    %v4071 = vld [vmem:[%s3663 + $0xd8] sm:$0xf]
    %v4072 = vld [vmem:[%s3663 + $0xf4] sm:$0xf]
    %v4073 = vld [vmem:[%s3663 + $0x110] sm:$0xf]
    %v4074 = vld [vmem:[%s3663 + $0x12c] sm:$0xf]
    %v4075 = vld [vmem:[%s3663 + $0x148] sm:$0xf]
    %v4076 = vld [vmem:[%s3663 + $0x164] sm:$0xf]
    %v4077 = vld [vmem:[%s3663 + $0x180] sm:$0xf]
    %v4078 = vld [vmem:[%s3663 + $0x19c] sm:$0xf]
    %v4079 = vld [vmem:[%s3663 + $0x1b8] sm:$0xf]
    %v4096 = vunpack.c.l.b16 %v4064
    %v4097 = vunpack.c.l.b16 %v4065
    %v4098 = vunpack.c.l.b16 %v4066
    %v4099 = vunpack.c.l.b16 %v4067
    %v4100 = vunpack.c.l.b16 %v4068
    %v4101 = vunpack.c.l.b16 %v4069
    %v4102 = vunpack.c.l.b16 %v4070
    %v4103 = vunpack.c.l.b16 %v4071
    %v4104 = vunpack.c.l.b16 %v4072
    %v4105 = vunpack.c.l.b16 %v4073
    %v4106 = vunpack.c.l.b16 %v4074
    %v4107 = vunpack.c.l.b16 %v4075
    %v4108 = vunpack.c.l.b16 %v4076
    %v4109 = vunpack.c.l.b16 %v4077
    %v4110 = vunpack.c.l.b16 %v4078
    %v4111 = vunpack.c.l.b16 %v4079
    %v4112 = vpack.c.b16 %v4097, %v4096
    %v4113 = vpack.c.b16 %v4099, %v4098
    %v4114 = vpack.c.b16 %v4101, %v4100
    %v4115 = vpack.c.b16 %v4103, %v4102
    %v4116 = vpack.c.b16 %v4105, %v4104
    %v4117 = vpack.c.b16 %v4107, %v4106
    %v4118 = vpack.c.b16 %v4109, %v4108
    %v4119 = vpack.c.b16 %v4111, %v4110
    %4128 = vmatpush.bf16.msra.mxu0 %v4119
    %4129 = vmatpush.bf16.msra.mxu0 %v4118
    %4130 = vmatpush.bf16.msra.mxu0 %v4117
    %4131 = vmatpush.bf16.msra.mxu0 %v4116
    %4132 = vmatpush.bf16.msra.mxu0 %v4115
    %4133 = vmatpush.bf16.msra.mxu0 %v4114
    %4134 = vmatpush.bf16.msra.mxu0 %v4113
    %4135 = vmatpush.bf16.msra.mxu0 %v4112
    %4136 = vmatmul.bf16.gmra.mxu0 %v4063
    %v4137 = vpop.f32.mrf.mxu0
    %v4138 = vadd.f32 0.0, %v4137
    %v4139 = vpop.f32.mrf.mxu0
    %v4140 = vadd.f32 0.0, %v4139
    %4141 = vdwg.mxu0
    %v4158 = vunpack.c.l.b16 %v4047
    %v4159 = vunpack.c.l.b16 %v4048
    %v4160 = vunpack.c.l.b16 %v4049
    %v4161 = vunpack.c.l.b16 %v4050
    %v4162 = vunpack.c.l.b16 %v4051
    %v4163 = vunpack.c.l.b16 %v4052
    %v4164 = vunpack.c.l.b16 %v4053
    %v4165 = vunpack.c.l.b16 %v4054
    %v4166 = vunpack.c.l.b16 %v4055
    %v4167 = vunpack.c.l.b16 %v4056
    %v4168 = vunpack.c.l.b16 %v4057
    %v4169 = vunpack.c.l.b16 %v4058
    %v4170 = vunpack.c.l.b16 %v4059
    %v4171 = vunpack.c.l.b16 %v4060
    %v4172 = vunpack.c.l.b16 %v4061
    %v4173 = vunpack.c.l.b16 %v4062
    %v4174 = vpack.c.b16 %v4159, %v4158
    %v4175 = vpack.c.b16 %v4161, %v4160
    %v4176 = vpack.c.b16 %v4163, %v4162
    %v4177 = vpack.c.b16 %v4165, %v4164
    %v4178 = vpack.c.b16 %v4167, %v4166
    %v4179 = vpack.c.b16 %v4169, %v4168
    %v4180 = vpack.c.b16 %v4171, %v4170
    %v4181 = vpack.c.b16 %v4173, %v4172
    %4190 = vmatpush.bf16.msra.mxu0 %v4181
    %4191 = vmatpush.bf16.msra.mxu0 %v4180
    %4192 = vmatpush.bf16.msra.mxu0 %v4179
    %4193 = vmatpush.bf16.msra.mxu0 %v4178
    %4194 = vmatpush.bf16.msra.mxu0 %v4177
    %4195 = vmatpush.bf16.msra.mxu0 %v4176
    %4196 = vmatpush.bf16.msra.mxu0 %v4175
    %4197 = vmatpush.bf16.msra.mxu0 %v4174
    %4198 = vmatmul.bf16.gmra.mxu0 %v3660
    %v4199 = vpop.f32.mrf.mxu0
    %v4200 = vadd.f32 %v4138, %v4199
    %v4201 = vpop.f32.mrf.mxu0
    %v4202 = vadd.f32 %v4140, %v4201
    %4203 = vdwg.mxu0
    %v4204 = vperm.slane %v3662, 2
    %v4205 = vadd.f32 %v4200, %v4204
    %v4206 = vadd.f32 %v4202, %v4204
    %vm4207 = vcmp.gt.f32.partialorder %v4205, 0.0
    %vm4208 = vcmp.gt.f32.partialorder %v4206, 0.0
    %v4209 = vmul.f32 %v4205, 1.442695
    %v4210 = vpow.pop %v4209
    %v4211 = vmul.f32 %v4206, 1.442695
    %v4212 = vpow.pop %v4211
    %v4213 = vsub.f32 %v4210, 1.0
    %v4214 = vsub.f32 %v4212, 1.0
    %v4215 = vmul.f32 %v4213, 1.6732632
    %v4216 = vmul.f32 %v4214, 1.6732632
    %v4217 = vsel %vm4207, %v4205, %v4215
    %v4218 = vsel %vm4208, %v4206, %v4216
    %v4219 = vmul.f32 %v4217, 1.050701
    %v4220 = vmul.f32 %v4218, 1.050701
    %v4221 = vpack.c.bf16 %v4220, %v4219
    %v4222 = vld [vmem:[%s3663 + $0x18] sm:$0xf]
    %v4223 = vld [vmem:[%s3663 + $0x34] sm:$0xf]
    %v4224 = vld [vmem:[%s3663 + $0x50] sm:$0xf]
    %v4225 = vld [vmem:[%s3663 + $0x6c] sm:$0xf]
    %v4226 = vld [vmem:[%s3663 + $0x88] sm:$0xf]
    %v4227 = vld [vmem:[%s3663 + $0xa4] sm:$0xf]
    %v4228 = vld [vmem:[%s3663 + $0xc0] sm:$0xf]
    %v4229 = vld [vmem:[%s3663 + $0xdc] sm:$0xf]
    %v4230 = vld [vmem:[%s3663 + $0xf8] sm:$0xf]
    %v4231 = vld [vmem:[%s3663 + $0x114] sm:$0xf]
    %v4232 = vld [vmem:[%s3663 + $0x130] sm:$0xf]
    %v4233 = vld [vmem:[%s3663 + $0x14c] sm:$0xf]
    %v4234 = vld [vmem:[%s3663 + $0x168] sm:$0xf]
    %v4235 = vld [vmem:[%s3663 + $0x184] sm:$0xf]
    %v4236 = vld [vmem:[%s3663 + $0x1a0] sm:$0xf]
    %v4237 = vld [vmem:[%s3663 + $0x1bc] sm:$0xf]
    %v4254 = vunpack.c.l.b16 %v4222
    %v4255 = vunpack.c.l.b16 %v4223
    %v4256 = vunpack.c.l.b16 %v4224
    %v4257 = vunpack.c.l.b16 %v4225
    %v4258 = vunpack.c.l.b16 %v4226
    %v4259 = vunpack.c.l.b16 %v4227
    %v4260 = vunpack.c.l.b16 %v4228
    %v4261 = vunpack.c.l.b16 %v4229
    %v4262 = vunpack.c.l.b16 %v4230
    %v4263 = vunpack.c.l.b16 %v4231
    %v4264 = vunpack.c.l.b16 %v4232
    %v4265 = vunpack.c.l.b16 %v4233
    %v4266 = vunpack.c.l.b16 %v4234
    %v4267 = vunpack.c.l.b16 %v4235
    %v4268 = vunpack.c.l.b16 %v4236
    %v4269 = vunpack.c.l.b16 %v4237
    %v4270 = vpack.c.b16 %v4255, %v4254
    %v4271 = vpack.c.b16 %v4257, %v4256
    %v4272 = vpack.c.b16 %v4259, %v4258
    %v4273 = vpack.c.b16 %v4261, %v4260
    %v4274 = vpack.c.b16 %v4263, %v4262
    %v4275 = vpack.c.b16 %v4265, %v4264
    %v4276 = vpack.c.b16 %v4267, %v4266
    %v4277 = vpack.c.b16 %v4269, %v4268
    %4286 = vmatpush.bf16.msra.mxu0 %v4277
    %4287 = vmatpush.bf16.msra.mxu0 %v4276
    %4288 = vmatpush.bf16.msra.mxu0 %v4275
    %4289 = vmatpush.bf16.msra.mxu0 %v4274
    %4290 = vmatpush.bf16.msra.mxu0 %v4273
    %4291 = vmatpush.bf16.msra.mxu0 %v4272
    %4292 = vmatpush.bf16.msra.mxu0 %v4271
    %4293 = vmatpush.bf16.msra.mxu0 %v4270
    %4294 = vmatmul.bf16.gmra.mxu0 %v4221
    %v4295 = vpop.f32.mrf.mxu0
    %v4296 = vadd.f32 0.0, %v4295
    %v4297 = vpop.f32.mrf.mxu0
    %v4298 = vadd.f32 0.0, %v4297
    %4299 = vdwg.mxu0
    %v4300 = vadd.f32 %v3658, %v4296
    %v4301 = vadd.f32 %v3659, %v4298
    %v4302 = vperm.slane %v3662, 3
    %v4303 = vadd.f32 %v4300, %v4302
    %v4304 = vadd.f32 %v4301, %v4302
    %v4305 = vpack.c.bf16 %v4304, %v4303
    %s4306 = scalar_lea.vmem [#allocation21], 192
    %v4307 = vld [vmem:[%s4306] sm:$0xf]
    %v4308 = vld [vmem:[%s4306 + $0x4] sm:$0xf]
    %v4309 = vld [vmem:[%s4306 + $0x8] sm:$0xf]
    %v4310 = vld [vmem:[%s4306 + $0xc] sm:$0xf]
    %v4311 = vld [vmem:[%s4306 + $0x10] sm:$0xf]
    %v4312 = vld [vmem:[%s4306 + $0x14] sm:$0xf]
    %v4313 = vld [vmem:[%s4306 + $0x18] sm:$0xf]
    %v4314 = vld [vmem:[%s4306 + $0x1c] sm:$0xf]
    %v4315 = vld [vmem:[%s4306 + $0x20] sm:$0xf]
    %v4316 = vld [vmem:[%s4306 + $0x24] sm:$0xf]
    %v4317 = vld [vmem:[%s4306 + $0x28] sm:$0xf]
    %v4318 = vld [vmem:[%s4306 + $0x2c] sm:$0xf]
    %v4319 = vld [vmem:[%s4306 + $0x30] sm:$0xf]
    %v4320 = vld [vmem:[%s4306 + $0x34] sm:$0xf]
    %v4321 = vld [vmem:[%s4306 + $0x38] sm:$0xf]
    %v4322 = vld [vmem:[%s4306 + $0x3c] sm:$0xf]
    %v4339 = vunpack.c.l.b16 %v4307
    %v4340 = vunpack.c.l.b16 %v4308
    %v4341 = vunpack.c.l.b16 %v4309
    %v4342 = vunpack.c.l.b16 %v4310
    %v4343 = vunpack.c.l.b16 %v4311
    %v4344 = vunpack.c.l.b16 %v4312
    %v4345 = vunpack.c.l.b16 %v4313
    %v4346 = vunpack.c.l.b16 %v4314
    %v4347 = vunpack.c.l.b16 %v4315
    %v4348 = vunpack.c.l.b16 %v4316
    %v4349 = vunpack.c.l.b16 %v4317
    %v4350 = vunpack.c.l.b16 %v4318
    %v4351 = vunpack.c.l.b16 %v4319
    %v4352 = vunpack.c.l.b16 %v4320
    %v4353 = vunpack.c.l.b16 %v4321
    %v4354 = vunpack.c.l.b16 %v4322
    %v4355 = vpack.c.b16 %v4340, %v4339
    %v4356 = vpack.c.b16 %v4342, %v4341
    %v4357 = vpack.c.b16 %v4344, %v4343
    %v4358 = vpack.c.b16 %v4346, %v4345
    %v4359 = vpack.c.b16 %v4348, %v4347
    %v4360 = vpack.c.b16 %v4350, %v4349
    %v4361 = vpack.c.b16 %v4352, %v4351
    %v4362 = vpack.c.b16 %v4354, %v4353
    %4371 = vmatpush.bf16.msra.mxu0 %v4362
    %4372 = vmatpush.bf16.msra.mxu0 %v4361
    %4373 = vmatpush.bf16.msra.mxu0 %v4360
    %4374 = vmatpush.bf16.msra.mxu0 %v4359
    %4375 = vmatpush.bf16.msra.mxu0 %v4358
    %4376 = vmatpush.bf16.msra.mxu0 %v4357
    %4377 = vmatpush.bf16.msra.mxu0 %v4356
    %4378 = vmatpush.bf16.msra.mxu0 %v4355
    %4379 = vmatmul.bf16.gmra.mxu0 %v4305
    %v4380 = vpop.f32.mrf.mxu0
    %v4381 = vadd.f32 0.0, %v4380
    %v4382 = vpop.f32.mrf.mxu0
    %v4383 = vadd.f32 0.0, %v4382
    %4384 = vdwg.mxu0
    %v4385 = vpack.c.bf16 %v4383, %v4381
    %v4386 = vld [vmem:[%s7] sm:$0xf]
    %v4387 = vld [vmem:[%s7 + $0x4] sm:$0xf]
    %v4388 = vld [vmem:[%s7 + $0x8] sm:$0xf]
    %v4389 = vld [vmem:[%s7 + $0xc] sm:$0xf]
    %v4390 = vld [vmem:[%s7 + $0x10] sm:$0xf]
    %v4391 = vld [vmem:[%s7 + $0x14] sm:$0xf]
    %v4392 = vld [vmem:[%s7 + $0x18] sm:$0xf]
    %v4393 = vld [vmem:[%s7 + $0x1c] sm:$0xf]
    %v4394 = vld [vmem:[#allocation22 + $0x6] sm:$0x1]
    %v4395 = vperm.slane %v4394, 0
    %v4396 = vmul.f32 %v284, %v4395
    %v4397 = vmul.f32 %v285, %v4395
    %v4398 = vmul.f32 %v286, %v4395
    %v4399 = vmul.f32 %v287, %v4395
    %v4400 = vmul.f32 %v288, %v4395
    %v4401 = vmul.f32 %v289, %v4395
    %v4402 = vmul.f32 %v290, %v4395
    %v4403 = vmul.f32 %v291, %v4395
    %v4412 = vunpack.c.l.b16 %v4386
    %v4413 = vunpack.c.l.b16 %v4387
    %v4414 = vunpack.c.l.b16 %v4388
    %v4415 = vunpack.c.l.b16 %v4389
    %v4416 = vunpack.c.l.b16 %v4390
    %v4417 = vunpack.c.l.b16 %v4391
    %v4418 = vunpack.c.l.b16 %v4392
    %v4419 = vunpack.c.l.b16 %v4393
    %v4420 = vpack.c.b16 %v4413, %v4412
    %v4421 = vpack.c.b16 %v4415, %v4414
    %v4422 = vpack.c.b16 %v4417, %v4416
    %v4423 = vpack.c.b16 %v4419, %v4418
    %vm4424 = vcmask 130048
    %v4426 = vsel %vm4424, %v4420, 0
    %v4429 = vsel %vm4424, %v4421, 0
    %v4432 = vsel %vm4424, %v4422, 0
    %v4435 = vsel %vm4424, %v4423, 0
    %4437 = vmatpush.bf16.msra.mxu0 0
    %4438 = vmatpush.bf16.msra.mxu0 0
    %4439 = vmatpush.bf16.msra.mxu0 0
    %4440 = vmatpush.bf16.msra.mxu0 0
    %4441 = vmatpush.bf16.msra.mxu0 0
    %4442 = vmatpush.bf16.msra.mxu0 0
    %4443 = vmatpush.bf16.msra.mxu0 0
    %4444 = vmatpush.bf16.msra.mxu0 %v4385
    %4445 = vmatmul.bf16.gmra.mxu0 %v4426
    %v4446 = vpop.f32.mrf.mxu0
    %v4447 = vadd.f32 %v4396, %v4446
    %v4448 = vpop.f32.mrf.mxu0
    %v4449 = vadd.f32 %v4397, %v4448
    %4450 = vmatmul.bf16.gmra.mxu0 %v4429
    %v4451 = vpop.f32.mrf.mxu0
    %v4452 = vadd.f32 %v4398, %v4451
    %v4453 = vpop.f32.mrf.mxu0
    %v4454 = vadd.f32 %v4399, %v4453
    %4455 = vmatmul.bf16.gmra.mxu0 %v4432
    %v4456 = vpop.f32.mrf.mxu0
    %v4457 = vadd.f32 %v4400, %v4456
    %v4458 = vpop.f32.mrf.mxu0
    %v4459 = vadd.f32 %v4401, %v4458
    %4460 = vmatmul.bf16.gmra.mxu0 %v4435
    %v4461 = vpop.f32.mrf.mxu0
    %v4462 = vadd.f32 %v4402, %v4461
    %v4463 = vpop.f32.mrf.mxu0
    %v4464 = vadd.f32 %v4403, %v4463
    %4465 = vdwg.mxu0
    %v4466 = vld [vmem:[#allocation22 + $0x7] sm:$0x1]
    %v4467 = vperm.slane %v4466, 0
    %v4468 = vadd.f32 %v4447, %v4467
    %v4469 = vadd.f32 %v4449, %v4467
    %v4470 = vadd.f32 %v4452, %v4467
    %v4471 = vadd.f32 %v4454, %v4467
    %v4472 = vadd.f32 %v4457, %v4467
    %v4473 = vadd.f32 %v4459, %v4467
    %v4474 = vadd.f32 %v4462, %v4467
    %v4475 = vadd.f32 %v4464, %v4467
    %vm4476 = vcmp.gt.f32.partialorder %v4468, 0.0
    %vm4477 = vcmp.gt.f32.partialorder %v4469, 0.0
    %vm4478 = vcmp.gt.f32.partialorder %v4470, 0.0
    %vm4479 = vcmp.gt.f32.partialorder %v4471, 0.0
    %vm4480 = vcmp.gt.f32.partialorder %v4472, 0.0
    %vm4481 = vcmp.gt.f32.partialorder %v4473, 0.0
    %vm4482 = vcmp.gt.f32.partialorder %v4474, 0.0
    %vm4483 = vcmp.gt.f32.partialorder %v4475, 0.0
    %v4484 = vmul.f32 %v4468, 1.442695
    %v4485 = vpow.pop %v4484
    %v4486 = vmul.f32 %v4469, 1.442695
    %v4487 = vpow.pop %v4486
    %v4488 = vmul.f32 %v4470, 1.442695
    %v4489 = vpow.pop %v4488
    %v4490 = vmul.f32 %v4471, 1.442695
    %v4491 = vpow.pop %v4490
    %v4492 = vmul.f32 %v4472, 1.442695
    %v4493 = vpow.pop %v4492
    %v4494 = vmul.f32 %v4473, 1.442695
    %v4495 = vpow.pop %v4494
    %v4496 = vmul.f32 %v4474, 1.442695
    %v4497 = vpow.pop %v4496
    %v4498 = vmul.f32 %v4475, 1.442695
    %v4499 = vpow.pop %v4498
    %v4500 = vsub.f32 %v4485, 1.0
    %v4501 = vsub.f32 %v4487, 1.0
    %v4502 = vsub.f32 %v4489, 1.0
    %v4503 = vsub.f32 %v4491, 1.0
    %v4504 = vsub.f32 %v4493, 1.0
    %v4505 = vsub.f32 %v4495, 1.0
    %v4506 = vsub.f32 %v4497, 1.0
    %v4507 = vsub.f32 %v4499, 1.0
    %v4508 = vmul.f32 %v4500, 1.6732632
    %v4509 = vmul.f32 %v4501, 1.6732632
    %v4510 = vmul.f32 %v4502, 1.6732632
    %v4511 = vmul.f32 %v4503, 1.6732632
    %v4512 = vmul.f32 %v4504, 1.6732632
    %v4513 = vmul.f32 %v4505, 1.6732632
    %v4514 = vmul.f32 %v4506, 1.6732632
    %v4515 = vmul.f32 %v4507, 1.6732632
    %v4516 = vsel %vm4476, %v4468, %v4508
    %v4517 = vsel %vm4477, %v4469, %v4509
    %v4518 = vsel %vm4478, %v4470, %v4510
    %v4519 = vsel %vm4479, %v4471, %v4511
    %v4520 = vsel %vm4480, %v4472, %v4512
    %v4521 = vsel %vm4481, %v4473, %v4513
    %v4522 = vsel %vm4482, %v4474, %v4514
    %v4523 = vsel %vm4483, %v4475, %v4515
    %v4524 = vmul.f32 %v4516, 1.050701
    %v4525 = vmul.f32 %v4517, 1.050701
    %v4526 = vmul.f32 %v4518, 1.050701
    %v4527 = vmul.f32 %v4519, 1.050701
    %v4528 = vmul.f32 %v4520, 1.050701
    %v4529 = vmul.f32 %v4521, 1.050701
    %v4530 = vmul.f32 %v4522, 1.050701
    %v4531 = vmul.f32 %v4523, 1.050701
    %v4532 = vld [vmem:[#allocation2] sm:$0xff]
    %v4533 = vld [vmem:[#allocation2 + $0x8] sm:$0xff]
    %v4534 = vld [vmem:[#allocation2 + $0x10] sm:$0xff]
    %v4535 = vld [vmem:[#allocation2 + $0x18] sm:$0xff]
    %v4536 = vld [vmem:[#allocation2 + $0x20] sm:$0xff]
    %v4537 = vld [vmem:[#allocation2 + $0x28] sm:$0xff]
    %v4538 = vld [vmem:[#allocation2 + $0x30] sm:$0xff]
    %v4539 = vld [vmem:[#allocation2 + $0x38] sm:$0xff]
    %v4540 = vpack.c.bf16 %v4525, %v4524
    %v4541 = vpack.c.bf16 %v4527, %v4526
    %v4542 = vpack.c.bf16 %v4529, %v4528
    %v4543 = vpack.c.bf16 %v4531, %v4530
    %s4544 = scalar_lea.vmem [#allocation21], 256
    %v4545 = vld [vmem:[%s4544] sm:$0xf]
    %v4546 = vld [vmem:[%s4544 + $0x4] sm:$0xf]
    %v4547 = vld [vmem:[%s4544 + $0x8] sm:$0xf]
    %v4548 = vld [vmem:[%s4544 + $0xc] sm:$0xf]
    %v4549 = vld [vmem:[%s4544 + $0x10] sm:$0xf]
    %v4550 = vld [vmem:[%s4544 + $0x14] sm:$0xf]
    %v4551 = vld [vmem:[%s4544 + $0x18] sm:$0xf]
    %v4552 = vld [vmem:[%s4544 + $0x1c] sm:$0xf]
    %v4553 = vld [vmem:[%s4544 + $0x20] sm:$0xf]
    %v4554 = vld [vmem:[%s4544 + $0x24] sm:$0xf]
    %v4555 = vld [vmem:[%s4544 + $0x28] sm:$0xf]
    %v4556 = vld [vmem:[%s4544 + $0x2c] sm:$0xf]
    %v4557 = vld [vmem:[%s4544 + $0x30] sm:$0xf]
    %v4558 = vld [vmem:[%s4544 + $0x34] sm:$0xf]
    %v4559 = vld [vmem:[%s4544 + $0x38] sm:$0xf]
    %v4560 = vld [vmem:[%s4544 + $0x3c] sm:$0xf]
    %v4577 = vunpack.c.l.b16 %v4545
    %v4578 = vunpack.c.l.b16 %v4546
    %v4579 = vunpack.c.l.b16 %v4547
    %v4580 = vunpack.c.l.b16 %v4548
    %v4581 = vunpack.c.l.b16 %v4549
    %v4582 = vunpack.c.l.b16 %v4550
    %v4583 = vunpack.c.l.b16 %v4551
    %v4584 = vunpack.c.l.b16 %v4552
    %v4585 = vunpack.c.l.b16 %v4553
    %v4586 = vunpack.c.l.b16 %v4554
    %v4587 = vunpack.c.l.b16 %v4555
    %v4588 = vunpack.c.l.b16 %v4556
    %v4589 = vunpack.c.l.b16 %v4557
    %v4590 = vunpack.c.l.b16 %v4558
    %v4591 = vunpack.c.l.b16 %v4559
    %v4592 = vunpack.c.l.b16 %v4560
    %v4593 = vpack.c.b16 %v4578, %v4577
    %v4594 = vpack.c.b16 %v4580, %v4579
    %v4595 = vpack.c.b16 %v4582, %v4581
    %v4596 = vpack.c.b16 %v4584, %v4583
    %v4597 = vpack.c.b16 %v4586, %v4585
    %v4598 = vpack.c.b16 %v4588, %v4587
    %v4599 = vpack.c.b16 %v4590, %v4589
    %v4600 = vpack.c.b16 %v4592, %v4591
    %4609 = vmatpush.bf16.msra.mxu0 %v4600
    %4610 = vmatpush.bf16.msra.mxu0 %v4599
    %4611 = vmatpush.bf16.msra.mxu0 %v4598
    %4612 = vmatpush.bf16.msra.mxu0 %v4597
    %4613 = vmatpush.bf16.msra.mxu0 %v4596
    %4614 = vmatpush.bf16.msra.mxu0 %v4595
    %4615 = vmatpush.bf16.msra.mxu0 %v4594
    %4616 = vmatpush.bf16.msra.mxu0 %v4593
    %4617 = vmatmul.bf16.gmra.mxu0 %v4540
    %v4618 = vpop.f32.mrf.mxu0
    %v4619 = vadd.f32 0.0, %v4618
    %v4620 = vpop.f32.mrf.mxu0
    %v4621 = vadd.f32 0.0, %v4620
    %4622 = vmatmul.bf16.gmra.mxu0 %v4541
    %v4623 = vpop.f32.mrf.mxu0
    %v4624 = vadd.f32 0.0, %v4623
    %v4625 = vpop.f32.mrf.mxu0
    %v4626 = vadd.f32 0.0, %v4625
    %4627 = vmatmul.bf16.gmra.mxu0 %v4542
    %v4628 = vpop.f32.mrf.mxu0
    %v4629 = vadd.f32 0.0, %v4628
    %v4630 = vpop.f32.mrf.mxu0
    %v4631 = vadd.f32 0.0, %v4630
    %4632 = vmatmul.bf16.gmra.mxu0 %v4543
    %v4633 = vpop.f32.mrf.mxu0
    %v4634 = vadd.f32 0.0, %v4633
    %v4635 = vpop.f32.mrf.mxu0
    %v4636 = vadd.f32 0.0, %v4635
    %4637 = vdwg.mxu0
    %v4638 = vadd.f32 %v4532, %v4619
    %v4639 = vadd.f32 %v4533, %v4621
    %v4640 = vadd.f32 %v4534, %v4624
    %v4641 = vadd.f32 %v4535, %v4626
    %v4642 = vadd.f32 %v4536, %v4629
    %v4643 = vadd.f32 %v4537, %v4631
    %v4644 = vadd.f32 %v4538, %v4634
    %v4645 = vadd.f32 %v4539, %v4636
    %v4646 = vld [vmem:[#allocation22 + $0x8] sm:$0x1]
    %v4647 = vperm.slane %v4646, 0
    %v4648 = vadd.f32 %v4638, %v4647
    %v4649 = vadd.f32 %v4639, %v4647
    %v4650 = vadd.f32 %v4640, %v4647
    %v4651 = vadd.f32 %v4641, %v4647
    %v4652 = vadd.f32 %v4642, %v4647
    %v4653 = vadd.f32 %v4643, %v4647
    %v4654 = vadd.f32 %v4644, %v4647
    %v4655 = vadd.f32 %v4645, %v4647
    %v4656 = vld [vmem:[#allocation3] sm:$0xff]
    %v4657 = vld [vmem:[#allocation3 + $0x8] sm:$0xff]
    %v4658 = vld [vmem:[#allocation3 + $0x10] sm:$0xff]
    %v4659 = vld [vmem:[#allocation3 + $0x18] sm:$0xff]
    %v4660 = vld [vmem:[#allocation3 + $0x20] sm:$0xff]
    %v4661 = vld [vmem:[#allocation3 + $0x28] sm:$0xff]
    %v4662 = vld [vmem:[#allocation3 + $0x30] sm:$0xff]
    %v4663 = vld [vmem:[#allocation3 + $0x38] sm:$0xff]
    %v4664 = vld [vmem:[#allocation3 + $0x40] sm:$0xff]
    %v4665 = vld [vmem:[#allocation3 + $0x48] sm:$0xff]
    %v4666 = vld [vmem:[#allocation3 + $0x50] sm:$0xff]
    %v4667 = vld [vmem:[#allocation3 + $0x58] sm:$0xff]
    %v4668 = vld [vmem:[#allocation3 + $0x60] sm:$0xff]
    %v4669 = vld [vmem:[#allocation3 + $0x68] sm:$0xff]
    %v4670 = vld [vmem:[#allocation3 + $0x70] sm:$0xff]
    %v4671 = vld [vmem:[#allocation3 + $0x78] sm:$0xff]
    %v4672 = vpack.c.bf16 %v4649, %v4648
    %v4673 = vpack.c.bf16 %v4651, %v4650
    %v4674 = vpack.c.bf16 %v4653, %v4652
    %v4675 = vpack.c.bf16 %v4655, %v4654
    %v4676 = vpack.c.bf16 %v4657, %v4656
    %v4677 = vpack.c.bf16 %v4659, %v4658
    %v4678 = vpack.c.bf16 %v4661, %v4660
    %v4679 = vpack.c.bf16 %v4663, %v4662
    %v4680 = vpack.c.bf16 %v4665, %v4664
    %v4681 = vpack.c.bf16 %v4667, %v4666
    %v4682 = vpack.c.bf16 %v4669, %v4668
    %v4683 = vpack.c.bf16 %v4671, %v4670
    %s4684 = scalar_lea.vmem %s10, 8
    %v4685 = vld [vmem:[%s4684] sm:$0xf]
    %s4686 = scalar_lea.vmem [#allocation16], 896
    %v4687 = vld [vmem:[%s4686] sm:$0xff]
    %v4688 = vld [vmem:[%s4686 + $0x1c] sm:$0xff]
    %v4689 = vld [vmem:[%s4686 + $0x38] sm:$0xff]
    %v4690 = vld [vmem:[%s4686 + $0x54] sm:$0xff]
    %v4691 = vld [vmem:[%s4686 + $0x70] sm:$0xff]
    %v4692 = vld [vmem:[%s4686 + $0x8c] sm:$0xff]
    %v4693 = vld [vmem:[%s4686 + $0xa8] sm:$0xff]
    %v4694 = vld [vmem:[%s4686 + $0xc4] sm:$0xff]
    %v4695 = vld [vmem:[%s4686 + $0xe0] sm:$0xff]
    %v4696 = vld [vmem:[%s4686 + $0xfc] sm:$0xff]
    %v4697 = vld [vmem:[%s4686 + $0x118] sm:$0xff]
    %v4698 = vld [vmem:[%s4686 + $0x134] sm:$0xff]
    %v4699 = vld [vmem:[%s4686 + $0x150] sm:$0xff]
    %v4700 = vld [vmem:[%s4686 + $0x16c] sm:$0xff]
    %v4701 = vld [vmem:[%s4686 + $0x188] sm:$0xff]
    %v4702 = vld [vmem:[%s4686 + $0x1a4] sm:$0xff]
    %v4719 = vunpack.c.l.b16 %v4687
    %v4720 = vunpack.c.h.b16 %v4687
    %v4721 = vunpack.c.l.b16 %v4688
    %v4722 = vunpack.c.h.b16 %v4688
    %v4723 = vunpack.c.l.b16 %v4689
    %v4724 = vunpack.c.h.b16 %v4689
    %v4725 = vunpack.c.l.b16 %v4690
    %v4726 = vunpack.c.h.b16 %v4690
    %v4727 = vunpack.c.l.b16 %v4691
    %v4728 = vunpack.c.h.b16 %v4691
    %v4729 = vunpack.c.l.b16 %v4692
    %v4730 = vunpack.c.h.b16 %v4692
    %v4731 = vunpack.c.l.b16 %v4693
    %v4732 = vunpack.c.h.b16 %v4693
    %v4733 = vunpack.c.l.b16 %v4694
    %v4734 = vunpack.c.h.b16 %v4694
    %v4735 = vunpack.c.l.b16 %v4695
    %v4736 = vunpack.c.h.b16 %v4695
    %v4737 = vunpack.c.l.b16 %v4696
    %v4738 = vunpack.c.h.b16 %v4696
    %v4739 = vunpack.c.l.b16 %v4697
    %v4740 = vunpack.c.h.b16 %v4697
    %v4741 = vunpack.c.l.b16 %v4698
    %v4742 = vunpack.c.h.b16 %v4698
    %v4743 = vunpack.c.l.b16 %v4699
    %v4744 = vunpack.c.h.b16 %v4699
    %v4745 = vunpack.c.l.b16 %v4700
    %v4746 = vunpack.c.h.b16 %v4700
    %v4747 = vunpack.c.l.b16 %v4701
    %v4748 = vunpack.c.h.b16 %v4701
    %v4749 = vunpack.c.l.b16 %v4702
    %v4750 = vunpack.c.h.b16 %v4702
    %v4751 = vpack.c.b16 %v4721, %v4719
    %v4752 = vpack.c.b16 %v4722, %v4720
    %v4753 = vpack.c.b16 %v4725, %v4723
    %v4754 = vpack.c.b16 %v4726, %v4724
    %v4755 = vpack.c.b16 %v4729, %v4727
    %v4756 = vpack.c.b16 %v4730, %v4728
    %v4757 = vpack.c.b16 %v4733, %v4731
    %v4758 = vpack.c.b16 %v4734, %v4732
    %v4759 = vpack.c.b16 %v4737, %v4735
    %v4760 = vpack.c.b16 %v4738, %v4736
    %v4761 = vpack.c.b16 %v4741, %v4739
    %v4762 = vpack.c.b16 %v4742, %v4740
    %v4763 = vpack.c.b16 %v4745, %v4743
    %v4764 = vpack.c.b16 %v4746, %v4744
    %v4765 = vpack.c.b16 %v4749, %v4747
    %v4766 = vpack.c.b16 %v4750, %v4748
    %4783 = vmatpush.bf16.msra.mxu0 %v4765
    %4784 = vmatpush.bf16.msra.mxu0 %v4763
    %4785 = vmatpush.bf16.msra.mxu0 %v4761
    %4786 = vmatpush.bf16.msra.mxu0 %v4759
    %4787 = vmatpush.bf16.msra.mxu0 %v4757
    %4788 = vmatpush.bf16.msra.mxu0 %v4755
    %4789 = vmatpush.bf16.msra.mxu0 %v4753
    %4790 = vmatpush.bf16.msra.mxu0 %v4751
    %4791 = vmatmul.bf16.gmra.mxu0 %v4672
    %v4792 = vpop.f32.mrf.mxu0
    %v4793 = vadd.f32 0.0, %v4792
    %v4794 = vpop.f32.mrf.mxu0
    %v4795 = vadd.f32 0.0, %v4794
    %4796 = vmatmul.bf16.gmra.mxu0 %v4673
    %v4797 = vpop.f32.mrf.mxu0
    %v4798 = vadd.f32 0.0, %v4797
    %v4799 = vpop.f32.mrf.mxu0
    %v4800 = vadd.f32 0.0, %v4799
    %4801 = vmatmul.bf16.gmra.mxu0 %v4674
    %v4802 = vpop.f32.mrf.mxu0
    %v4803 = vadd.f32 0.0, %v4802
    %v4804 = vpop.f32.mrf.mxu0
    %v4805 = vadd.f32 0.0, %v4804
    %4806 = vmatmul.bf16.gmra.mxu0 %v4675
    %v4807 = vpop.f32.mrf.mxu0
    %v4808 = vadd.f32 0.0, %v4807
    %v4809 = vpop.f32.mrf.mxu0
    %v4810 = vadd.f32 0.0, %v4809
    %4811 = vdwg.mxu0
    %4812 = vmatpush.bf16.msra.mxu0 %v4766
    %4813 = vmatpush.bf16.msra.mxu0 %v4764
    %4814 = vmatpush.bf16.msra.mxu0 %v4762
    %4815 = vmatpush.bf16.msra.mxu0 %v4760
    %4816 = vmatpush.bf16.msra.mxu0 %v4758
    %4817 = vmatpush.bf16.msra.mxu0 %v4756
    %4818 = vmatpush.bf16.msra.mxu0 %v4754
    %4819 = vmatpush.bf16.msra.mxu0 %v4752
    %4820 = vmatmul.bf16.gmra.mxu0 %v4672
    %v4821 = vpop.f32.mrf.mxu0
    %v4822 = vadd.f32 0.0, %v4821
    %v4823 = vpop.f32.mrf.mxu0
    %v4824 = vadd.f32 0.0, %v4823
    %4825 = vmatmul.bf16.gmra.mxu0 %v4673
    %v4826 = vpop.f32.mrf.mxu0
    %v4827 = vadd.f32 0.0, %v4826
    %v4828 = vpop.f32.mrf.mxu0
    %v4829 = vadd.f32 0.0, %v4828
    %4830 = vmatmul.bf16.gmra.mxu0 %v4674
    %v4831 = vpop.f32.mrf.mxu0
    %v4832 = vadd.f32 0.0, %v4831
    %v4833 = vpop.f32.mrf.mxu0
    %v4834 = vadd.f32 0.0, %v4833
    %4835 = vmatmul.bf16.gmra.mxu0 %v4675
    %v4836 = vpop.f32.mrf.mxu0
    %v4837 = vadd.f32 0.0, %v4836
    %v4838 = vpop.f32.mrf.mxu0
    %v4839 = vadd.f32 0.0, %v4838
    %4840 = vdwg.mxu0
    %v4841 = vpack.c.bf16 %v4822, %v4793
    %v4842 = vpack.c.bf16 %v4824, %v4795
    %v4843 = vpack.c.bf16 %v4827, %v4798
    %v4844 = vpack.c.bf16 %v4829, %v4800
    %v4845 = vpack.c.bf16 %v4832, %v4803
    %v4846 = vpack.c.bf16 %v4834, %v4805
    %v4847 = vpack.c.bf16 %v4837, %v4808
    %v4848 = vpack.c.bf16 %v4839, %v4810
    %v4857 = vunpack.c.l.b16 %v4841
    %v4858 = vunpack.c.l.b16 %v4842
    %v4859 = vunpack.c.l.b16 %v4843
    %v4860 = vunpack.c.l.b16 %v4844
    %v4861 = vunpack.c.l.b16 %v4845
    %v4862 = vunpack.c.l.b16 %v4846
    %v4863 = vunpack.c.l.b16 %v4847
    %v4864 = vunpack.c.l.b16 %v4848
    %v4865 = vpack.c.b16 %v4858, %v4857
    %v4866 = vpack.c.b16 %v4860, %v4859
    %v4867 = vpack.c.b16 %v4862, %v4861
    %v4868 = vpack.c.b16 %v4864, %v4863
    %v4873 = vunpack.c.h.b16 %v4841
    %v4874 = vunpack.c.h.b16 %v4842
    %v4875 = vunpack.c.h.b16 %v4843
    %v4876 = vunpack.c.h.b16 %v4844
    %v4877 = vunpack.c.h.b16 %v4845
    %v4878 = vunpack.c.h.b16 %v4846
    %v4879 = vunpack.c.h.b16 %v4847
    %v4880 = vunpack.c.h.b16 %v4848
    %v4881 = vpack.c.b16 %v4874, %v4873
    %v4882 = vpack.c.b16 %v4876, %v4875
    %v4883 = vpack.c.b16 %v4878, %v4877
    %v4884 = vpack.c.b16 %v4880, %v4879
    %v4889 = vld [vmem:[%s4686 + $0x8] sm:$0xf]
    %v4890 = vld [vmem:[%s4686 + $0x24] sm:$0xf]
    %v4891 = vld [vmem:[%s4686 + $0x40] sm:$0xf]
    %v4892 = vld [vmem:[%s4686 + $0x5c] sm:$0xf]
    %v4893 = vld [vmem:[%s4686 + $0x78] sm:$0xf]
    %v4894 = vld [vmem:[%s4686 + $0x94] sm:$0xf]
    %v4895 = vld [vmem:[%s4686 + $0xb0] sm:$0xf]
    %v4896 = vld [vmem:[%s4686 + $0xcc] sm:$0xf]
    %v4897 = vld [vmem:[%s4686 + $0xe8] sm:$0xf]
    %v4898 = vld [vmem:[%s4686 + $0x104] sm:$0xf]
    %v4899 = vld [vmem:[%s4686 + $0x120] sm:$0xf]
    %v4900 = vld [vmem:[%s4686 + $0x13c] sm:$0xf]
    %v4901 = vld [vmem:[%s4686 + $0x158] sm:$0xf]
    %v4902 = vld [vmem:[%s4686 + $0x174] sm:$0xf]
    %v4903 = vld [vmem:[%s4686 + $0x190] sm:$0xf]
    %v4904 = vld [vmem:[%s4686 + $0x1ac] sm:$0xf]
    %v4921 = vunpack.c.l.b16 %v4889
    %v4922 = vunpack.c.l.b16 %v4890
    %v4923 = vunpack.c.l.b16 %v4891
    %v4924 = vunpack.c.l.b16 %v4892
    %v4925 = vunpack.c.l.b16 %v4893
    %v4926 = vunpack.c.l.b16 %v4894
    %v4927 = vunpack.c.l.b16 %v4895
    %v4928 = vunpack.c.l.b16 %v4896
    %v4929 = vunpack.c.l.b16 %v4897
    %v4930 = vunpack.c.l.b16 %v4898
    %v4931 = vunpack.c.l.b16 %v4899
    %v4932 = vunpack.c.l.b16 %v4900
    %v4933 = vunpack.c.l.b16 %v4901
    %v4934 = vunpack.c.l.b16 %v4902
    %v4935 = vunpack.c.l.b16 %v4903
    %v4936 = vunpack.c.l.b16 %v4904
    %v4937 = vpack.c.b16 %v4922, %v4921
    %v4938 = vpack.c.b16 %v4924, %v4923
    %v4939 = vpack.c.b16 %v4926, %v4925
    %v4940 = vpack.c.b16 %v4928, %v4927
    %v4941 = vpack.c.b16 %v4930, %v4929
    %v4942 = vpack.c.b16 %v4932, %v4931
    %v4943 = vpack.c.b16 %v4934, %v4933
    %v4944 = vpack.c.b16 %v4936, %v4935
    %4953 = vmatpush.bf16.msra.mxu0 %v4944
    %4954 = vmatpush.bf16.msra.mxu0 %v4943
    %4955 = vmatpush.bf16.msra.mxu0 %v4942
    %4956 = vmatpush.bf16.msra.mxu0 %v4941
    %4957 = vmatpush.bf16.msra.mxu0 %v4940
    %4958 = vmatpush.bf16.msra.mxu0 %v4939
    %4959 = vmatpush.bf16.msra.mxu0 %v4938
    %4960 = vmatpush.bf16.msra.mxu0 %v4937
    %4961 = vmatmul.bf16.gmra.mxu0 %v4676
    %v4962 = vpop.f32.mrf.mxu0
    %v4963 = vadd.f32 0.0, %v4962
    %v4964 = vpop.f32.mrf.mxu0
    %v4965 = vadd.f32 0.0, %v4964
    %4966 = vmatmul.bf16.gmra.mxu0 %v4677
    %v4967 = vpop.f32.mrf.mxu0
    %v4968 = vadd.f32 0.0, %v4967
    %v4969 = vpop.f32.mrf.mxu0
    %v4970 = vadd.f32 0.0, %v4969
    %4971 = vmatmul.bf16.gmra.mxu0 %v4678
    %v4972 = vpop.f32.mrf.mxu0
    %v4973 = vadd.f32 0.0, %v4972
    %v4974 = vpop.f32.mrf.mxu0
    %v4975 = vadd.f32 0.0, %v4974
    %4976 = vmatmul.bf16.gmra.mxu0 %v4679
    %v4977 = vpop.f32.mrf.mxu0
    %v4978 = vadd.f32 0.0, %v4977
    %v4979 = vpop.f32.mrf.mxu0
    %v4980 = vadd.f32 0.0, %v4979
    %4981 = vmatmul.bf16.gmra.mxu0 %v4680
    %v4982 = vpop.f32.mrf.mxu0
    %v4983 = vadd.f32 0.0, %v4982
    %v4984 = vpop.f32.mrf.mxu0
    %v4985 = vadd.f32 0.0, %v4984
    %4986 = vmatmul.bf16.gmra.mxu0 %v4681
    %v4987 = vpop.f32.mrf.mxu0
    %v4988 = vadd.f32 0.0, %v4987
    %v4989 = vpop.f32.mrf.mxu0
    %v4990 = vadd.f32 0.0, %v4989
    %4991 = vmatmul.bf16.gmra.mxu0 %v4682
    %v4992 = vpop.f32.mrf.mxu0
    %v4993 = vadd.f32 0.0, %v4992
    %v4994 = vpop.f32.mrf.mxu0
    %v4995 = vadd.f32 0.0, %v4994
    %4996 = vmatmul.bf16.gmra.mxu0 %v4683
    %v4997 = vpop.f32.mrf.mxu0
    %v4998 = vadd.f32 0.0, %v4997
    %v4999 = vpop.f32.mrf.mxu0
    %v5000 = vadd.f32 0.0, %v4999
    %5001 = vdwg.mxu0
    %5002 = vmatpush.bf16.msra.mxu0 %v4884
    %5003 = vmatpush.bf16.msra.mxu0 %v4883
    %5004 = vmatpush.bf16.msra.mxu0 %v4882
    %5005 = vmatpush.bf16.msra.mxu0 %v4881
    %5006 = vmatpush.bf16.msra.mxu0 %v4868
    %5007 = vmatpush.bf16.msra.mxu0 %v4867
    %5008 = vmatpush.bf16.msra.mxu0 %v4866
    %5009 = vmatpush.bf16.msra.mxu0 %v4865
    %5010 = vmatmul.bf16.gmra.mxu0 %v680
    %v5011 = vpop.f32.mrf.mxu0
    %v5012 = vadd.f32 %v4963, %v5011
    %v5013 = vpop.f32.mrf.mxu0
    %v5014 = vadd.f32 %v4965, %v5013
    %5015 = vmatmul.bf16.gmra.mxu0 %v681
    %v5016 = vpop.f32.mrf.mxu0
    %v5017 = vadd.f32 %v4968, %v5016
    %v5018 = vpop.f32.mrf.mxu0
    %v5019 = vadd.f32 %v4970, %v5018
    %5020 = vmatmul.bf16.gmra.mxu0 %v682
    %v5021 = vpop.f32.mrf.mxu0
    %v5022 = vadd.f32 %v4973, %v5021
    %v5023 = vpop.f32.mrf.mxu0
    %v5024 = vadd.f32 %v4975, %v5023
    %5025 = vmatmul.bf16.gmra.mxu0 %v683
    %v5026 = vpop.f32.mrf.mxu0
    %v5027 = vadd.f32 %v4978, %v5026
    %v5028 = vpop.f32.mrf.mxu0
    %v5029 = vadd.f32 %v4980, %v5028
    %5030 = vmatmul.bf16.gmra.mxu0 %v684
    %v5031 = vpop.f32.mrf.mxu0
    %v5032 = vadd.f32 %v4983, %v5031
    %v5033 = vpop.f32.mrf.mxu0
    %v5034 = vadd.f32 %v4985, %v5033
    %5035 = vmatmul.bf16.gmra.mxu0 %v685
    %v5036 = vpop.f32.mrf.mxu0
    %v5037 = vadd.f32 %v4988, %v5036
    %v5038 = vpop.f32.mrf.mxu0
    %v5039 = vadd.f32 %v4990, %v5038
    %5040 = vmatmul.bf16.gmra.mxu0 %v686
    %v5041 = vpop.f32.mrf.mxu0
    %v5042 = vadd.f32 %v4993, %v5041
    %v5043 = vpop.f32.mrf.mxu0
    %v5044 = vadd.f32 %v4995, %v5043
    %5045 = vmatmul.bf16.gmra.mxu0 %v687
    %v5046 = vpop.f32.mrf.mxu0
    %v5047 = vadd.f32 %v4998, %v5046
    %v5048 = vpop.f32.mrf.mxu0
    %v5049 = vadd.f32 %v5000, %v5048
    %5050 = vdwg.mxu0
    %v5051 = vperm.slane %v4685, 0
    %v5052 = vadd.f32 %v5012, %v5051
    %v5053 = vadd.f32 %v5014, %v5051
    %v5054 = vadd.f32 %v5017, %v5051
    %v5055 = vadd.f32 %v5019, %v5051
    %v5056 = vadd.f32 %v5022, %v5051
    %v5057 = vadd.f32 %v5024, %v5051
    %v5058 = vadd.f32 %v5027, %v5051
    %v5059 = vadd.f32 %v5029, %v5051
    %v5060 = vadd.f32 %v5032, %v5051
    %v5061 = vadd.f32 %v5034, %v5051
    %v5062 = vadd.f32 %v5037, %v5051
    %v5063 = vadd.f32 %v5039, %v5051
    %v5064 = vadd.f32 %v5042, %v5051
    %v5065 = vadd.f32 %v5044, %v5051
    %v5066 = vadd.f32 %v5047, %v5051
    %v5067 = vadd.f32 %v5049, %v5051
    %vm5068 = vcmp.gt.f32.partialorder %v5052, 0.0
    %vm5069 = vcmp.gt.f32.partialorder %v5053, 0.0
    %vm5070 = vcmp.gt.f32.partialorder %v5054, 0.0
    %vm5071 = vcmp.gt.f32.partialorder %v5055, 0.0
    %vm5072 = vcmp.gt.f32.partialorder %v5056, 0.0
    %vm5073 = vcmp.gt.f32.partialorder %v5057, 0.0
    %vm5074 = vcmp.gt.f32.partialorder %v5058, 0.0
    %vm5075 = vcmp.gt.f32.partialorder %v5059, 0.0
    %vm5076 = vcmp.gt.f32.partialorder %v5060, 0.0
    %vm5077 = vcmp.gt.f32.partialorder %v5061, 0.0
    %vm5078 = vcmp.gt.f32.partialorder %v5062, 0.0
    %vm5079 = vcmp.gt.f32.partialorder %v5063, 0.0
    %vm5080 = vcmp.gt.f32.partialorder %v5064, 0.0
    %vm5081 = vcmp.gt.f32.partialorder %v5065, 0.0
    %vm5082 = vcmp.gt.f32.partialorder %v5066, 0.0
    %vm5083 = vcmp.gt.f32.partialorder %v5067, 0.0
    %v5084 = vmul.f32 %v5052, 1.442695
    %v5085 = vpow.pop %v5084
    %v5086 = vmul.f32 %v5053, 1.442695
    %v5087 = vpow.pop %v5086
    %v5088 = vmul.f32 %v5054, 1.442695
    %v5089 = vpow.pop %v5088
    %v5090 = vmul.f32 %v5055, 1.442695
    %v5091 = vpow.pop %v5090
    %v5092 = vmul.f32 %v5056, 1.442695
    %v5093 = vpow.pop %v5092
    %v5094 = vmul.f32 %v5057, 1.442695
    %v5095 = vpow.pop %v5094
    %v5096 = vmul.f32 %v5058, 1.442695
    %v5097 = vpow.pop %v5096
    %v5098 = vmul.f32 %v5059, 1.442695
    %v5099 = vpow.pop %v5098
    %v5100 = vmul.f32 %v5060, 1.442695
    %v5101 = vpow.pop %v5100
    %v5102 = vmul.f32 %v5061, 1.442695
    %v5103 = vpow.pop %v5102
    %v5104 = vmul.f32 %v5062, 1.442695
    %v5105 = vpow.pop %v5104
    %v5106 = vmul.f32 %v5063, 1.442695
    %v5107 = vpow.pop %v5106
    %v5108 = vmul.f32 %v5064, 1.442695
    %v5109 = vpow.pop %v5108
    %v5110 = vmul.f32 %v5065, 1.442695
    %v5111 = vpow.pop %v5110
    %v5112 = vmul.f32 %v5066, 1.442695
    %v5113 = vpow.pop %v5112
    %v5114 = vmul.f32 %v5067, 1.442695
    %v5115 = vpow.pop %v5114
    %v5116 = vsub.f32 %v5085, 1.0
    %v5117 = vsub.f32 %v5087, 1.0
    %v5118 = vsub.f32 %v5089, 1.0
    %v5119 = vsub.f32 %v5091, 1.0
    %v5120 = vsub.f32 %v5093, 1.0
    %v5121 = vsub.f32 %v5095, 1.0
    %v5122 = vsub.f32 %v5097, 1.0
    %v5123 = vsub.f32 %v5099, 1.0
    %v5124 = vsub.f32 %v5101, 1.0
    %v5125 = vsub.f32 %v5103, 1.0
    %v5126 = vsub.f32 %v5105, 1.0
    %v5127 = vsub.f32 %v5107, 1.0
    %v5128 = vsub.f32 %v5109, 1.0
    %v5129 = vsub.f32 %v5111, 1.0
    %v5130 = vsub.f32 %v5113, 1.0
    %v5131 = vsub.f32 %v5115, 1.0
    %v5132 = vmul.f32 %v5116, 1.6732632
    %v5133 = vmul.f32 %v5117, 1.6732632
    %v5134 = vmul.f32 %v5118, 1.6732632
    %v5135 = vmul.f32 %v5119, 1.6732632
    %v5136 = vmul.f32 %v5120, 1.6732632
    %v5137 = vmul.f32 %v5121, 1.6732632
    %v5138 = vmul.f32 %v5122, 1.6732632
    %v5139 = vmul.f32 %v5123, 1.6732632
    %v5140 = vmul.f32 %v5124, 1.6732632
    %v5141 = vmul.f32 %v5125, 1.6732632
    %v5142 = vmul.f32 %v5126, 1.6732632
    %v5143 = vmul.f32 %v5127, 1.6732632
    %v5144 = vmul.f32 %v5128, 1.6732632
    %v5145 = vmul.f32 %v5129, 1.6732632
    %v5146 = vmul.f32 %v5130, 1.6732632
    %v5147 = vmul.f32 %v5131, 1.6732632
    %v5148 = vsel %vm5068, %v5052, %v5132
    %v5149 = vsel %vm5069, %v5053, %v5133
    %v5150 = vsel %vm5070, %v5054, %v5134
    %v5151 = vsel %vm5071, %v5055, %v5135
    %v5152 = vsel %vm5072, %v5056, %v5136
    %v5153 = vsel %vm5073, %v5057, %v5137
    %v5154 = vsel %vm5074, %v5058, %v5138
    %v5155 = vsel %vm5075, %v5059, %v5139
    %v5156 = vsel %vm5076, %v5060, %v5140
    %v5157 = vsel %vm5077, %v5061, %v5141
    %v5158 = vsel %vm5078, %v5062, %v5142
    %v5159 = vsel %vm5079, %v5063, %v5143
    %v5160 = vsel %vm5080, %v5064, %v5144
    %v5161 = vsel %vm5081, %v5065, %v5145
    %v5162 = vsel %vm5082, %v5066, %v5146
    %v5163 = vsel %vm5083, %v5067, %v5147
    %v5164 = vmul.f32 %v5148, 1.050701
    %v5165 = vmul.f32 %v5149, 1.050701
    %v5166 = vmul.f32 %v5150, 1.050701
    %v5167 = vmul.f32 %v5151, 1.050701
    %v5168 = vmul.f32 %v5152, 1.050701
    %v5169 = vmul.f32 %v5153, 1.050701
    %v5170 = vmul.f32 %v5154, 1.050701
    %v5171 = vmul.f32 %v5155, 1.050701
    %v5172 = vmul.f32 %v5156, 1.050701
    %v5173 = vmul.f32 %v5157, 1.050701
    %v5174 = vmul.f32 %v5158, 1.050701
    %v5175 = vmul.f32 %v5159, 1.050701
    %v5176 = vmul.f32 %v5160, 1.050701
    %v5177 = vmul.f32 %v5161, 1.050701
    %v5178 = vmul.f32 %v5162, 1.050701
    %v5179 = vmul.f32 %v5163, 1.050701
    %v5180 = vpack.c.bf16 %v5165, %v5164
    %v5181 = vpack.c.bf16 %v5167, %v5166
    %v5182 = vpack.c.bf16 %v5169, %v5168
    %v5183 = vpack.c.bf16 %v5171, %v5170
    %v5184 = vpack.c.bf16 %v5173, %v5172
    %v5185 = vpack.c.bf16 %v5175, %v5174
    %v5186 = vpack.c.bf16 %v5177, %v5176
    %v5187 = vpack.c.bf16 %v5179, %v5178
    %v5188 = vld [vmem:[%s4686 + $0xc] sm:$0xf]
    %v5189 = vld [vmem:[%s4686 + $0x28] sm:$0xf]
    %v5190 = vld [vmem:[%s4686 + $0x44] sm:$0xf]
    %v5191 = vld [vmem:[%s4686 + $0x60] sm:$0xf]
    %v5192 = vld [vmem:[%s4686 + $0x7c] sm:$0xf]
    %v5193 = vld [vmem:[%s4686 + $0x98] sm:$0xf]
    %v5194 = vld [vmem:[%s4686 + $0xb4] sm:$0xf]
    %v5195 = vld [vmem:[%s4686 + $0xd0] sm:$0xf]
    %v5196 = vld [vmem:[%s4686 + $0xec] sm:$0xf]
    %v5197 = vld [vmem:[%s4686 + $0x108] sm:$0xf]
    %v5198 = vld [vmem:[%s4686 + $0x124] sm:$0xf]
    %v5199 = vld [vmem:[%s4686 + $0x140] sm:$0xf]
    %v5200 = vld [vmem:[%s4686 + $0x15c] sm:$0xf]
    %v5201 = vld [vmem:[%s4686 + $0x178] sm:$0xf]
    %v5202 = vld [vmem:[%s4686 + $0x194] sm:$0xf]
    %v5203 = vld [vmem:[%s4686 + $0x1b0] sm:$0xf]
    %v5220 = vunpack.c.l.b16 %v5188
    %v5221 = vunpack.c.l.b16 %v5189
    %v5222 = vunpack.c.l.b16 %v5190
    %v5223 = vunpack.c.l.b16 %v5191
    %v5224 = vunpack.c.l.b16 %v5192
    %v5225 = vunpack.c.l.b16 %v5193
    %v5226 = vunpack.c.l.b16 %v5194
    %v5227 = vunpack.c.l.b16 %v5195
    %v5228 = vunpack.c.l.b16 %v5196
    %v5229 = vunpack.c.l.b16 %v5197
    %v5230 = vunpack.c.l.b16 %v5198
    %v5231 = vunpack.c.l.b16 %v5199
    %v5232 = vunpack.c.l.b16 %v5200
    %v5233 = vunpack.c.l.b16 %v5201
    %v5234 = vunpack.c.l.b16 %v5202
    %v5235 = vunpack.c.l.b16 %v5203
    %v5236 = vpack.c.b16 %v5221, %v5220
    %v5237 = vpack.c.b16 %v5223, %v5222
    %v5238 = vpack.c.b16 %v5225, %v5224
    %v5239 = vpack.c.b16 %v5227, %v5226
    %v5240 = vpack.c.b16 %v5229, %v5228
    %v5241 = vpack.c.b16 %v5231, %v5230
    %v5242 = vpack.c.b16 %v5233, %v5232
    %v5243 = vpack.c.b16 %v5235, %v5234
    %5252 = vmatpush.bf16.msra.mxu0 %v5243
    %5253 = vmatpush.bf16.msra.mxu0 %v5242
    %5254 = vmatpush.bf16.msra.mxu0 %v5241
    %5255 = vmatpush.bf16.msra.mxu0 %v5240
    %5256 = vmatpush.bf16.msra.mxu0 %v5239
    %5257 = vmatpush.bf16.msra.mxu0 %v5238
    %5258 = vmatpush.bf16.msra.mxu0 %v5237
    %5259 = vmatpush.bf16.msra.mxu0 %v5236
    %5260 = vmatmul.bf16.gmra.mxu0 %v5180
    %v5261 = vpop.f32.mrf.mxu0
    %v5262 = vadd.f32 0.0, %v5261
    %v5263 = vpop.f32.mrf.mxu0
    %v5264 = vadd.f32 0.0, %v5263
    %5265 = vmatmul.bf16.gmra.mxu0 %v5181
    %v5266 = vpop.f32.mrf.mxu0
    %v5267 = vadd.f32 0.0, %v5266
    %v5268 = vpop.f32.mrf.mxu0
    %v5269 = vadd.f32 0.0, %v5268
    %5270 = vmatmul.bf16.gmra.mxu0 %v5182
    %v5271 = vpop.f32.mrf.mxu0
    %v5272 = vadd.f32 0.0, %v5271
    %v5273 = vpop.f32.mrf.mxu0
    %v5274 = vadd.f32 0.0, %v5273
    %5275 = vmatmul.bf16.gmra.mxu0 %v5183
    %v5276 = vpop.f32.mrf.mxu0
    %v5277 = vadd.f32 0.0, %v5276
    %v5278 = vpop.f32.mrf.mxu0
    %v5279 = vadd.f32 0.0, %v5278
    %5280 = vmatmul.bf16.gmra.mxu0 %v5184
    %v5281 = vpop.f32.mrf.mxu0
    %v5282 = vadd.f32 0.0, %v5281
    %v5283 = vpop.f32.mrf.mxu0
    %v5284 = vadd.f32 0.0, %v5283
    %5285 = vmatmul.bf16.gmra.mxu0 %v5185
    %v5286 = vpop.f32.mrf.mxu0
    %v5287 = vadd.f32 0.0, %v5286
    %v5288 = vpop.f32.mrf.mxu0
    %v5289 = vadd.f32 0.0, %v5288
    %5290 = vmatmul.bf16.gmra.mxu0 %v5186
    %v5291 = vpop.f32.mrf.mxu0
    %v5292 = vadd.f32 0.0, %v5291
    %v5293 = vpop.f32.mrf.mxu0
    %v5294 = vadd.f32 0.0, %v5293
    %5295 = vmatmul.bf16.gmra.mxu0 %v5187
    %v5296 = vpop.f32.mrf.mxu0
    %v5297 = vadd.f32 0.0, %v5296
    %v5298 = vpop.f32.mrf.mxu0
    %v5299 = vadd.f32 0.0, %v5298
    %5300 = vdwg.mxu0
    %v5301 = vadd.f32 %v4656, %v5262
    %v5302 = vadd.f32 %v4657, %v5264
    %v5303 = vadd.f32 %v4658, %v5267
    %v5304 = vadd.f32 %v4659, %v5269
    %v5305 = vadd.f32 %v4660, %v5272
    %v5306 = vadd.f32 %v4661, %v5274
    %v5307 = vadd.f32 %v4662, %v5277
    %v5308 = vadd.f32 %v4663, %v5279
    %v5309 = vadd.f32 %v4664, %v5282
    %v5310 = vadd.f32 %v4665, %v5284
    %v5311 = vadd.f32 %v4666, %v5287
    %v5312 = vadd.f32 %v4667, %v5289
    %v5313 = vadd.f32 %v4668, %v5292
    %v5314 = vadd.f32 %v4669, %v5294
    %v5315 = vadd.f32 %v4670, %v5297
    %v5316 = vadd.f32 %v4671, %v5299
    %v5317 = vperm.slane %v4685, 1
    %v5318 = vadd.f32 %v5301, %v5317
    %v5319 = vadd.f32 %v5302, %v5317
    %v5320 = vadd.f32 %v5303, %v5317
    %v5321 = vadd.f32 %v5304, %v5317
    %v5322 = vadd.f32 %v5305, %v5317
    %v5323 = vadd.f32 %v5306, %v5317
    %v5324 = vadd.f32 %v5307, %v5317
    %v5325 = vadd.f32 %v5308, %v5317
    %v5326 = vadd.f32 %v5309, %v5317
    %v5327 = vadd.f32 %v5310, %v5317
    %v5328 = vadd.f32 %v5311, %v5317
    %v5329 = vadd.f32 %v5312, %v5317
    %v5330 = vadd.f32 %v5313, %v5317
    %v5331 = vadd.f32 %v5314, %v5317
    %v5332 = vadd.f32 %v5315, %v5317
    %v5333 = vadd.f32 %v5316, %v5317
    %v5334 = vpack.c.bf16 %v5319, %v5318
    %v5335 = vpack.c.bf16 %v5321, %v5320
    %v5336 = vpack.c.bf16 %v5323, %v5322
    %v5337 = vpack.c.bf16 %v5325, %v5324
    %v5338 = vpack.c.bf16 %v5327, %v5326
    %v5339 = vpack.c.bf16 %v5329, %v5328
    %v5340 = vpack.c.bf16 %v5331, %v5330
    %v5341 = vpack.c.bf16 %v5333, %v5332
    %5342 = vmatpush.bf16.msra.mxu0 %v5341
    %5343 = vmatpush.bf16.msra.mxu0 %v5340
    %5344 = vmatpush.bf16.msra.mxu0 %v5339
    %5345 = vmatpush.bf16.msra.mxu0 %v5338
    %5346 = vmatpush.bf16.msra.mxu0 %v5337
    %5347 = vmatpush.bf16.msra.mxu0 %v5336
    %5348 = vmatpush.bf16.msra.mxu0 %v5335
    %5349 = vmatpush.bf16.msra.mxu0 %v5334
    %5350 = vmatmul.bf16.gmra.mxu0 %v1052
    %v5351 = vpop.f32.mrf.mxu0
    %v5352 = vadd.f32 0.0, %v5351
    %v5353 = vpop.f32.mrf.mxu0
    %v5354 = vadd.f32 0.0, %v5353
    %5355 = vmatmul.bf16.gmra.mxu0 %v1053
    %v5356 = vpop.f32.mrf.mxu0
    %v5357 = vadd.f32 0.0, %v5356
    %v5358 = vpop.f32.mrf.mxu0
    %v5359 = vadd.f32 0.0, %v5358
    %5360 = vmatmul.bf16.gmra.mxu0 %v1054
    %v5361 = vpop.f32.mrf.mxu0
    %v5362 = vadd.f32 0.0, %v5361
    %v5363 = vpop.f32.mrf.mxu0
    %v5364 = vadd.f32 0.0, %v5363
    %5365 = vmatmul.bf16.gmra.mxu0 %v1055
    %v5366 = vpop.f32.mrf.mxu0
    %v5367 = vadd.f32 0.0, %v5366
    %v5368 = vpop.f32.mrf.mxu0
    %v5369 = vadd.f32 0.0, %v5368
    %5370 = vdwg.mxu0
    %v5371 = vmul.f32 %v5352, %v272
    %v5372 = vmul.f32 %v5354, %v273
    %v5373 = vmul.f32 %v5357, %v274
    %v5374 = vmul.f32 %v5359, %v275
    %v5375 = vmul.f32 %v5362, %v276
    %v5376 = vmul.f32 %v5364, %v277
    %v5377 = vmul.f32 %v5367, %v278
    %v5378 = vmul.f32 %v5369, %v279
    %v5379 = vld [vmem:[%s4686 + $0x10] sm:$0xf]
    %v5380 = vld [vmem:[%s4686 + $0x2c] sm:$0xf]
    %v5381 = vld [vmem:[%s4686 + $0x48] sm:$0xf]
    %v5382 = vld [vmem:[%s4686 + $0x64] sm:$0xf]
    %v5383 = vld [vmem:[%s4686 + $0x80] sm:$0xf]
    %v5384 = vld [vmem:[%s4686 + $0x9c] sm:$0xf]
    %v5385 = vld [vmem:[%s4686 + $0xb8] sm:$0xf]
    %v5386 = vld [vmem:[%s4686 + $0xd4] sm:$0xf]
    %v5387 = vld [vmem:[%s4686 + $0xf0] sm:$0xf]
    %v5388 = vld [vmem:[%s4686 + $0x10c] sm:$0xf]
    %v5389 = vld [vmem:[%s4686 + $0x128] sm:$0xf]
    %v5390 = vld [vmem:[%s4686 + $0x144] sm:$0xf]
    %v5391 = vld [vmem:[%s4686 + $0x160] sm:$0xf]
    %v5392 = vld [vmem:[%s4686 + $0x17c] sm:$0xf]
    %v5393 = vld [vmem:[%s4686 + $0x198] sm:$0xf]
    %v5394 = vld [vmem:[%s4686 + $0x1b4] sm:$0xf]
    %v5395 = vpack.c.bf16 %v5372, %v5371
    %v5396 = vpack.c.bf16 %v5374, %v5373
    %v5397 = vpack.c.bf16 %v5376, %v5375
    %v5398 = vpack.c.bf16 %v5378, %v5377
    %v5399 = vld [vmem:[%s4686 + $0x14] sm:$0xf]
    %v5400 = vld [vmem:[%s4686 + $0x30] sm:$0xf]
    %v5401 = vld [vmem:[%s4686 + $0x4c] sm:$0xf]
    %v5402 = vld [vmem:[%s4686 + $0x68] sm:$0xf]
    %v5403 = vld [vmem:[%s4686 + $0x84] sm:$0xf]
    %v5404 = vld [vmem:[%s4686 + $0xa0] sm:$0xf]
    %v5405 = vld [vmem:[%s4686 + $0xbc] sm:$0xf]
    %v5406 = vld [vmem:[%s4686 + $0xd8] sm:$0xf]
    %v5407 = vld [vmem:[%s4686 + $0xf4] sm:$0xf]
    %v5408 = vld [vmem:[%s4686 + $0x110] sm:$0xf]
    %v5409 = vld [vmem:[%s4686 + $0x12c] sm:$0xf]
    %v5410 = vld [vmem:[%s4686 + $0x148] sm:$0xf]
    %v5411 = vld [vmem:[%s4686 + $0x164] sm:$0xf]
    %v5412 = vld [vmem:[%s4686 + $0x180] sm:$0xf]
    %v5413 = vld [vmem:[%s4686 + $0x19c] sm:$0xf]
    %v5414 = vld [vmem:[%s4686 + $0x1b8] sm:$0xf]
    %v5431 = vunpack.c.l.b16 %v5399
    %v5432 = vunpack.c.l.b16 %v5400
    %v5433 = vunpack.c.l.b16 %v5401
    %v5434 = vunpack.c.l.b16 %v5402
    %v5435 = vunpack.c.l.b16 %v5403
    %v5436 = vunpack.c.l.b16 %v5404
    %v5437 = vunpack.c.l.b16 %v5405
    %v5438 = vunpack.c.l.b16 %v5406
    %v5439 = vunpack.c.l.b16 %v5407
    %v5440 = vunpack.c.l.b16 %v5408
    %v5441 = vunpack.c.l.b16 %v5409
    %v5442 = vunpack.c.l.b16 %v5410
    %v5443 = vunpack.c.l.b16 %v5411
    %v5444 = vunpack.c.l.b16 %v5412
    %v5445 = vunpack.c.l.b16 %v5413
    %v5446 = vunpack.c.l.b16 %v5414
    %v5447 = vpack.c.b16 %v5432, %v5431
    %v5448 = vpack.c.b16 %v5434, %v5433
    %v5449 = vpack.c.b16 %v5436, %v5435
    %v5450 = vpack.c.b16 %v5438, %v5437
    %v5451 = vpack.c.b16 %v5440, %v5439
    %v5452 = vpack.c.b16 %v5442, %v5441
    %v5453 = vpack.c.b16 %v5444, %v5443
    %v5454 = vpack.c.b16 %v5446, %v5445
    %5463 = vmatpush.bf16.msra.mxu0 %v5454
    %5464 = vmatpush.bf16.msra.mxu0 %v5453
    %5465 = vmatpush.bf16.msra.mxu0 %v5452
    %5466 = vmatpush.bf16.msra.mxu0 %v5451
    %5467 = vmatpush.bf16.msra.mxu0 %v5450
    %5468 = vmatpush.bf16.msra.mxu0 %v5449
    %5469 = vmatpush.bf16.msra.mxu0 %v5448
    %5470 = vmatpush.bf16.msra.mxu0 %v5447
    %5471 = vmatmul.bf16.gmra.mxu0 %v5395
    %v5472 = vpop.f32.mrf.mxu0
    %v5473 = vadd.f32 0.0, %v5472
    %v5474 = vpop.f32.mrf.mxu0
    %v5475 = vadd.f32 0.0, %v5474
    %5476 = vmatmul.bf16.gmra.mxu0 %v5396
    %v5477 = vpop.f32.mrf.mxu0
    %v5478 = vadd.f32 0.0, %v5477
    %v5479 = vpop.f32.mrf.mxu0
    %v5480 = vadd.f32 0.0, %v5479
    %5481 = vmatmul.bf16.gmra.mxu0 %v5397
    %v5482 = vpop.f32.mrf.mxu0
    %v5483 = vadd.f32 0.0, %v5482
    %v5484 = vpop.f32.mrf.mxu0
    %v5485 = vadd.f32 0.0, %v5484
    %5486 = vmatmul.bf16.gmra.mxu0 %v5398
    %v5487 = vpop.f32.mrf.mxu0
    %v5488 = vadd.f32 0.0, %v5487
    %v5489 = vpop.f32.mrf.mxu0
    %v5490 = vadd.f32 0.0, %v5489
    %5491 = vdwg.mxu0
    %v5508 = vunpack.c.l.b16 %v5379
    %v5509 = vunpack.c.l.b16 %v5380
    %v5510 = vunpack.c.l.b16 %v5381
    %v5511 = vunpack.c.l.b16 %v5382
    %v5512 = vunpack.c.l.b16 %v5383
    %v5513 = vunpack.c.l.b16 %v5384
    %v5514 = vunpack.c.l.b16 %v5385
    %v5515 = vunpack.c.l.b16 %v5386
    %v5516 = vunpack.c.l.b16 %v5387
    %v5517 = vunpack.c.l.b16 %v5388
    %v5518 = vunpack.c.l.b16 %v5389
    %v5519 = vunpack.c.l.b16 %v5390
    %v5520 = vunpack.c.l.b16 %v5391
    %v5521 = vunpack.c.l.b16 %v5392
    %v5522 = vunpack.c.l.b16 %v5393
    %v5523 = vunpack.c.l.b16 %v5394
    %v5524 = vpack.c.b16 %v5509, %v5508
    %v5525 = vpack.c.b16 %v5511, %v5510
    %v5526 = vpack.c.b16 %v5513, %v5512
    %v5527 = vpack.c.b16 %v5515, %v5514
    %v5528 = vpack.c.b16 %v5517, %v5516
    %v5529 = vpack.c.b16 %v5519, %v5518
    %v5530 = vpack.c.b16 %v5521, %v5520
    %v5531 = vpack.c.b16 %v5523, %v5522
    %5540 = vmatpush.bf16.msra.mxu0 %v5531
    %5541 = vmatpush.bf16.msra.mxu0 %v5530
    %5542 = vmatpush.bf16.msra.mxu0 %v5529
    %5543 = vmatpush.bf16.msra.mxu0 %v5528
    %5544 = vmatpush.bf16.msra.mxu0 %v5527
    %5545 = vmatpush.bf16.msra.mxu0 %v5526
    %5546 = vmatpush.bf16.msra.mxu0 %v5525
    %5547 = vmatpush.bf16.msra.mxu0 %v5524
    %5548 = vmatmul.bf16.gmra.mxu0 %v4672
    %v5549 = vpop.f32.mrf.mxu0
    %v5550 = vadd.f32 %v5473, %v5549
    %v5551 = vpop.f32.mrf.mxu0
    %v5552 = vadd.f32 %v5475, %v5551
    %5553 = vmatmul.bf16.gmra.mxu0 %v4673
    %v5554 = vpop.f32.mrf.mxu0
    %v5555 = vadd.f32 %v5478, %v5554
    %v5556 = vpop.f32.mrf.mxu0
    %v5557 = vadd.f32 %v5480, %v5556
    %5558 = vmatmul.bf16.gmra.mxu0 %v4674
    %v5559 = vpop.f32.mrf.mxu0
    %v5560 = vadd.f32 %v5483, %v5559
    %v5561 = vpop.f32.mrf.mxu0
    %v5562 = vadd.f32 %v5485, %v5561
    %5563 = vmatmul.bf16.gmra.mxu0 %v4675
    %v5564 = vpop.f32.mrf.mxu0
    %v5565 = vadd.f32 %v5488, %v5564
    %v5566 = vpop.f32.mrf.mxu0
    %v5567 = vadd.f32 %v5490, %v5566
    %5568 = vdwg.mxu0
    %v5569 = vperm.slane %v4685, 2
    %v5570 = vadd.f32 %v5550, %v5569
    %v5571 = vadd.f32 %v5552, %v5569
    %v5572 = vadd.f32 %v5555, %v5569
    %v5573 = vadd.f32 %v5557, %v5569
    %v5574 = vadd.f32 %v5560, %v5569
    %v5575 = vadd.f32 %v5562, %v5569
    %v5576 = vadd.f32 %v5565, %v5569
    %v5577 = vadd.f32 %v5567, %v5569
    %vm5578 = vcmp.gt.f32.partialorder %v5570, 0.0
    %vm5579 = vcmp.gt.f32.partialorder %v5571, 0.0
    %vm5580 = vcmp.gt.f32.partialorder %v5572, 0.0
    %vm5581 = vcmp.gt.f32.partialorder %v5573, 0.0
    %vm5582 = vcmp.gt.f32.partialorder %v5574, 0.0
    %vm5583 = vcmp.gt.f32.partialorder %v5575, 0.0
    %vm5584 = vcmp.gt.f32.partialorder %v5576, 0.0
    %vm5585 = vcmp.gt.f32.partialorder %v5577, 0.0
    %v5586 = vmul.f32 %v5570, 1.442695
    %v5587 = vpow.pop %v5586
    %v5588 = vmul.f32 %v5571, 1.442695
    %v5589 = vpow.pop %v5588
    %v5590 = vmul.f32 %v5572, 1.442695
    %v5591 = vpow.pop %v5590
    %v5592 = vmul.f32 %v5573, 1.442695
    %v5593 = vpow.pop %v5592
    %v5594 = vmul.f32 %v5574, 1.442695
    %v5595 = vpow.pop %v5594
    %v5596 = vmul.f32 %v5575, 1.442695
    %v5597 = vpow.pop %v5596
    %v5598 = vmul.f32 %v5576, 1.442695
    %v5599 = vpow.pop %v5598
    %v5600 = vmul.f32 %v5577, 1.442695
    %v5601 = vpow.pop %v5600
    %v5602 = vsub.f32 %v5587, 1.0
    %v5603 = vsub.f32 %v5589, 1.0
    %v5604 = vsub.f32 %v5591, 1.0
    %v5605 = vsub.f32 %v5593, 1.0
    %v5606 = vsub.f32 %v5595, 1.0
    %v5607 = vsub.f32 %v5597, 1.0
    %v5608 = vsub.f32 %v5599, 1.0
    %v5609 = vsub.f32 %v5601, 1.0
    %v5610 = vmul.f32 %v5602, 1.6732632
    %v5611 = vmul.f32 %v5603, 1.6732632
    %v5612 = vmul.f32 %v5604, 1.6732632
    %v5613 = vmul.f32 %v5605, 1.6732632
    %v5614 = vmul.f32 %v5606, 1.6732632
    %v5615 = vmul.f32 %v5607, 1.6732632
    %v5616 = vmul.f32 %v5608, 1.6732632
    %v5617 = vmul.f32 %v5609, 1.6732632
    %v5618 = vsel %vm5578, %v5570, %v5610
    %v5619 = vsel %vm5579, %v5571, %v5611
    %v5620 = vsel %vm5580, %v5572, %v5612
    %v5621 = vsel %vm5581, %v5573, %v5613
    %v5622 = vsel %vm5582, %v5574, %v5614
    %v5623 = vsel %vm5583, %v5575, %v5615
    %v5624 = vsel %vm5584, %v5576, %v5616
    %v5625 = vsel %vm5585, %v5577, %v5617
    %v5626 = vmul.f32 %v5618, 1.050701
    %v5627 = vmul.f32 %v5619, 1.050701
    %v5628 = vmul.f32 %v5620, 1.050701
    %v5629 = vmul.f32 %v5621, 1.050701
    %v5630 = vmul.f32 %v5622, 1.050701
    %v5631 = vmul.f32 %v5623, 1.050701
    %v5632 = vmul.f32 %v5624, 1.050701
    %v5633 = vmul.f32 %v5625, 1.050701
    %v5634 = vpack.c.bf16 %v5627, %v5626
    %v5635 = vpack.c.bf16 %v5629, %v5628
    %v5636 = vpack.c.bf16 %v5631, %v5630
    %v5637 = vpack.c.bf16 %v5633, %v5632
    %v5638 = vld [vmem:[%s4686 + $0x18] sm:$0xf]
    %v5639 = vld [vmem:[%s4686 + $0x34] sm:$0xf]
    %v5640 = vld [vmem:[%s4686 + $0x50] sm:$0xf]
    %v5641 = vld [vmem:[%s4686 + $0x6c] sm:$0xf]
    %v5642 = vld [vmem:[%s4686 + $0x88] sm:$0xf]
    %v5643 = vld [vmem:[%s4686 + $0xa4] sm:$0xf]
    %v5644 = vld [vmem:[%s4686 + $0xc0] sm:$0xf]
    %v5645 = vld [vmem:[%s4686 + $0xdc] sm:$0xf]
    %v5646 = vld [vmem:[%s4686 + $0xf8] sm:$0xf]
    %v5647 = vld [vmem:[%s4686 + $0x114] sm:$0xf]
    %v5648 = vld [vmem:[%s4686 + $0x130] sm:$0xf]
    %v5649 = vld [vmem:[%s4686 + $0x14c] sm:$0xf]
    %v5650 = vld [vmem:[%s4686 + $0x168] sm:$0xf]
    %v5651 = vld [vmem:[%s4686 + $0x184] sm:$0xf]
    %v5652 = vld [vmem:[%s4686 + $0x1a0] sm:$0xf]
    %v5653 = vld [vmem:[%s4686 + $0x1bc] sm:$0xf]
    %v5670 = vunpack.c.l.b16 %v5638
    %v5671 = vunpack.c.l.b16 %v5639
    %v5672 = vunpack.c.l.b16 %v5640
    %v5673 = vunpack.c.l.b16 %v5641
    %v5674 = vunpack.c.l.b16 %v5642
    %v5675 = vunpack.c.l.b16 %v5643
    %v5676 = vunpack.c.l.b16 %v5644
    %v5677 = vunpack.c.l.b16 %v5645
    %v5678 = vunpack.c.l.b16 %v5646
    %v5679 = vunpack.c.l.b16 %v5647
    %v5680 = vunpack.c.l.b16 %v5648
    %v5681 = vunpack.c.l.b16 %v5649
    %v5682 = vunpack.c.l.b16 %v5650
    %v5683 = vunpack.c.l.b16 %v5651
    %v5684 = vunpack.c.l.b16 %v5652
    %v5685 = vunpack.c.l.b16 %v5653
    %v5686 = vpack.c.b16 %v5671, %v5670
    %v5687 = vpack.c.b16 %v5673, %v5672
    %v5688 = vpack.c.b16 %v5675, %v5674
    %v5689 = vpack.c.b16 %v5677, %v5676
    %v5690 = vpack.c.b16 %v5679, %v5678
    %v5691 = vpack.c.b16 %v5681, %v5680
    %v5692 = vpack.c.b16 %v5683, %v5682
    %v5693 = vpack.c.b16 %v5685, %v5684
    %5702 = vmatpush.bf16.msra.mxu0 %v5693
    %5703 = vmatpush.bf16.msra.mxu0 %v5692
    %5704 = vmatpush.bf16.msra.mxu0 %v5691
    %5705 = vmatpush.bf16.msra.mxu0 %v5690
    %5706 = vmatpush.bf16.msra.mxu0 %v5689
    %5707 = vmatpush.bf16.msra.mxu0 %v5688
    %5708 = vmatpush.bf16.msra.mxu0 %v5687
    %5709 = vmatpush.bf16.msra.mxu0 %v5686
    %5710 = vmatmul.bf16.gmra.mxu0 %v5634
    %v5711 = vpop.f32.mrf.mxu0
    %v5712 = vadd.f32 0.0, %v5711
    %v5713 = vpop.f32.mrf.mxu0
    %v5714 = vadd.f32 0.0, %v5713
    %5715 = vmatmul.bf16.gmra.mxu0 %v5635
    %v5716 = vpop.f32.mrf.mxu0
    %v5717 = vadd.f32 0.0, %v5716
    %v5718 = vpop.f32.mrf.mxu0
    %v5719 = vadd.f32 0.0, %v5718
    %5720 = vmatmul.bf16.gmra.mxu0 %v5636
    %v5721 = vpop.f32.mrf.mxu0
    %v5722 = vadd.f32 0.0, %v5721
    %v5723 = vpop.f32.mrf.mxu0
    %v5724 = vadd.f32 0.0, %v5723
    %5725 = vmatmul.bf16.gmra.mxu0 %v5637
    %v5726 = vpop.f32.mrf.mxu0
    %v5727 = vadd.f32 0.0, %v5726
    %v5728 = vpop.f32.mrf.mxu0
    %v5729 = vadd.f32 0.0, %v5728
    %5730 = vdwg.mxu0
    %v5731 = vadd.f32 %v4648, %v5712
    %v5732 = vadd.f32 %v4649, %v5714
    %v5733 = vadd.f32 %v4650, %v5717
    %v5734 = vadd.f32 %v4651, %v5719
    %v5735 = vadd.f32 %v4652, %v5722
    %v5736 = vadd.f32 %v4653, %v5724
    %v5737 = vadd.f32 %v4654, %v5727
    %v5738 = vadd.f32 %v4655, %v5729
    %v5739 = vperm.slane %v4685, 3
    %v5740 = vadd.f32 %v5731, %v5739
    %v5741 = vadd.f32 %v5732, %v5739
    %v5742 = vadd.f32 %v5733, %v5739
    %v5743 = vadd.f32 %v5734, %v5739
    %v5744 = vadd.f32 %v5735, %v5739
    %v5745 = vadd.f32 %v5736, %v5739
    %v5746 = vadd.f32 %v5737, %v5739
    %v5747 = vadd.f32 %v5738, %v5739
    %v5748 = vpack.c.bf16 %v5741, %v5740
    %v5749 = vpack.c.bf16 %v5743, %v5742
    %v5750 = vpack.c.bf16 %v5745, %v5744
    %v5751 = vpack.c.bf16 %v5747, %v5746
    %s5752 = scalar_lea.vmem %s10, 12
    %v5753 = vld [vmem:[%s5752] sm:$0xf]
    %s5754 = scalar_lea.vmem [#allocation16], 1344
    %v5755 = vld [vmem:[%s5754] sm:$0xff]
    %v5756 = vld [vmem:[%s5754 + $0x1c] sm:$0xff]
    %v5757 = vld [vmem:[%s5754 + $0x38] sm:$0xff]
    %v5758 = vld [vmem:[%s5754 + $0x54] sm:$0xff]
    %v5759 = vld [vmem:[%s5754 + $0x70] sm:$0xff]
    %v5760 = vld [vmem:[%s5754 + $0x8c] sm:$0xff]
    %v5761 = vld [vmem:[%s5754 + $0xa8] sm:$0xff]
    %v5762 = vld [vmem:[%s5754 + $0xc4] sm:$0xff]
    %v5763 = vld [vmem:[%s5754 + $0xe0] sm:$0xff]
    %v5764 = vld [vmem:[%s5754 + $0xfc] sm:$0xff]
    %v5765 = vld [vmem:[%s5754 + $0x118] sm:$0xff]
    %v5766 = vld [vmem:[%s5754 + $0x134] sm:$0xff]
    %v5767 = vld [vmem:[%s5754 + $0x150] sm:$0xff]
    %v5768 = vld [vmem:[%s5754 + $0x16c] sm:$0xff]
    %v5769 = vld [vmem:[%s5754 + $0x188] sm:$0xff]
    %v5770 = vld [vmem:[%s5754 + $0x1a4] sm:$0xff]
    %v5787 = vunpack.c.l.b16 %v5755
    %v5788 = vunpack.c.h.b16 %v5755
    %v5789 = vunpack.c.l.b16 %v5756
    %v5790 = vunpack.c.h.b16 %v5756
    %v5791 = vunpack.c.l.b16 %v5757
    %v5792 = vunpack.c.h.b16 %v5757
    %v5793 = vunpack.c.l.b16 %v5758
    %v5794 = vunpack.c.h.b16 %v5758
    %v5795 = vunpack.c.l.b16 %v5759
    %v5796 = vunpack.c.h.b16 %v5759
    %v5797 = vunpack.c.l.b16 %v5760
    %v5798 = vunpack.c.h.b16 %v5760
    %v5799 = vunpack.c.l.b16 %v5761
    %v5800 = vunpack.c.h.b16 %v5761
    %v5801 = vunpack.c.l.b16 %v5762
    %v5802 = vunpack.c.h.b16 %v5762
    %v5803 = vunpack.c.l.b16 %v5763
    %v5804 = vunpack.c.h.b16 %v5763
    %v5805 = vunpack.c.l.b16 %v5764
    %v5806 = vunpack.c.h.b16 %v5764
    %v5807 = vunpack.c.l.b16 %v5765
    %v5808 = vunpack.c.h.b16 %v5765
    %v5809 = vunpack.c.l.b16 %v5766
    %v5810 = vunpack.c.h.b16 %v5766
    %v5811 = vunpack.c.l.b16 %v5767
    %v5812 = vunpack.c.h.b16 %v5767
    %v5813 = vunpack.c.l.b16 %v5768
    %v5814 = vunpack.c.h.b16 %v5768
    %v5815 = vunpack.c.l.b16 %v5769
    %v5816 = vunpack.c.h.b16 %v5769
    %v5817 = vunpack.c.l.b16 %v5770
    %v5818 = vunpack.c.h.b16 %v5770
    %v5819 = vpack.c.b16 %v5789, %v5787
    %v5820 = vpack.c.b16 %v5790, %v5788
    %v5821 = vpack.c.b16 %v5793, %v5791
    %v5822 = vpack.c.b16 %v5794, %v5792
    %v5823 = vpack.c.b16 %v5797, %v5795
    %v5824 = vpack.c.b16 %v5798, %v5796
    %v5825 = vpack.c.b16 %v5801, %v5799
    %v5826 = vpack.c.b16 %v5802, %v5800
    %v5827 = vpack.c.b16 %v5805, %v5803
    %v5828 = vpack.c.b16 %v5806, %v5804
    %v5829 = vpack.c.b16 %v5809, %v5807
    %v5830 = vpack.c.b16 %v5810, %v5808
    %v5831 = vpack.c.b16 %v5813, %v5811
    %v5832 = vpack.c.b16 %v5814, %v5812
    %v5833 = vpack.c.b16 %v5817, %v5815
    %v5834 = vpack.c.b16 %v5818, %v5816
    %5851 = vmatpush.bf16.msra.mxu0 %v5833
    %5852 = vmatpush.bf16.msra.mxu0 %v5831
    %5853 = vmatpush.bf16.msra.mxu0 %v5829
    %5854 = vmatpush.bf16.msra.mxu0 %v5827
    %5855 = vmatpush.bf16.msra.mxu0 %v5825
    %5856 = vmatpush.bf16.msra.mxu0 %v5823
    %5857 = vmatpush.bf16.msra.mxu0 %v5821
    %5858 = vmatpush.bf16.msra.mxu0 %v5819
    %5859 = vmatmul.bf16.gmra.mxu0 %v5748
    %v5860 = vpop.f32.mrf.mxu0
    %v5861 = vadd.f32 0.0, %v5860
    %v5862 = vpop.f32.mrf.mxu0
    %v5863 = vadd.f32 0.0, %v5862
    %5864 = vmatmul.bf16.gmra.mxu0 %v5749
    %v5865 = vpop.f32.mrf.mxu0
    %v5866 = vadd.f32 0.0, %v5865
    %v5867 = vpop.f32.mrf.mxu0
    %v5868 = vadd.f32 0.0, %v5867
    %5869 = vmatmul.bf16.gmra.mxu0 %v5750
    %v5870 = vpop.f32.mrf.mxu0
    %v5871 = vadd.f32 0.0, %v5870
    %v5872 = vpop.f32.mrf.mxu0
    %v5873 = vadd.f32 0.0, %v5872
    %5874 = vmatmul.bf16.gmra.mxu0 %v5751
    %v5875 = vpop.f32.mrf.mxu0
    %v5876 = vadd.f32 0.0, %v5875
    %v5877 = vpop.f32.mrf.mxu0
    %v5878 = vadd.f32 0.0, %v5877
    %5879 = vdwg.mxu0
    %5880 = vmatpush.bf16.msra.mxu0 %v5834
    %5881 = vmatpush.bf16.msra.mxu0 %v5832
    %5882 = vmatpush.bf16.msra.mxu0 %v5830
    %5883 = vmatpush.bf16.msra.mxu0 %v5828
    %5884 = vmatpush.bf16.msra.mxu0 %v5826
    %5885 = vmatpush.bf16.msra.mxu0 %v5824
    %5886 = vmatpush.bf16.msra.mxu0 %v5822
    %5887 = vmatpush.bf16.msra.mxu0 %v5820
    %5888 = vmatmul.bf16.gmra.mxu0 %v5748
    %v5889 = vpop.f32.mrf.mxu0
    %v5890 = vadd.f32 0.0, %v5889
    %v5891 = vpop.f32.mrf.mxu0
    %v5892 = vadd.f32 0.0, %v5891
    %5893 = vmatmul.bf16.gmra.mxu0 %v5749
    %v5894 = vpop.f32.mrf.mxu0
    %v5895 = vadd.f32 0.0, %v5894
    %v5896 = vpop.f32.mrf.mxu0
    %v5897 = vadd.f32 0.0, %v5896
    %5898 = vmatmul.bf16.gmra.mxu0 %v5750
    %v5899 = vpop.f32.mrf.mxu0
    %v5900 = vadd.f32 0.0, %v5899
    %v5901 = vpop.f32.mrf.mxu0
    %v5902 = vadd.f32 0.0, %v5901
    %5903 = vmatmul.bf16.gmra.mxu0 %v5751
    %v5904 = vpop.f32.mrf.mxu0
    %v5905 = vadd.f32 0.0, %v5904
    %v5906 = vpop.f32.mrf.mxu0
    %v5907 = vadd.f32 0.0, %v5906
    %5908 = vdwg.mxu0
    %v5909 = vpack.c.bf16 %v5890, %v5861
    %v5910 = vpack.c.bf16 %v5892, %v5863
    %v5911 = vpack.c.bf16 %v5895, %v5866
    %v5912 = vpack.c.bf16 %v5897, %v5868
    %v5913 = vpack.c.bf16 %v5900, %v5871
    %v5914 = vpack.c.bf16 %v5902, %v5873
    %v5915 = vpack.c.bf16 %v5905, %v5876
    %v5916 = vpack.c.bf16 %v5907, %v5878
    %v5925 = vunpack.c.l.b16 %v5909
    %v5926 = vunpack.c.l.b16 %v5910
    %v5927 = vunpack.c.l.b16 %v5911
    %v5928 = vunpack.c.l.b16 %v5912
    %v5929 = vunpack.c.l.b16 %v5913
    %v5930 = vunpack.c.l.b16 %v5914
    %v5931 = vunpack.c.l.b16 %v5915
    %v5932 = vunpack.c.l.b16 %v5916
    %v5933 = vpack.c.b16 %v5926, %v5925
    %v5934 = vpack.c.b16 %v5928, %v5927
    %v5935 = vpack.c.b16 %v5930, %v5929
    %v5936 = vpack.c.b16 %v5932, %v5931
    %v5941 = vunpack.c.h.b16 %v5909
    %v5942 = vunpack.c.h.b16 %v5910
    %v5943 = vunpack.c.h.b16 %v5911
    %v5944 = vunpack.c.h.b16 %v5912
    %v5945 = vunpack.c.h.b16 %v5913
    %v5946 = vunpack.c.h.b16 %v5914
    %v5947 = vunpack.c.h.b16 %v5915
    %v5948 = vunpack.c.h.b16 %v5916
    %v5949 = vpack.c.b16 %v5942, %v5941
    %v5950 = vpack.c.b16 %v5944, %v5943
    %v5951 = vpack.c.b16 %v5946, %v5945
    %v5952 = vpack.c.b16 %v5948, %v5947
    %v5957 = vld [vmem:[%s5754 + $0x8] sm:$0xf]
    %v5958 = vld [vmem:[%s5754 + $0x24] sm:$0xf]
    %v5959 = vld [vmem:[%s5754 + $0x40] sm:$0xf]
    %v5960 = vld [vmem:[%s5754 + $0x5c] sm:$0xf]
    %v5961 = vld [vmem:[%s5754 + $0x78] sm:$0xf]
    %v5962 = vld [vmem:[%s5754 + $0x94] sm:$0xf]
    %v5963 = vld [vmem:[%s5754 + $0xb0] sm:$0xf]
    %v5964 = vld [vmem:[%s5754 + $0xcc] sm:$0xf]
    %v5965 = vld [vmem:[%s5754 + $0xe8] sm:$0xf]
    %v5966 = vld [vmem:[%s5754 + $0x104] sm:$0xf]
    %v5967 = vld [vmem:[%s5754 + $0x120] sm:$0xf]
    %v5968 = vld [vmem:[%s5754 + $0x13c] sm:$0xf]
    %v5969 = vld [vmem:[%s5754 + $0x158] sm:$0xf]
    %v5970 = vld [vmem:[%s5754 + $0x174] sm:$0xf]
    %v5971 = vld [vmem:[%s5754 + $0x190] sm:$0xf]
    %v5972 = vld [vmem:[%s5754 + $0x1ac] sm:$0xf]
    %v5989 = vunpack.c.l.b16 %v5957
    %v5990 = vunpack.c.l.b16 %v5958
    %v5991 = vunpack.c.l.b16 %v5959
    %v5992 = vunpack.c.l.b16 %v5960
    %v5993 = vunpack.c.l.b16 %v5961
    %v5994 = vunpack.c.l.b16 %v5962
    %v5995 = vunpack.c.l.b16 %v5963
    %v5996 = vunpack.c.l.b16 %v5964
    %v5997 = vunpack.c.l.b16 %v5965
    %v5998 = vunpack.c.l.b16 %v5966
    %v5999 = vunpack.c.l.b16 %v5967
    %v6000 = vunpack.c.l.b16 %v5968
    %v6001 = vunpack.c.l.b16 %v5969
    %v6002 = vunpack.c.l.b16 %v5970
    %v6003 = vunpack.c.l.b16 %v5971
    %v6004 = vunpack.c.l.b16 %v5972
    %v6005 = vpack.c.b16 %v5990, %v5989
    %v6006 = vpack.c.b16 %v5992, %v5991
    %v6007 = vpack.c.b16 %v5994, %v5993
    %v6008 = vpack.c.b16 %v5996, %v5995
    %v6009 = vpack.c.b16 %v5998, %v5997
    %v6010 = vpack.c.b16 %v6000, %v5999
    %v6011 = vpack.c.b16 %v6002, %v6001
    %v6012 = vpack.c.b16 %v6004, %v6003
    %6021 = vmatpush.bf16.msra.mxu0 %v6012
    %6022 = vmatpush.bf16.msra.mxu0 %v6011
    %6023 = vmatpush.bf16.msra.mxu0 %v6010
    %6024 = vmatpush.bf16.msra.mxu0 %v6009
    %6025 = vmatpush.bf16.msra.mxu0 %v6008
    %6026 = vmatpush.bf16.msra.mxu0 %v6007
    %6027 = vmatpush.bf16.msra.mxu0 %v6006
    %6028 = vmatpush.bf16.msra.mxu0 %v6005
    %6029 = vmatmul.bf16.gmra.mxu0 %v5334
    %v6030 = vpop.f32.mrf.mxu0
    %v6031 = vadd.f32 0.0, %v6030
    %v6032 = vpop.f32.mrf.mxu0
    %v6033 = vadd.f32 0.0, %v6032
    %6034 = vmatmul.bf16.gmra.mxu0 %v5335
    %v6035 = vpop.f32.mrf.mxu0
    %v6036 = vadd.f32 0.0, %v6035
    %v6037 = vpop.f32.mrf.mxu0
    %v6038 = vadd.f32 0.0, %v6037
    %6039 = vmatmul.bf16.gmra.mxu0 %v5336
    %v6040 = vpop.f32.mrf.mxu0
    %v6041 = vadd.f32 0.0, %v6040
    %v6042 = vpop.f32.mrf.mxu0
    %v6043 = vadd.f32 0.0, %v6042
    %6044 = vmatmul.bf16.gmra.mxu0 %v5337
    %v6045 = vpop.f32.mrf.mxu0
    %v6046 = vadd.f32 0.0, %v6045
    %v6047 = vpop.f32.mrf.mxu0
    %v6048 = vadd.f32 0.0, %v6047
    %6049 = vmatmul.bf16.gmra.mxu0 %v5338
    %v6050 = vpop.f32.mrf.mxu0
    %v6051 = vadd.f32 0.0, %v6050
    %v6052 = vpop.f32.mrf.mxu0
    %v6053 = vadd.f32 0.0, %v6052
    %6054 = vmatmul.bf16.gmra.mxu0 %v5339
    %v6055 = vpop.f32.mrf.mxu0
    %v6056 = vadd.f32 0.0, %v6055
    %v6057 = vpop.f32.mrf.mxu0
    %v6058 = vadd.f32 0.0, %v6057
    %6059 = vmatmul.bf16.gmra.mxu0 %v5340
    %v6060 = vpop.f32.mrf.mxu0
    %v6061 = vadd.f32 0.0, %v6060
    %v6062 = vpop.f32.mrf.mxu0
    %v6063 = vadd.f32 0.0, %v6062
    %6064 = vmatmul.bf16.gmra.mxu0 %v5341
    %v6065 = vpop.f32.mrf.mxu0
    %v6066 = vadd.f32 0.0, %v6065
    %v6067 = vpop.f32.mrf.mxu0
    %v6068 = vadd.f32 0.0, %v6067
    %6069 = vdwg.mxu0
    %6070 = vmatpush.bf16.msra.mxu0 %v5952
    %6071 = vmatpush.bf16.msra.mxu0 %v5951
    %6072 = vmatpush.bf16.msra.mxu0 %v5950
    %6073 = vmatpush.bf16.msra.mxu0 %v5949
    %6074 = vmatpush.bf16.msra.mxu0 %v5936
    %6075 = vmatpush.bf16.msra.mxu0 %v5935
    %6076 = vmatpush.bf16.msra.mxu0 %v5934
    %6077 = vmatpush.bf16.msra.mxu0 %v5933
    %6078 = vmatmul.bf16.gmra.mxu0 %v680
    %v6079 = vpop.f32.mrf.mxu0
    %v6080 = vadd.f32 %v6031, %v6079
    %v6081 = vpop.f32.mrf.mxu0
    %v6082 = vadd.f32 %v6033, %v6081
    %6083 = vmatmul.bf16.gmra.mxu0 %v681
    %v6084 = vpop.f32.mrf.mxu0
    %v6085 = vadd.f32 %v6036, %v6084
    %v6086 = vpop.f32.mrf.mxu0
    %v6087 = vadd.f32 %v6038, %v6086
    %6088 = vmatmul.bf16.gmra.mxu0 %v682
    %v6089 = vpop.f32.mrf.mxu0
    %v6090 = vadd.f32 %v6041, %v6089
    %v6091 = vpop.f32.mrf.mxu0
    %v6092 = vadd.f32 %v6043, %v6091
    %6093 = vmatmul.bf16.gmra.mxu0 %v683
    %v6094 = vpop.f32.mrf.mxu0
    %v6095 = vadd.f32 %v6046, %v6094
    %v6096 = vpop.f32.mrf.mxu0
    %v6097 = vadd.f32 %v6048, %v6096
    %6098 = vmatmul.bf16.gmra.mxu0 %v684
    %v6099 = vpop.f32.mrf.mxu0
    %v6100 = vadd.f32 %v6051, %v6099
    %v6101 = vpop.f32.mrf.mxu0
    %v6102 = vadd.f32 %v6053, %v6101
    %6103 = vmatmul.bf16.gmra.mxu0 %v685
    %v6104 = vpop.f32.mrf.mxu0
    %v6105 = vadd.f32 %v6056, %v6104
    %v6106 = vpop.f32.mrf.mxu0
    %v6107 = vadd.f32 %v6058, %v6106
    %6108 = vmatmul.bf16.gmra.mxu0 %v686
    %v6109 = vpop.f32.mrf.mxu0
    %v6110 = vadd.f32 %v6061, %v6109
    %v6111 = vpop.f32.mrf.mxu0
    %v6112 = vadd.f32 %v6063, %v6111
    %6113 = vmatmul.bf16.gmra.mxu0 %v687
    %v6114 = vpop.f32.mrf.mxu0
    %v6115 = vadd.f32 %v6066, %v6114
    %v6116 = vpop.f32.mrf.mxu0
    %v6117 = vadd.f32 %v6068, %v6116
    %6118 = vdwg.mxu0
    %v6119 = vperm.slane %v5753, 0
    %v6120 = vadd.f32 %v6080, %v6119
    %v6121 = vadd.f32 %v6082, %v6119
    %v6122 = vadd.f32 %v6085, %v6119
    %v6123 = vadd.f32 %v6087, %v6119
    %v6124 = vadd.f32 %v6090, %v6119
    %v6125 = vadd.f32 %v6092, %v6119
    %v6126 = vadd.f32 %v6095, %v6119
    %v6127 = vadd.f32 %v6097, %v6119
    %v6128 = vadd.f32 %v6100, %v6119
    %v6129 = vadd.f32 %v6102, %v6119
    %v6130 = vadd.f32 %v6105, %v6119
    %v6131 = vadd.f32 %v6107, %v6119
    %v6132 = vadd.f32 %v6110, %v6119
    %v6133 = vadd.f32 %v6112, %v6119
    %v6134 = vadd.f32 %v6115, %v6119
    %v6135 = vadd.f32 %v6117, %v6119
    %vm6136 = vcmp.gt.f32.partialorder %v6120, 0.0
    %vm6137 = vcmp.gt.f32.partialorder %v6121, 0.0
    %vm6138 = vcmp.gt.f32.partialorder %v6122, 0.0
    %vm6139 = vcmp.gt.f32.partialorder %v6123, 0.0
    %vm6140 = vcmp.gt.f32.partialorder %v6124, 0.0
    %vm6141 = vcmp.gt.f32.partialorder %v6125, 0.0
    %vm6142 = vcmp.gt.f32.partialorder %v6126, 0.0
    %vm6143 = vcmp.gt.f32.partialorder %v6127, 0.0
    %vm6144 = vcmp.gt.f32.partialorder %v6128, 0.0
    %vm6145 = vcmp.gt.f32.partialorder %v6129, 0.0
    %vm6146 = vcmp.gt.f32.partialorder %v6130, 0.0
    %vm6147 = vcmp.gt.f32.partialorder %v6131, 0.0
    %vm6148 = vcmp.gt.f32.partialorder %v6132, 0.0
    %vm6149 = vcmp.gt.f32.partialorder %v6133, 0.0
    %vm6150 = vcmp.gt.f32.partialorder %v6134, 0.0
    %vm6151 = vcmp.gt.f32.partialorder %v6135, 0.0
    %v6152 = vmul.f32 %v6120, 1.442695
    %v6153 = vpow.pop %v6152
    %v6154 = vmul.f32 %v6121, 1.442695
    %v6155 = vpow.pop %v6154
    %v6156 = vmul.f32 %v6122, 1.442695
    %v6157 = vpow.pop %v6156
    %v6158 = vmul.f32 %v6123, 1.442695
    %v6159 = vpow.pop %v6158
    %v6160 = vmul.f32 %v6124, 1.442695
    %v6161 = vpow.pop %v6160
    %v6162 = vmul.f32 %v6125, 1.442695
    %v6163 = vpow.pop %v6162
    %v6164 = vmul.f32 %v6126, 1.442695
    %v6165 = vpow.pop %v6164
    %v6166 = vmul.f32 %v6127, 1.442695
    %v6167 = vpow.pop %v6166
    %v6168 = vmul.f32 %v6128, 1.442695
    %v6169 = vpow.pop %v6168
    %v6170 = vmul.f32 %v6129, 1.442695
    %v6171 = vpow.pop %v6170
    %v6172 = vmul.f32 %v6130, 1.442695
    %v6173 = vpow.pop %v6172
    %v6174 = vmul.f32 %v6131, 1.442695
    %v6175 = vpow.pop %v6174
    %v6176 = vmul.f32 %v6132, 1.442695
    %v6177 = vpow.pop %v6176
    %v6178 = vmul.f32 %v6133, 1.442695
    %v6179 = vpow.pop %v6178
    %v6180 = vmul.f32 %v6134, 1.442695
    %v6181 = vpow.pop %v6180
    %v6182 = vmul.f32 %v6135, 1.442695
    %v6183 = vpow.pop %v6182
    %v6184 = vsub.f32 %v6153, 1.0
    %v6185 = vsub.f32 %v6155, 1.0
    %v6186 = vsub.f32 %v6157, 1.0
    %v6187 = vsub.f32 %v6159, 1.0
    %v6188 = vsub.f32 %v6161, 1.0
    %v6189 = vsub.f32 %v6163, 1.0
    %v6190 = vsub.f32 %v6165, 1.0
    %v6191 = vsub.f32 %v6167, 1.0
    %v6192 = vsub.f32 %v6169, 1.0
    %v6193 = vsub.f32 %v6171, 1.0
    %v6194 = vsub.f32 %v6173, 1.0
    %v6195 = vsub.f32 %v6175, 1.0
    %v6196 = vsub.f32 %v6177, 1.0
    %v6197 = vsub.f32 %v6179, 1.0
    %v6198 = vsub.f32 %v6181, 1.0
    %v6199 = vsub.f32 %v6183, 1.0
    %v6200 = vmul.f32 %v6184, 1.6732632
    %v6201 = vmul.f32 %v6185, 1.6732632
    %v6202 = vmul.f32 %v6186, 1.6732632
    %v6203 = vmul.f32 %v6187, 1.6732632
    %v6204 = vmul.f32 %v6188, 1.6732632
    %v6205 = vmul.f32 %v6189, 1.6732632
    %v6206 = vmul.f32 %v6190, 1.6732632
    %v6207 = vmul.f32 %v6191, 1.6732632
    %v6208 = vmul.f32 %v6192, 1.6732632
    %v6209 = vmul.f32 %v6193, 1.6732632
    %v6210 = vmul.f32 %v6194, 1.6732632
    %v6211 = vmul.f32 %v6195, 1.6732632
    %v6212 = vmul.f32 %v6196, 1.6732632
    %v6213 = vmul.f32 %v6197, 1.6732632
    %v6214 = vmul.f32 %v6198, 1.6732632
    %v6215 = vmul.f32 %v6199, 1.6732632
    %v6216 = vsel %vm6136, %v6120, %v6200
    %v6217 = vsel %vm6137, %v6121, %v6201
    %v6218 = vsel %vm6138, %v6122, %v6202
    %v6219 = vsel %vm6139, %v6123, %v6203
    %v6220 = vsel %vm6140, %v6124, %v6204
    %v6221 = vsel %vm6141, %v6125, %v6205
    %v6222 = vsel %vm6142, %v6126, %v6206
    %v6223 = vsel %vm6143, %v6127, %v6207
    %v6224 = vsel %vm6144, %v6128, %v6208
    %v6225 = vsel %vm6145, %v6129, %v6209
    %v6226 = vsel %vm6146, %v6130, %v6210
    %v6227 = vsel %vm6147, %v6131, %v6211
    %v6228 = vsel %vm6148, %v6132, %v6212
    %v6229 = vsel %vm6149, %v6133, %v6213
    %v6230 = vsel %vm6150, %v6134, %v6214
    %v6231 = vsel %vm6151, %v6135, %v6215
    %v6232 = vmul.f32 %v6216, 1.050701
    %v6233 = vmul.f32 %v6217, 1.050701
    %v6234 = vmul.f32 %v6218, 1.050701
    %v6235 = vmul.f32 %v6219, 1.050701
    %v6236 = vmul.f32 %v6220, 1.050701
    %v6237 = vmul.f32 %v6221, 1.050701
    %v6238 = vmul.f32 %v6222, 1.050701
    %v6239 = vmul.f32 %v6223, 1.050701
    %v6240 = vmul.f32 %v6224, 1.050701
    %v6241 = vmul.f32 %v6225, 1.050701
    %v6242 = vmul.f32 %v6226, 1.050701
    %v6243 = vmul.f32 %v6227, 1.050701
    %v6244 = vmul.f32 %v6228, 1.050701
    %v6245 = vmul.f32 %v6229, 1.050701
    %v6246 = vmul.f32 %v6230, 1.050701
    %v6247 = vmul.f32 %v6231, 1.050701
    %v6248 = vpack.c.bf16 %v6233, %v6232
    %v6249 = vpack.c.bf16 %v6235, %v6234
    %v6250 = vpack.c.bf16 %v6237, %v6236
    %v6251 = vpack.c.bf16 %v6239, %v6238
    %v6252 = vpack.c.bf16 %v6241, %v6240
    %v6253 = vpack.c.bf16 %v6243, %v6242
    %v6254 = vpack.c.bf16 %v6245, %v6244
    %v6255 = vpack.c.bf16 %v6247, %v6246
    %v6256 = vld [vmem:[%s5754 + $0xc] sm:$0xf]
    %v6257 = vld [vmem:[%s5754 + $0x28] sm:$0xf]
    %v6258 = vld [vmem:[%s5754 + $0x44] sm:$0xf]
    %v6259 = vld [vmem:[%s5754 + $0x60] sm:$0xf]
    %v6260 = vld [vmem:[%s5754 + $0x7c] sm:$0xf]
    %v6261 = vld [vmem:[%s5754 + $0x98] sm:$0xf]
    %v6262 = vld [vmem:[%s5754 + $0xb4] sm:$0xf]
    %v6263 = vld [vmem:[%s5754 + $0xd0] sm:$0xf]
    %v6264 = vld [vmem:[%s5754 + $0xec] sm:$0xf]
    %v6265 = vld [vmem:[%s5754 + $0x108] sm:$0xf]
    %v6266 = vld [vmem:[%s5754 + $0x124] sm:$0xf]
    %v6267 = vld [vmem:[%s5754 + $0x140] sm:$0xf]
    %v6268 = vld [vmem:[%s5754 + $0x15c] sm:$0xf]
    %v6269 = vld [vmem:[%s5754 + $0x178] sm:$0xf]
    %v6270 = vld [vmem:[%s5754 + $0x194] sm:$0xf]
    %v6271 = vld [vmem:[%s5754 + $0x1b0] sm:$0xf]
    %v6288 = vunpack.c.l.b16 %v6256
    %v6289 = vunpack.c.l.b16 %v6257
    %v6290 = vunpack.c.l.b16 %v6258
    %v6291 = vunpack.c.l.b16 %v6259
    %v6292 = vunpack.c.l.b16 %v6260
    %v6293 = vunpack.c.l.b16 %v6261
    %v6294 = vunpack.c.l.b16 %v6262
    %v6295 = vunpack.c.l.b16 %v6263
    %v6296 = vunpack.c.l.b16 %v6264
    %v6297 = vunpack.c.l.b16 %v6265
    %v6298 = vunpack.c.l.b16 %v6266
    %v6299 = vunpack.c.l.b16 %v6267
    %v6300 = vunpack.c.l.b16 %v6268
    %v6301 = vunpack.c.l.b16 %v6269
    %v6302 = vunpack.c.l.b16 %v6270
    %v6303 = vunpack.c.l.b16 %v6271
    %v6304 = vpack.c.b16 %v6289, %v6288
    %v6305 = vpack.c.b16 %v6291, %v6290
    %v6306 = vpack.c.b16 %v6293, %v6292
    %v6307 = vpack.c.b16 %v6295, %v6294
    %v6308 = vpack.c.b16 %v6297, %v6296
    %v6309 = vpack.c.b16 %v6299, %v6298
    %v6310 = vpack.c.b16 %v6301, %v6300
    %v6311 = vpack.c.b16 %v6303, %v6302
    %6320 = vmatpush.bf16.msra.mxu0 %v6311
    %6321 = vmatpush.bf16.msra.mxu0 %v6310
    %6322 = vmatpush.bf16.msra.mxu0 %v6309
    %6323 = vmatpush.bf16.msra.mxu0 %v6308
    %6324 = vmatpush.bf16.msra.mxu0 %v6307
    %6325 = vmatpush.bf16.msra.mxu0 %v6306
    %6326 = vmatpush.bf16.msra.mxu0 %v6305
    %6327 = vmatpush.bf16.msra.mxu0 %v6304
    %6328 = vmatmul.bf16.gmra.mxu0 %v6248
    %v6329 = vpop.f32.mrf.mxu0
    %v6330 = vadd.f32 0.0, %v6329
    %v6331 = vpop.f32.mrf.mxu0
    %v6332 = vadd.f32 0.0, %v6331
    %6333 = vmatmul.bf16.gmra.mxu0 %v6249
    %v6334 = vpop.f32.mrf.mxu0
    %v6335 = vadd.f32 0.0, %v6334
    %v6336 = vpop.f32.mrf.mxu0
    %v6337 = vadd.f32 0.0, %v6336
    %6338 = vmatmul.bf16.gmra.mxu0 %v6250
    %v6339 = vpop.f32.mrf.mxu0
    %v6340 = vadd.f32 0.0, %v6339
    %v6341 = vpop.f32.mrf.mxu0
    %v6342 = vadd.f32 0.0, %v6341
    %6343 = vmatmul.bf16.gmra.mxu0 %v6251
    %v6344 = vpop.f32.mrf.mxu0
    %v6345 = vadd.f32 0.0, %v6344
    %v6346 = vpop.f32.mrf.mxu0
    %v6347 = vadd.f32 0.0, %v6346
    %6348 = vmatmul.bf16.gmra.mxu0 %v6252
    %v6349 = vpop.f32.mrf.mxu0
    %v6350 = vadd.f32 0.0, %v6349
    %v6351 = vpop.f32.mrf.mxu0
    %v6352 = vadd.f32 0.0, %v6351
    %6353 = vmatmul.bf16.gmra.mxu0 %v6253
    %v6354 = vpop.f32.mrf.mxu0
    %v6355 = vadd.f32 0.0, %v6354
    %v6356 = vpop.f32.mrf.mxu0
    %v6357 = vadd.f32 0.0, %v6356
    %6358 = vmatmul.bf16.gmra.mxu0 %v6254
    %v6359 = vpop.f32.mrf.mxu0
    %v6360 = vadd.f32 0.0, %v6359
    %v6361 = vpop.f32.mrf.mxu0
    %v6362 = vadd.f32 0.0, %v6361
    %6363 = vmatmul.bf16.gmra.mxu0 %v6255
    %v6364 = vpop.f32.mrf.mxu0
    %v6365 = vadd.f32 0.0, %v6364
    %v6366 = vpop.f32.mrf.mxu0
    %v6367 = vadd.f32 0.0, %v6366
    %6368 = vdwg.mxu0
    %v6369 = vadd.f32 %v5318, %v6330
    %v6370 = vadd.f32 %v5319, %v6332
    %v6371 = vadd.f32 %v5320, %v6335
    %v6372 = vadd.f32 %v5321, %v6337
    %v6373 = vadd.f32 %v5322, %v6340
    %v6374 = vadd.f32 %v5323, %v6342
    %v6375 = vadd.f32 %v5324, %v6345
    %v6376 = vadd.f32 %v5325, %v6347
    %v6377 = vadd.f32 %v5326, %v6350
    %v6378 = vadd.f32 %v5327, %v6352
    %v6379 = vadd.f32 %v5328, %v6355
    %v6380 = vadd.f32 %v5329, %v6357
    %v6381 = vadd.f32 %v5330, %v6360
    %v6382 = vadd.f32 %v5331, %v6362
    %v6383 = vadd.f32 %v5332, %v6365
    %v6384 = vadd.f32 %v5333, %v6367
    %v6385 = vperm.slane %v5753, 1
    %v6386 = vadd.f32 %v6369, %v6385
    %v6387 = vadd.f32 %v6370, %v6385
    %v6388 = vadd.f32 %v6371, %v6385
    %v6389 = vadd.f32 %v6372, %v6385
    %v6390 = vadd.f32 %v6373, %v6385
    %v6391 = vadd.f32 %v6374, %v6385
    %v6392 = vadd.f32 %v6375, %v6385
    %v6393 = vadd.f32 %v6376, %v6385
    %v6394 = vadd.f32 %v6377, %v6385
    %v6395 = vadd.f32 %v6378, %v6385
    %v6396 = vadd.f32 %v6379, %v6385
    %v6397 = vadd.f32 %v6380, %v6385
    %v6398 = vadd.f32 %v6381, %v6385
    %v6399 = vadd.f32 %v6382, %v6385
    %v6400 = vadd.f32 %v6383, %v6385
    %v6401 = vadd.f32 %v6384, %v6385
    %v6402 = vpack.c.bf16 %v6387, %v6386
    %v6403 = vpack.c.bf16 %v6389, %v6388
    %v6404 = vpack.c.bf16 %v6391, %v6390
    %v6405 = vpack.c.bf16 %v6393, %v6392
    %v6406 = vpack.c.bf16 %v6395, %v6394
    %v6407 = vpack.c.bf16 %v6397, %v6396
    %v6408 = vpack.c.bf16 %v6399, %v6398
    %v6409 = vpack.c.bf16 %v6401, %v6400
    %6410 = vmatpush.bf16.msra.mxu0 %v6409
    %6411 = vmatpush.bf16.msra.mxu0 %v6408
    %6412 = vmatpush.bf16.msra.mxu0 %v6407
    %6413 = vmatpush.bf16.msra.mxu0 %v6406
    %6414 = vmatpush.bf16.msra.mxu0 %v6405
    %6415 = vmatpush.bf16.msra.mxu0 %v6404
    %6416 = vmatpush.bf16.msra.mxu0 %v6403
    %6417 = vmatpush.bf16.msra.mxu0 %v6402
    %6418 = vmatmul.bf16.gmra.mxu0 %v1052
    %v6419 = vpop.f32.mrf.mxu0
    %v6420 = vadd.f32 0.0, %v6419
    %v6421 = vpop.f32.mrf.mxu0
    %v6422 = vadd.f32 0.0, %v6421
    %6423 = vmatmul.bf16.gmra.mxu0 %v1053
    %v6424 = vpop.f32.mrf.mxu0
    %v6425 = vadd.f32 0.0, %v6424
    %v6426 = vpop.f32.mrf.mxu0
    %v6427 = vadd.f32 0.0, %v6426
    %6428 = vmatmul.bf16.gmra.mxu0 %v1054
    %v6429 = vpop.f32.mrf.mxu0
    %v6430 = vadd.f32 0.0, %v6429
    %v6431 = vpop.f32.mrf.mxu0
    %v6432 = vadd.f32 0.0, %v6431
    %6433 = vmatmul.bf16.gmra.mxu0 %v1055
    %v6434 = vpop.f32.mrf.mxu0
    %v6435 = vadd.f32 0.0, %v6434
    %v6436 = vpop.f32.mrf.mxu0
    %v6437 = vadd.f32 0.0, %v6436
    %6438 = vdwg.mxu0
    %v6439 = vmul.f32 %v6420, %v272
    %v6440 = vmul.f32 %v6422, %v273
    %v6441 = vmul.f32 %v6425, %v274
    %v6442 = vmul.f32 %v6427, %v275
    %v6443 = vmul.f32 %v6430, %v276
    %v6444 = vmul.f32 %v6432, %v277
    %v6445 = vmul.f32 %v6435, %v278
    %v6446 = vmul.f32 %v6437, %v279
    %v6447 = vld [vmem:[%s5754 + $0x10] sm:$0xf]
    %v6448 = vld [vmem:[%s5754 + $0x2c] sm:$0xf]
    %v6449 = vld [vmem:[%s5754 + $0x48] sm:$0xf]
    %v6450 = vld [vmem:[%s5754 + $0x64] sm:$0xf]
    %v6451 = vld [vmem:[%s5754 + $0x80] sm:$0xf]
    %v6452 = vld [vmem:[%s5754 + $0x9c] sm:$0xf]
    %v6453 = vld [vmem:[%s5754 + $0xb8] sm:$0xf]
    %v6454 = vld [vmem:[%s5754 + $0xd4] sm:$0xf]
    %v6455 = vld [vmem:[%s5754 + $0xf0] sm:$0xf]
    %v6456 = vld [vmem:[%s5754 + $0x10c] sm:$0xf]
    %v6457 = vld [vmem:[%s5754 + $0x128] sm:$0xf]
    %v6458 = vld [vmem:[%s5754 + $0x144] sm:$0xf]
    %v6459 = vld [vmem:[%s5754 + $0x160] sm:$0xf]
    %v6460 = vld [vmem:[%s5754 + $0x17c] sm:$0xf]
    %v6461 = vld [vmem:[%s5754 + $0x198] sm:$0xf]
    %v6462 = vld [vmem:[%s5754 + $0x1b4] sm:$0xf]
    %v6463 = vpack.c.bf16 %v6440, %v6439
    %v6464 = vpack.c.bf16 %v6442, %v6441
    %v6465 = vpack.c.bf16 %v6444, %v6443
    %v6466 = vpack.c.bf16 %v6446, %v6445
    %v6467 = vld [vmem:[%s5754 + $0x14] sm:$0xf]
    %v6468 = vld [vmem:[%s5754 + $0x30] sm:$0xf]
    %v6469 = vld [vmem:[%s5754 + $0x4c] sm:$0xf]
    %v6470 = vld [vmem:[%s5754 + $0x68] sm:$0xf]
    %v6471 = vld [vmem:[%s5754 + $0x84] sm:$0xf]
    %v6472 = vld [vmem:[%s5754 + $0xa0] sm:$0xf]
    %v6473 = vld [vmem:[%s5754 + $0xbc] sm:$0xf]
    %v6474 = vld [vmem:[%s5754 + $0xd8] sm:$0xf]
    %v6475 = vld [vmem:[%s5754 + $0xf4] sm:$0xf]
    %v6476 = vld [vmem:[%s5754 + $0x110] sm:$0xf]
    %v6477 = vld [vmem:[%s5754 + $0x12c] sm:$0xf]
    %v6478 = vld [vmem:[%s5754 + $0x148] sm:$0xf]
    %v6479 = vld [vmem:[%s5754 + $0x164] sm:$0xf]
    %v6480 = vld [vmem:[%s5754 + $0x180] sm:$0xf]
    %v6481 = vld [vmem:[%s5754 + $0x19c] sm:$0xf]
    %v6482 = vld [vmem:[%s5754 + $0x1b8] sm:$0xf]
    %v6499 = vunpack.c.l.b16 %v6467
    %v6500 = vunpack.c.l.b16 %v6468
    %v6501 = vunpack.c.l.b16 %v6469
    %v6502 = vunpack.c.l.b16 %v6470
    %v6503 = vunpack.c.l.b16 %v6471
    %v6504 = vunpack.c.l.b16 %v6472
    %v6505 = vunpack.c.l.b16 %v6473
    %v6506 = vunpack.c.l.b16 %v6474
    %v6507 = vunpack.c.l.b16 %v6475
    %v6508 = vunpack.c.l.b16 %v6476
    %v6509 = vunpack.c.l.b16 %v6477
    %v6510 = vunpack.c.l.b16 %v6478
    %v6511 = vunpack.c.l.b16 %v6479
    %v6512 = vunpack.c.l.b16 %v6480
    %v6513 = vunpack.c.l.b16 %v6481
    %v6514 = vunpack.c.l.b16 %v6482
    %v6515 = vpack.c.b16 %v6500, %v6499
    %v6516 = vpack.c.b16 %v6502, %v6501
    %v6517 = vpack.c.b16 %v6504, %v6503
    %v6518 = vpack.c.b16 %v6506, %v6505
    %v6519 = vpack.c.b16 %v6508, %v6507
    %v6520 = vpack.c.b16 %v6510, %v6509
    %v6521 = vpack.c.b16 %v6512, %v6511
    %v6522 = vpack.c.b16 %v6514, %v6513
    %6531 = vmatpush.bf16.msra.mxu0 %v6522
    %6532 = vmatpush.bf16.msra.mxu0 %v6521
    %6533 = vmatpush.bf16.msra.mxu0 %v6520
    %6534 = vmatpush.bf16.msra.mxu0 %v6519
    %6535 = vmatpush.bf16.msra.mxu0 %v6518
    %6536 = vmatpush.bf16.msra.mxu0 %v6517
    %6537 = vmatpush.bf16.msra.mxu0 %v6516
    %6538 = vmatpush.bf16.msra.mxu0 %v6515
    %6539 = vmatmul.bf16.gmra.mxu0 %v6463
    %v6540 = vpop.f32.mrf.mxu0
    %v6541 = vadd.f32 0.0, %v6540
    %v6542 = vpop.f32.mrf.mxu0
    %v6543 = vadd.f32 0.0, %v6542
    %6544 = vmatmul.bf16.gmra.mxu0 %v6464
    %v6545 = vpop.f32.mrf.mxu0
    %v6546 = vadd.f32 0.0, %v6545
    %v6547 = vpop.f32.mrf.mxu0
    %v6548 = vadd.f32 0.0, %v6547
    %6549 = vmatmul.bf16.gmra.mxu0 %v6465
    %v6550 = vpop.f32.mrf.mxu0
    %v6551 = vadd.f32 0.0, %v6550
    %v6552 = vpop.f32.mrf.mxu0
    %v6553 = vadd.f32 0.0, %v6552
    %6554 = vmatmul.bf16.gmra.mxu0 %v6466
    %v6555 = vpop.f32.mrf.mxu0
    %v6556 = vadd.f32 0.0, %v6555
    %v6557 = vpop.f32.mrf.mxu0
    %v6558 = vadd.f32 0.0, %v6557
    %6559 = vdwg.mxu0
    %v6576 = vunpack.c.l.b16 %v6447
    %v6577 = vunpack.c.l.b16 %v6448
    %v6578 = vunpack.c.l.b16 %v6449
    %v6579 = vunpack.c.l.b16 %v6450
    %v6580 = vunpack.c.l.b16 %v6451
    %v6581 = vunpack.c.l.b16 %v6452
    %v6582 = vunpack.c.l.b16 %v6453
    %v6583 = vunpack.c.l.b16 %v6454
    %v6584 = vunpack.c.l.b16 %v6455
    %v6585 = vunpack.c.l.b16 %v6456
    %v6586 = vunpack.c.l.b16 %v6457
    %v6587 = vunpack.c.l.b16 %v6458
    %v6588 = vunpack.c.l.b16 %v6459
    %v6589 = vunpack.c.l.b16 %v6460
    %v6590 = vunpack.c.l.b16 %v6461
    %v6591 = vunpack.c.l.b16 %v6462
    %v6592 = vpack.c.b16 %v6577, %v6576
    %v6593 = vpack.c.b16 %v6579, %v6578
    %v6594 = vpack.c.b16 %v6581, %v6580
    %v6595 = vpack.c.b16 %v6583, %v6582
    %v6596 = vpack.c.b16 %v6585, %v6584
    %v6597 = vpack.c.b16 %v6587, %v6586
    %v6598 = vpack.c.b16 %v6589, %v6588
    %v6599 = vpack.c.b16 %v6591, %v6590
    %6608 = vmatpush.bf16.msra.mxu0 %v6599
    %6609 = vmatpush.bf16.msra.mxu0 %v6598
    %6610 = vmatpush.bf16.msra.mxu0 %v6597
    %6611 = vmatpush.bf16.msra.mxu0 %v6596
    %6612 = vmatpush.bf16.msra.mxu0 %v6595
    %6613 = vmatpush.bf16.msra.mxu0 %v6594
    %6614 = vmatpush.bf16.msra.mxu0 %v6593
    %6615 = vmatpush.bf16.msra.mxu0 %v6592
    %6616 = vmatmul.bf16.gmra.mxu0 %v5748
    %v6617 = vpop.f32.mrf.mxu0
    %v6618 = vadd.f32 %v6541, %v6617
    %v6619 = vpop.f32.mrf.mxu0
    %v6620 = vadd.f32 %v6543, %v6619
    %6621 = vmatmul.bf16.gmra.mxu0 %v5749
    %v6622 = vpop.f32.mrf.mxu0
    %v6623 = vadd.f32 %v6546, %v6622
    %v6624 = vpop.f32.mrf.mxu0
    %v6625 = vadd.f32 %v6548, %v6624
    %6626 = vmatmul.bf16.gmra.mxu0 %v5750
    %v6627 = vpop.f32.mrf.mxu0
    %v6628 = vadd.f32 %v6551, %v6627
    %v6629 = vpop.f32.mrf.mxu0
    %v6630 = vadd.f32 %v6553, %v6629
    %6631 = vmatmul.bf16.gmra.mxu0 %v5751
    %v6632 = vpop.f32.mrf.mxu0
    %v6633 = vadd.f32 %v6556, %v6632
    %v6634 = vpop.f32.mrf.mxu0
    %v6635 = vadd.f32 %v6558, %v6634
    %6636 = vdwg.mxu0
    %v6637 = vperm.slane %v5753, 2
    %v6638 = vadd.f32 %v6618, %v6637
    %v6639 = vadd.f32 %v6620, %v6637
    %v6640 = vadd.f32 %v6623, %v6637
    %v6641 = vadd.f32 %v6625, %v6637
    %v6642 = vadd.f32 %v6628, %v6637
    %v6643 = vadd.f32 %v6630, %v6637
    %v6644 = vadd.f32 %v6633, %v6637
    %v6645 = vadd.f32 %v6635, %v6637
    %vm6646 = vcmp.gt.f32.partialorder %v6638, 0.0
    %vm6647 = vcmp.gt.f32.partialorder %v6639, 0.0
    %vm6648 = vcmp.gt.f32.partialorder %v6640, 0.0
    %vm6649 = vcmp.gt.f32.partialorder %v6641, 0.0
    %vm6650 = vcmp.gt.f32.partialorder %v6642, 0.0
    %vm6651 = vcmp.gt.f32.partialorder %v6643, 0.0
    %vm6652 = vcmp.gt.f32.partialorder %v6644, 0.0
    %vm6653 = vcmp.gt.f32.partialorder %v6645, 0.0
    %v6654 = vmul.f32 %v6638, 1.442695
    %v6655 = vpow.pop %v6654
    %v6656 = vmul.f32 %v6639, 1.442695
    %v6657 = vpow.pop %v6656
    %v6658 = vmul.f32 %v6640, 1.442695
    %v6659 = vpow.pop %v6658
    %v6660 = vmul.f32 %v6641, 1.442695
    %v6661 = vpow.pop %v6660
    %v6662 = vmul.f32 %v6642, 1.442695
    %v6663 = vpow.pop %v6662
    %v6664 = vmul.f32 %v6643, 1.442695
    %v6665 = vpow.pop %v6664
    %v6666 = vmul.f32 %v6644, 1.442695
    %v6667 = vpow.pop %v6666
    %v6668 = vmul.f32 %v6645, 1.442695
    %v6669 = vpow.pop %v6668
    %v6670 = vsub.f32 %v6655, 1.0
    %v6671 = vsub.f32 %v6657, 1.0
    %v6672 = vsub.f32 %v6659, 1.0
    %v6673 = vsub.f32 %v6661, 1.0
    %v6674 = vsub.f32 %v6663, 1.0
    %v6675 = vsub.f32 %v6665, 1.0
    %v6676 = vsub.f32 %v6667, 1.0
    %v6677 = vsub.f32 %v6669, 1.0
    %v6678 = vmul.f32 %v6670, 1.6732632
    %v6679 = vmul.f32 %v6671, 1.6732632
    %v6680 = vmul.f32 %v6672, 1.6732632
    %v6681 = vmul.f32 %v6673, 1.6732632
    %v6682 = vmul.f32 %v6674, 1.6732632
    %v6683 = vmul.f32 %v6675, 1.6732632
    %v6684 = vmul.f32 %v6676, 1.6732632
    %v6685 = vmul.f32 %v6677, 1.6732632
    %v6686 = vsel %vm6646, %v6638, %v6678
    %v6687 = vsel %vm6647, %v6639, %v6679
    %v6688 = vsel %vm6648, %v6640, %v6680
    %v6689 = vsel %vm6649, %v6641, %v6681
    %v6690 = vsel %vm6650, %v6642, %v6682
    %v6691 = vsel %vm6651, %v6643, %v6683
    %v6692 = vsel %vm6652, %v6644, %v6684
    %v6693 = vsel %vm6653, %v6645, %v6685
    %v6694 = vmul.f32 %v6686, 1.050701
    %v6695 = vmul.f32 %v6687, 1.050701
    %v6696 = vmul.f32 %v6688, 1.050701
    %v6697 = vmul.f32 %v6689, 1.050701
    %v6698 = vmul.f32 %v6690, 1.050701
    %v6699 = vmul.f32 %v6691, 1.050701
    %v6700 = vmul.f32 %v6692, 1.050701
    %v6701 = vmul.f32 %v6693, 1.050701
    %v6702 = vpack.c.bf16 %v6695, %v6694
    %v6703 = vpack.c.bf16 %v6697, %v6696
    %v6704 = vpack.c.bf16 %v6699, %v6698
    %v6705 = vpack.c.bf16 %v6701, %v6700
    %v6706 = vld [vmem:[%s5754 + $0x18] sm:$0xf]
    %v6707 = vld [vmem:[%s5754 + $0x34] sm:$0xf]
    %v6708 = vld [vmem:[%s5754 + $0x50] sm:$0xf]
    %v6709 = vld [vmem:[%s5754 + $0x6c] sm:$0xf]
    %v6710 = vld [vmem:[%s5754 + $0x88] sm:$0xf]
    %v6711 = vld [vmem:[%s5754 + $0xa4] sm:$0xf]
    %v6712 = vld [vmem:[%s5754 + $0xc0] sm:$0xf]
    %v6713 = vld [vmem:[%s5754 + $0xdc] sm:$0xf]
    %v6714 = vld [vmem:[%s5754 + $0xf8] sm:$0xf]
    %v6715 = vld [vmem:[%s5754 + $0x114] sm:$0xf]
    %v6716 = vld [vmem:[%s5754 + $0x130] sm:$0xf]
    %v6717 = vld [vmem:[%s5754 + $0x14c] sm:$0xf]
    %v6718 = vld [vmem:[%s5754 + $0x168] sm:$0xf]
    %v6719 = vld [vmem:[%s5754 + $0x184] sm:$0xf]
    %v6720 = vld [vmem:[%s5754 + $0x1a0] sm:$0xf]
    %v6721 = vld [vmem:[%s5754 + $0x1bc] sm:$0xf]
    %v6738 = vunpack.c.l.b16 %v6706
    %v6739 = vunpack.c.l.b16 %v6707
    %v6740 = vunpack.c.l.b16 %v6708
    %v6741 = vunpack.c.l.b16 %v6709
    %v6742 = vunpack.c.l.b16 %v6710
    %v6743 = vunpack.c.l.b16 %v6711
    %v6744 = vunpack.c.l.b16 %v6712
    %v6745 = vunpack.c.l.b16 %v6713
    %v6746 = vunpack.c.l.b16 %v6714
    %v6747 = vunpack.c.l.b16 %v6715
    %v6748 = vunpack.c.l.b16 %v6716
    %v6749 = vunpack.c.l.b16 %v6717
    %v6750 = vunpack.c.l.b16 %v6718
    %v6751 = vunpack.c.l.b16 %v6719
    %v6752 = vunpack.c.l.b16 %v6720
    %v6753 = vunpack.c.l.b16 %v6721
    %v6754 = vpack.c.b16 %v6739, %v6738
    %v6755 = vpack.c.b16 %v6741, %v6740
    %v6756 = vpack.c.b16 %v6743, %v6742
    %v6757 = vpack.c.b16 %v6745, %v6744
    %v6758 = vpack.c.b16 %v6747, %v6746
    %v6759 = vpack.c.b16 %v6749, %v6748
    %v6760 = vpack.c.b16 %v6751, %v6750
    %v6761 = vpack.c.b16 %v6753, %v6752
    %6770 = vmatpush.bf16.msra.mxu0 %v6761
    %6771 = vmatpush.bf16.msra.mxu0 %v6760
    %6772 = vmatpush.bf16.msra.mxu0 %v6759
    %6773 = vmatpush.bf16.msra.mxu0 %v6758
    %6774 = vmatpush.bf16.msra.mxu0 %v6757
    %6775 = vmatpush.bf16.msra.mxu0 %v6756
    %6776 = vmatpush.bf16.msra.mxu0 %v6755
    %6777 = vmatpush.bf16.msra.mxu0 %v6754
    %6778 = vmatmul.bf16.gmra.mxu0 %v6702
    %v6779 = vpop.f32.mrf.mxu0
    %v6780 = vadd.f32 0.0, %v6779
    %v6781 = vpop.f32.mrf.mxu0
    %v6782 = vadd.f32 0.0, %v6781
    %6783 = vmatmul.bf16.gmra.mxu0 %v6703
    %v6784 = vpop.f32.mrf.mxu0
    %v6785 = vadd.f32 0.0, %v6784
    %v6786 = vpop.f32.mrf.mxu0
    %v6787 = vadd.f32 0.0, %v6786
    %6788 = vmatmul.bf16.gmra.mxu0 %v6704
    %v6789 = vpop.f32.mrf.mxu0
    %v6790 = vadd.f32 0.0, %v6789
    %v6791 = vpop.f32.mrf.mxu0
    %v6792 = vadd.f32 0.0, %v6791
    %6793 = vmatmul.bf16.gmra.mxu0 %v6705
    %v6794 = vpop.f32.mrf.mxu0
    %v6795 = vadd.f32 0.0, %v6794
    %v6796 = vpop.f32.mrf.mxu0
    %v6797 = vadd.f32 0.0, %v6796
    %6798 = vdwg.mxu0
    %v6799 = vadd.f32 %v5740, %v6780
    %v6800 = vadd.f32 %v5741, %v6782
    %v6801 = vadd.f32 %v5742, %v6785
    %v6802 = vadd.f32 %v5743, %v6787
    %v6803 = vadd.f32 %v5744, %v6790
    %v6804 = vadd.f32 %v5745, %v6792
    %v6805 = vadd.f32 %v5746, %v6795
    %v6806 = vadd.f32 %v5747, %v6797
    %v6807 = vperm.slane %v5753, 3
    %v6808 = vadd.f32 %v6799, %v6807
    %v6809 = vadd.f32 %v6800, %v6807
    %v6810 = vadd.f32 %v6801, %v6807
    %v6811 = vadd.f32 %v6802, %v6807
    %v6812 = vadd.f32 %v6803, %v6807
    %v6813 = vadd.f32 %v6804, %v6807
    %v6814 = vadd.f32 %v6805, %v6807
    %v6815 = vadd.f32 %v6806, %v6807
    %6816 = vst [vmem:[#allocation24] sm:$0xff] %v6808
    %6817 = vst [vmem:[#allocation24 + $0x8] sm:$0xff] %v6809
    %6818 = vst [vmem:[#allocation24 + $0x10] sm:$0xff] %v6810
    %6819 = vst [vmem:[#allocation24 + $0x18] sm:$0xff] %v6811
    %6820 = vst [vmem:[#allocation24 + $0x20] sm:$0xff] %v6812
    %6821 = vst [vmem:[#allocation24 + $0x28] sm:$0xff] %v6813
    %6822 = vst [vmem:[#allocation24 + $0x30] sm:$0xff] %v6814
    %6823 = vst [vmem:[#allocation24 + $0x38] sm:$0xff] %v6815
    %6824 = vst [vmem:[#allocation25] sm:$0xff] %v6386
    %6825 = vst [vmem:[#allocation25 + $0x8] sm:$0xff] %v6387
    %6826 = vst [vmem:[#allocation25 + $0x10] sm:$0xff] %v6388
    %6827 = vst [vmem:[#allocation25 + $0x18] sm:$0xff] %v6389
    %6828 = vst [vmem:[#allocation25 + $0x20] sm:$0xff] %v6390
    %6829 = vst [vmem:[#allocation25 + $0x28] sm:$0xff] %v6391
    %6830 = vst [vmem:[#allocation25 + $0x30] sm:$0xff] %v6392
    %6831 = vst [vmem:[#allocation25 + $0x38] sm:$0xff] %v6393
    %6832 = vst [vmem:[#allocation25 + $0x40] sm:$0xff] %v6394
    %6833 = vst [vmem:[#allocation25 + $0x48] sm:$0xff] %v6395
    %6834 = vst [vmem:[#allocation25 + $0x50] sm:$0xff] %v6396
    %6835 = vst [vmem:[#allocation25 + $0x58] sm:$0xff] %v6397
    %6836 = vst [vmem:[#allocation25 + $0x60] sm:$0xff] %v6398
    %6837 = vst [vmem:[#allocation25 + $0x68] sm:$0xff] %v6399
    %6838 = vst [vmem:[#allocation25 + $0x70] sm:$0xff] %v6400
    %6839 = vst [vmem:[#allocation25 + $0x78] sm:$0xff] %v6401
    // Predicated region
    $region110: #{tpu_custom_call.1} parent=1 // pred_check
      _
    $region111: #{tpu_custom_call.1} parent=1 // pred_check_branch
      %6841 = sbr.rel (0) target = $region113
    $region112: #{tpu_custom_call.1} parent=1 // pred_region
      %6843 = vsyncadd [#allocation6], 0
      %s6844 = sshll.u32 [#allocation24], 4
      %s6845 = int_to_ptr.vmem [resolvable:$true] %s6844
      %s6846 = sshll.u32 %s15, 4
      %s6847 = int_to_ptr.hbm [resolvable:$true] %s6846
      %6852 = dma.vmem_to_hbm [thread:$0]  %s6845, 1024, %s6847, [#allocation6], 128, 128, 8
    $region113: #{tpu_custom_call.1} parent=1 // pred_fallthru
      _
    // Predicated region
    $region114: #{tpu_custom_call.1} parent=1 // pred_check
      _
    $region115: #{tpu_custom_call.1} parent=1 // pred_check_branch
      %6854 = sbr.rel (0) target = $region117
    $region116: #{tpu_custom_call.1} parent=1 // pred_region
      %6856 = vsyncadd [#allocation26], 0
      %s6857 = sshll.u32 [#allocation25], 4
      %s6858 = int_to_ptr.vmem [resolvable:$true] %s6857
      %s6859 = sshll.u32 %s16, 4
      %s6860 = int_to_ptr.hbm [resolvable:$true] %s6859
      %6865 = dma.vmem_to_hbm [thread:$0]  %s6858, 2048, %s6860, [#allocation26], 128, 128, 8
    $region117: #{tpu_custom_call.1} parent=1 // pred_fallthru
      _
    // Predicated region
    $region118: #{tpu_custom_call.1} parent=1 // pred_check
      _
    $region119: #{tpu_custom_call.1} parent=1 // pred_check_branch
      %6867 = sbr.rel (0) target = $region121
    $region120: #{tpu_custom_call.1} parent=1 // pred_region
      %6869 = dma.done [#allocation6], 1024
    $region121: #{tpu_custom_call.1} parent=1 // pred_fallthru
      _
    // Predicated region
    $region122: #{tpu_custom_call.1} parent=1 // pred_check
      _
    $region123: #{tpu_custom_call.1} parent=1 // pred_check_branch
      %6871 = sbr.rel (0) target = $region125
    $region124: #{tpu_custom_call.1} parent=1 // pred_region
      %6873 = dma.done [#allocation26], 2048
    $region125: #{tpu_custom_call.1} parent=1 // pred_fallthru
      _
    %6874 = vsyncpa [#allocation5], 1
    %6875 = vsyncpa [#allocation8], 1
    %6876 = vsyncpa [#allocation11], 1
    %6877 = vsyncpa [#allocation14], 1
    %6878 = vsyncpa [#allocation17], 1
    %6879 = vsyncpa [#allocation20], 1
    %6880 = vsyncpa [#allocation23], 1
    %6881 = vsyncpa [#allocation6], 1
    %6882 = vsyncpa [#allocation26], 1

</llo_original>
